<compile_context>
chip_gen: v7x
topology: tpu7x:2x2x1
jax: 0.10.0
libtpu: 0.0.40
codegen_flags: <defaults>
</compile_context>

<pallas_src>
import functools

import jax
import jax.numpy as jnp
from jax.experimental import pallas as pl
from jax.experimental.pallas import tpu as pltpu


LN_EPS = 1e-5  # nn.LayerNorm default


def _layernorm(x, gamma, beta):
    mu = jnp.mean(x, axis=-1, keepdims=True)
    xc = x - mu
    var = jnp.mean(xc * xc, axis=-1, keepdims=True)
    return xc * jax.lax.rsqrt(var + LN_EPS) * gamma + beta


def _gelu_tanh(x):
    # TODO(synk): PyTorch nn.GELU() defaults to the exact erf form; the tanh
    # approximation is used here (erf has no guaranteed Mosaic lowering).
    c = 0.7978845608028654  # sqrt(2/pi)
    return 0.5 * x * (1.0 + jnp.tanh(c * (x + 0.044715 * x * x * x)))


def block_kernel(num_heads, head_dim,
                 x_ref, g1_ref, b1_ref, wqkv_ref, wo_ref, bo_ref,
                 g2_ref, b2_ref, w1_ref, b1m_ref, w2_ref, b2m_ref, o_ref):
    # x_ref   : (N, C)  f32   tokens for one batch element
    # wqkv_ref: (C, 3C) bf16  qkv weight (matmul form), qkv_bias=False (module default)
    # wo_ref  : (H, D, C) bf16  per-head output-projection weight
    # w1_ref  : (C, Hd) bf16, w2_ref: (Hd, C) bf16   MLP weights
    # biases / LN params: (1, C) or (1, Hd) f32
    N, C = x_ref.shape
    H, D = num_heads, head_dim
    scale = 1.0 / (D ** 0.5)

    x = x_ref[...]                                             # (N, C) f32

    # ---------- Attention branch ----------
    h = _layernorm(x, g1_ref[...], b1_ref[...])
    qkv = jnp.dot(h.astype(jnp.bfloat16), wqkv_ref[...],
                  preferred_element_type=jnp.float32)          # (N, 3C) f32

    # Cast once; fold the softmax scale into Q (cheaper than scaling every (N, N) score).
    q_all = (qkv[:, 0 * C:1 * C] * scale).astype(jnp.bfloat16)  # (N, C)
    k_all = qkv[:, 1 * C:2 * C].astype(jnp.bfloat16)            # (N, C)
    v_all = qkv[:, 2 * C:3 * C].astype(jnp.bfloat16)            # (N, C)

    # Residual + proj bias seed the accumulator; per-head proj outputs add into it.
    acc = x + bo_ref[...]                                      # (N, C) f32
    for hh in range(H):                                        # unrolled, H small
        q = q_all[:, hh * D:(hh + 1) * D]                      # (N, D) bf16
        k = k_all[:, hh * D:(hh + 1) * D]                      # (N, D) bf16
        v = v_all[:, hh * D:(hh + 1) * D]                      # (N, D) bf16

        s = jax.lax.dot_general(
            q, k, dimension_numbers=(((1,), (1,)), ((), ())),
            preferred_element_type=jnp.float32)                # (N, N) f32
        s = s - jnp.max(s, axis=-1, keepdims=True)
        p = jnp.exp(s)
        p = p * pl.reciprocal(jnp.sum(p, axis=-1, keepdims=True), approx=True)

        o_h = jnp.dot(p.astype(jnp.bfloat16), v,
                      preferred_element_type=jnp.float32)      # (N, D) f32
        acc = acc + jnp.dot(o_h.astype(jnp.bfloat16), wo_ref[hh],
                            preferred_element_type=jnp.float32)  # (N, C) f32

    x1 = acc                                                   # residual 1 applied

    # ---------- MLP branch ----------
    h2 = _layernorm(x1, g2_ref[...], b2_ref[...])
    a1 = jnp.dot(h2.astype(jnp.bfloat16), w1_ref[...],
                 preferred_element_type=jnp.float32) + b1m_ref[...]
    a1 = _gelu_tanh(a1)
    a2 = jnp.dot(a1.astype(jnp.bfloat16), w2_ref[...],
                 preferred_element_type=jnp.float32) + b2m_ref[...]

    o_ref[...] = (x1 + a2).astype(o_ref.dtype)                 # residual 2


def block_forward(x, params, num_heads, *, interpret=False):
    """x: (B, N, C) f32. Returns (B, N, C) f32 matching Block.forward (eval mode)."""
    B, N, C = x.shape
    assert C % num_heads == 0
    D = C // num_heads
    g1, b1, wqkv_t, wproj_t, bproj, g2, b2, w1_t, b1m, w2_t, b2m = params
    hidden = w1_t.shape[1]

    # One-time weight layout / dtype prep (kept out of the kernel & per-step path).
    wqkv_bf = wqkv_t.astype(jnp.bfloat16)                          # (C, 3C)
    wo_bf = wproj_t.reshape(num_heads, D, C).astype(jnp.bfloat16)  # (H, D, C)
    w1_bf = w1_t.astype(jnp.bfloat16)                              # (C, Hd)
    w2_bf = w2_t.astype(jnp.bfloat16)                              # (Hd, C)
    g1r, b1r = g1.reshape(1, C), b1.reshape(1, C)
    g2r, b2r = g2.reshape(1, C), b2.reshape(1, C)
    bor = bproj.reshape(1, C)
    b1mr = b1m.reshape(1, hidden)
    b2mr = b2m.reshape(1, C)

    def full(shape):
        n = len(shape)
        return pl.BlockSpec(shape, lambda b, _n=n: (0,) * _n)

    grid_spec = pltpu.PrefetchScalarGridSpec(
        num_scalar_prefetch=0,
        grid=(B,),
        in_specs=[
            pl.BlockSpec((None, N, C), lambda b: (b, 0, 0)),  # x: one batch per step
            full((1, C)), full((1, C)),                       # LN1 gamma / beta
            full((C, 3 * C)),                                 # qkv weight (resident)
            full((num_heads, D, C)),                          # proj weight per head
            full((1, C)),                                     # proj bias
            full((1, C)), full((1, C)),                       # LN2 gamma / beta
            full((C, hidden)), full((1, hidden)),             # fc1 weight / bias
            full((hidden, C)), full((1, C)),                  # fc2 weight / bias
        ],
        out_specs=pl.BlockSpec((None, N, C), lambda b: (b, 0, 0)),
    )

    flops = B * (2 * N * C * 3 * C            # qkv matmul
                 + 2 * 2 * N * N * C          # QK^T + PV over all heads
                 + 2 * N * C * C              # output projection
                 + 2 * 2 * N * C * hidden)    # MLP fc1 + fc2
    transcendentals = B * (num_heads * N * N + N * hidden + 2 * N)
    bytes_accessed = (2 * B * N * C * 4
                      + 2 * (C * 3 * C + C * C + 2 * C * hidden)
                      + 4 * (6 * C + hidden))

    kernel = functools.partial(block_kernel, num_heads, D)
    return pl.pallas_call(
        kernel,
        out_shape=jax.ShapeDtypeStruct((B, N, C), x.dtype),
        grid_spec=grid_spec,
        compiler_params=pltpu.CompilerParams(
            dimension_semantics=("parallel",),
            vmem_limit_bytes=32 * 1024 * 1024),
        cost_estimate=pl.CostEstimate(flops=flops,
                                      transcendentals=transcendentals,
                                      bytes_accessed=bytes_accessed),
        interpret=interpret,
    )(x, g1r, b1r, wqkv_bf, wo_bf, bor, g2r, b2r, w1_bf, b1mr, w2_bf, b2mr)


def reference(x, params, num_heads):
    """Pure-JAX f32 reference matching the PyTorch Block forward (eval mode)."""
    g1, b1, wqkv_t, wproj_t, bproj, g2, b2, w1_t, b1m, w2_t, b2m = params
    B, N, C = x.shape
    H = num_heads
    D = C // H
    scale = D ** -0.5

    h = _layernorm(x, g1, b1)
    qkv = h @ wqkv_t                                         # (B, N, 3C)
    qkv = qkv.reshape(B, N, 3, H, D).transpose(2, 0, 3, 1, 4)
    q, k, v = qkv[0], qkv[1], qkv[2]                         # (B, H, N, D)
    attn = jnp.einsum('bhnd,bhmd->bhnm', q, k) * scale
    attn = jax.nn.softmax(attn, axis=-1)
    out = jnp.einsum('bhnm,bhmd->bhnd', attn, v)
    out = out.transpose(0, 2, 1, 3).reshape(B, N, C)
    x = x + out @ wproj_t + bproj
    h2 = _layernorm(x, g2, b2)
    x = x + _gelu_tanh(h2 @ w1_t + b1m) @ w2_t + b2m
    return x


if __name__ == "__main__":
    # Small but MXU/lane-friendly shapes implied by the module:
    #   batch=2, seq=128, dim=256 (multiple of 128), heads=8 (head_dim=32), mlp_ratio=4.
    B, N, C = 2, 128, 256
    num_heads = 8
    hidden = 4 * C

    key = jax.random.PRNGKey(0)
    ks = jax.random.split(key, 12)
    x = jax.random.normal(ks[0], (B, N, C), jnp.float32)

    def lin(k, fan_in, fan_out):
        # PyTorch Linear weight is (out, in); keep the transposed matmul form (in, out).
        w = jax.random.normal(k, (fan_out, fan_in), jnp.float32) * 0.02
        return w.T

    g1 = 1.0 + 0.02 * jax.random.normal(ks[1], (C,), jnp.float32)
    b1 = 0.02 * jax.random.normal(ks[2], (C,), jnp.float32)
    wqkv_t = lin(ks[3], C, 3 * C)            # qkv_bias=False (module default)
    wproj_t = lin(ks[4], C, C)
    bproj = 0.02 * jax.random.normal(ks[5], (C,), jnp.float32)
    g2 = 1.0 + 0.02 * jax.random.normal(ks[6], (C,), jnp.float32)
    b2 = 0.02 * jax.random.normal(ks[7], (C,), jnp.float32)
    w1_t = lin(ks[8], C, hidden)
    b1m = 0.02 * jax.random.normal(ks[9], (hidden,), jnp.float32)
    w2_t = lin(ks[10], hidden, C)
    b2m = 0.02 * jax.random.normal(ks[11], (C,), jnp.float32)

    params = (g1, b1, wqkv_t, wproj_t, bproj, g2, b2, w1_t, b1m, w2_t, b2m)

    out = block_forward(x, params, num_heads)
    out = jax.block_until_ready(out)

    ref = reference(x, params, num_heads)
    assert out.shape == (B, N, C), out.shape
    max_err = float(jnp.max(jnp.abs(out - ref)))
    # bf16 MXU inputs with f32 accumulation -> loosened tolerance vs the f32 reference.
    assert jnp.allclose(out, ref, atol=2e-2, rtol=2e-2), f"mismatch vs reference, max|d|={max_err}"
    print("KERNEL_OK")
</pallas_src>

<mosaic_0001>
module attributes {stable_mosaic.version = 11 : i64} {
  func.func @block_kernel(%arg0: i32, %arg1: memref<1x128x256xf32, #tpu.memory_space<vmem>>, %arg2: memref<1x256xf32, #tpu.memory_space<vmem>>, %arg3: memref<1x256xf32, #tpu.memory_space<vmem>>, %arg4: memref<256x768xbf16, #tpu.memory_space<vmem>>, %arg5: memref<8x32x256xbf16, #tpu.memory_space<vmem>>, %arg6: memref<1x256xf32, #tpu.memory_space<vmem>>, %arg7: memref<1x256xf32, #tpu.memory_space<vmem>>, %arg8: memref<1x256xf32, #tpu.memory_space<vmem>>, %arg9: memref<256x1024xbf16, #tpu.memory_space<vmem>>, %arg10: memref<1x1024xf32, #tpu.memory_space<vmem>>, %arg11: memref<1024x256xbf16, #tpu.memory_space<vmem>>, %arg12: memref<1x256xf32, #tpu.memory_space<vmem>>, %arg13: memref<1x128x256xf32, #tpu.memory_space<vmem>>) attributes {dimension_semantics = [#tpu.dimension_semantics<parallel>], iteration_bounds = array<i64: 2>, scalar_prefetch = 0 : i64, scratch_operands = 0 : i64, tpu.core_type = #tpu.core_type<tc>, window_params = [{transform_indices = @transform_0, window_bounds = array<i64: 1, 128, 256>}, {pipeline_mode = #tpu.pipeline_mode<synchronous>, transform_indices = @transform_1, window_bounds = array<i64: 1, 256>}, {pipeline_mode = #tpu.pipeline_mode<synchronous>, transform_indices = @transform_2, window_bounds = array<i64: 1, 256>}, {pipeline_mode = #tpu.pipeline_mode<synchronous>, transform_indices = @transform_3, window_bounds = array<i64: 256, 768>}, {pipeline_mode = #tpu.pipeline_mode<synchronous>, transform_indices = @transform_4, window_bounds = array<i64: 8, 32, 256>}, {pipeline_mode = #tpu.pipeline_mode<synchronous>, transform_indices = @transform_5, window_bounds = array<i64: 1, 256>}, {pipeline_mode = #tpu.pipeline_mode<synchronous>, transform_indices = @transform_6, window_bounds = array<i64: 1, 256>}, {pipeline_mode = #tpu.pipeline_mode<synchronous>, transform_indices = @transform_7, window_bounds = array<i64: 1, 256>}, {pipeline_mode = #tpu.pipeline_mode<synchronous>, transform_indices = @transform_8, window_bounds = array<i64: 256, 1024>}, {pipeline_mode = #tpu.pipeline_mode<synchronous>, transform_indices = @transform_9, window_bounds = array<i64: 1, 1024>}, {pipeline_mode = #tpu.pipeline_mode<synchronous>, transform_indices = @transform_10, window_bounds = array<i64: 1024, 256>}, {pipeline_mode = #tpu.pipeline_mode<synchronous>, transform_indices = @transform_11, window_bounds = array<i64: 1, 256>}, {transform_indices = @transform_12, window_bounds = array<i64: 1, 128, 256>}]} {
    %c0 = arith.constant 0 : index
    %c0_0 = arith.constant 0 : index
    %c0_1 = arith.constant 0 : index
    %0 = vector.load %arg1[%c0, %c0_0, %c0_1] : memref<1x128x256xf32, #tpu.memory_space<vmem>>, vector<1x128x256xf32>
    %1 = vector.shape_cast %0 : vector<1x128x256xf32> to vector<128x256xf32>
    %c0_2 = arith.constant 0 : index
    %c0_3 = arith.constant 0 : index
    %2 = vector.load %arg2[%c0_2, %c0_3] : memref<1x256xf32, #tpu.memory_space<vmem>>, vector<1x256xf32>
    %c0_4 = arith.constant 0 : index
    %c0_5 = arith.constant 0 : index
    %3 = vector.load %arg3[%c0_4, %c0_5] : memref<1x256xf32, #tpu.memory_space<vmem>>, vector<1x256xf32>
    %cst = arith.constant dense<0.000000e+00> : vector<128xf32>
    %4 = vector.multi_reduction <add>, %1, %cst [1] : vector<128x256xf32> to vector<128xf32>
    %5 = vector.shape_cast %4 : vector<128xf32> to vector<128x1xf32>
    %cst_6 = arith.constant 2.560000e+02 : f32
    %6 = vector.broadcast %cst_6 : f32 to vector<128x1xf32>
    %7 = arith.divf %5, %6 : vector<128x1xf32>
    %8 = vector.broadcast %7 : vector<128x1xf32> to vector<128x256xf32>
    %9 = arith.subf %1, %8 : vector<128x256xf32>
    %10 = arith.mulf %9, %9 : vector<128x256xf32>
    %cst_7 = arith.constant dense<0.000000e+00> : vector<128xf32>
    %11 = vector.multi_reduction <add>, %10, %cst_7 [1] : vector<128x256xf32> to vector<128xf32>
    %12 = vector.shape_cast %11 : vector<128xf32> to vector<128x1xf32>
    %cst_8 = arith.constant 2.560000e+02 : f32
    %13 = vector.broadcast %cst_8 : f32 to vector<128x1xf32>
    %14 = arith.divf %12, %13 : vector<128x1xf32>
    %cst_9 = arith.constant 9.99999974E-6 : f32
    %15 = vector.broadcast %cst_9 : f32 to vector<128x1xf32>
    %16 = arith.addf %14, %15 : vector<128x1xf32>
    %17 = math.rsqrt %16 : vector<128x1xf32>
    %18 = vector.broadcast %17 : vector<128x1xf32> to vector<128x256xf32>
    %19 = arith.mulf %9, %18 : vector<128x256xf32>
    %20 = vector.broadcast %2 : vector<1x256xf32> to vector<128x256xf32>
    %21 = arith.mulf %19, %20 : vector<128x256xf32>
    %22 = vector.broadcast %3 : vector<1x256xf32> to vector<128x256xf32>
    %23 = arith.addf %21, %22 : vector<128x256xf32>
    %24 = arith.truncf %23 : vector<128x256xf32> to vector<128x256xbf16>
    %c0_10 = arith.constant 0 : index
    %c0_11 = arith.constant 0 : index
    %25 = vector.load %arg4[%c0_10, %c0_11] : memref<256x768xbf16, #tpu.memory_space<vmem>>, vector<256x768xbf16>
    %cst_12 = arith.constant dense<0.000000e+00> : vector<128x768xf32>
    %26 = tpu.matmul %24, %25, %cst_12 {dimension_numbers = #tpu.dot_dimension_numbers<[1], [0], [0], [1], [0, 0, 1, 1], [], []>} : vector<128x256xbf16>, vector<256x768xbf16>, vector<128x768xf32> -> vector<128x768xf32>
    %27 = vector.extract_strided_slice %26 {offsets = [0, 0], sizes = [128, 256], strides = [1, 1]} : vector<128x768xf32> to vector<128x256xf32>
    %cst_13 = arith.constant 0.176776692 : f32
    %28 = vector.broadcast %cst_13 : f32 to vector<128x256xf32>
    %29 = arith.mulf %27, %28 : vector<128x256xf32>
    %30 = arith.truncf %29 : vector<128x256xf32> to vector<128x256xbf16>
    %31 = vector.extract_strided_slice %26 {offsets = [0, 256], sizes = [128, 256], strides = [1, 1]} : vector<128x768xf32> to vector<128x256xf32>
    %32 = arith.truncf %31 : vector<128x256xf32> to vector<128x256xbf16>
    %33 = vector.extract_strided_slice %26 {offsets = [0, 512], sizes = [128, 256], strides = [1, 1]} : vector<128x768xf32> to vector<128x256xf32>
    %34 = arith.truncf %33 : vector<128x256xf32> to vector<128x256xbf16>
    %c0_14 = arith.constant 0 : index
    %c0_15 = arith.constant 0 : index
    %35 = vector.load %arg6[%c0_14, %c0_15] : memref<1x256xf32, #tpu.memory_space<vmem>>, vector<1x256xf32>
    %36 = vector.broadcast %35 : vector<1x256xf32> to vector<128x256xf32>
    %37 = arith.addf %1, %36 : vector<128x256xf32>
    %38 = vector.extract_strided_slice %30 {offsets = [0, 0], sizes = [128, 32], strides = [1, 1]} : vector<128x256xbf16> to vector<128x32xbf16>
    %39 = vector.extract_strided_slice %32 {offsets = [0, 0], sizes = [128, 32], strides = [1, 1]} : vector<128x256xbf16> to vector<128x32xbf16>
    %40 = vector.extract_strided_slice %34 {offsets = [0, 0], sizes = [128, 32], strides = [1, 1]} : vector<128x256xbf16> to vector<128x32xbf16>
    %cst_16 = arith.constant dense<0.000000e+00> : vector<128x128xf32>
    %41 = tpu.matmul %38, %39, %cst_16 {dimension_numbers = #tpu.dot_dimension_numbers<[1], [1], [0], [0], [0, 0, 1, 0], [], []>} : vector<128x32xbf16>, vector<128x32xbf16>, vector<128x128xf32> -> vector<128x128xf32>
    %cst_17 = arith.constant dense<0xFF800000> : vector<128xf32>
    %42 = vector.multi_reduction <maximumf>, %41, %cst_17 [1] : vector<128x128xf32> to vector<128xf32>
    %43 = vector.shape_cast %42 : vector<128xf32> to vector<128x1xf32>
    %44 = vector.broadcast %43 : vector<128x1xf32> to vector<128x128xf32>
    %45 = arith.subf %41, %44 : vector<128x128xf32>
    %46 = math.exp %45 : vector<128x128xf32>
    %cst_18 = arith.constant dense<0.000000e+00> : vector<128xf32>
    %47 = vector.multi_reduction <add>, %46, %cst_18 [1] : vector<128x128xf32> to vector<128xf32>
    %48 = vector.shape_cast %47 : vector<128xf32> to vector<128x1xf32>
    %49 = tpu.reciprocal %48 {approx = true} : vector<128x1xf32> -> vector<128x1xf32>
    %50 = vector.broadcast %49 : vector<128x1xf32> to vector<128x128xf32>
    %51 = arith.mulf %46, %50 : vector<128x128xf32>
    %52 = arith.truncf %51 : vector<128x128xf32> to vector<128x128xbf16>
    %cst_19 = arith.constant dense<0.000000e+00> : vector<128x32xf32>
    %53 = tpu.matmul %52, %40, %cst_19 {dimension_numbers = #tpu.dot_dimension_numbers<[1], [0], [0], [1], [0, 0, 1, 1], [], []>} : vector<128x128xbf16>, vector<128x32xbf16>, vector<128x32xf32> -> vector<128x32xf32>
    %54 = arith.truncf %53 : vector<128x32xf32> to vector<128x32xbf16>
    %c0_20 = arith.constant 0 : index
    %c0_21 = arith.constant 0 : index
    %c0_22 = arith.constant 0 : index
    %55 = vector.load %arg5[%c0_20, %c0_21, %c0_22] : memref<8x32x256xbf16, #tpu.memory_space<vmem>>, vector<1x32x256xbf16>
    %56 = vector.shape_cast %55 : vector<1x32x256xbf16> to vector<32x256xbf16>
    %cst_23 = arith.constant dense<0.000000e+00> : vector<128x256xf32>
    %57 = tpu.matmul %54, %56, %cst_23 {dimension_numbers = #tpu.dot_dimension_numbers<[1], [0], [0], [1], [0, 0, 1, 1], [], []>} : vector<128x32xbf16>, vector<32x256xbf16>, vector<128x256xf32> -> vector<128x256xf32>
    %58 = arith.addf %37, %57 : vector<128x256xf32>
    %59 = vector.extract_strided_slice %30 {offsets = [0, 32], sizes = [128, 32], strides = [1, 1]} : vector<128x256xbf16> to vector<128x32xbf16>
    %60 = vector.extract_strided_slice %32 {offsets = [0, 32], sizes = [128, 32], strides = [1, 1]} : vector<128x256xbf16> to vector<128x32xbf16>
    %61 = vector.extract_strided_slice %34 {offsets = [0, 32], sizes = [128, 32], strides = [1, 1]} : vector<128x256xbf16> to vector<128x32xbf16>
    %cst_24 = arith.constant dense<0.000000e+00> : vector<128x128xf32>
    %62 = tpu.matmul %59, %60, %cst_24 {dimension_numbers = #tpu.dot_dimension_numbers<[1], [1], [0], [0], [0, 0, 1, 0], [], []>} : vector<128x32xbf16>, vector<128x32xbf16>, vector<128x128xf32> -> vector<128x128xf32>
    %cst_25 = arith.constant dense<0xFF800000> : vector<128xf32>
    %63 = vector.multi_reduction <maximumf>, %62, %cst_25 [1] : vector<128x128xf32> to vector<128xf32>
    %64 = vector.shape_cast %63 : vector<128xf32> to vector<128x1xf32>
    %65 = vector.broadcast %64 : vector<128x1xf32> to vector<128x128xf32>
    %66 = arith.subf %62, %65 : vector<128x128xf32>
    %67 = math.exp %66 : vector<128x128xf32>
    %cst_26 = arith.constant dense<0.000000e+00> : vector<128xf32>
    %68 = vector.multi_reduction <add>, %67, %cst_26 [1] : vector<128x128xf32> to vector<128xf32>
    %69 = vector.shape_cast %68 : vector<128xf32> to vector<128x1xf32>
    %70 = tpu.reciprocal %69 {approx = true} : vector<128x1xf32> -> vector<128x1xf32>
    %71 = vector.broadcast %70 : vector<128x1xf32> to vector<128x128xf32>
    %72 = arith.mulf %67, %71 : vector<128x128xf32>
    %73 = arith.truncf %72 : vector<128x128xf32> to vector<128x128xbf16>
    %cst_27 = arith.constant dense<0.000000e+00> : vector<128x32xf32>
    %74 = tpu.matmul %73, %61, %cst_27 {dimension_numbers = #tpu.dot_dimension_numbers<[1], [0], [0], [1], [0, 0, 1, 1], [], []>} : vector<128x128xbf16>, vector<128x32xbf16>, vector<128x32xf32> -> vector<128x32xf32>
    %75 = arith.truncf %74 : vector<128x32xf32> to vector<128x32xbf16>
    %c1 = arith.constant 1 : index
    %c0_28 = arith.constant 0 : index
    %c0_29 = arith.constant 0 : index
    %76 = vector.load %arg5[%c1, %c0_28, %c0_29] : memref<8x32x256xbf16, #tpu.memory_space<vmem>>, vector<1x32x256xbf16>
    %77 = vector.shape_cast %76 : vector<1x32x256xbf16> to vector<32x256xbf16>
    %cst_30 = arith.constant dense<0.000000e+00> : vector<128x256xf32>
    %78 = tpu.matmul %75, %77, %cst_30 {dimension_numbers = #tpu.dot_dimension_numbers<[1], [0], [0], [1], [0, 0, 1, 1], [], []>} : vector<128x32xbf16>, vector<32x256xbf16>, vector<128x256xf32> -> vector<128x256xf32>
    %79 = arith.addf %58, %78 : vector<128x256xf32>
    %80 = vector.extract_strided_slice %30 {offsets = [0, 64], sizes = [128, 32], strides = [1, 1]} : vector<128x256xbf16> to vector<128x32xbf16>
    %81 = vector.extract_strided_slice %32 {offsets = [0, 64], sizes = [128, 32], strides = [1, 1]} : vector<128x256xbf16> to vector<128x32xbf16>
    %82 = vector.extract_strided_slice %34 {offsets = [0, 64], sizes = [128, 32], strides = [1, 1]} : vector<128x256xbf16> to vector<128x32xbf16>
    %cst_31 = arith.constant dense<0.000000e+00> : vector<128x128xf32>
    %83 = tpu.matmul %80, %81, %cst_31 {dimension_numbers = #tpu.dot_dimension_numbers<[1], [1], [0], [0], [0, 0, 1, 0], [], []>} : vector<128x32xbf16>, vector<128x32xbf16>, vector<128x128xf32> -> vector<128x128xf32>
    %cst_32 = arith.constant dense<0xFF800000> : vector<128xf32>
    %84 = vector.multi_reduction <maximumf>, %83, %cst_32 [1] : vector<128x128xf32> to vector<128xf32>
    %85 = vector.shape_cast %84 : vector<128xf32> to vector<128x1xf32>
    %86 = vector.broadcast %85 : vector<128x1xf32> to vector<128x128xf32>
    %87 = arith.subf %83, %86 : vector<128x128xf32>
    %88 = math.exp %87 : vector<128x128xf32>
    %cst_33 = arith.constant dense<0.000000e+00> : vector<128xf32>
    %89 = vector.multi_reduction <add>, %88, %cst_33 [1] : vector<128x128xf32> to vector<128xf32>
    %90 = vector.shape_cast %89 : vector<128xf32> to vector<128x1xf32>
    %91 = tpu.reciprocal %90 {approx = true} : vector<128x1xf32> -> vector<128x1xf32>
    %92 = vector.broadcast %91 : vector<128x1xf32> to vector<128x128xf32>
    %93 = arith.mulf %88, %92 : vector<128x128xf32>
    %94 = arith.truncf %93 : vector<128x128xf32> to vector<128x128xbf16>
    %cst_34 = arith.constant dense<0.000000e+00> : vector<128x32xf32>
    %95 = tpu.matmul %94, %82, %cst_34 {dimension_numbers = #tpu.dot_dimension_numbers<[1], [0], [0], [1], [0, 0, 1, 1], [], []>} : vector<128x128xbf16>, vector<128x32xbf16>, vector<128x32xf32> -> vector<128x32xf32>
    %96 = arith.truncf %95 : vector<128x32xf32> to vector<128x32xbf16>
    %c2 = arith.constant 2 : index
    %c0_35 = arith.constant 0 : index
    %c0_36 = arith.constant 0 : index
    %97 = vector.load %arg5[%c2, %c0_35, %c0_36] : memref<8x32x256xbf16, #tpu.memory_space<vmem>>, vector<1x32x256xbf16>
    %98 = vector.shape_cast %97 : vector<1x32x256xbf16> to vector<32x256xbf16>
    %cst_37 = arith.constant dense<0.000000e+00> : vector<128x256xf32>
    %99 = tpu.matmul %96, %98, %cst_37 {dimension_numbers = #tpu.dot_dimension_numbers<[1], [0], [0], [1], [0, 0, 1, 1], [], []>} : vector<128x32xbf16>, vector<32x256xbf16>, vector<128x256xf32> -> vector<128x256xf32>
    %100 = arith.addf %79, %99 : vector<128x256xf32>
    %101 = vector.extract_strided_slice %30 {offsets = [0, 96], sizes = [128, 32], strides = [1, 1]} : vector<128x256xbf16> to vector<128x32xbf16>
    %102 = vector.extract_strided_slice %32 {offsets = [0, 96], sizes = [128, 32], strides = [1, 1]} : vector<128x256xbf16> to vector<128x32xbf16>
    %103 = vector.extract_strided_slice %34 {offsets = [0, 96], sizes = [128, 32], strides = [1, 1]} : vector<128x256xbf16> to vector<128x32xbf16>
    %cst_38 = arith.constant dense<0.000000e+00> : vector<128x128xf32>
    %104 = tpu.matmul %101, %102, %cst_38 {dimension_numbers = #tpu.dot_dimension_numbers<[1], [1], [0], [0], [0, 0, 1, 0], [], []>} : vector<128x32xbf16>, vector<128x32xbf16>, vector<128x128xf32> -> vector<128x128xf32>
    %cst_39 = arith.constant dense<0xFF800000> : vector<128xf32>
    %105 = vector.multi_reduction <maximumf>, %104, %cst_39 [1] : vector<128x128xf32> to vector<128xf32>
    %106 = vector.shape_cast %105 : vector<128xf32> to vector<128x1xf32>
    %107 = vector.broadcast %106 : vector<128x1xf32> to vector<128x128xf32>
    %108 = arith.subf %104, %107 : vector<128x128xf32>
    %109 = math.exp %108 : vector<128x128xf32>
    %cst_40 = arith.constant dense<0.000000e+00> : vector<128xf32>
    %110 = vector.multi_reduction <add>, %109, %cst_40 [1] : vector<128x128xf32> to vector<128xf32>
    %111 = vector.shape_cast %110 : vector<128xf32> to vector<128x1xf32>
    %112 = tpu.reciprocal %111 {approx = true} : vector<128x1xf32> -> vector<128x1xf32>
    %113 = vector.broadcast %112 : vector<128x1xf32> to vector<128x128xf32>
    %114 = arith.mulf %109, %113 : vector<128x128xf32>
    %115 = arith.truncf %114 : vector<128x128xf32> to vector<128x128xbf16>
    %cst_41 = arith.constant dense<0.000000e+00> : vector<128x32xf32>
    %116 = tpu.matmul %115, %103, %cst_41 {dimension_numbers = #tpu.dot_dimension_numbers<[1], [0], [0], [1], [0, 0, 1, 1], [], []>} : vector<128x128xbf16>, vector<128x32xbf16>, vector<128x32xf32> -> vector<128x32xf32>
    %117 = arith.truncf %116 : vector<128x32xf32> to vector<128x32xbf16>
    %c3 = arith.constant 3 : index
    %c0_42 = arith.constant 0 : index
    %c0_43 = arith.constant 0 : index
    %118 = vector.load %arg5[%c3, %c0_42, %c0_43] : memref<8x32x256xbf16, #tpu.memory_space<vmem>>, vector<1x32x256xbf16>
    %119 = vector.shape_cast %118 : vector<1x32x256xbf16> to vector<32x256xbf16>
    %cst_44 = arith.constant dense<0.000000e+00> : vector<128x256xf32>
    %120 = tpu.matmul %117, %119, %cst_44 {dimension_numbers = #tpu.dot_dimension_numbers<[1], [0], [0], [1], [0, 0, 1, 1], [], []>} : vector<128x32xbf16>, vector<32x256xbf16>, vector<128x256xf32> -> vector<128x256xf32>
    %121 = arith.addf %100, %120 : vector<128x256xf32>
    %122 = vector.extract_strided_slice %30 {offsets = [0, 128], sizes = [128, 32], strides = [1, 1]} : vector<128x256xbf16> to vector<128x32xbf16>
    %123 = vector.extract_strided_slice %32 {offsets = [0, 128], sizes = [128, 32], strides = [1, 1]} : vector<128x256xbf16> to vector<128x32xbf16>
    %124 = vector.extract_strided_slice %34 {offsets = [0, 128], sizes = [128, 32], strides = [1, 1]} : vector<128x256xbf16> to vector<128x32xbf16>
    %cst_45 = arith.constant dense<0.000000e+00> : vector<128x128xf32>
    %125 = tpu.matmul %122, %123, %cst_45 {dimension_numbers = #tpu.dot_dimension_numbers<[1], [1], [0], [0], [0, 0, 1, 0], [], []>} : vector<128x32xbf16>, vector<128x32xbf16>, vector<128x128xf32> -> vector<128x128xf32>
    %cst_46 = arith.constant dense<0xFF800000> : vector<128xf32>
    %126 = vector.multi_reduction <maximumf>, %125, %cst_46 [1] : vector<128x128xf32> to vector<128xf32>
    %127 = vector.shape_cast %126 : vector<128xf32> to vector<128x1xf32>
    %128 = vector.broadcast %127 : vector<128x1xf32> to vector<128x128xf32>
    %129 = arith.subf %125, %128 : vector<128x128xf32>
    %130 = math.exp %129 : vector<128x128xf32>
    %cst_47 = arith.constant dense<0.000000e+00> : vector<128xf32>
    %131 = vector.multi_reduction <add>, %130, %cst_47 [1] : vector<128x128xf32> to vector<128xf32>
    %132 = vector.shape_cast %131 : vector<128xf32> to vector<128x1xf32>
    %133 = tpu.reciprocal %132 {approx = true} : vector<128x1xf32> -> vector<128x1xf32>
    %134 = vector.broadcast %133 : vector<128x1xf32> to vector<128x128xf32>
    %135 = arith.mulf %130, %134 : vector<128x128xf32>
    %136 = arith.truncf %135 : vector<128x128xf32> to vector<128x128xbf16>
    %cst_48 = arith.constant dense<0.000000e+00> : vector<128x32xf32>
    %137 = tpu.matmul %136, %124, %cst_48 {dimension_numbers = #tpu.dot_dimension_numbers<[1], [0], [0], [1], [0, 0, 1, 1], [], []>} : vector<128x128xbf16>, vector<128x32xbf16>, vector<128x32xf32> -> vector<128x32xf32>
    %138 = arith.truncf %137 : vector<128x32xf32> to vector<128x32xbf16>
    %c4 = arith.constant 4 : index
    %c0_49 = arith.constant 0 : index
    %c0_50 = arith.constant 0 : index
    %139 = vector.load %arg5[%c4, %c0_49, %c0_50] : memref<8x32x256xbf16, #tpu.memory_space<vmem>>, vector<1x32x256xbf16>
    %140 = vector.shape_cast %139 : vector<1x32x256xbf16> to vector<32x256xbf16>
    %cst_51 = arith.constant dense<0.000000e+00> : vector<128x256xf32>
    %141 = tpu.matmul %138, %140, %cst_51 {dimension_numbers = #tpu.dot_dimension_numbers<[1], [0], [0], [1], [0, 0, 1, 1], [], []>} : vector<128x32xbf16>, vector<32x256xbf16>, vector<128x256xf32> -> vector<128x256xf32>
    %142 = arith.addf %121, %141 : vector<128x256xf32>
    %143 = vector.extract_strided_slice %30 {offsets = [0, 160], sizes = [128, 32], strides = [1, 1]} : vector<128x256xbf16> to vector<128x32xbf16>
    %144 = vector.extract_strided_slice %32 {offsets = [0, 160], sizes = [128, 32], strides = [1, 1]} : vector<128x256xbf16> to vector<128x32xbf16>
    %145 = vector.extract_strided_slice %34 {offsets = [0, 160], sizes = [128, 32], strides = [1, 1]} : vector<128x256xbf16> to vector<128x32xbf16>
    %cst_52 = arith.constant dense<0.000000e+00> : vector<128x128xf32>
    %146 = tpu.matmul %143, %144, %cst_52 {dimension_numbers = #tpu.dot_dimension_numbers<[1], [1], [0], [0], [0, 0, 1, 0], [], []>} : vector<128x32xbf16>, vector<128x32xbf16>, vector<128x128xf32> -> vector<128x128xf32>
    %cst_53 = arith.constant dense<0xFF800000> : vector<128xf32>
    %147 = vector.multi_reduction <maximumf>, %146, %cst_53 [1] : vector<128x128xf32> to vector<128xf32>
    %148 = vector.shape_cast %147 : vector<128xf32> to vector<128x1xf32>
    %149 = vector.broadcast %148 : vector<128x1xf32> to vector<128x128xf32>
    %150 = arith.subf %146, %149 : vector<128x128xf32>
    %151 = math.exp %150 : vector<128x128xf32>
    %cst_54 = arith.constant dense<0.000000e+00> : vector<128xf32>
    %152 = vector.multi_reduction <add>, %151, %cst_54 [1] : vector<128x128xf32> to vector<128xf32>
    %153 = vector.shape_cast %152 : vector<128xf32> to vector<128x1xf32>
    %154 = tpu.reciprocal %153 {approx = true} : vector<128x1xf32> -> vector<128x1xf32>
    %155 = vector.broadcast %154 : vector<128x1xf32> to vector<128x128xf32>
    %156 = arith.mulf %151, %155 : vector<128x128xf32>
    %157 = arith.truncf %156 : vector<128x128xf32> to vector<128x128xbf16>
    %cst_55 = arith.constant dense<0.000000e+00> : vector<128x32xf32>
    %158 = tpu.matmul %157, %145, %cst_55 {dimension_numbers = #tpu.dot_dimension_numbers<[1], [0], [0], [1], [0, 0, 1, 1], [], []>} : vector<128x128xbf16>, vector<128x32xbf16>, vector<128x32xf32> -> vector<128x32xf32>
    %159 = arith.truncf %158 : vector<128x32xf32> to vector<128x32xbf16>
    %c5 = arith.constant 5 : index
    %c0_56 = arith.constant 0 : index
    %c0_57 = arith.constant 0 : index
    %160 = vector.load %arg5[%c5, %c0_56, %c0_57] : memref<8x32x256xbf16, #tpu.memory_space<vmem>>, vector<1x32x256xbf16>
    %161 = vector.shape_cast %160 : vector<1x32x256xbf16> to vector<32x256xbf16>
    %cst_58 = arith.constant dense<0.000000e+00> : vector<128x256xf32>
    %162 = tpu.matmul %159, %161, %cst_58 {dimension_numbers = #tpu.dot_dimension_numbers<[1], [0], [0], [1], [0, 0, 1, 1], [], []>} : vector<128x32xbf16>, vector<32x256xbf16>, vector<128x256xf32> -> vector<128x256xf32>
    %163 = arith.addf %142, %162 : vector<128x256xf32>
    %164 = vector.extract_strided_slice %30 {offsets = [0, 192], sizes = [128, 32], strides = [1, 1]} : vector<128x256xbf16> to vector<128x32xbf16>
    %165 = vector.extract_strided_slice %32 {offsets = [0, 192], sizes = [128, 32], strides = [1, 1]} : vector<128x256xbf16> to vector<128x32xbf16>
    %166 = vector.extract_strided_slice %34 {offsets = [0, 192], sizes = [128, 32], strides = [1, 1]} : vector<128x256xbf16> to vector<128x32xbf16>
    %cst_59 = arith.constant dense<0.000000e+00> : vector<128x128xf32>
    %167 = tpu.matmul %164, %165, %cst_59 {dimension_numbers = #tpu.dot_dimension_numbers<[1], [1], [0], [0], [0, 0, 1, 0], [], []>} : vector<128x32xbf16>, vector<128x32xbf16>, vector<128x128xf32> -> vector<128x128xf32>
    %cst_60 = arith.constant dense<0xFF800000> : vector<128xf32>
    %168 = vector.multi_reduction <maximumf>, %167, %cst_60 [1] : vector<128x128xf32> to vector<128xf32>
    %169 = vector.shape_cast %168 : vector<128xf32> to vector<128x1xf32>
    %170 = vector.broadcast %169 : vector<128x1xf32> to vector<128x128xf32>
    %171 = arith.subf %167, %170 : vector<128x128xf32>
    %172 = math.exp %171 : vector<128x128xf32>
    %cst_61 = arith.constant dense<0.000000e+00> : vector<128xf32>
    %173 = vector.multi_reduction <add>, %172, %cst_61 [1] : vector<128x128xf32> to vector<128xf32>
    %174 = vector.shape_cast %173 : vector<128xf32> to vector<128x1xf32>
    %175 = tpu.reciprocal %174 {approx = true} : vector<128x1xf32> -> vector<128x1xf32>
    %176 = vector.broadcast %175 : vector<128x1xf32> to vector<128x128xf32>
    %177 = arith.mulf %172, %176 : vector<128x128xf32>
    %178 = arith.truncf %177 : vector<128x128xf32> to vector<128x128xbf16>
    %cst_62 = arith.constant dense<0.000000e+00> : vector<128x32xf32>
    %179 = tpu.matmul %178, %166, %cst_62 {dimension_numbers = #tpu.dot_dimension_numbers<[1], [0], [0], [1], [0, 0, 1, 1], [], []>} : vector<128x128xbf16>, vector<128x32xbf16>, vector<128x32xf32> -> vector<128x32xf32>
    %180 = arith.truncf %179 : vector<128x32xf32> to vector<128x32xbf16>
    %c6 = arith.constant 6 : index
    %c0_63 = arith.constant 0 : index
    %c0_64 = arith.constant 0 : index
    %181 = vector.load %arg5[%c6, %c0_63, %c0_64] : memref<8x32x256xbf16, #tpu.memory_space<vmem>>, vector<1x32x256xbf16>
    %182 = vector.shape_cast %181 : vector<1x32x256xbf16> to vector<32x256xbf16>
    %cst_65 = arith.constant dense<0.000000e+00> : vector<128x256xf32>
    %183 = tpu.matmul %180, %182, %cst_65 {dimension_numbers = #tpu.dot_dimension_numbers<[1], [0], [0], [1], [0, 0, 1, 1], [], []>} : vector<128x32xbf16>, vector<32x256xbf16>, vector<128x256xf32> -> vector<128x256xf32>
    %184 = arith.addf %163, %183 : vector<128x256xf32>
    %185 = vector.extract_strided_slice %30 {offsets = [0, 224], sizes = [128, 32], strides = [1, 1]} : vector<128x256xbf16> to vector<128x32xbf16>
    %186 = vector.extract_strided_slice %32 {offsets = [0, 224], sizes = [128, 32], strides = [1, 1]} : vector<128x256xbf16> to vector<128x32xbf16>
    %187 = vector.extract_strided_slice %34 {offsets = [0, 224], sizes = [128, 32], strides = [1, 1]} : vector<128x256xbf16> to vector<128x32xbf16>
    %cst_66 = arith.constant dense<0.000000e+00> : vector<128x128xf32>
    %188 = tpu.matmul %185, %186, %cst_66 {dimension_numbers = #tpu.dot_dimension_numbers<[1], [1], [0], [0], [0, 0, 1, 0], [], []>} : vector<128x32xbf16>, vector<128x32xbf16>, vector<128x128xf32> -> vector<128x128xf32>
    %cst_67 = arith.constant dense<0xFF800000> : vector<128xf32>
    %189 = vector.multi_reduction <maximumf>, %188, %cst_67 [1] : vector<128x128xf32> to vector<128xf32>
    %190 = vector.shape_cast %189 : vector<128xf32> to vector<128x1xf32>
    %191 = vector.broadcast %190 : vector<128x1xf32> to vector<128x128xf32>
    %192 = arith.subf %188, %191 : vector<128x128xf32>
    %193 = math.exp %192 : vector<128x128xf32>
    %cst_68 = arith.constant dense<0.000000e+00> : vector<128xf32>
    %194 = vector.multi_reduction <add>, %193, %cst_68 [1] : vector<128x128xf32> to vector<128xf32>
    %195 = vector.shape_cast %194 : vector<128xf32> to vector<128x1xf32>
    %196 = tpu.reciprocal %195 {approx = true} : vector<128x1xf32> -> vector<128x1xf32>
    %197 = vector.broadcast %196 : vector<128x1xf32> to vector<128x128xf32>
    %198 = arith.mulf %193, %197 : vector<128x128xf32>
    %199 = arith.truncf %198 : vector<128x128xf32> to vector<128x128xbf16>
    %cst_69 = arith.constant dense<0.000000e+00> : vector<128x32xf32>
    %200 = tpu.matmul %199, %187, %cst_69 {dimension_numbers = #tpu.dot_dimension_numbers<[1], [0], [0], [1], [0, 0, 1, 1], [], []>} : vector<128x128xbf16>, vector<128x32xbf16>, vector<128x32xf32> -> vector<128x32xf32>
    %201 = arith.truncf %200 : vector<128x32xf32> to vector<128x32xbf16>
    %c7 = arith.constant 7 : index
    %c0_70 = arith.constant 0 : index
    %c0_71 = arith.constant 0 : index
    %202 = vector.load %arg5[%c7, %c0_70, %c0_71] : memref<8x32x256xbf16, #tpu.memory_space<vmem>>, vector<1x32x256xbf16>
    %203 = vector.shape_cast %202 : vector<1x32x256xbf16> to vector<32x256xbf16>
    %cst_72 = arith.constant dense<0.000000e+00> : vector<128x256xf32>
    %204 = tpu.matmul %201, %203, %cst_72 {dimension_numbers = #tpu.dot_dimension_numbers<[1], [0], [0], [1], [0, 0, 1, 1], [], []>} : vector<128x32xbf16>, vector<32x256xbf16>, vector<128x256xf32> -> vector<128x256xf32>
    %205 = arith.addf %184, %204 : vector<128x256xf32>
    %c0_73 = arith.constant 0 : index
    %c0_74 = arith.constant 0 : index
    %206 = vector.load %arg7[%c0_73, %c0_74] : memref<1x256xf32, #tpu.memory_space<vmem>>, vector<1x256xf32>
    %c0_75 = arith.constant 0 : index
    %c0_76 = arith.constant 0 : index
    %207 = vector.load %arg8[%c0_75, %c0_76] : memref<1x256xf32, #tpu.memory_space<vmem>>, vector<1x256xf32>
    %cst_77 = arith.constant dense<0.000000e+00> : vector<128xf32>
    %208 = vector.multi_reduction <add>, %205, %cst_77 [1] : vector<128x256xf32> to vector<128xf32>
    %209 = vector.shape_cast %208 : vector<128xf32> to vector<128x1xf32>
    %cst_78 = arith.constant 2.560000e+02 : f32
    %210 = vector.broadcast %cst_78 : f32 to vector<128x1xf32>
    %211 = arith.divf %209, %210 : vector<128x1xf32>
    %212 = vector.broadcast %211 : vector<128x1xf32> to vector<128x256xf32>
    %213 = arith.subf %205, %212 : vector<128x256xf32>
    %214 = arith.mulf %213, %213 : vector<128x256xf32>
    %cst_79 = arith.constant dense<0.000000e+00> : vector<128xf32>
    %215 = vector.multi_reduction <add>, %214, %cst_79 [1] : vector<128x256xf32> to vector<128xf32>
    %216 = vector.shape_cast %215 : vector<128xf32> to vector<128x1xf32>
    %cst_80 = arith.constant 2.560000e+02 : f32
    %217 = vector.broadcast %cst_80 : f32 to vector<128x1xf32>
    %218 = arith.divf %216, %217 : vector<128x1xf32>
    %cst_81 = arith.constant 9.99999974E-6 : f32
    %219 = vector.broadcast %cst_81 : f32 to vector<128x1xf32>
    %220 = arith.addf %218, %219 : vector<128x1xf32>
    %221 = math.rsqrt %220 : vector<128x1xf32>
    %222 = vector.broadcast %221 : vector<128x1xf32> to vector<128x256xf32>
    %223 = arith.mulf %213, %222 : vector<128x256xf32>
    %224 = vector.broadcast %206 : vector<1x256xf32> to vector<128x256xf32>
    %225 = arith.mulf %223, %224 : vector<128x256xf32>
    %226 = vector.broadcast %207 : vector<1x256xf32> to vector<128x256xf32>
    %227 = arith.addf %225, %226 : vector<128x256xf32>
    %228 = arith.truncf %227 : vector<128x256xf32> to vector<128x256xbf16>
    %c0_82 = arith.constant 0 : index
    %c0_83 = arith.constant 0 : index
    %229 = vector.load %arg9[%c0_82, %c0_83] : memref<256x1024xbf16, #tpu.memory_space<vmem>>, vector<256x1024xbf16>
    %cst_84 = arith.constant dense<0.000000e+00> : vector<128x1024xf32>
    %230 = tpu.matmul %228, %229, %cst_84 {dimension_numbers = #tpu.dot_dimension_numbers<[1], [0], [0], [1], [0, 0, 1, 1], [], []>} : vector<128x256xbf16>, vector<256x1024xbf16>, vector<128x1024xf32> -> vector<128x1024xf32>
    %c0_85 = arith.constant 0 : index
    %c0_86 = arith.constant 0 : index
    %231 = vector.load %arg10[%c0_85, %c0_86] : memref<1x1024xf32, #tpu.memory_space<vmem>>, vector<1x1024xf32>
    %232 = vector.broadcast %231 : vector<1x1024xf32> to vector<128x1024xf32>
    %233 = arith.addf %230, %232 : vector<128x1024xf32>
    %cst_87 = arith.constant 5.000000e-01 : f32
    %234 = vector.broadcast %cst_87 : f32 to vector<128x1024xf32>
    %235 = arith.mulf %234, %233 : vector<128x1024xf32>
    %cst_88 = arith.constant 4.471500e-02 : f32
    %236 = vector.broadcast %cst_88 : f32 to vector<128x1024xf32>
    %237 = arith.mulf %236, %233 : vector<128x1024xf32>
    %238 = arith.mulf %237, %233 : vector<128x1024xf32>
    %239 = arith.mulf %238, %233 : vector<128x1024xf32>
    %240 = arith.addf %233, %239 : vector<128x1024xf32>
    %cst_89 = arith.constant 0.797884583 : f32
    %241 = vector.broadcast %cst_89 : f32 to vector<128x1024xf32>
    %242 = arith.mulf %241, %240 : vector<128x1024xf32>
    %243 = math.tanh %242 : vector<128x1024xf32>
    %cst_90 = arith.constant 1.000000e+00 : f32
    %244 = vector.broadcast %cst_90 : f32 to vector<128x1024xf32>
    %245 = arith.addf %244, %243 : vector<128x1024xf32>
    %246 = arith.mulf %235, %245 : vector<128x1024xf32>
    %247 = arith.truncf %246 : vector<128x1024xf32> to vector<128x1024xbf16>
    %c0_91 = arith.constant 0 : index
    %c0_92 = arith.constant 0 : index
    %248 = vector.load %arg11[%c0_91, %c0_92] : memref<1024x256xbf16, #tpu.memory_space<vmem>>, vector<1024x256xbf16>
    %cst_93 = arith.constant dense<0.000000e+00> : vector<128x256xf32>
    %249 = tpu.matmul %247, %248, %cst_93 {dimension_numbers = #tpu.dot_dimension_numbers<[1], [0], [0], [1], [0, 0, 1, 1], [], []>} : vector<128x1024xbf16>, vector<1024x256xbf16>, vector<128x256xf32> -> vector<128x256xf32>
    %c0_94 = arith.constant 0 : index
    %c0_95 = arith.constant 0 : index
    %250 = vector.load %arg12[%c0_94, %c0_95] : memref<1x256xf32, #tpu.memory_space<vmem>>, vector<1x256xf32>
    %251 = vector.broadcast %250 : vector<1x256xf32> to vector<128x256xf32>
    %252 = arith.addf %249, %251 : vector<128x256xf32>
    %253 = arith.addf %205, %252 : vector<128x256xf32>
    %c0_96 = arith.constant 0 : index
    %c0_97 = arith.constant 0 : index
    %c0_98 = arith.constant 0 : index
    %254 = vector.load %arg13[%c0_96, %c0_97, %c0_98] : memref<1x128x256xf32, #tpu.memory_space<vmem>>, vector<1x128x256xf32>
    %255 = vector.shape_cast %254 : vector<1x128x256xf32> to vector<128x256xf32>
    %256 = vector.shape_cast %253 : vector<128x256xf32> to vector<1x128x256xf32>
    tpu.vector_store %arg13[%c0_96, %c0_97, %c0_98], %256 {strides = array<i32>} : memref<1x128x256xf32, #tpu.memory_space<vmem>>, vector<1x128x256xf32>,
    return
  }
  func.func @transform_0(%arg0: i32) -> (i32, i32, i32) {
    %c0_i32 = arith.constant 0 : i32
    %c0_i32_0 = arith.constant 0 : i32
    %c0_i32_1 = arith.constant 0 : i32
    return %arg0, %c0_i32, %c0_i32_0 : i32, i32, i32
  }
  func.func @transform_1(%arg0: i32) -> (i32, i32) {
    %c0_i32 = arith.constant 0 : i32
    %c0_i32_0 = arith.constant 0 : i32
    %c0_i32_1 = arith.constant 0 : i32
    return %c0_i32, %c0_i32_0 : i32, i32
  }
  func.func @transform_2(%arg0: i32) -> (i32, i32) {
    %c0_i32 = arith.constant 0 : i32
    %c0_i32_0 = arith.constant 0 : i32
    %c0_i32_1 = arith.constant 0 : i32
    return %c0_i32, %c0_i32_0 : i32, i32
  }
  func.func @transform_3(%arg0: i32) -> (i32, i32) {
    %c0_i32 = arith.constant 0 : i32
    %c0_i32_0 = arith.constant 0 : i32
    %c0_i32_1 = arith.constant 0 : i32
    return %c0_i32, %c0_i32_0 : i32, i32
  }
  func.func @transform_4(%arg0: i32) -> (i32, i32, i32) {
    %c0_i32 = arith.constant 0 : i32
    %c0_i32_0 = arith.constant 0 : i32
    %c0_i32_1 = arith.constant 0 : i32
    %c0_i32_2 = arith.constant 0 : i32
    return %c0_i32, %c0_i32_0, %c0_i32_1 : i32, i32, i32
  }
  func.func @transform_5(%arg0: i32) -> (i32, i32) {
    %c0_i32 = arith.constant 0 : i32
    %c0_i32_0 = arith.constant 0 : i32
    %c0_i32_1 = arith.constant 0 : i32
    return %c0_i32, %c0_i32_0 : i32, i32
  }
  func.func @transform_6(%arg0: i32) -> (i32, i32) {
    %c0_i32 = arith.constant 0 : i32
    %c0_i32_0 = arith.constant 0 : i32
    %c0_i32_1 = arith.constant 0 : i32
    return %c0_i32, %c0_i32_0 : i32, i32
  }
  func.func @transform_7(%arg0: i32) -> (i32, i32) {
    %c0_i32 = arith.constant 0 : i32
    %c0_i32_0 = arith.constant 0 : i32
    %c0_i32_1 = arith.constant 0 : i32
    return %c0_i32, %c0_i32_0 : i32, i32
  }
  func.func @transform_8(%arg0: i32) -> (i32, i32) {
    %c0_i32 = arith.constant 0 : i32
    %c0_i32_0 = arith.constant 0 : i32
    %c0_i32_1 = arith.constant 0 : i32
    return %c0_i32, %c0_i32_0 : i32, i32
  }
  func.func @transform_9(%arg0: i32) -> (i32, i32) {
    %c0_i32 = arith.constant 0 : i32
    %c0_i32_0 = arith.constant 0 : i32
    %c0_i32_1 = arith.constant 0 : i32
    return %c0_i32, %c0_i32_0 : i32, i32
  }
  func.func @transform_10(%arg0: i32) -> (i32, i32) {
    %c0_i32 = arith.constant 0 : i32
    %c0_i32_0 = arith.constant 0 : i32
    %c0_i32_1 = arith.constant 0 : i32
    return %c0_i32, %c0_i32_0 : i32, i32
  }
  func.func @transform_11(%arg0: i32) -> (i32, i32) {
    %c0_i32 = arith.constant 0 : i32
    %c0_i32_0 = arith.constant 0 : i32
    %c0_i32_1 = arith.constant 0 : i32
    return %c0_i32, %c0_i32_0 : i32, i32
  }
  func.func @transform_12(%arg0: i32) -> (i32, i32, i32) {
    %c0_i32 = arith.constant 0 : i32
    %c0_i32_0 = arith.constant 0 : i32
    %c0_i32_1 = arith.constant 0 : i32
    return %arg0, %c0_i32, %c0_i32_0 : i32, i32, i32
  }
}

</mosaic_0001>

<llo_original>
// kernel: tpu_custom_call.1
$region0: #{tpu_custom_call.1}
  #allocation0 [shape = 'u32[]', space=smem, size = 0x4, offset = 0x4, fixed_abs, tag = 'smem constant byte address 0x4 - core index']
  #allocation1 [shape = 'u32[144,128]{1,0:T(1,128)}', space=vmem, size = 0x12000, scoped, tag = 'internal scratch']
  %s0 = inlined_call_operand.hbm [shape: f32[2,128,256], index: 0, kind: input, shape index: {}]
  %s1 = inlined_call_operand.vmem [shape: f32[1,256], index: 1, kind: input, shape index: {}]
  %s2 = inlined_call_operand.vmem [shape: f32[1,256], index: 2, kind: input, shape index: {}]
  %s3 = inlined_call_operand.hbm [shape: bf16[256,768], index: 3, kind: input, shape index: {}]
  %s4 = inlined_call_operand.hbm [shape: bf16[8,32,256], index: 4, kind: input, shape index: {}]
  %s5 = inlined_call_operand.vmem [shape: f32[1,256], index: 5, kind: input, shape index: {}]
  %s6 = inlined_call_operand.vmem [shape: f32[1,256], index: 6, kind: input, shape index: {}]
  %s7 = inlined_call_operand.vmem [shape: f32[1,256], index: 7, kind: input, shape index: {}]
  %s8 = inlined_call_operand.hbm [shape: bf16[256,1024], index: 8, kind: input, shape index: {}]
  %s9 = inlined_call_operand.vmem [shape: f32[1,1024], index: 9, kind: input, shape index: {}]
  %s10 = inlined_call_operand.hbm [shape: bf16[1024,256], index: 10, kind: input, shape index: {}]
  %s11 = inlined_call_operand.vmem [shape: f32[1,256], index: 11, kind: input, shape index: {}]
  %s12 = inlined_call_operand.hbm [shape: f32[2,128,256], index: 12, kind: output, shape index: {}]
  %s13 = sld [smem:[#allocation0]]
  $region101: #{tpu_custom_call.1} parent=0
    _
  %s15 = ssub.s32 1, %s13
  %s16 = scalar_select 0, %s15, %s13
  $region1: #{tpu_custom_call.1} parent=0
    #allocation2 [shape = 'u8[262144]{0}', space=vmem, size = 0x40000, scoped, tag = 'input window, operand 0']
    #allocation3 [shape = 's32[2]{0}', space=sflag, size = 0x8, scoped, tag = 'scoped memory for tpu_custom_call.1']
    #allocation4 [shape = 's32[2]{0}', space=sflag, size = 0x8, scoped, tag = 'scoped memory for tpu_custom_call.1']
    #allocation5 [shape = 'u8[393216]{0}', space=vmem, size = 0x60000, scoped, tag = 'input window, operand 3, single buffered']
    #allocation6 [shape = 's32[1]{0}', space=sflag, size = 0x4, scoped, tag = 'scoped memory for tpu_custom_call.1']
    #allocation7 [shape = 'u8[131072]{0}', space=vmem, size = 0x20000, scoped, tag = 'input window, operand 4, single buffered']
    #allocation8 [shape = 'u8[524288]{0}', space=vmem, size = 0x80000, scoped, tag = 'input window, operand 8, single buffered']
    #allocation9 [shape = 's32[1]{0}', space=sflag, size = 0x4, scoped, tag = 'scoped memory for tpu_custom_call.1']
    #allocation10 [shape = 'u8[524288]{0}', space=vmem, size = 0x80000, scoped, tag = 'input window, operand 10, single buffered']
    #allocation11 [shape = 'u8[262144]{0}', space=vmem, size = 0x40000, scoped, tag = 'output window, operand 0']
    %17 = vsyncpa [#allocation3], 0
    %s18 = scalar_lea.sflag [#allocation3], 1
    %19 = vsyncpa %s18, 0
    %20 = vsyncpa [#allocation6], 0
    %21 = vsyncpa [#allocation9], 0
    %22 = vsyncpa [#allocation4], 0
    %s23 = scalar_lea.sflag [#allocation4], 1
    %24 = vsyncpa %s23, 0
    loop: start=0, step=1, limit=4
    $region2: #{tpu_custom_call.1} parent=1 // loop_pre_header
      _
    $region3: #{tpu_custom_call.1} parent=1 // loop_header
      %s26 = sphi 0, %s30
      %p27 = scmp.ge.s32.totalorder %s26, 4
      %s36 = sphi 0, %s38
      %s39 = sphi 0, %s36
      %s40 = sphi 0, %s39
      %s56 = sphi 0, %s40
      %s60 = sphi 0, %s60
      %s62 = sphi 0, %s60
      %s63 = sphi 0, %s62
      %s77 = sphi 0, %s63
      %s81 = sphi 0, %s81
      %s83 = sphi 0, %s81
      %s84 = sphi 0, %s83
      %s98 = sphi 0, %s84
      %s102 = sphi 0, %s102
      %s104 = sphi 0, %s102
      %s105 = sphi 0, %s104
      %s119 = sphi 0, %s105
      %s123 = sphi 0, %s123
      %s125 = sphi 0, %s123
      %s126 = sphi 0, %s125
      %s140 = sphi 0, %s126
      %s144 = sphi 0, %s144
      %s146 = sphi 0, %s144
      %s147 = sphi 0, %s146
      %s161 = sphi 0, %s147
      %s165 = sphi 0, %s165
      %s167 = sphi 0, %s165
      %s168 = sphi 0, %s167
      %s182 = sphi 0, %s168
      %s186 = sphi 0, %s186
      %s188 = sphi 0, %s186
      %s189 = sphi 0, %s188
      %s203 = sphi 0, %s189
      %s207 = sphi 0, %s207
      %s209 = sphi 0, %s207
      %s210 = sphi 0, %s209
      %s224 = sphi 0, %s210
      %s228 = sphi 0, %s228
      %s230 = sphi 0, %s228
      %s231 = sphi 0, %s230
      %s245 = sphi 0, %s231
      %s249 = sphi 0, %s249
      %s251 = sphi 0, %s249
      %s252 = sphi 0, %s251
      %s266 = sphi 0, %s252
      %s270 = sphi 0, %s270
      %s272 = sphi 0, %s270
      %s273 = sphi 0, %s272
      %s287 = sphi 0, %s273
      %s293 = sphi 0, %s295
      %s296 = sphi 0, %s293
      %s297 = sphi 0, %s296
      %s313 = sphi 0, %s297
    $region4: #{tpu_custom_call.1} parent=1 // loop_header_branch
      %29 = sbr.rel (%p27) target = $region8
    $region5: #{tpu_custom_call.1} parent=1 // loop_body
      %s31 = ssub.s32 %s26, 1
      %s32 = ssub.s32 %s26, 2
      %s33 = sadd.s32 %s26, 1
      %s34 = ssub.s32 %s26, %s33
      %p35 = scmp.eq.s32.totalorder %s34, 0
      %s37 = sadd.s32 %s36, 1
      %s38 = scalar_select %p35, %s36, %s37
      %p41 = pneg %p35
      %p42 = scmp.eq.s32.totalorder %s26, 1
      %p43 = por %p41, %p42
      %p44 = scmp.ne.s32.totalorder %s36, %s39
      %p45 = scmp.eq.s32.totalorder %s26, 0
      %p46 = por %p44, %p45
      %p47 = scmp.ne.s32.totalorder %s36, %s39
      %p48 = scmp.eq.s32.totalorder %s31, 1
      %p49 = por %p47, %p48
      %p50 = scmp.ne.s32.totalorder %s39, %s40
      %p51 = scmp.eq.s32.totalorder %s31, 0
      %p52 = por %p50, %p51
      %p53 = scmp.ne.s32.totalorder %s39, %s40
      %p54 = scmp.eq.s32.totalorder %s32, 1
      %p55 = por %p53, %p54
      %p57 = scmp.ne.s32.totalorder %s40, %s56
      %p58 = scmp.eq.s32.totalorder %s32, 0
      %p59 = por %p57, %p58
      %s61 = sadd.s32 %s60, 1
      %p64 = scmp.eq.s32.totalorder %s26, 1
      %p65 = scmp.ne.s32.totalorder %s60, %s62
      %p66 = scmp.eq.s32.totalorder %s26, 0
      %p67 = por %p65, %p66
      %p68 = scmp.ne.s32.totalorder %s60, %s62
      %p69 = scmp.eq.s32.totalorder %s31, 1
      %p70 = por %p68, %p69
      %p71 = scmp.ne.s32.totalorder %s62, %s63
      %p72 = scmp.eq.s32.totalorder %s31, 0
      %p73 = por %p71, %p72
      %p74 = scmp.ne.s32.totalorder %s62, %s63
      %p75 = scmp.eq.s32.totalorder %s32, 1
      %p76 = por %p74, %p75
      %p78 = scmp.ne.s32.totalorder %s63, %s77
      %p79 = scmp.eq.s32.totalorder %s32, 0
      %p80 = por %p78, %p79
      %s82 = sadd.s32 %s81, 1
      %p85 = scmp.eq.s32.totalorder %s26, 1
      %p86 = scmp.ne.s32.totalorder %s81, %s83
      %p87 = scmp.eq.s32.totalorder %s26, 0
      %p88 = por %p86, %p87
      %p89 = scmp.ne.s32.totalorder %s81, %s83
      %p90 = scmp.eq.s32.totalorder %s31, 1
      %p91 = por %p89, %p90
      %p92 = scmp.ne.s32.totalorder %s83, %s84
      %p93 = scmp.eq.s32.totalorder %s31, 0
      %p94 = por %p92, %p93
      %p95 = scmp.ne.s32.totalorder %s83, %s84
      %p96 = scmp.eq.s32.totalorder %s32, 1
      %p97 = por %p95, %p96
      %p99 = scmp.ne.s32.totalorder %s84, %s98
      %p100 = scmp.eq.s32.totalorder %s32, 0
      %p101 = por %p99, %p100
      %s103 = sadd.s32 %s102, 1
      %p106 = scmp.eq.s32.totalorder %s26, 1
      %p107 = scmp.ne.s32.totalorder %s102, %s104
      %p108 = scmp.eq.s32.totalorder %s26, 0
      %p109 = por %p107, %p108
      %p110 = scmp.ne.s32.totalorder %s102, %s104
      %p111 = scmp.eq.s32.totalorder %s31, 1
      %p112 = por %p110, %p111
      %p113 = scmp.ne.s32.totalorder %s104, %s105
      %p114 = scmp.eq.s32.totalorder %s31, 0
      %p115 = por %p113, %p114
      %p116 = scmp.ne.s32.totalorder %s104, %s105
      %p117 = scmp.eq.s32.totalorder %s32, 1
      %p118 = por %p116, %p117
      %p120 = scmp.ne.s32.totalorder %s105, %s119
      %p121 = scmp.eq.s32.totalorder %s32, 0
      %p122 = por %p120, %p121
      %s124 = sadd.s32 %s123, 1
      %p127 = scmp.eq.s32.totalorder %s26, 1
      %p128 = scmp.ne.s32.totalorder %s123, %s125
      %p129 = scmp.eq.s32.totalorder %s26, 0
      %p130 = por %p128, %p129
      %p131 = scmp.ne.s32.totalorder %s123, %s125
      %p132 = scmp.eq.s32.totalorder %s31, 1
      %p133 = por %p131, %p132
      %p134 = scmp.ne.s32.totalorder %s125, %s126
      %p135 = scmp.eq.s32.totalorder %s31, 0
      %p136 = por %p134, %p135
      %p137 = scmp.ne.s32.totalorder %s125, %s126
      %p138 = scmp.eq.s32.totalorder %s32, 1
      %p139 = por %p137, %p138
      %p141 = scmp.ne.s32.totalorder %s126, %s140
      %p142 = scmp.eq.s32.totalorder %s32, 0
      %p143 = por %p141, %p142
      %s145 = sadd.s32 %s144, 1
      %p148 = scmp.eq.s32.totalorder %s26, 1
      %p149 = scmp.ne.s32.totalorder %s144, %s146
      %p150 = scmp.eq.s32.totalorder %s26, 0
      %p151 = por %p149, %p150
      %p152 = scmp.ne.s32.totalorder %s144, %s146
      %p153 = scmp.eq.s32.totalorder %s31, 1
      %p154 = por %p152, %p153
      %p155 = scmp.ne.s32.totalorder %s146, %s147
      %p156 = scmp.eq.s32.totalorder %s31, 0
      %p157 = por %p155, %p156
      %p158 = scmp.ne.s32.totalorder %s146, %s147
      %p159 = scmp.eq.s32.totalorder %s32, 1
      %p160 = por %p158, %p159
      %p162 = scmp.ne.s32.totalorder %s147, %s161
      %p163 = scmp.eq.s32.totalorder %s32, 0
      %p164 = por %p162, %p163
      %s166 = sadd.s32 %s165, 1
      %p169 = scmp.eq.s32.totalorder %s26, 1
      %p170 = scmp.ne.s32.totalorder %s165, %s167
      %p171 = scmp.eq.s32.totalorder %s26, 0
      %p172 = por %p170, %p171
      %p173 = scmp.ne.s32.totalorder %s165, %s167
      %p174 = scmp.eq.s32.totalorder %s31, 1
      %p175 = por %p173, %p174
      %p176 = scmp.ne.s32.totalorder %s167, %s168
      %p177 = scmp.eq.s32.totalorder %s31, 0
      %p178 = por %p176, %p177
      %p179 = scmp.ne.s32.totalorder %s167, %s168
      %p180 = scmp.eq.s32.totalorder %s32, 1
      %p181 = por %p179, %p180
      %p183 = scmp.ne.s32.totalorder %s168, %s182
      %p184 = scmp.eq.s32.totalorder %s32, 0
      %p185 = por %p183, %p184
      %s187 = sadd.s32 %s186, 1
      %p190 = scmp.eq.s32.totalorder %s26, 1
      %p191 = scmp.ne.s32.totalorder %s186, %s188
      %p192 = scmp.eq.s32.totalorder %s26, 0
      %p193 = por %p191, %p192
      %p194 = scmp.ne.s32.totalorder %s186, %s188
      %p195 = scmp.eq.s32.totalorder %s31, 1
      %p196 = por %p194, %p195
      %p197 = scmp.ne.s32.totalorder %s188, %s189
      %p198 = scmp.eq.s32.totalorder %s31, 0
      %p199 = por %p197, %p198
      %p200 = scmp.ne.s32.totalorder %s188, %s189
      %p201 = scmp.eq.s32.totalorder %s32, 1
      %p202 = por %p200, %p201
      %p204 = scmp.ne.s32.totalorder %s189, %s203
      %p205 = scmp.eq.s32.totalorder %s32, 0
      %p206 = por %p204, %p205
      %s208 = sadd.s32 %s207, 1
      %p211 = scmp.eq.s32.totalorder %s26, 1
      %p212 = scmp.ne.s32.totalorder %s207, %s209
      %p213 = scmp.eq.s32.totalorder %s26, 0
      %p214 = por %p212, %p213
      %p215 = scmp.ne.s32.totalorder %s207, %s209
      %p216 = scmp.eq.s32.totalorder %s31, 1
      %p217 = por %p215, %p216
      %p218 = scmp.ne.s32.totalorder %s209, %s210
      %p219 = scmp.eq.s32.totalorder %s31, 0
      %p220 = por %p218, %p219
      %p221 = scmp.ne.s32.totalorder %s209, %s210
      %p222 = scmp.eq.s32.totalorder %s32, 1
      %p223 = por %p221, %p222
      %p225 = scmp.ne.s32.totalorder %s210, %s224
      %p226 = scmp.eq.s32.totalorder %s32, 0
      %p227 = por %p225, %p226
      %s229 = sadd.s32 %s228, 1
      %p232 = scmp.eq.s32.totalorder %s26, 1
      %p233 = scmp.ne.s32.totalorder %s228, %s230
      %p234 = scmp.eq.s32.totalorder %s26, 0
      %p235 = por %p233, %p234
      %p236 = scmp.ne.s32.totalorder %s228, %s230
      %p237 = scmp.eq.s32.totalorder %s31, 1
      %p238 = por %p236, %p237
      %p239 = scmp.ne.s32.totalorder %s230, %s231
      %p240 = scmp.eq.s32.totalorder %s31, 0
      %p241 = por %p239, %p240
      %p242 = scmp.ne.s32.totalorder %s230, %s231
      %p243 = scmp.eq.s32.totalorder %s32, 1
      %p244 = por %p242, %p243
      %p246 = scmp.ne.s32.totalorder %s231, %s245
      %p247 = scmp.eq.s32.totalorder %s32, 0
      %p248 = por %p246, %p247
      %s250 = sadd.s32 %s249, 1
      %p253 = scmp.eq.s32.totalorder %s26, 1
      %p254 = scmp.ne.s32.totalorder %s249, %s251
      %p255 = scmp.eq.s32.totalorder %s26, 0
      %p256 = por %p254, %p255
      %p257 = scmp.ne.s32.totalorder %s249, %s251
      %p258 = scmp.eq.s32.totalorder %s31, 1
      %p259 = por %p257, %p258
      %p260 = scmp.ne.s32.totalorder %s251, %s252
      %p261 = scmp.eq.s32.totalorder %s31, 0
      %p262 = por %p260, %p261
      %p263 = scmp.ne.s32.totalorder %s251, %s252
      %p264 = scmp.eq.s32.totalorder %s32, 1
      %p265 = por %p263, %p264
      %p267 = scmp.ne.s32.totalorder %s252, %s266
      %p268 = scmp.eq.s32.totalorder %s32, 0
      %p269 = por %p267, %p268
      %s271 = sadd.s32 %s270, 1
      %p274 = scmp.eq.s32.totalorder %s26, 1
      %p275 = scmp.ne.s32.totalorder %s270, %s272
      %p276 = scmp.eq.s32.totalorder %s26, 0
      %p277 = por %p275, %p276
      %p278 = scmp.ne.s32.totalorder %s270, %s272
      %p279 = scmp.eq.s32.totalorder %s31, 1
      %p280 = por %p278, %p279
      %p281 = scmp.ne.s32.totalorder %s272, %s273
      %p282 = scmp.eq.s32.totalorder %s31, 0
      %p283 = por %p281, %p282
      %p284 = scmp.ne.s32.totalorder %s272, %s273
      %p285 = scmp.eq.s32.totalorder %s32, 1
      %p286 = por %p284, %p285
      %p288 = scmp.ne.s32.totalorder %s273, %s287
      %p289 = scmp.eq.s32.totalorder %s32, 0
      %p290 = por %p288, %p289
      %s291 = ssub.s32 %s26, %s33
      %p292 = scmp.eq.s32.totalorder %s291, 0
      %s294 = sadd.s32 %s293, 1
      %s295 = scalar_select %p292, %s293, %s294
      %p298 = pneg %p292
      %p299 = scmp.eq.s32.totalorder %s26, 1
      %p300 = por %p298, %p299
      %p301 = scmp.ne.s32.totalorder %s293, %s296
      %p302 = scmp.eq.s32.totalorder %s26, 0
      %p303 = por %p301, %p302
      %p304 = scmp.ne.s32.totalorder %s293, %s296
      %p305 = scmp.eq.s32.totalorder %s31, 1
      %p306 = por %p304, %p305
      %p307 = scmp.ne.s32.totalorder %s296, %s297
      %p308 = scmp.eq.s32.totalorder %s31, 0
      %p309 = por %p307, %p308
      %p310 = scmp.ne.s32.totalorder %s296, %s297
      %p311 = scmp.eq.s32.totalorder %s32, 1
      %p312 = por %p310, %p311
      %p314 = scmp.ne.s32.totalorder %s297, %s313
      %p315 = scmp.eq.s32.totalorder %s32, 0
      %p316 = por %p314, %p315
      %p317 = scmp.le.s32.totalorder 1, %s26
      %p318 = scmp.lt.s32.totalorder %s26, 3
      %p319 = pnand %p317, %p318
      %p320 = pneg %p319
      // Predicated region
      $region9: #{tpu_custom_call.1} parent=5 // pred_check
        _
      $region10: #{tpu_custom_call.1} parent=5 // pred_check_branch
        %322 = sbr.rel (%p319) target = $region12
      $region11: #{tpu_custom_call.1} parent=5 // pred_region
        %s323 = ssub.s32 %s26, 1
        // Predicated region
        $region13: #{tpu_custom_call.1} parent=11 // pred_check
          %p324 = pneg %p73
        $region14: #{tpu_custom_call.1} parent=11 // pred_check_branch
          %326 = sbr.rel (%p324) target = $region16
        $region15: #{tpu_custom_call.1} parent=11 // pred_region
          _
        $region16: #{tpu_custom_call.1} parent=11 // pred_fallthru
          _
        // Predicated region
        $region17: #{tpu_custom_call.1} parent=11 // pred_check
          %p327 = pneg %p94
        $region18: #{tpu_custom_call.1} parent=11 // pred_check_branch
          %329 = sbr.rel (%p327) target = $region20
        $region19: #{tpu_custom_call.1} parent=11 // pred_region
          _
        $region20: #{tpu_custom_call.1} parent=11 // pred_fallthru
          _
        // Predicated region
        $region21: #{tpu_custom_call.1} parent=11 // pred_check
          %p330 = pneg %p115
        $region22: #{tpu_custom_call.1} parent=11 // pred_check_branch
          %332 = sbr.rel (%p330) target = $region24
        $region23: #{tpu_custom_call.1} parent=11 // pred_region
          %s334 = ssub.s32 12288, 12288
          %335 = vsyncadd [#allocation6], %s334
          %s336 = sshll.u32 [#allocation5], 4
          %s337 = int_to_ptr.vmem [resolvable:$true] %s336
          %342 = dma.hbm_to_vmem [thread:$0]  %s3, 12288, %s337, [#allocation6], 384, 384, 24
        $region24: #{tpu_custom_call.1} parent=11 // pred_fallthru
          _
        // Predicated region
        $region25: #{tpu_custom_call.1} parent=11 // pred_check
          %p343 = pneg %p136
        $region26: #{tpu_custom_call.1} parent=11 // pred_check_branch
          %345 = sbr.rel (%p343) target = $region28
        $region27: #{tpu_custom_call.1} parent=11 // pred_region
          %s347 = ssub.s32 4096, 4096
          %348 = vsyncadd [#allocation6], %s347
          %s349 = sshll.u32 [#allocation7], 4
          %s350 = int_to_ptr.vmem [resolvable:$true] %s349
          %355 = dma.hbm_to_vmem [thread:$0]  %s4, 4096, %s350, [#allocation6], 128, 128, 8
        $region28: #{tpu_custom_call.1} parent=11 // pred_fallthru
          _
        // Predicated region
        $region29: #{tpu_custom_call.1} parent=11 // pred_check
          %p356 = pneg %p157
        $region30: #{tpu_custom_call.1} parent=11 // pred_check_branch
          %358 = sbr.rel (%p356) target = $region32
        $region31: #{tpu_custom_call.1} parent=11 // pred_region
          _
        $region32: #{tpu_custom_call.1} parent=11 // pred_fallthru
          _
        // Predicated region
        $region33: #{tpu_custom_call.1} parent=11 // pred_check
          %p359 = pneg %p178
        $region34: #{tpu_custom_call.1} parent=11 // pred_check_branch
          %361 = sbr.rel (%p359) target = $region36
        $region35: #{tpu_custom_call.1} parent=11 // pred_region
          _
        $region36: #{tpu_custom_call.1} parent=11 // pred_fallthru
          _
        // Predicated region
        $region37: #{tpu_custom_call.1} parent=11 // pred_check
          %p362 = pneg %p199
        $region38: #{tpu_custom_call.1} parent=11 // pred_check_branch
          %364 = sbr.rel (%p362) target = $region40
        $region39: #{tpu_custom_call.1} parent=11 // pred_region
          _
        $region40: #{tpu_custom_call.1} parent=11 // pred_fallthru
          _
        // Predicated region
        $region41: #{tpu_custom_call.1} parent=11 // pred_check
          %p365 = pneg %p220
        $region42: #{tpu_custom_call.1} parent=11 // pred_check_branch
          %367 = sbr.rel (%p365) target = $region44
        $region43: #{tpu_custom_call.1} parent=11 // pred_region
          %s369 = ssub.s32 16384, 16384
          %370 = vsyncadd [#allocation9], %s369
          %s371 = sshll.u32 [#allocation8], 4
          %s372 = int_to_ptr.vmem [resolvable:$true] %s371
          %377 = dma.hbm_to_vmem [thread:$0]  %s8, 16384, %s372, [#allocation9], 512, 512, 32
        $region44: #{tpu_custom_call.1} parent=11 // pred_fallthru
          _
        // Predicated region
        $region45: #{tpu_custom_call.1} parent=11 // pred_check
          %p378 = pneg %p241
        $region46: #{tpu_custom_call.1} parent=11 // pred_check_branch
          %380 = sbr.rel (%p378) target = $region48
        $region47: #{tpu_custom_call.1} parent=11 // pred_region
          _
        $region48: #{tpu_custom_call.1} parent=11 // pred_fallthru
          _
        // Predicated region
        $region49: #{tpu_custom_call.1} parent=11 // pred_check
          %p381 = pneg %p262
        $region50: #{tpu_custom_call.1} parent=11 // pred_check_branch
          %383 = sbr.rel (%p381) target = $region52
        $region51: #{tpu_custom_call.1} parent=11 // pred_region
          %s385 = ssub.s32 16384, 16384
          %386 = vsyncadd [#allocation9], %s385
          %s387 = sshll.u32 [#allocation10], 4
          %s388 = int_to_ptr.vmem [resolvable:$true] %s387
          %393 = dma.hbm_to_vmem [thread:$0]  %s10, 16384, %s388, [#allocation9], 128, 128, 8
        $region52: #{tpu_custom_call.1} parent=11 // pred_fallthru
          _
        // Predicated region
        $region53: #{tpu_custom_call.1} parent=11 // pred_check
          %p394 = pneg %p283
        $region54: #{tpu_custom_call.1} parent=11 // pred_check_branch
          %396 = sbr.rel (%p394) target = $region56
        $region55: #{tpu_custom_call.1} parent=11 // pred_region
          _
        $region56: #{tpu_custom_call.1} parent=11 // pred_fallthru
          _
      $region12: #{tpu_custom_call.1} parent=5 // pred_fallthru
        _
      %p397 = scmp.lt.s32.totalorder %s26, 2
      // Predicated region
      $region57: #{tpu_custom_call.1} parent=5 // pred_check
        %p398 = pneg %p397
      $region58: #{tpu_custom_call.1} parent=5 // pred_check_branch
        %400 = sbr.rel (%p398) target = $region60
      $region59: #{tpu_custom_call.1} parent=5 // pred_region
        // Predicated region
        $region61: #{tpu_custom_call.1} parent=59 // pred_check
          %p401 = pneg %p46
        $region62: #{tpu_custom_call.1} parent=59 // pred_check_branch
          %403 = sbr.rel (%p401) target = $region64
        $region63: #{tpu_custom_call.1} parent=59 // pred_region
          %s404 = sand.u32 %s36, 1
          %s405 = scalar_lea.sflag [#allocation3], %s404
          %s406 = sand.u32 %s36, 1
          %s407 = smul.addr %s406, 256
          %s408 = scalar_lea.vmem [#allocation2], %s407
          %s410 = ssub.s32 4096, 4096
          %411 = vsyncadd %s405, %s410
          %s412 = smul.addr %s26, 32
          %s413 = smul.addr %s412, 128
          %s414 = scalar_lea.hbm %s0, %s413
          %s415 = sshll.u32 %s408, 4
          %s416 = int_to_ptr.vmem [resolvable:$true] %s415
          %421 = dma.hbm_to_vmem [thread:$0]  %s414, 4096, %s416, %s405, 256, 256, 16
        $region64: #{tpu_custom_call.1} parent=59 // pred_fallthru
          _
      $region60: #{tpu_custom_call.1} parent=5 // pred_fallthru
        _
      %p422 = scmp.le.s32.totalorder 1, %s26
      %p423 = scmp.lt.s32.totalorder %s26, 3
      %p424 = pnand %p422, %p423
      %p425 = pneg %p424
      // Predicated region
      $region65: #{tpu_custom_call.1} parent=5 // pred_check
        _
      $region66: #{tpu_custom_call.1} parent=5 // pred_check_branch
        %427 = sbr.rel (%p424) target = $region68
      $region67: #{tpu_custom_call.1} parent=5 // pred_region
        %s428 = ssub.s32 %s26, 1
        %s429 = sand.u32 %s39, 1
        %s430 = scalar_lea.sflag [#allocation3], %s429
        %s431 = sand.u32 %s39, 1
        %s432 = smul.addr %s431, 256
        %s433 = scalar_lea.vmem [#allocation2], %s432
        // Predicated region
        $region69: #{tpu_custom_call.1} parent=67 // pred_check
          %p434 = pneg %p52
        $region70: #{tpu_custom_call.1} parent=67 // pred_check_branch
          %436 = sbr.rel (%p434) target = $region72
        $region71: #{tpu_custom_call.1} parent=67 // pred_region
          %437 = dma.done %s430, 4096
        $region72: #{tpu_custom_call.1} parent=67 // pred_fallthru
          _
        // Predicated region
        $region73: #{tpu_custom_call.1} parent=67 // pred_check
          %p438 = pneg %p115
        $region74: #{tpu_custom_call.1} parent=67 // pred_check_branch
          %440 = sbr.rel (%p438) target = $region76
        $region75: #{tpu_custom_call.1} parent=67 // pred_region
          %441 = dma.done [#allocation6], 12288
        $region76: #{tpu_custom_call.1} parent=67 // pred_fallthru
          _
        // Predicated region
        $region77: #{tpu_custom_call.1} parent=67 // pred_check
          %p442 = pneg %p136
        $region78: #{tpu_custom_call.1} parent=67 // pred_check_branch
          %444 = sbr.rel (%p442) target = $region80
        $region79: #{tpu_custom_call.1} parent=67 // pred_region
          %445 = dma.done [#allocation6], 4096
        $region80: #{tpu_custom_call.1} parent=67 // pred_fallthru
          _
        // Predicated region
        $region81: #{tpu_custom_call.1} parent=67 // pred_check
          %p446 = pneg %p220
        $region82: #{tpu_custom_call.1} parent=67 // pred_check_branch
          %448 = sbr.rel (%p446) target = $region84
        $region83: #{tpu_custom_call.1} parent=67 // pred_region
          %449 = dma.done [#allocation9], 16384
        $region84: #{tpu_custom_call.1} parent=67 // pred_fallthru
          _
        // Predicated region
        $region85: #{tpu_custom_call.1} parent=67 // pred_check
          %p450 = pneg %p262
        $region86: #{tpu_custom_call.1} parent=67 // pred_check_branch
          %452 = sbr.rel (%p450) target = $region88
        $region87: #{tpu_custom_call.1} parent=67 // pred_region
          %453 = dma.done [#allocation9], 16384
        $region88: #{tpu_custom_call.1} parent=67 // pred_fallthru
          _
        %s454 = sand.u32 %s39, 1
        %s455 = scalar_lea.sflag [#allocation3], %s454
        %s456 = sand.u32 %s39, 1
        %s457 = smul.addr %s456, 256
        %s458 = scalar_lea.vmem [#allocation2], %s457
        %p459 = pneg %p52
        %p460 = pneg %p49
        %p461 = pneg %p73
        %p462 = pneg %p70
        %p463 = pneg %p94
        %p464 = pneg %p91
        %p465 = pneg %p115
        %p466 = pneg %p112
        %p467 = pneg %p136
        %p468 = pneg %p133
        %p469 = pneg %p157
        %p470 = pneg %p154
        %p471 = pneg %p178
        %p472 = pneg %p175
        %p473 = pneg %p199
        %p474 = pneg %p196
        %p475 = pneg %p220
        %p476 = pneg %p217
        %p477 = pneg %p241
        %p478 = pneg %p238
        %p479 = pneg %p262
        %p480 = pneg %p259
        %p481 = pneg %p283
        %p482 = pneg %p280
        %p483 = pneg %p309
        %p484 = pneg %p306
        %s485 = sand.u32 %s296, 1
        %s486 = scalar_lea.sflag [#allocation4], %s485
        %s487 = sand.u32 %s296, 1
        %s488 = smul.addr %s487, 256
        %s489 = scalar_lea.vmem [#allocation11], %s488
        %v491 = vld [vmem:[%s433] sm:$0xff]
        %v492 = vld [vmem:[%s433 + $0x8] sm:$0xff]
        %v493 = vld [vmem:[%s433 + $0x10] sm:$0xff]
        %v494 = vld [vmem:[%s433 + $0x18] sm:$0xff]
        %v495 = vld [vmem:[%s433 + $0x20] sm:$0xff]
        %v496 = vld [vmem:[%s433 + $0x28] sm:$0xff]
        %v497 = vld [vmem:[%s433 + $0x30] sm:$0xff]
        %v498 = vld [vmem:[%s433 + $0x38] sm:$0xff]
        %v499 = vld [vmem:[%s433 + $0x40] sm:$0xff]
        %v500 = vld [vmem:[%s433 + $0x48] sm:$0xff]
        %v501 = vld [vmem:[%s433 + $0x50] sm:$0xff]
        %v502 = vld [vmem:[%s433 + $0x58] sm:$0xff]
        %v503 = vld [vmem:[%s433 + $0x60] sm:$0xff]
        %v504 = vld [vmem:[%s433 + $0x68] sm:$0xff]
        %v505 = vld [vmem:[%s433 + $0x70] sm:$0xff]
        %v506 = vld [vmem:[%s433 + $0x78] sm:$0xff]
        %v507 = vld [vmem:[%s433 + $0x80] sm:$0xff]
        %v508 = vld [vmem:[%s433 + $0x88] sm:$0xff]
        %v509 = vld [vmem:[%s433 + $0x90] sm:$0xff]
        %v510 = vld [vmem:[%s433 + $0x98] sm:$0xff]
        %v511 = vld [vmem:[%s433 + $0xa0] sm:$0xff]
        %v512 = vld [vmem:[%s433 + $0xa8] sm:$0xff]
        %v513 = vld [vmem:[%s433 + $0xb0] sm:$0xff]
        %v514 = vld [vmem:[%s433 + $0xb8] sm:$0xff]
        %v515 = vld [vmem:[%s433 + $0xc0] sm:$0xff]
        %v516 = vld [vmem:[%s433 + $0xc8] sm:$0xff]
        %v517 = vld [vmem:[%s433 + $0xd0] sm:$0xff]
        %v518 = vld [vmem:[%s433 + $0xd8] sm:$0xff]
        %v519 = vld [vmem:[%s433 + $0xe0] sm:$0xff]
        %v520 = vld [vmem:[%s433 + $0xe8] sm:$0xff]
        %v521 = vld [vmem:[%s433 + $0xf0] sm:$0xff]
        %v522 = vld [vmem:[%s433 + $0xf8] sm:$0xff]
        %v523 = vld [vmem:[%s1] sm:$0x3]
        %v524 = vld [vmem:[%s2] sm:$0x3]
        %v525 = vadd.f32 %v491, %v492
        %526 = vadd.xlane.f32.xlu0 %v525
        %v527 = vpop.xlane.xlu0 %526
        %v528 = vadd.f32 %v493, %v494
        %529 = vadd.xlane.f32.xlu0 %v528
        %v530 = vpop.xlane.xlu0 %529
        %v531 = vadd.f32 %v495, %v496
        %532 = vadd.xlane.f32.xlu0 %v531
        %v533 = vpop.xlane.xlu0 %532
        %v534 = vadd.f32 %v497, %v498
        %535 = vadd.xlane.f32.xlu0 %v534
        %v536 = vpop.xlane.xlu0 %535
        %v537 = vadd.f32 %v499, %v500
        %538 = vadd.xlane.f32.xlu0 %v537
        %v539 = vpop.xlane.xlu0 %538
        %v540 = vadd.f32 %v501, %v502
        %541 = vadd.xlane.f32.xlu0 %v540
        %v542 = vpop.xlane.xlu0 %541
        %v543 = vadd.f32 %v503, %v504
        %544 = vadd.xlane.f32.xlu0 %v543
        %v545 = vpop.xlane.xlu0 %544
        %v546 = vadd.f32 %v505, %v506
        %547 = vadd.xlane.f32.xlu0 %v546
        %v548 = vpop.xlane.xlu0 %547
        %v549 = vadd.f32 %v507, %v508
        %550 = vadd.xlane.f32.xlu0 %v549
        %v551 = vpop.xlane.xlu0 %550
        %v552 = vadd.f32 %v509, %v510
        %553 = vadd.xlane.f32.xlu0 %v552
        %v554 = vpop.xlane.xlu0 %553
        %v555 = vadd.f32 %v511, %v512
        %556 = vadd.xlane.f32.xlu0 %v555
        %v557 = vpop.xlane.xlu0 %556
        %v558 = vadd.f32 %v513, %v514
        %559 = vadd.xlane.f32.xlu0 %v558
        %v560 = vpop.xlane.xlu0 %559
        %v561 = vadd.f32 %v515, %v516
        %562 = vadd.xlane.f32.xlu0 %v561
        %v563 = vpop.xlane.xlu0 %562
        %v564 = vadd.f32 %v517, %v518
        %565 = vadd.xlane.f32.xlu0 %v564
        %v566 = vpop.xlane.xlu0 %565
        %v567 = vadd.f32 %v519, %v520
        %568 = vadd.xlane.f32.xlu0 %v567
        %v569 = vpop.xlane.xlu0 %568
        %v570 = vadd.f32 %v521, %v522
        %571 = vadd.xlane.f32.xlu0 %v570
        %v572 = vpop.xlane.xlu0 %571
        %v573 = vrcp.pop 256.0
        %v574 = vmul.f32 %v527, %v573
        %v575 = vmul.f32 %v530, %v573
        %v576 = vmul.f32 %v533, %v573
        %v577 = vmul.f32 %v536, %v573
        %v578 = vmul.f32 %v539, %v573
        %v579 = vmul.f32 %v542, %v573
        %v580 = vmul.f32 %v545, %v573
        %v581 = vmul.f32 %v548, %v573
        %v582 = vmul.f32 %v551, %v573
        %v583 = vmul.f32 %v554, %v573
        %v584 = vmul.f32 %v557, %v573
        %v585 = vmul.f32 %v560, %v573
        %v586 = vmul.f32 %v563, %v573
        %v587 = vmul.f32 %v566, %v573
        %v588 = vmul.f32 %v569, %v573
        %v589 = vmul.f32 %v572, %v573
        %v590 = vsub.f32 %v491, %v574
        %v591 = vsub.f32 %v492, %v574
        %v592 = vsub.f32 %v493, %v575
        %v593 = vsub.f32 %v494, %v575
        %v594 = vsub.f32 %v495, %v576
        %v595 = vsub.f32 %v496, %v576
        %v596 = vsub.f32 %v497, %v577
        %v597 = vsub.f32 %v498, %v577
        %v598 = vsub.f32 %v499, %v578
        %v599 = vsub.f32 %v500, %v578
        %v600 = vsub.f32 %v501, %v579
        %v601 = vsub.f32 %v502, %v579
        %v602 = vsub.f32 %v503, %v580
        %v603 = vsub.f32 %v504, %v580
        %v604 = vsub.f32 %v505, %v581
        %v605 = vsub.f32 %v506, %v581
        %v606 = vsub.f32 %v507, %v582
        %v607 = vsub.f32 %v508, %v582
        %v608 = vsub.f32 %v509, %v583
        %v609 = vsub.f32 %v510, %v583
        %v610 = vsub.f32 %v511, %v584
        %v611 = vsub.f32 %v512, %v584
        %v612 = vsub.f32 %v513, %v585
        %v613 = vsub.f32 %v514, %v585
        %v614 = vsub.f32 %v515, %v586
        %v615 = vsub.f32 %v516, %v586
        %v616 = vsub.f32 %v517, %v587
        %v617 = vsub.f32 %v518, %v587
        %v618 = vsub.f32 %v519, %v588
        %v619 = vsub.f32 %v520, %v588
        %v620 = vsub.f32 %v521, %v589
        %v621 = vsub.f32 %v522, %v589
        %v622 = vmul.f32 %v590, %v590
        %v623 = vmul.f32 %v591, %v591
        %v624 = vmul.f32 %v592, %v592
        %v625 = vmul.f32 %v593, %v593
        %v626 = vmul.f32 %v594, %v594
        %v627 = vmul.f32 %v595, %v595
        %v628 = vmul.f32 %v596, %v596
        %v629 = vmul.f32 %v597, %v597
        %v630 = vmul.f32 %v598, %v598
        %v631 = vmul.f32 %v599, %v599
        %v632 = vmul.f32 %v600, %v600
        %v633 = vmul.f32 %v601, %v601
        %v634 = vmul.f32 %v602, %v602
        %v635 = vmul.f32 %v603, %v603
        %v636 = vmul.f32 %v604, %v604
        %v637 = vmul.f32 %v605, %v605
        %v638 = vmul.f32 %v606, %v606
        %v639 = vmul.f32 %v607, %v607
        %v640 = vmul.f32 %v608, %v608
        %v641 = vmul.f32 %v609, %v609
        %v642 = vmul.f32 %v610, %v610
        %v643 = vmul.f32 %v611, %v611
        %v644 = vmul.f32 %v612, %v612
        %v645 = vmul.f32 %v613, %v613
        %v646 = vmul.f32 %v614, %v614
        %v647 = vmul.f32 %v615, %v615
        %v648 = vmul.f32 %v616, %v616
        %v649 = vmul.f32 %v617, %v617
        %v650 = vmul.f32 %v618, %v618
        %v651 = vmul.f32 %v619, %v619
        %v652 = vmul.f32 %v620, %v620
        %v653 = vmul.f32 %v621, %v621
        %v654 = vadd.f32 %v622, %v623
        %655 = vadd.xlane.f32.xlu0 %v654
        %v656 = vpop.xlane.xlu0 %655
        %v657 = vadd.f32 %v624, %v625
        %658 = vadd.xlane.f32.xlu0 %v657
        %v659 = vpop.xlane.xlu0 %658
        %v660 = vadd.f32 %v626, %v627
        %661 = vadd.xlane.f32.xlu0 %v660
        %v662 = vpop.xlane.xlu0 %661
        %v663 = vadd.f32 %v628, %v629
        %664 = vadd.xlane.f32.xlu0 %v663
        %v665 = vpop.xlane.xlu0 %664
        %v666 = vadd.f32 %v630, %v631
        %667 = vadd.xlane.f32.xlu0 %v666
        %v668 = vpop.xlane.xlu0 %667
        %v669 = vadd.f32 %v632, %v633
        %670 = vadd.xlane.f32.xlu0 %v669
        %v671 = vpop.xlane.xlu0 %670
        %v672 = vadd.f32 %v634, %v635
        %673 = vadd.xlane.f32.xlu0 %v672
        %v674 = vpop.xlane.xlu0 %673
        %v675 = vadd.f32 %v636, %v637
        %676 = vadd.xlane.f32.xlu0 %v675
        %v677 = vpop.xlane.xlu0 %676
        %v678 = vadd.f32 %v638, %v639
        %679 = vadd.xlane.f32.xlu0 %v678
        %v680 = vpop.xlane.xlu0 %679
        %v681 = vadd.f32 %v640, %v641
        %682 = vadd.xlane.f32.xlu0 %v681
        %v683 = vpop.xlane.xlu0 %682
        %v684 = vadd.f32 %v642, %v643
        %685 = vadd.xlane.f32.xlu0 %v684
        %v686 = vpop.xlane.xlu0 %685
        %v687 = vadd.f32 %v644, %v645
        %688 = vadd.xlane.f32.xlu0 %v687
        %v689 = vpop.xlane.xlu0 %688
        %v690 = vadd.f32 %v646, %v647
        %691 = vadd.xlane.f32.xlu0 %v690
        %v692 = vpop.xlane.xlu0 %691
        %v693 = vadd.f32 %v648, %v649
        %694 = vadd.xlane.f32.xlu0 %v693
        %v695 = vpop.xlane.xlu0 %694
        %v696 = vadd.f32 %v650, %v651
        %697 = vadd.xlane.f32.xlu0 %v696
        %v698 = vpop.xlane.xlu0 %697
        %v699 = vadd.f32 %v652, %v653
        %700 = vadd.xlane.f32.xlu0 %v699
        %v701 = vpop.xlane.xlu0 %700
        %v702 = vmul.f32 %v656, %v573
        %v703 = vmul.f32 %v659, %v573
        %v704 = vmul.f32 %v662, %v573
        %v705 = vmul.f32 %v665, %v573
        %v706 = vmul.f32 %v668, %v573
        %v707 = vmul.f32 %v671, %v573
        %v708 = vmul.f32 %v674, %v573
        %v709 = vmul.f32 %v677, %v573
        %v710 = vmul.f32 %v680, %v573
        %v711 = vmul.f32 %v683, %v573
        %v712 = vmul.f32 %v686, %v573
        %v713 = vmul.f32 %v689, %v573
        %v714 = vmul.f32 %v692, %v573
        %v715 = vmul.f32 %v695, %v573
        %v716 = vmul.f32 %v698, %v573
        %v717 = vmul.f32 %v701, %v573
        %v718 = vadd.f32 %v702, 1e-05
        %v719 = vadd.f32 %v703, 1e-05
        %v720 = vadd.f32 %v704, 1e-05
        %v721 = vadd.f32 %v705, 1e-05
        %v722 = vadd.f32 %v706, 1e-05
        %v723 = vadd.f32 %v707, 1e-05
        %v724 = vadd.f32 %v708, 1e-05
        %v725 = vadd.f32 %v709, 1e-05
        %v726 = vadd.f32 %v710, 1e-05
        %v727 = vadd.f32 %v711, 1e-05
        %v728 = vadd.f32 %v712, 1e-05
        %v729 = vadd.f32 %v713, 1e-05
        %v730 = vadd.f32 %v714, 1e-05
        %v731 = vadd.f32 %v715, 1e-05
        %v732 = vadd.f32 %v716, 1e-05
        %v733 = vadd.f32 %v717, 1e-05
        %v734 = vrsqrt.pop %v718
        %v735 = vrsqrt.pop %v719
        %v736 = vrsqrt.pop %v720
        %v737 = vrsqrt.pop %v721
        %v738 = vrsqrt.pop %v722
        %v739 = vrsqrt.pop %v723
        %v740 = vrsqrt.pop %v724
        %v741 = vrsqrt.pop %v725
        %v742 = vrsqrt.pop %v726
        %v743 = vrsqrt.pop %v727
        %v744 = vrsqrt.pop %v728
        %v745 = vrsqrt.pop %v729
        %v746 = vrsqrt.pop %v730
        %v747 = vrsqrt.pop %v731
        %v748 = vrsqrt.pop %v732
        %v749 = vrsqrt.pop %v733
        %v750 = vmul.f32 %v590, %v734
        %v751 = vmul.f32 %v591, %v734
        %v752 = vmul.f32 %v592, %v735
        %v753 = vmul.f32 %v593, %v735
        %v754 = vmul.f32 %v594, %v736
        %v755 = vmul.f32 %v595, %v736
        %v756 = vmul.f32 %v596, %v737
        %v757 = vmul.f32 %v597, %v737
        %v758 = vmul.f32 %v598, %v738
        %v759 = vmul.f32 %v599, %v738
        %v760 = vmul.f32 %v600, %v739
        %v761 = vmul.f32 %v601, %v739
        %v762 = vmul.f32 %v602, %v740
        %v763 = vmul.f32 %v603, %v740
        %v764 = vmul.f32 %v604, %v741
        %v765 = vmul.f32 %v605, %v741
        %v766 = vmul.f32 %v606, %v742
        %v767 = vmul.f32 %v607, %v742
        %v768 = vmul.f32 %v608, %v743
        %v769 = vmul.f32 %v609, %v743
        %v770 = vmul.f32 %v610, %v744
        %v771 = vmul.f32 %v611, %v744
        %v772 = vmul.f32 %v612, %v745
        %v773 = vmul.f32 %v613, %v745
        %v774 = vmul.f32 %v614, %v746
        %v775 = vmul.f32 %v615, %v746
        %v776 = vmul.f32 %v616, %v747
        %v777 = vmul.f32 %v617, %v747
        %v778 = vmul.f32 %v618, %v748
        %v779 = vmul.f32 %v619, %v748
        %v780 = vmul.f32 %v620, %v749
        %v781 = vmul.f32 %v621, %v749
        %v783 = vlaneseq
        %v784 = vshrl.u32 %v783, 7
        %v785 = vsub.s32 0, %v784
        %v786 = vrot.slane %v523, %v785
        %v787 = vlaneseq
        %v788 = vshrl.u32 %v787, 7
        %v789 = vsub.s32 1, %v788
        %v790 = vrot.slane %v523, %v789
        %v793 = vmul.f32 %v750, %v786
        %v794 = vmul.f32 %v751, %v790
        %v795 = vmul.f32 %v752, %v786
        %v796 = vmul.f32 %v753, %v790
        %v797 = vmul.f32 %v754, %v786
        %v798 = vmul.f32 %v755, %v790
        %v799 = vmul.f32 %v756, %v786
        %v800 = vmul.f32 %v757, %v790
        %v801 = vmul.f32 %v758, %v786
        %v802 = vmul.f32 %v759, %v790
        %v803 = vmul.f32 %v760, %v786
        %v804 = vmul.f32 %v761, %v790
        %v805 = vmul.f32 %v762, %v786
        %v806 = vmul.f32 %v763, %v790
        %v807 = vmul.f32 %v764, %v786
        %v808 = vmul.f32 %v765, %v790
        %v809 = vmul.f32 %v766, %v786
        %v810 = vmul.f32 %v767, %v790
        %v811 = vmul.f32 %v768, %v786
        %v812 = vmul.f32 %v769, %v790
        %v813 = vmul.f32 %v770, %v786
        %v814 = vmul.f32 %v771, %v790
        %v815 = vmul.f32 %v772, %v786
        %v816 = vmul.f32 %v773, %v790
        %v817 = vmul.f32 %v774, %v786
        %v818 = vmul.f32 %v775, %v790
        %v819 = vmul.f32 %v776, %v786
        %v820 = vmul.f32 %v777, %v790
        %v821 = vmul.f32 %v778, %v786
        %v822 = vmul.f32 %v779, %v790
        %v823 = vmul.f32 %v780, %v786
        %v824 = vmul.f32 %v781, %v790
        %v826 = vlaneseq
        %v827 = vshrl.u32 %v826, 7
        %v828 = vsub.s32 0, %v827
        %v829 = vrot.slane %v524, %v828
        %v830 = vlaneseq
        %v831 = vshrl.u32 %v830, 7
        %v832 = vsub.s32 1, %v831
        %v833 = vrot.slane %v524, %v832
        %v836 = vadd.f32 %v793, %v829
        %v837 = vadd.f32 %v794, %v833
        %v838 = vadd.f32 %v795, %v829
        %v839 = vadd.f32 %v796, %v833
        %v840 = vadd.f32 %v797, %v829
        %v841 = vadd.f32 %v798, %v833
        %v842 = vadd.f32 %v799, %v829
        %v843 = vadd.f32 %v800, %v833
        %v844 = vadd.f32 %v801, %v829
        %v845 = vadd.f32 %v802, %v833
        %v846 = vadd.f32 %v803, %v829
        %v847 = vadd.f32 %v804, %v833
        %v848 = vadd.f32 %v805, %v829
        %v849 = vadd.f32 %v806, %v833
        %v850 = vadd.f32 %v807, %v829
        %v851 = vadd.f32 %v808, %v833
        %v852 = vadd.f32 %v809, %v829
        %v853 = vadd.f32 %v810, %v833
        %v854 = vadd.f32 %v811, %v829
        %v855 = vadd.f32 %v812, %v833
        %v856 = vadd.f32 %v813, %v829
        %v857 = vadd.f32 %v814, %v833
        %v858 = vadd.f32 %v815, %v829
        %v859 = vadd.f32 %v816, %v833
        %v860 = vadd.f32 %v817, %v829
        %v861 = vadd.f32 %v818, %v833
        %v862 = vadd.f32 %v819, %v829
        %v863 = vadd.f32 %v820, %v833
        %v864 = vadd.f32 %v821, %v829
        %v865 = vadd.f32 %v822, %v833
        %v866 = vadd.f32 %v823, %v829
        %v867 = vadd.f32 %v824, %v833
        %v868 = vpack.c.bf16 %v838, %v836
        %v869 = vpack.c.bf16 %v839, %v837
        %v870 = vpack.c.bf16 %v842, %v840
        %v871 = vpack.c.bf16 %v843, %v841
        %v872 = vpack.c.bf16 %v846, %v844
        %v873 = vpack.c.bf16 %v847, %v845
        %v874 = vpack.c.bf16 %v850, %v848
        %v875 = vpack.c.bf16 %v851, %v849
        %v876 = vpack.c.bf16 %v854, %v852
        %v877 = vpack.c.bf16 %v855, %v853
        %v878 = vpack.c.bf16 %v858, %v856
        %v879 = vpack.c.bf16 %v859, %v857
        %v880 = vpack.c.bf16 %v862, %v860
        %v881 = vpack.c.bf16 %v863, %v861
        %v882 = vpack.c.bf16 %v866, %v864
        %v883 = vpack.c.bf16 %v867, %v865
        %v884 = vld [vmem:[#allocation5] sm:$0xff]
        %v885 = vld [vmem:[#allocation5 + $0x8] sm:$0xff]
        %v886 = vld [vmem:[#allocation5 + $0x10] sm:$0xff]
        %v887 = vld [vmem:[#allocation5 + $0x18] sm:$0xff]
        %v888 = vld [vmem:[#allocation5 + $0x20] sm:$0xff]
        %v889 = vld [vmem:[#allocation5 + $0x28] sm:$0xff]
        %v890 = vld [vmem:[#allocation5 + $0x30] sm:$0xff]
        %v891 = vld [vmem:[#allocation5 + $0x38] sm:$0xff]
        %v892 = vld [vmem:[#allocation5 + $0x40] sm:$0xff]
        %v893 = vld [vmem:[#allocation5 + $0x48] sm:$0xff]
        %v894 = vld [vmem:[#allocation5 + $0x50] sm:$0xff]
        %v895 = vld [vmem:[#allocation5 + $0x58] sm:$0xff]
        %v896 = vld [vmem:[#allocation5 + $0x60] sm:$0xff]
        %v897 = vld [vmem:[#allocation5 + $0x68] sm:$0xff]
        %v898 = vld [vmem:[#allocation5 + $0x70] sm:$0xff]
        %v899 = vld [vmem:[#allocation5 + $0x78] sm:$0xff]
        %v900 = vld [vmem:[#allocation5 + $0x80] sm:$0xff]
        %v901 = vld [vmem:[#allocation5 + $0x88] sm:$0xff]
        %v902 = vld [vmem:[#allocation5 + $0x90] sm:$0xff]
        %v903 = vld [vmem:[#allocation5 + $0x98] sm:$0xff]
        %v904 = vld [vmem:[#allocation5 + $0xa0] sm:$0xff]
        %v905 = vld [vmem:[#allocation5 + $0xa8] sm:$0xff]
        %v906 = vld [vmem:[#allocation5 + $0xb0] sm:$0xff]
        %v907 = vld [vmem:[#allocation5 + $0xb8] sm:$0xff]
        %v908 = vld [vmem:[#allocation5 + $0xc0] sm:$0xff]
        %v909 = vld [vmem:[#allocation5 + $0xc8] sm:$0xff]
        %v910 = vld [vmem:[#allocation5 + $0xd0] sm:$0xff]
        %v911 = vld [vmem:[#allocation5 + $0xd8] sm:$0xff]
        %v912 = vld [vmem:[#allocation5 + $0xe0] sm:$0xff]
        %v913 = vld [vmem:[#allocation5 + $0xe8] sm:$0xff]
        %v914 = vld [vmem:[#allocation5 + $0xf0] sm:$0xff]
        %v915 = vld [vmem:[#allocation5 + $0xf8] sm:$0xff]
        %v916 = vld [vmem:[#allocation5 + $0x100] sm:$0xff]
        %v917 = vld [vmem:[#allocation5 + $0x108] sm:$0xff]
        %v918 = vld [vmem:[#allocation5 + $0x110] sm:$0xff]
        %v919 = vld [vmem:[#allocation5 + $0x118] sm:$0xff]
        %v920 = vld [vmem:[#allocation5 + $0x120] sm:$0xff]
        %v921 = vld [vmem:[#allocation5 + $0x128] sm:$0xff]
        %v922 = vld [vmem:[#allocation5 + $0x130] sm:$0xff]
        %v923 = vld [vmem:[#allocation5 + $0x138] sm:$0xff]
        %v924 = vld [vmem:[#allocation5 + $0x140] sm:$0xff]
        %v925 = vld [vmem:[#allocation5 + $0x148] sm:$0xff]
        %v926 = vld [vmem:[#allocation5 + $0x150] sm:$0xff]
        %v927 = vld [vmem:[#allocation5 + $0x158] sm:$0xff]
        %v928 = vld [vmem:[#allocation5 + $0x160] sm:$0xff]
        %v929 = vld [vmem:[#allocation5 + $0x168] sm:$0xff]
        %v930 = vld [vmem:[#allocation5 + $0x170] sm:$0xff]
        %v931 = vld [vmem:[#allocation5 + $0x178] sm:$0xff]
        %v932 = vld [vmem:[#allocation5 + $0x180] sm:$0xff]
        %v933 = vld [vmem:[#allocation5 + $0x188] sm:$0xff]
        %v934 = vld [vmem:[#allocation5 + $0x190] sm:$0xff]
        %v935 = vld [vmem:[#allocation5 + $0x198] sm:$0xff]
        %v936 = vld [vmem:[#allocation5 + $0x1a0] sm:$0xff]
        %v937 = vld [vmem:[#allocation5 + $0x1a8] sm:$0xff]
        %v938 = vld [vmem:[#allocation5 + $0x1b0] sm:$0xff]
        %v939 = vld [vmem:[#allocation5 + $0x1b8] sm:$0xff]
        %v940 = vld [vmem:[#allocation5 + $0x1c0] sm:$0xff]
        %v941 = vld [vmem:[#allocation5 + $0x1c8] sm:$0xff]
        %v942 = vld [vmem:[#allocation5 + $0x1d0] sm:$0xff]
        %v943 = vld [vmem:[#allocation5 + $0x1d8] sm:$0xff]
        %v944 = vld [vmem:[#allocation5 + $0x1e0] sm:$0xff]
        %v945 = vld [vmem:[#allocation5 + $0x1e8] sm:$0xff]
        %v946 = vld [vmem:[#allocation5 + $0x1f0] sm:$0xff]
        %v947 = vld [vmem:[#allocation5 + $0x1f8] sm:$0xff]
        %v948 = vld [vmem:[#allocation5 + $0x200] sm:$0xff]
        %v949 = vld [vmem:[#allocation5 + $0x208] sm:$0xff]
        %v950 = vld [vmem:[#allocation5 + $0x210] sm:$0xff]
        %v951 = vld [vmem:[#allocation5 + $0x218] sm:$0xff]
        %v952 = vld [vmem:[#allocation5 + $0x220] sm:$0xff]
        %v953 = vld [vmem:[#allocation5 + $0x228] sm:$0xff]
        %v954 = vld [vmem:[#allocation5 + $0x230] sm:$0xff]
        %v955 = vld [vmem:[#allocation5 + $0x238] sm:$0xff]
        %v956 = vld [vmem:[#allocation5 + $0x240] sm:$0xff]
        %v957 = vld [vmem:[#allocation5 + $0x248] sm:$0xff]
        %v958 = vld [vmem:[#allocation5 + $0x250] sm:$0xff]
        %v959 = vld [vmem:[#allocation5 + $0x258] sm:$0xff]
        %v960 = vld [vmem:[#allocation5 + $0x260] sm:$0xff]
        %v961 = vld [vmem:[#allocation5 + $0x268] sm:$0xff]
        %v962 = vld [vmem:[#allocation5 + $0x270] sm:$0xff]
        %v963 = vld [vmem:[#allocation5 + $0x278] sm:$0xff]
        %v964 = vld [vmem:[#allocation5 + $0x280] sm:$0xff]
        %v965 = vld [vmem:[#allocation5 + $0x288] sm:$0xff]
        %v966 = vld [vmem:[#allocation5 + $0x290] sm:$0xff]
        %v967 = vld [vmem:[#allocation5 + $0x298] sm:$0xff]
        %v968 = vld [vmem:[#allocation5 + $0x2a0] sm:$0xff]
        %v969 = vld [vmem:[#allocation5 + $0x2a8] sm:$0xff]
        %v970 = vld [vmem:[#allocation5 + $0x2b0] sm:$0xff]
        %v971 = vld [vmem:[#allocation5 + $0x2b8] sm:$0xff]
        %v972 = vld [vmem:[#allocation5 + $0x2c0] sm:$0xff]
        %v973 = vld [vmem:[#allocation5 + $0x2c8] sm:$0xff]
        %v974 = vld [vmem:[#allocation5 + $0x2d0] sm:$0xff]
        %v975 = vld [vmem:[#allocation5 + $0x2d8] sm:$0xff]
        %v976 = vld [vmem:[#allocation5 + $0x2e0] sm:$0xff]
        %v977 = vld [vmem:[#allocation5 + $0x2e8] sm:$0xff]
        %v978 = vld [vmem:[#allocation5 + $0x2f0] sm:$0xff]
        %v979 = vld [vmem:[#allocation5 + $0x2f8] sm:$0xff]
        %v1076 = vunpack.c.l.b16 %v884
        %v1077 = vunpack.c.h.b16 %v884
        %v1078 = vunpack.c.l.b16 %v885
        %v1079 = vunpack.c.h.b16 %v885
        %v1080 = vunpack.c.l.b16 %v886
        %v1081 = vunpack.c.h.b16 %v886
        %v1082 = vunpack.c.l.b16 %v887
        %v1083 = vunpack.c.h.b16 %v887
        %v1084 = vunpack.c.l.b16 %v888
        %v1085 = vunpack.c.h.b16 %v888
        %v1086 = vunpack.c.l.b16 %v889
        %v1087 = vunpack.c.h.b16 %v889
        %v1088 = vunpack.c.l.b16 %v890
        %v1089 = vunpack.c.h.b16 %v890
        %v1090 = vunpack.c.l.b16 %v891
        %v1091 = vunpack.c.h.b16 %v891
        %v1092 = vunpack.c.l.b16 %v892
        %v1093 = vunpack.c.h.b16 %v892
        %v1094 = vunpack.c.l.b16 %v893
        %v1095 = vunpack.c.h.b16 %v893
        %v1096 = vunpack.c.l.b16 %v894
        %v1097 = vunpack.c.h.b16 %v894
        %v1098 = vunpack.c.l.b16 %v895
        %v1099 = vunpack.c.h.b16 %v895
        %v1100 = vunpack.c.l.b16 %v896
        %v1101 = vunpack.c.h.b16 %v896
        %v1102 = vunpack.c.l.b16 %v897
        %v1103 = vunpack.c.h.b16 %v897
        %v1104 = vunpack.c.l.b16 %v898
        %v1105 = vunpack.c.h.b16 %v898
        %v1106 = vunpack.c.l.b16 %v899
        %v1107 = vunpack.c.h.b16 %v899
        %v1108 = vunpack.c.l.b16 %v900
        %v1109 = vunpack.c.h.b16 %v900
        %v1110 = vunpack.c.l.b16 %v901
        %v1111 = vunpack.c.h.b16 %v901
        %v1112 = vunpack.c.l.b16 %v902
        %v1113 = vunpack.c.h.b16 %v902
        %v1114 = vunpack.c.l.b16 %v903
        %v1115 = vunpack.c.h.b16 %v903
        %v1116 = vunpack.c.l.b16 %v904
        %v1117 = vunpack.c.h.b16 %v904
        %v1118 = vunpack.c.l.b16 %v905
        %v1119 = vunpack.c.h.b16 %v905
        %v1120 = vunpack.c.l.b16 %v906
        %v1121 = vunpack.c.h.b16 %v906
        %v1122 = vunpack.c.l.b16 %v907
        %v1123 = vunpack.c.h.b16 %v907
        %v1124 = vunpack.c.l.b16 %v908
        %v1125 = vunpack.c.h.b16 %v908
        %v1126 = vunpack.c.l.b16 %v909
        %v1127 = vunpack.c.h.b16 %v909
        %v1128 = vunpack.c.l.b16 %v910
        %v1129 = vunpack.c.h.b16 %v910
        %v1130 = vunpack.c.l.b16 %v911
        %v1131 = vunpack.c.h.b16 %v911
        %v1132 = vunpack.c.l.b16 %v912
        %v1133 = vunpack.c.h.b16 %v912
        %v1134 = vunpack.c.l.b16 %v913
        %v1135 = vunpack.c.h.b16 %v913
        %v1136 = vunpack.c.l.b16 %v914
        %v1137 = vunpack.c.h.b16 %v914
        %v1138 = vunpack.c.l.b16 %v915
        %v1139 = vunpack.c.h.b16 %v915
        %v1140 = vunpack.c.l.b16 %v916
        %v1141 = vunpack.c.h.b16 %v916
        %v1142 = vunpack.c.l.b16 %v917
        %v1143 = vunpack.c.h.b16 %v917
        %v1144 = vunpack.c.l.b16 %v918
        %v1145 = vunpack.c.h.b16 %v918
        %v1146 = vunpack.c.l.b16 %v919
        %v1147 = vunpack.c.h.b16 %v919
        %v1148 = vunpack.c.l.b16 %v920
        %v1149 = vunpack.c.h.b16 %v920
        %v1150 = vunpack.c.l.b16 %v921
        %v1151 = vunpack.c.h.b16 %v921
        %v1152 = vunpack.c.l.b16 %v922
        %v1153 = vunpack.c.h.b16 %v922
        %v1154 = vunpack.c.l.b16 %v923
        %v1155 = vunpack.c.h.b16 %v923
        %v1156 = vunpack.c.l.b16 %v924
        %v1157 = vunpack.c.h.b16 %v924
        %v1158 = vunpack.c.l.b16 %v925
        %v1159 = vunpack.c.h.b16 %v925
        %v1160 = vunpack.c.l.b16 %v926
        %v1161 = vunpack.c.h.b16 %v926
        %v1162 = vunpack.c.l.b16 %v927
        %v1163 = vunpack.c.h.b16 %v927
        %v1164 = vunpack.c.l.b16 %v928
        %v1165 = vunpack.c.h.b16 %v928
        %v1166 = vunpack.c.l.b16 %v929
        %v1167 = vunpack.c.h.b16 %v929
        %v1168 = vunpack.c.l.b16 %v930
        %v1169 = vunpack.c.h.b16 %v930
        %v1170 = vunpack.c.l.b16 %v931
        %v1171 = vunpack.c.h.b16 %v931
        %v1172 = vunpack.c.l.b16 %v932
        %v1173 = vunpack.c.h.b16 %v932
        %v1174 = vunpack.c.l.b16 %v933
        %v1175 = vunpack.c.h.b16 %v933
        %v1176 = vunpack.c.l.b16 %v934
        %v1177 = vunpack.c.h.b16 %v934
        %v1178 = vunpack.c.l.b16 %v935
        %v1179 = vunpack.c.h.b16 %v935
        %v1180 = vunpack.c.l.b16 %v936
        %v1181 = vunpack.c.h.b16 %v936
        %v1182 = vunpack.c.l.b16 %v937
        %v1183 = vunpack.c.h.b16 %v937
        %v1184 = vunpack.c.l.b16 %v938
        %v1185 = vunpack.c.h.b16 %v938
        %v1186 = vunpack.c.l.b16 %v939
        %v1187 = vunpack.c.h.b16 %v939
        %v1188 = vunpack.c.l.b16 %v940
        %v1189 = vunpack.c.h.b16 %v940
        %v1190 = vunpack.c.l.b16 %v941
        %v1191 = vunpack.c.h.b16 %v941
        %v1192 = vunpack.c.l.b16 %v942
        %v1193 = vunpack.c.h.b16 %v942
        %v1194 = vunpack.c.l.b16 %v943
        %v1195 = vunpack.c.h.b16 %v943
        %v1196 = vunpack.c.l.b16 %v944
        %v1197 = vunpack.c.h.b16 %v944
        %v1198 = vunpack.c.l.b16 %v945
        %v1199 = vunpack.c.h.b16 %v945
        %v1200 = vunpack.c.l.b16 %v946
        %v1201 = vunpack.c.h.b16 %v946
        %v1202 = vunpack.c.l.b16 %v947
        %v1203 = vunpack.c.h.b16 %v947
        %v1204 = vunpack.c.l.b16 %v948
        %v1205 = vunpack.c.h.b16 %v948
        %v1206 = vunpack.c.l.b16 %v949
        %v1207 = vunpack.c.h.b16 %v949
        %v1208 = vunpack.c.l.b16 %v950
        %v1209 = vunpack.c.h.b16 %v950
        %v1210 = vunpack.c.l.b16 %v951
        %v1211 = vunpack.c.h.b16 %v951
        %v1212 = vunpack.c.l.b16 %v952
        %v1213 = vunpack.c.h.b16 %v952
        %v1214 = vunpack.c.l.b16 %v953
        %v1215 = vunpack.c.h.b16 %v953
        %v1216 = vunpack.c.l.b16 %v954
        %v1217 = vunpack.c.h.b16 %v954
        %v1218 = vunpack.c.l.b16 %v955
        %v1219 = vunpack.c.h.b16 %v955
        %v1220 = vunpack.c.l.b16 %v956
        %v1221 = vunpack.c.h.b16 %v956
        %v1222 = vunpack.c.l.b16 %v957
        %v1223 = vunpack.c.h.b16 %v957
        %v1224 = vunpack.c.l.b16 %v958
        %v1225 = vunpack.c.h.b16 %v958
        %v1226 = vunpack.c.l.b16 %v959
        %v1227 = vunpack.c.h.b16 %v959
        %v1228 = vunpack.c.l.b16 %v960
        %v1229 = vunpack.c.h.b16 %v960
        %v1230 = vunpack.c.l.b16 %v961
        %v1231 = vunpack.c.h.b16 %v961
        %v1232 = vunpack.c.l.b16 %v962
        %v1233 = vunpack.c.h.b16 %v962
        %v1234 = vunpack.c.l.b16 %v963
        %v1235 = vunpack.c.h.b16 %v963
        %v1236 = vunpack.c.l.b16 %v964
        %v1237 = vunpack.c.h.b16 %v964
        %v1238 = vunpack.c.l.b16 %v965
        %v1239 = vunpack.c.h.b16 %v965
        %v1240 = vunpack.c.l.b16 %v966
        %v1241 = vunpack.c.h.b16 %v966
        %v1242 = vunpack.c.l.b16 %v967
        %v1243 = vunpack.c.h.b16 %v967
        %v1244 = vunpack.c.l.b16 %v968
        %v1245 = vunpack.c.h.b16 %v968
        %v1246 = vunpack.c.l.b16 %v969
        %v1247 = vunpack.c.h.b16 %v969
        %v1248 = vunpack.c.l.b16 %v970
        %v1249 = vunpack.c.h.b16 %v970
        %v1250 = vunpack.c.l.b16 %v971
        %v1251 = vunpack.c.h.b16 %v971
        %v1252 = vunpack.c.l.b16 %v972
        %v1253 = vunpack.c.h.b16 %v972
        %v1254 = vunpack.c.l.b16 %v973
        %v1255 = vunpack.c.h.b16 %v973
        %v1256 = vunpack.c.l.b16 %v974
        %v1257 = vunpack.c.h.b16 %v974
        %v1258 = vunpack.c.l.b16 %v975
        %v1259 = vunpack.c.h.b16 %v975
        %v1260 = vunpack.c.l.b16 %v976
        %v1261 = vunpack.c.h.b16 %v976
        %v1262 = vunpack.c.l.b16 %v977
        %v1263 = vunpack.c.h.b16 %v977
        %v1264 = vunpack.c.l.b16 %v978
        %v1265 = vunpack.c.h.b16 %v978
        %v1266 = vunpack.c.l.b16 %v979
        %v1267 = vunpack.c.h.b16 %v979
        %v1268 = vpack.c.b16 %v1082, %v1076
        %v1269 = vpack.c.b16 %v1083, %v1077
        %v1270 = vpack.c.b16 %v1084, %v1078
        %v1271 = vpack.c.b16 %v1085, %v1079
        %v1272 = vpack.c.b16 %v1086, %v1080
        %v1273 = vpack.c.b16 %v1087, %v1081
        %v1274 = vpack.c.b16 %v1094, %v1088
        %v1275 = vpack.c.b16 %v1095, %v1089
        %v1276 = vpack.c.b16 %v1096, %v1090
        %v1277 = vpack.c.b16 %v1097, %v1091
        %v1278 = vpack.c.b16 %v1098, %v1092
        %v1279 = vpack.c.b16 %v1099, %v1093
        %v1280 = vpack.c.b16 %v1106, %v1100
        %v1281 = vpack.c.b16 %v1107, %v1101
        %v1282 = vpack.c.b16 %v1108, %v1102
        %v1283 = vpack.c.b16 %v1109, %v1103
        %v1284 = vpack.c.b16 %v1110, %v1104
        %v1285 = vpack.c.b16 %v1111, %v1105
        %v1286 = vpack.c.b16 %v1118, %v1112
        %v1287 = vpack.c.b16 %v1119, %v1113
        %v1288 = vpack.c.b16 %v1120, %v1114
        %v1289 = vpack.c.b16 %v1121, %v1115
        %v1290 = vpack.c.b16 %v1122, %v1116
        %v1291 = vpack.c.b16 %v1123, %v1117
        %v1292 = vpack.c.b16 %v1130, %v1124
        %v1293 = vpack.c.b16 %v1131, %v1125
        %v1294 = vpack.c.b16 %v1132, %v1126
        %v1295 = vpack.c.b16 %v1133, %v1127
        %v1296 = vpack.c.b16 %v1134, %v1128
        %v1297 = vpack.c.b16 %v1135, %v1129
        %v1298 = vpack.c.b16 %v1142, %v1136
        %v1299 = vpack.c.b16 %v1143, %v1137
        %v1300 = vpack.c.b16 %v1144, %v1138
        %v1301 = vpack.c.b16 %v1145, %v1139
        %v1302 = vpack.c.b16 %v1146, %v1140
        %v1303 = vpack.c.b16 %v1147, %v1141
        %v1304 = vpack.c.b16 %v1154, %v1148
        %v1305 = vpack.c.b16 %v1155, %v1149
        %v1306 = vpack.c.b16 %v1156, %v1150
        %v1307 = vpack.c.b16 %v1157, %v1151
        %v1308 = vpack.c.b16 %v1158, %v1152
        %v1309 = vpack.c.b16 %v1159, %v1153
        %v1310 = vpack.c.b16 %v1166, %v1160
        %v1311 = vpack.c.b16 %v1167, %v1161
        %v1312 = vpack.c.b16 %v1168, %v1162
        %v1313 = vpack.c.b16 %v1169, %v1163
        %v1314 = vpack.c.b16 %v1170, %v1164
        %v1315 = vpack.c.b16 %v1171, %v1165
        %v1316 = vpack.c.b16 %v1178, %v1172
        %v1317 = vpack.c.b16 %v1179, %v1173
        %v1318 = vpack.c.b16 %v1180, %v1174
        %v1319 = vpack.c.b16 %v1181, %v1175
        %v1320 = vpack.c.b16 %v1182, %v1176
        %v1321 = vpack.c.b16 %v1183, %v1177
        %v1322 = vpack.c.b16 %v1190, %v1184
        %v1323 = vpack.c.b16 %v1191, %v1185
        %v1324 = vpack.c.b16 %v1192, %v1186
        %v1325 = vpack.c.b16 %v1193, %v1187
        %v1326 = vpack.c.b16 %v1194, %v1188
        %v1327 = vpack.c.b16 %v1195, %v1189
        %v1328 = vpack.c.b16 %v1202, %v1196
        %v1329 = vpack.c.b16 %v1203, %v1197
        %v1330 = vpack.c.b16 %v1204, %v1198
        %v1331 = vpack.c.b16 %v1205, %v1199
        %v1332 = vpack.c.b16 %v1206, %v1200
        %v1333 = vpack.c.b16 %v1207, %v1201
        %v1334 = vpack.c.b16 %v1214, %v1208
        %v1335 = vpack.c.b16 %v1215, %v1209
        %v1336 = vpack.c.b16 %v1216, %v1210
        %v1337 = vpack.c.b16 %v1217, %v1211
        %v1338 = vpack.c.b16 %v1218, %v1212
        %v1339 = vpack.c.b16 %v1219, %v1213
        %v1340 = vpack.c.b16 %v1226, %v1220
        %v1341 = vpack.c.b16 %v1227, %v1221
        %v1342 = vpack.c.b16 %v1228, %v1222
        %v1343 = vpack.c.b16 %v1229, %v1223
        %v1344 = vpack.c.b16 %v1230, %v1224
        %v1345 = vpack.c.b16 %v1231, %v1225
        %v1346 = vpack.c.b16 %v1238, %v1232
        %v1347 = vpack.c.b16 %v1239, %v1233
        %v1348 = vpack.c.b16 %v1240, %v1234
        %v1349 = vpack.c.b16 %v1241, %v1235
        %v1350 = vpack.c.b16 %v1242, %v1236
        %v1351 = vpack.c.b16 %v1243, %v1237
        %v1352 = vpack.c.b16 %v1250, %v1244
        %v1353 = vpack.c.b16 %v1251, %v1245
        %v1354 = vpack.c.b16 %v1252, %v1246
        %v1355 = vpack.c.b16 %v1253, %v1247
        %v1356 = vpack.c.b16 %v1254, %v1248
        %v1357 = vpack.c.b16 %v1255, %v1249
        %v1358 = vpack.c.b16 %v1262, %v1256
        %v1359 = vpack.c.b16 %v1263, %v1257
        %v1360 = vpack.c.b16 %v1264, %v1258
        %v1361 = vpack.c.b16 %v1265, %v1259
        %v1362 = vpack.c.b16 %v1266, %v1260
        %v1363 = vpack.c.b16 %v1267, %v1261
        %1460 = vmatprep.subr.bf16.mxu0 %v1269
        %1461 = vmatpush1.bf16.msra.mxu0 %v1268
        %1462 = vmatprep.subr.bf16.mxu0 %v1275
        %1463 = vmatpush1.bf16.msra.mxu0 %v1274
        %1464 = vmatprep.subr.bf16.mxu0 %v1281
        %1465 = vmatpush1.bf16.msra.mxu0 %v1280
        %1466 = vmatprep.subr.bf16.mxu0 %v1287
        %1467 = vmatpush1.bf16.msra.mxu0 %v1286
        %1468 = vmatprep.subr.bf16.mxu0 %v1293
        %1469 = vmatpush1.bf16.msra.mxu0 %v1292
        %1470 = vmatprep.subr.bf16.mxu0 %v1299
        %1471 = vmatpush1.bf16.msra.mxu0 %v1298
        %1472 = vmatprep.subr.bf16.mxu0 %v1305
        %1473 = vmatpush1.bf16.msra.mxu0 %v1304
        %1474 = vmatprep.subr.bf16.mxu0 %v1311
        %1475 = vmatpush1.bf16.msra.mxu0 %v1310
        %1476 = vmatprep.subr.bf16.mxu0 %v1317
        %1477 = vmatpush1.bf16.msra.mxu0 %v1316
        %1478 = vmatprep.subr.bf16.mxu0 %v1323
        %1479 = vmatpush1.bf16.msra.mxu0 %v1322
        %1480 = vmatprep.subr.bf16.mxu0 %v1329
        %1481 = vmatpush1.bf16.msra.mxu0 %v1328
        %1482 = vmatprep.subr.bf16.mxu0 %v1335
        %1483 = vmatpush1.bf16.msra.mxu0 %v1334
        %1484 = vmatprep.subr.bf16.mxu0 %v1341
        %1485 = vmatpush1.bf16.msra.mxu0 %v1340
        %1486 = vmatprep.subr.bf16.mxu0 %v1347
        %1487 = vmatpush1.bf16.msra.mxu0 %v1346
        %1488 = vmatprep.subr.bf16.mxu0 %v1353
        %1489 = vmatpush1.bf16.msra.mxu0 %v1352
        %1490 = vmatprep.subr.bf16.mxu0 %v1359
        %1491 = vmatpush1.bf16.msra.mxu0 %v1358
        %1492 = vmatprep.mubr.bf16.mxu0 %v869
        %1493 = vmatmul.mubr.bf16.gmra.mrb[0].mxu0 %v868
        %v1494 = vpop.f32.mrb[0].mxu0
        %v1495 = vadd.f32 0.0, %v1494
        %v1496 = vpop.f32.mrb[0].mxu0
        %v1497 = vadd.f32 0.0, %v1496
        %v1498 = vpop.f32.mrb[0].mxu0
        %v1499 = vadd.f32 0.0, %v1498
        %v1500 = vpop.f32.mrb[0].mxu0
        %v1501 = vadd.f32 0.0, %v1500
        %1502 = vmatprep.mubr.bf16.mxu0 %v871
        %1503 = vmatmul.mubr.bf16.gmra.mrb[0].mxu0 %v870
        %v1504 = vpop.f32.mrb[0].mxu0
        %v1505 = vadd.f32 0.0, %v1504
        %v1506 = vpop.f32.mrb[0].mxu0
        %v1507 = vadd.f32 0.0, %v1506
        %v1508 = vpop.f32.mrb[0].mxu0
        %v1509 = vadd.f32 0.0, %v1508
        %v1510 = vpop.f32.mrb[0].mxu0
        %v1511 = vadd.f32 0.0, %v1510
        %1512 = vmatprep.mubr.bf16.mxu0 %v873
        %1513 = vmatmul.mubr.bf16.gmra.mrb[0].mxu0 %v872
        %v1514 = vpop.f32.mrb[0].mxu0
        %v1515 = vadd.f32 0.0, %v1514
        %v1516 = vpop.f32.mrb[0].mxu0
        %v1517 = vadd.f32 0.0, %v1516
        %v1518 = vpop.f32.mrb[0].mxu0
        %v1519 = vadd.f32 0.0, %v1518
        %v1520 = vpop.f32.mrb[0].mxu0
        %v1521 = vadd.f32 0.0, %v1520
        %1522 = vmatprep.mubr.bf16.mxu0 %v875
        %1523 = vmatmul.mubr.bf16.gmra.mrb[0].mxu0 %v874
        %v1524 = vpop.f32.mrb[0].mxu0
        %v1525 = vadd.f32 0.0, %v1524
        %v1526 = vpop.f32.mrb[0].mxu0
        %v1527 = vadd.f32 0.0, %v1526
        %v1528 = vpop.f32.mrb[0].mxu0
        %v1529 = vadd.f32 0.0, %v1528
        %v1530 = vpop.f32.mrb[0].mxu0
        %v1531 = vadd.f32 0.0, %v1530
        %1532 = vmatprep.mubr.bf16.mxu0 %v877
        %1533 = vmatmul.mubr.bf16.gmra.mrb[0].mxu0 %v876
        %v1534 = vpop.f32.mrb[0].mxu0
        %v1535 = vadd.f32 0.0, %v1534
        %v1536 = vpop.f32.mrb[0].mxu0
        %v1537 = vadd.f32 0.0, %v1536
        %v1538 = vpop.f32.mrb[0].mxu0
        %v1539 = vadd.f32 0.0, %v1538
        %v1540 = vpop.f32.mrb[0].mxu0
        %v1541 = vadd.f32 0.0, %v1540
        %1542 = vmatprep.mubr.bf16.mxu0 %v879
        %1543 = vmatmul.mubr.bf16.gmra.mrb[0].mxu0 %v878
        %v1544 = vpop.f32.mrb[0].mxu0
        %v1545 = vadd.f32 0.0, %v1544
        %v1546 = vpop.f32.mrb[0].mxu0
        %v1547 = vadd.f32 0.0, %v1546
        %v1548 = vpop.f32.mrb[0].mxu0
        %v1549 = vadd.f32 0.0, %v1548
        %v1550 = vpop.f32.mrb[0].mxu0
        %v1551 = vadd.f32 0.0, %v1550
        %1552 = vmatprep.mubr.bf16.mxu0 %v881
        %1553 = vmatmul.mubr.bf16.gmra.mrb[0].mxu0 %v880
        %v1554 = vpop.f32.mrb[0].mxu0
        %v1555 = vadd.f32 0.0, %v1554
        %v1556 = vpop.f32.mrb[0].mxu0
        %v1557 = vadd.f32 0.0, %v1556
        %v1558 = vpop.f32.mrb[0].mxu0
        %v1559 = vadd.f32 0.0, %v1558
        %v1560 = vpop.f32.mrb[0].mxu0
        %v1561 = vadd.f32 0.0, %v1560
        %1562 = vmatprep.mubr.bf16.mxu0 %v883
        %1563 = vmatmul.mubr.bf16.gmra.mrb[0].mxu0 %v882
        %v1564 = vpop.f32.mrb[0].mxu0
        %v1565 = vadd.f32 0.0, %v1564
        %v1566 = vpop.f32.mrb[0].mxu0
        %v1567 = vadd.f32 0.0, %v1566
        %v1568 = vpop.f32.mrb[0].mxu0
        %v1569 = vadd.f32 0.0, %v1568
        %v1570 = vpop.f32.mrb[0].mxu0
        %v1571 = vadd.f32 0.0, %v1570
        %1572 = vdwg.mxu0
        %1573 = vmatprep.subr.bf16.mxu0 %v1271
        %1574 = vmatpush1.bf16.msra.mxu0 %v1270
        %1575 = vmatprep.subr.bf16.mxu0 %v1277
        %1576 = vmatpush1.bf16.msra.mxu0 %v1276
        %1577 = vmatprep.subr.bf16.mxu0 %v1283
        %1578 = vmatpush1.bf16.msra.mxu0 %v1282
        %1579 = vmatprep.subr.bf16.mxu0 %v1289
        %1580 = vmatpush1.bf16.msra.mxu0 %v1288
        %1581 = vmatprep.subr.bf16.mxu0 %v1295
        %1582 = vmatpush1.bf16.msra.mxu0 %v1294
        %1583 = vmatprep.subr.bf16.mxu0 %v1301
        %1584 = vmatpush1.bf16.msra.mxu0 %v1300
        %1585 = vmatprep.subr.bf16.mxu0 %v1307
        %1586 = vmatpush1.bf16.msra.mxu0 %v1306
        %1587 = vmatprep.subr.bf16.mxu0 %v1313
        %1588 = vmatpush1.bf16.msra.mxu0 %v1312
        %1589 = vmatprep.subr.bf16.mxu0 %v1319
        %1590 = vmatpush1.bf16.msra.mxu0 %v1318
        %1591 = vmatprep.subr.bf16.mxu0 %v1325
        %1592 = vmatpush1.bf16.msra.mxu0 %v1324
        %1593 = vmatprep.subr.bf16.mxu0 %v1331
        %1594 = vmatpush1.bf16.msra.mxu0 %v1330
        %1595 = vmatprep.subr.bf16.mxu0 %v1337
        %1596 = vmatpush1.bf16.msra.mxu0 %v1336
        %1597 = vmatprep.subr.bf16.mxu0 %v1343
        %1598 = vmatpush1.bf16.msra.mxu0 %v1342
        %1599 = vmatprep.subr.bf16.mxu0 %v1349
        %1600 = vmatpush1.bf16.msra.mxu0 %v1348
        %1601 = vmatprep.subr.bf16.mxu0 %v1355
        %1602 = vmatpush1.bf16.msra.mxu0 %v1354
        %1603 = vmatprep.subr.bf16.mxu0 %v1361
        %1604 = vmatpush1.bf16.msra.mxu0 %v1360
        %1605 = vmatprep.mubr.bf16.mxu0 %v869
        %1606 = vmatmul.mubr.bf16.gmra.mrb[0].mxu0 %v868
        %v1607 = vpop.f32.mrb[0].mxu0
        %v1608 = vadd.f32 0.0, %v1607
        %v1609 = vpop.f32.mrb[0].mxu0
        %v1610 = vadd.f32 0.0, %v1609
        %v1611 = vpop.f32.mrb[0].mxu0
        %v1612 = vadd.f32 0.0, %v1611
        %v1613 = vpop.f32.mrb[0].mxu0
        %v1614 = vadd.f32 0.0, %v1613
        %1615 = vmatprep.mubr.bf16.mxu0 %v871
        %1616 = vmatmul.mubr.bf16.gmra.mrb[0].mxu0 %v870
        %v1617 = vpop.f32.mrb[0].mxu0
        %v1618 = vadd.f32 0.0, %v1617
        %v1619 = vpop.f32.mrb[0].mxu0
        %v1620 = vadd.f32 0.0, %v1619
        %v1621 = vpop.f32.mrb[0].mxu0
        %v1622 = vadd.f32 0.0, %v1621
        %v1623 = vpop.f32.mrb[0].mxu0
        %v1624 = vadd.f32 0.0, %v1623
        %1625 = vmatprep.mubr.bf16.mxu0 %v873
        %1626 = vmatmul.mubr.bf16.gmra.mrb[0].mxu0 %v872
        %v1627 = vpop.f32.mrb[0].mxu0
        %v1628 = vadd.f32 0.0, %v1627
        %v1629 = vpop.f32.mrb[0].mxu0
        %v1630 = vadd.f32 0.0, %v1629
        %v1631 = vpop.f32.mrb[0].mxu0
        %v1632 = vadd.f32 0.0, %v1631
        %v1633 = vpop.f32.mrb[0].mxu0
        %v1634 = vadd.f32 0.0, %v1633
        %1635 = vmatprep.mubr.bf16.mxu0 %v875
        %1636 = vmatmul.mubr.bf16.gmra.mrb[0].mxu0 %v874
        %v1637 = vpop.f32.mrb[0].mxu0
        %v1638 = vadd.f32 0.0, %v1637
        %v1639 = vpop.f32.mrb[0].mxu0
        %v1640 = vadd.f32 0.0, %v1639
        %v1641 = vpop.f32.mrb[0].mxu0
        %v1642 = vadd.f32 0.0, %v1641
        %v1643 = vpop.f32.mrb[0].mxu0
        %v1644 = vadd.f32 0.0, %v1643
        %1645 = vmatprep.mubr.bf16.mxu0 %v877
        %1646 = vmatmul.mubr.bf16.gmra.mrb[0].mxu0 %v876
        %v1647 = vpop.f32.mrb[0].mxu0
        %v1648 = vadd.f32 0.0, %v1647
        %v1649 = vpop.f32.mrb[0].mxu0
        %v1650 = vadd.f32 0.0, %v1649
        %v1651 = vpop.f32.mrb[0].mxu0
        %v1652 = vadd.f32 0.0, %v1651
        %v1653 = vpop.f32.mrb[0].mxu0
        %v1654 = vadd.f32 0.0, %v1653
        %1655 = vmatprep.mubr.bf16.mxu0 %v879
        %1656 = vmatmul.mubr.bf16.gmra.mrb[0].mxu0 %v878
        %v1657 = vpop.f32.mrb[0].mxu0
        %v1658 = vadd.f32 0.0, %v1657
        %v1659 = vpop.f32.mrb[0].mxu0
        %v1660 = vadd.f32 0.0, %v1659
        %v1661 = vpop.f32.mrb[0].mxu0
        %v1662 = vadd.f32 0.0, %v1661
        %v1663 = vpop.f32.mrb[0].mxu0
        %v1664 = vadd.f32 0.0, %v1663
        %1665 = vmatprep.mubr.bf16.mxu0 %v881
        %1666 = vmatmul.mubr.bf16.gmra.mrb[0].mxu0 %v880
        %v1667 = vpop.f32.mrb[0].mxu0
        %v1668 = vadd.f32 0.0, %v1667
        %v1669 = vpop.f32.mrb[0].mxu0
        %v1670 = vadd.f32 0.0, %v1669
        %v1671 = vpop.f32.mrb[0].mxu0
        %v1672 = vadd.f32 0.0, %v1671
        %v1673 = vpop.f32.mrb[0].mxu0
        %v1674 = vadd.f32 0.0, %v1673
        %1675 = vmatprep.mubr.bf16.mxu0 %v883
        %1676 = vmatmul.mubr.bf16.gmra.mrb[0].mxu0 %v882
        %v1677 = vpop.f32.mrb[0].mxu0
        %v1678 = vadd.f32 0.0, %v1677
        %v1679 = vpop.f32.mrb[0].mxu0
        %v1680 = vadd.f32 0.0, %v1679
        %v1681 = vpop.f32.mrb[0].mxu0
        %v1682 = vadd.f32 0.0, %v1681
        %v1683 = vpop.f32.mrb[0].mxu0
        %v1684 = vadd.f32 0.0, %v1683
        %1685 = vdwg.mxu0
        %1686 = vmatprep.subr.bf16.mxu0 %v1273
        %1687 = vmatpush1.bf16.msra.mxu0 %v1272
        %1688 = vmatprep.subr.bf16.mxu0 %v1279
        %1689 = vmatpush1.bf16.msra.mxu0 %v1278
        %1690 = vmatprep.subr.bf16.mxu0 %v1285
        %1691 = vmatpush1.bf16.msra.mxu0 %v1284
        %1692 = vmatprep.subr.bf16.mxu0 %v1291
        %1693 = vmatpush1.bf16.msra.mxu0 %v1290
        %1694 = vmatprep.subr.bf16.mxu0 %v1297
        %1695 = vmatpush1.bf16.msra.mxu0 %v1296
        %1696 = vmatprep.subr.bf16.mxu0 %v1303
        %1697 = vmatpush1.bf16.msra.mxu0 %v1302
        %1698 = vmatprep.subr.bf16.mxu0 %v1309
        %1699 = vmatpush1.bf16.msra.mxu0 %v1308
        %1700 = vmatprep.subr.bf16.mxu0 %v1315
        %1701 = vmatpush1.bf16.msra.mxu0 %v1314
        %1702 = vmatprep.subr.bf16.mxu0 %v1321
        %1703 = vmatpush1.bf16.msra.mxu0 %v1320
        %1704 = vmatprep.subr.bf16.mxu0 %v1327
        %1705 = vmatpush1.bf16.msra.mxu0 %v1326
        %1706 = vmatprep.subr.bf16.mxu0 %v1333
        %1707 = vmatpush1.bf16.msra.mxu0 %v1332
        %1708 = vmatprep.subr.bf16.mxu0 %v1339
        %1709 = vmatpush1.bf16.msra.mxu0 %v1338
        %1710 = vmatprep.subr.bf16.mxu0 %v1345
        %1711 = vmatpush1.bf16.msra.mxu0 %v1344
        %1712 = vmatprep.subr.bf16.mxu0 %v1351
        %1713 = vmatpush1.bf16.msra.mxu0 %v1350
        %1714 = vmatprep.subr.bf16.mxu0 %v1357
        %1715 = vmatpush1.bf16.msra.mxu0 %v1356
        %1716 = vmatprep.subr.bf16.mxu0 %v1363
        %1717 = vmatpush1.bf16.msra.mxu0 %v1362
        %1718 = vmatprep.mubr.bf16.mxu0 %v869
        %1719 = vmatmul.mubr.bf16.gmra.mrb[0].mxu0 %v868
        %v1720 = vpop.f32.mrb[0].mxu0
        %v1721 = vadd.f32 0.0, %v1720
        %v1722 = vpop.f32.mrb[0].mxu0
        %v1723 = vadd.f32 0.0, %v1722
        %v1724 = vpop.f32.mrb[0].mxu0
        %v1725 = vadd.f32 0.0, %v1724
        %v1726 = vpop.f32.mrb[0].mxu0
        %v1727 = vadd.f32 0.0, %v1726
        %1728 = vmatprep.mubr.bf16.mxu0 %v871
        %1729 = vmatmul.mubr.bf16.gmra.mrb[0].mxu0 %v870
        %v1730 = vpop.f32.mrb[0].mxu0
        %v1731 = vadd.f32 0.0, %v1730
        %v1732 = vpop.f32.mrb[0].mxu0
        %v1733 = vadd.f32 0.0, %v1732
        %v1734 = vpop.f32.mrb[0].mxu0
        %v1735 = vadd.f32 0.0, %v1734
        %v1736 = vpop.f32.mrb[0].mxu0
        %v1737 = vadd.f32 0.0, %v1736
        %1738 = vmatprep.mubr.bf16.mxu0 %v873
        %1739 = vmatmul.mubr.bf16.gmra.mrb[0].mxu0 %v872
        %v1740 = vpop.f32.mrb[0].mxu0
        %v1741 = vadd.f32 0.0, %v1740
        %v1742 = vpop.f32.mrb[0].mxu0
        %v1743 = vadd.f32 0.0, %v1742
        %v1744 = vpop.f32.mrb[0].mxu0
        %v1745 = vadd.f32 0.0, %v1744
        %v1746 = vpop.f32.mrb[0].mxu0
        %v1747 = vadd.f32 0.0, %v1746
        %1748 = vmatprep.mubr.bf16.mxu0 %v875
        %1749 = vmatmul.mubr.bf16.gmra.mrb[0].mxu0 %v874
        %v1750 = vpop.f32.mrb[0].mxu0
        %v1751 = vadd.f32 0.0, %v1750
        %v1752 = vpop.f32.mrb[0].mxu0
        %v1753 = vadd.f32 0.0, %v1752
        %v1754 = vpop.f32.mrb[0].mxu0
        %v1755 = vadd.f32 0.0, %v1754
        %v1756 = vpop.f32.mrb[0].mxu0
        %v1757 = vadd.f32 0.0, %v1756
        %1758 = vmatprep.mubr.bf16.mxu0 %v877
        %1759 = vmatmul.mubr.bf16.gmra.mrb[0].mxu0 %v876
        %v1760 = vpop.f32.mrb[0].mxu0
        %v1761 = vadd.f32 0.0, %v1760
        %v1762 = vpop.f32.mrb[0].mxu0
        %v1763 = vadd.f32 0.0, %v1762
        %v1764 = vpop.f32.mrb[0].mxu0
        %v1765 = vadd.f32 0.0, %v1764
        %v1766 = vpop.f32.mrb[0].mxu0
        %v1767 = vadd.f32 0.0, %v1766
        %1768 = vmatprep.mubr.bf16.mxu0 %v879
        %1769 = vmatmul.mubr.bf16.gmra.mrb[0].mxu0 %v878
        %v1770 = vpop.f32.mrb[0].mxu0
        %v1771 = vadd.f32 0.0, %v1770
        %v1772 = vpop.f32.mrb[0].mxu0
        %v1773 = vadd.f32 0.0, %v1772
        %v1774 = vpop.f32.mrb[0].mxu0
        %v1775 = vadd.f32 0.0, %v1774
        %v1776 = vpop.f32.mrb[0].mxu0
        %v1777 = vadd.f32 0.0, %v1776
        %1778 = vmatprep.mubr.bf16.mxu0 %v881
        %1779 = vmatmul.mubr.bf16.gmra.mrb[0].mxu0 %v880
        %v1780 = vpop.f32.mrb[0].mxu0
        %v1781 = vadd.f32 0.0, %v1780
        %v1782 = vpop.f32.mrb[0].mxu0
        %v1783 = vadd.f32 0.0, %v1782
        %v1784 = vpop.f32.mrb[0].mxu0
        %v1785 = vadd.f32 0.0, %v1784
        %v1786 = vpop.f32.mrb[0].mxu0
        %v1787 = vadd.f32 0.0, %v1786
        %1788 = vmatprep.mubr.bf16.mxu0 %v883
        %1789 = vmatmul.mubr.bf16.gmra.mrb[0].mxu0 %v882
        %v1790 = vpop.f32.mrb[0].mxu0
        %v1791 = vadd.f32 0.0, %v1790
        %v1792 = vpop.f32.mrb[0].mxu0
        %v1793 = vadd.f32 0.0, %v1792
        %v1794 = vpop.f32.mrb[0].mxu0
        %v1795 = vadd.f32 0.0, %v1794
        %v1796 = vpop.f32.mrb[0].mxu0
        %v1797 = vadd.f32 0.0, %v1796
        %1798 = vdwg.mxu0
        %v1799 = vmul.f32 %v1495, 0.17677669
        %v1800 = vmul.f32 %v1497, 0.17677669
        %v1801 = vmul.f32 %v1499, 0.17677669
        %v1802 = vmul.f32 %v1501, 0.17677669
        %v1803 = vmul.f32 %v1505, 0.17677669
        %v1804 = vmul.f32 %v1507, 0.17677669
        %v1805 = vmul.f32 %v1509, 0.17677669
        %v1806 = vmul.f32 %v1511, 0.17677669
        %v1807 = vmul.f32 %v1515, 0.17677669
        %v1808 = vmul.f32 %v1517, 0.17677669
        %v1809 = vmul.f32 %v1519, 0.17677669
        %v1810 = vmul.f32 %v1521, 0.17677669
        %v1811 = vmul.f32 %v1525, 0.17677669
        %v1812 = vmul.f32 %v1527, 0.17677669
        %v1813 = vmul.f32 %v1529, 0.17677669
        %v1814 = vmul.f32 %v1531, 0.17677669
        %v1815 = vmul.f32 %v1535, 0.17677669
        %v1816 = vmul.f32 %v1537, 0.17677669
        %v1817 = vmul.f32 %v1539, 0.17677669
        %v1818 = vmul.f32 %v1541, 0.17677669
        %v1819 = vmul.f32 %v1545, 0.17677669
        %v1820 = vmul.f32 %v1547, 0.17677669
        %v1821 = vmul.f32 %v1549, 0.17677669
        %v1822 = vmul.f32 %v1551, 0.17677669
        %v1823 = vmul.f32 %v1555, 0.17677669
        %v1824 = vmul.f32 %v1557, 0.17677669
        %v1825 = vmul.f32 %v1559, 0.17677669
        %v1826 = vmul.f32 %v1561, 0.17677669
        %v1827 = vmul.f32 %v1565, 0.17677669
        %v1828 = vmul.f32 %v1567, 0.17677669
        %v1829 = vmul.f32 %v1569, 0.17677669
        %v1830 = vmul.f32 %v1571, 0.17677669
        %v1831 = vpack.c.bf16 %v1801, %v1799
        %v1832 = vpack.c.bf16 %v1802, %v1800
        %v1833 = vpack.c.bf16 %v1805, %v1803
        %v1834 = vpack.c.bf16 %v1806, %v1804
        %v1835 = vpack.c.bf16 %v1809, %v1807
        %v1836 = vpack.c.bf16 %v1810, %v1808
        %v1837 = vpack.c.bf16 %v1813, %v1811
        %v1838 = vpack.c.bf16 %v1814, %v1812
        %v1839 = vpack.c.bf16 %v1817, %v1815
        %v1840 = vpack.c.bf16 %v1818, %v1816
        %v1841 = vpack.c.bf16 %v1821, %v1819
        %v1842 = vpack.c.bf16 %v1822, %v1820
        %v1843 = vpack.c.bf16 %v1825, %v1823
        %v1844 = vpack.c.bf16 %v1826, %v1824
        %v1845 = vpack.c.bf16 %v1829, %v1827
        %v1846 = vpack.c.bf16 %v1830, %v1828
        %v1847 = vpack.c.bf16 %v1612, %v1608
        %v1848 = vpack.c.bf16 %v1614, %v1610
        %v1849 = vpack.c.bf16 %v1622, %v1618
        %v1850 = vpack.c.bf16 %v1624, %v1620
        %v1851 = vpack.c.bf16 %v1632, %v1628
        %v1852 = vpack.c.bf16 %v1634, %v1630
        %v1853 = vpack.c.bf16 %v1642, %v1638
        %v1854 = vpack.c.bf16 %v1644, %v1640
        %v1855 = vpack.c.bf16 %v1652, %v1648
        %v1856 = vpack.c.bf16 %v1654, %v1650
        %v1857 = vpack.c.bf16 %v1662, %v1658
        %v1858 = vpack.c.bf16 %v1664, %v1660
        %v1859 = vpack.c.bf16 %v1672, %v1668
        %v1860 = vpack.c.bf16 %v1674, %v1670
        %v1861 = vpack.c.bf16 %v1682, %v1678
        %v1862 = vpack.c.bf16 %v1684, %v1680
        %v1863 = vpack.c.bf16 %v1725, %v1721
        %v1864 = vpack.c.bf16 %v1727, %v1723
        %v1865 = vpack.c.bf16 %v1735, %v1731
        %v1866 = vpack.c.bf16 %v1737, %v1733
        %v1867 = vpack.c.bf16 %v1745, %v1741
        %v1868 = vpack.c.bf16 %v1747, %v1743
        %v1869 = vpack.c.bf16 %v1755, %v1751
        %v1870 = vpack.c.bf16 %v1757, %v1753
        %v1871 = vpack.c.bf16 %v1765, %v1761
        %v1872 = vpack.c.bf16 %v1767, %v1763
        %v1873 = vpack.c.bf16 %v1775, %v1771
        %v1874 = vpack.c.bf16 %v1777, %v1773
        %v1875 = vpack.c.bf16 %v1785, %v1781
        %v1876 = vpack.c.bf16 %v1787, %v1783
        %v1877 = vpack.c.bf16 %v1795, %v1791
        %v1878 = vpack.c.bf16 %v1797, %v1793
        %v1879 = vld [vmem:[%s5] sm:$0x3]
        %v1881 = vlaneseq
        %v1882 = vshrl.u32 %v1881, 7
        %v1883 = vsub.s32 0, %v1882
        %v1884 = vrot.slane %v1879, %v1883
        %v1885 = vlaneseq
        %v1886 = vshrl.u32 %v1885, 7
        %v1887 = vsub.s32 1, %v1886
        %v1888 = vrot.slane %v1879, %v1887
        %v1891 = vadd.f32 %v491, %v1884
        %v1892 = vadd.f32 %v492, %v1888
        %v1893 = vadd.f32 %v493, %v1884
        %v1894 = vadd.f32 %v494, %v1888
        %v1895 = vadd.f32 %v495, %v1884
        %v1896 = vadd.f32 %v496, %v1888
        %v1897 = vadd.f32 %v497, %v1884
        %v1898 = vadd.f32 %v498, %v1888
        %v1899 = vadd.f32 %v499, %v1884
        %v1900 = vadd.f32 %v500, %v1888
        %v1901 = vadd.f32 %v501, %v1884
        %v1902 = vadd.f32 %v502, %v1888
        %v1903 = vadd.f32 %v503, %v1884
        %v1904 = vadd.f32 %v504, %v1888
        %v1905 = vadd.f32 %v505, %v1884
        %v1906 = vadd.f32 %v506, %v1888
        %v1907 = vadd.f32 %v507, %v1884
        %v1908 = vadd.f32 %v508, %v1888
        %v1909 = vadd.f32 %v509, %v1884
        %v1910 = vadd.f32 %v510, %v1888
        %v1911 = vadd.f32 %v511, %v1884
        %v1912 = vadd.f32 %v512, %v1888
        %v1913 = vadd.f32 %v513, %v1884
        %v1914 = vadd.f32 %v514, %v1888
        %v1915 = vadd.f32 %v515, %v1884
        %v1916 = vadd.f32 %v516, %v1888
        %v1917 = vadd.f32 %v517, %v1884
        %v1918 = vadd.f32 %v518, %v1888
        %v1919 = vadd.f32 %v519, %v1884
        %v1920 = vadd.f32 %v520, %v1888
        %v1921 = vadd.f32 %v521, %v1884
        %v1922 = vadd.f32 %v522, %v1888
        %vm1923 = vcmask 261120
        %v1925 = vsel %vm1923, %v1831, 0
        %v1928 = vsel %vm1923, %v1833, 0
        %v1931 = vsel %vm1923, %v1835, 0
        %v1934 = vsel %vm1923, %v1837, 0
        %v1937 = vsel %vm1923, %v1839, 0
        %v1940 = vsel %vm1923, %v1841, 0
        %v1943 = vsel %vm1923, %v1843, 0
        %v1946 = vsel %vm1923, %v1845, 0
        %v1949 = vsel %vm1923, %v1847, 0
        %v1952 = vsel %vm1923, %v1849, 0
        %v1955 = vsel %vm1923, %v1851, 0
        %v1958 = vsel %vm1923, %v1853, 0
        %v1961 = vsel %vm1923, %v1855, 0
        %v1964 = vsel %vm1923, %v1857, 0
        %v1967 = vsel %vm1923, %v1859, 0
        %v1970 = vsel %vm1923, %v1861, 0
        %1972 = vmatprep.subr.bf16.mxu0 0
        %1973 = vmatpush1.bf16.xpose.msra.mxu0 %v1949
        %1974 = vmatprep.subr.bf16.mxu0 0
        %1975 = vmatpush1.bf16.xpose.msra.mxu0 %v1952
        %1976 = vmatprep.subr.bf16.mxu0 0
        %1977 = vmatpush1.bf16.xpose.msra.mxu0 %v1955
        %1978 = vmatprep.subr.bf16.mxu0 0
        %1979 = vmatpush1.bf16.xpose.msra.mxu0 %v1958
        %1980 = vmatprep.subr.bf16.mxu0 0
        %1981 = vmatpush1.bf16.xpose.msra.mxu0 %v1961
        %1982 = vmatprep.subr.bf16.mxu0 0
        %1983 = vmatpush1.bf16.xpose.msra.mxu0 %v1964
        %1984 = vmatprep.subr.bf16.mxu0 0
        %1985 = vmatpush1.bf16.xpose.msra.mxu0 %v1967
        %1986 = vmatprep.subr.bf16.mxu0 0
        %1987 = vmatpush1.bf16.xpose.msra.mxu0 %v1970
        %1988 = vmatprep.subr.bf16.mxu0 0
        %1989 = vmatpush1.bf16.xpose.msra.mxu0 0
        %1990 = vmatprep.subr.bf16.mxu0 0
        %1991 = vmatpush1.bf16.xpose.msra.mxu0 0
        %1992 = vmatprep.subr.bf16.mxu0 0
        %1993 = vmatpush1.bf16.xpose.msra.mxu0 0
        %1994 = vmatprep.subr.bf16.mxu0 0
        %1995 = vmatpush1.bf16.xpose.msra.mxu0 0
        %1996 = vmatprep.subr.bf16.mxu0 0
        %1997 = vmatpush1.bf16.xpose.msra.mxu0 0
        %1998 = vmatprep.subr.bf16.mxu0 0
        %1999 = vmatpush1.bf16.xpose.msra.mxu0 0
        %2000 = vmatprep.subr.bf16.mxu0 0
        %2001 = vmatpush1.bf16.xpose.msra.mxu0 0
        %2002 = vmatprep.subr.bf16.mxu0 0
        %2003 = vmatpush1.bf16.xpose.msra.mxu0 0
        %2004 = vmatprep.mubr.bf16.mxu0 0
        %2005 = vmatmul.mubr.bf16.gmra.mrb[0].mxu0 %v1925
        %v2006 = vpop.f32.mrb[0].mxu0
        %v2007 = vadd.f32 0.0, %v2006
        %v2008 = vpop.f32.mrb[0].mxu0
        %v2009 = vpop.f32.mrb[0].mxu0
        %v2010 = vadd.f32 0.0, %v2009
        %v2011 = vpop.f32.mrb[0].mxu0
        %2012 = vmatprep.mubr.bf16.mxu0 0
        %2013 = vmatmul.mubr.bf16.gmra.mrb[0].mxu0 %v1928
        %v2014 = vpop.f32.mrb[0].mxu0
        %v2015 = vadd.f32 0.0, %v2014
        %v2016 = vpop.f32.mrb[0].mxu0
        %v2017 = vpop.f32.mrb[0].mxu0
        %v2018 = vadd.f32 0.0, %v2017
        %v2019 = vpop.f32.mrb[0].mxu0
        %2020 = vmatprep.mubr.bf16.mxu0 0
        %2021 = vmatmul.mubr.bf16.gmra.mrb[0].mxu0 %v1931
        %v2022 = vpop.f32.mrb[0].mxu0
        %v2023 = vadd.f32 0.0, %v2022
        %v2024 = vpop.f32.mrb[0].mxu0
        %v2025 = vpop.f32.mrb[0].mxu0
        %v2026 = vadd.f32 0.0, %v2025
        %v2027 = vpop.f32.mrb[0].mxu0
        %2028 = vmatprep.mubr.bf16.mxu0 0
        %2029 = vmatmul.mubr.bf16.gmra.mrb[0].mxu0 %v1934
        %v2030 = vpop.f32.mrb[0].mxu0
        %v2031 = vadd.f32 0.0, %v2030
        %v2032 = vpop.f32.mrb[0].mxu0
        %v2033 = vpop.f32.mrb[0].mxu0
        %v2034 = vadd.f32 0.0, %v2033
        %v2035 = vpop.f32.mrb[0].mxu0
        %2036 = vmatprep.mubr.bf16.mxu0 0
        %2037 = vmatmul.mubr.bf16.gmra.mrb[0].mxu0 %v1937
        %v2038 = vpop.f32.mrb[0].mxu0
        %v2039 = vadd.f32 0.0, %v2038
        %v2040 = vpop.f32.mrb[0].mxu0
        %v2041 = vpop.f32.mrb[0].mxu0
        %v2042 = vadd.f32 0.0, %v2041
        %v2043 = vpop.f32.mrb[0].mxu0
        %2044 = vmatprep.mubr.bf16.mxu0 0
        %2045 = vmatmul.mubr.bf16.gmra.mrb[0].mxu0 %v1940
        %v2046 = vpop.f32.mrb[0].mxu0
        %v2047 = vadd.f32 0.0, %v2046
        %v2048 = vpop.f32.mrb[0].mxu0
        %v2049 = vpop.f32.mrb[0].mxu0
        %v2050 = vadd.f32 0.0, %v2049
        %v2051 = vpop.f32.mrb[0].mxu0
        %2052 = vmatprep.mubr.bf16.mxu0 0
        %2053 = vmatmul.mubr.bf16.gmra.mrb[0].mxu0 %v1943
        %v2054 = vpop.f32.mrb[0].mxu0
        %v2055 = vadd.f32 0.0, %v2054
        %v2056 = vpop.f32.mrb[0].mxu0
        %v2057 = vpop.f32.mrb[0].mxu0
        %v2058 = vadd.f32 0.0, %v2057
        %v2059 = vpop.f32.mrb[0].mxu0
        %2060 = vmatprep.mubr.bf16.mxu0 0
        %2061 = vmatmul.mubr.bf16.gmra.mrb[0].mxu0 %v1946
        %v2062 = vpop.f32.mrb[0].mxu0
        %v2063 = vadd.f32 0.0, %v2062
        %v2064 = vpop.f32.mrb[0].mxu0
        %v2065 = vpop.f32.mrb[0].mxu0
        %v2066 = vadd.f32 0.0, %v2065
        %v2067 = vpop.f32.mrb[0].mxu0
        %2068 = vdwg.mxu0
        %2069 = vmax.xlane.f32.xlu0 %v2007
        %v2070 = vpop.xlane.xlu0 %2069
        %2071 = vmax.xlane.f32.xlu0 %v2010
        %v2072 = vpop.xlane.xlu0 %2071
        %2073 = vmax.xlane.f32.xlu0 %v2015
        %v2074 = vpop.xlane.xlu0 %2073
        %2075 = vmax.xlane.f32.xlu0 %v2018
        %v2076 = vpop.xlane.xlu0 %2075
        %2077 = vmax.xlane.f32.xlu0 %v2023
        %v2078 = vpop.xlane.xlu0 %2077
        %2079 = vmax.xlane.f32.xlu0 %v2026
        %v2080 = vpop.xlane.xlu0 %2079
        %2081 = vmax.xlane.f32.xlu0 %v2031
        %v2082 = vpop.xlane.xlu0 %2081
        %2083 = vmax.xlane.f32.xlu0 %v2034
        %v2084 = vpop.xlane.xlu0 %2083
        %2085 = vmax.xlane.f32.xlu0 %v2039
        %v2086 = vpop.xlane.xlu0 %2085
        %2087 = vmax.xlane.f32.xlu0 %v2042
        %v2088 = vpop.xlane.xlu0 %2087
        %2089 = vmax.xlane.f32.xlu0 %v2047
        %v2090 = vpop.xlane.xlu0 %2089
        %2091 = vmax.xlane.f32.xlu0 %v2050
        %v2092 = vpop.xlane.xlu0 %2091
        %2093 = vmax.xlane.f32.xlu0 %v2055
        %v2094 = vpop.xlane.xlu0 %2093
        %2095 = vmax.xlane.f32.xlu0 %v2058
        %v2096 = vpop.xlane.xlu0 %2095
        %2097 = vmax.xlane.f32.xlu0 %v2063
        %v2098 = vpop.xlane.xlu0 %2097
        %2099 = vmax.xlane.f32.xlu0 %v2066
        %v2100 = vpop.xlane.xlu0 %2099
        %v2101 = vsub.f32 %v2007, %v2070
        %v2102 = vsub.f32 %v2010, %v2072
        %v2103 = vsub.f32 %v2015, %v2074
        %v2104 = vsub.f32 %v2018, %v2076
        %v2105 = vsub.f32 %v2023, %v2078
        %v2106 = vsub.f32 %v2026, %v2080
        %v2107 = vsub.f32 %v2031, %v2082
        %v2108 = vsub.f32 %v2034, %v2084
        %v2109 = vsub.f32 %v2039, %v2086
        %v2110 = vsub.f32 %v2042, %v2088
        %v2111 = vsub.f32 %v2047, %v2090
        %v2112 = vsub.f32 %v2050, %v2092
        %v2113 = vsub.f32 %v2055, %v2094
        %v2114 = vsub.f32 %v2058, %v2096
        %v2115 = vsub.f32 %v2063, %v2098
        %v2116 = vsub.f32 %v2066, %v2100
        %v2117 = vmul.f32 %v2101, 1.442695
        %v2118 = vpow.pop %v2117
        %v2119 = vmul.f32 %v2102, 1.442695
        %v2120 = vpow.pop %v2119
        %v2121 = vmul.f32 %v2103, 1.442695
        %v2122 = vpow.pop %v2121
        %v2123 = vmul.f32 %v2104, 1.442695
        %v2124 = vpow.pop %v2123
        %v2125 = vmul.f32 %v2105, 1.442695
        %v2126 = vpow.pop %v2125
        %v2127 = vmul.f32 %v2106, 1.442695
        %v2128 = vpow.pop %v2127
        %v2129 = vmul.f32 %v2107, 1.442695
        %v2130 = vpow.pop %v2129
        %v2131 = vmul.f32 %v2108, 1.442695
        %v2132 = vpow.pop %v2131
        %v2133 = vmul.f32 %v2109, 1.442695
        %v2134 = vpow.pop %v2133
        %v2135 = vmul.f32 %v2110, 1.442695
        %v2136 = vpow.pop %v2135
        %v2137 = vmul.f32 %v2111, 1.442695
        %v2138 = vpow.pop %v2137
        %v2139 = vmul.f32 %v2112, 1.442695
        %v2140 = vpow.pop %v2139
        %v2141 = vmul.f32 %v2113, 1.442695
        %v2142 = vpow.pop %v2141
        %v2143 = vmul.f32 %v2114, 1.442695
        %v2144 = vpow.pop %v2143
        %v2145 = vmul.f32 %v2115, 1.442695
        %v2146 = vpow.pop %v2145
        %v2147 = vmul.f32 %v2116, 1.442695
        %v2148 = vpow.pop %v2147
        %2149 = vadd.xlane.f32.xlu0 %v2118
        %v2150 = vpop.xlane.xlu0 %2149
        %2151 = vadd.xlane.f32.xlu0 %v2120
        %v2152 = vpop.xlane.xlu0 %2151
        %2153 = vadd.xlane.f32.xlu0 %v2122
        %v2154 = vpop.xlane.xlu0 %2153
        %2155 = vadd.xlane.f32.xlu0 %v2124
        %v2156 = vpop.xlane.xlu0 %2155
        %2157 = vadd.xlane.f32.xlu0 %v2126
        %v2158 = vpop.xlane.xlu0 %2157
        %2159 = vadd.xlane.f32.xlu0 %v2128
        %v2160 = vpop.xlane.xlu0 %2159
        %2161 = vadd.xlane.f32.xlu0 %v2130
        %v2162 = vpop.xlane.xlu0 %2161
        %2163 = vadd.xlane.f32.xlu0 %v2132
        %v2164 = vpop.xlane.xlu0 %2163
        %2165 = vadd.xlane.f32.xlu0 %v2134
        %v2166 = vpop.xlane.xlu0 %2165
        %2167 = vadd.xlane.f32.xlu0 %v2136
        %v2168 = vpop.xlane.xlu0 %2167
        %2169 = vadd.xlane.f32.xlu0 %v2138
        %v2170 = vpop.xlane.xlu0 %2169
        %2171 = vadd.xlane.f32.xlu0 %v2140
        %v2172 = vpop.xlane.xlu0 %2171
        %2173 = vadd.xlane.f32.xlu0 %v2142
        %v2174 = vpop.xlane.xlu0 %2173
        %2175 = vadd.xlane.f32.xlu0 %v2144
        %v2176 = vpop.xlane.xlu0 %2175
        %2177 = vadd.xlane.f32.xlu0 %v2146
        %v2178 = vpop.xlane.xlu0 %2177
        %2179 = vadd.xlane.f32.xlu0 %v2148
        %v2180 = vpop.xlane.xlu0 %2179
        %v2181 = vrcp.pop %v2150
        %v2182 = vrcp.pop %v2152
        %v2183 = vrcp.pop %v2154
        %v2184 = vrcp.pop %v2156
        %v2185 = vrcp.pop %v2158
        %v2186 = vrcp.pop %v2160
        %v2187 = vrcp.pop %v2162
        %v2188 = vrcp.pop %v2164
        %v2189 = vrcp.pop %v2166
        %v2190 = vrcp.pop %v2168
        %v2191 = vrcp.pop %v2170
        %v2192 = vrcp.pop %v2172
        %v2193 = vrcp.pop %v2174
        %v2194 = vrcp.pop %v2176
        %v2195 = vrcp.pop %v2178
        %v2196 = vrcp.pop %v2180
        %v2197 = vmul.f32 %v2118, %v2181
        %v2198 = vmul.f32 %v2120, %v2182
        %v2199 = vmul.f32 %v2122, %v2183
        %v2200 = vmul.f32 %v2124, %v2184
        %v2201 = vmul.f32 %v2126, %v2185
        %v2202 = vmul.f32 %v2128, %v2186
        %v2203 = vmul.f32 %v2130, %v2187
        %v2204 = vmul.f32 %v2132, %v2188
        %v2205 = vmul.f32 %v2134, %v2189
        %v2206 = vmul.f32 %v2136, %v2190
        %v2207 = vmul.f32 %v2138, %v2191
        %v2208 = vmul.f32 %v2140, %v2192
        %v2209 = vmul.f32 %v2142, %v2193
        %v2210 = vmul.f32 %v2144, %v2194
        %v2211 = vmul.f32 %v2146, %v2195
        %v2212 = vmul.f32 %v2148, %v2196
        %v2213 = vpack.c.bf16 %v2198, %v2197
        %v2214 = vpack.c.bf16 %v2200, %v2199
        %v2215 = vpack.c.bf16 %v2202, %v2201
        %v2216 = vpack.c.bf16 %v2204, %v2203
        %v2217 = vpack.c.bf16 %v2206, %v2205
        %v2218 = vpack.c.bf16 %v2208, %v2207
        %v2219 = vpack.c.bf16 %v2210, %v2209
        %v2220 = vpack.c.bf16 %v2212, %v2211
        %2221 = vmatprep.subr.bf16.mxu0 0
        %2222 = vmatpush1.bf16.msra.mxu0 %v1863
        %2223 = vmatprep.subr.bf16.mxu0 0
        %2224 = vmatpush1.bf16.msra.mxu0 %v1865
        %2225 = vmatprep.subr.bf16.mxu0 0
        %2226 = vmatpush1.bf16.msra.mxu0 %v1867
        %2227 = vmatprep.subr.bf16.mxu0 0
        %2228 = vmatpush1.bf16.msra.mxu0 %v1869
        %2229 = vmatprep.subr.bf16.mxu0 0
        %2230 = vmatpush1.bf16.msra.mxu0 %v1871
        %2231 = vmatprep.subr.bf16.mxu0 0
        %2232 = vmatpush1.bf16.msra.mxu0 %v1873
        %2233 = vmatprep.subr.bf16.mxu0 0
        %2234 = vmatpush1.bf16.msra.mxu0 %v1875
        %2235 = vmatprep.subr.bf16.mxu0 0
        %2236 = vmatpush1.bf16.msra.mxu0 %v1877
        %2237 = vmatprep.subr.bf16.mxu0 0
        %2238 = vmatpush1.bf16.msra.mxu0 0
        %2239 = vmatprep.subr.bf16.mxu0 0
        %2240 = vmatpush1.bf16.msra.mxu0 0
        %2241 = vmatprep.subr.bf16.mxu0 0
        %2242 = vmatpush1.bf16.msra.mxu0 0
        %2243 = vmatprep.subr.bf16.mxu0 0
        %2244 = vmatpush1.bf16.msra.mxu0 0
        %2245 = vmatprep.subr.bf16.mxu0 0
        %2246 = vmatpush1.bf16.msra.mxu0 0
        %2247 = vmatprep.subr.bf16.mxu0 0
        %2248 = vmatpush1.bf16.msra.mxu0 0
        %2249 = vmatprep.subr.bf16.mxu0 0
        %2250 = vmatpush1.bf16.msra.mxu0 0
        %2251 = vmatprep.subr.bf16.mxu0 0
        %2252 = vmatpush1.bf16.msra.mxu0 0
        %2253 = vmatprep.mubr.bf16.mxu0 0
        %2254 = vmatmul.mubr.bf16.gmra.mrb[0].mxu0 %v2213
        %v2255 = vpop.f32.mrb[0].mxu0
        %v2256 = vadd.f32 0.0, %v2255
        %v2257 = vpop.f32.mrb[0].mxu0
        %v2258 = vpop.f32.mrb[0].mxu0
        %v2259 = vadd.f32 0.0, %v2258
        %v2260 = vpop.f32.mrb[0].mxu0
        %2261 = vmatprep.mubr.bf16.mxu0 0
        %2262 = vmatmul.mubr.bf16.gmra.mrb[0].mxu0 %v2214
        %v2263 = vpop.f32.mrb[0].mxu0
        %v2264 = vadd.f32 0.0, %v2263
        %v2265 = vpop.f32.mrb[0].mxu0
        %v2266 = vpop.f32.mrb[0].mxu0
        %v2267 = vadd.f32 0.0, %v2266
        %v2268 = vpop.f32.mrb[0].mxu0
        %2269 = vmatprep.mubr.bf16.mxu0 0
        %2270 = vmatmul.mubr.bf16.gmra.mrb[0].mxu0 %v2215
        %v2271 = vpop.f32.mrb[0].mxu0
        %v2272 = vadd.f32 0.0, %v2271
        %v2273 = vpop.f32.mrb[0].mxu0
        %v2274 = vpop.f32.mrb[0].mxu0
        %v2275 = vadd.f32 0.0, %v2274
        %v2276 = vpop.f32.mrb[0].mxu0
        %2277 = vmatprep.mubr.bf16.mxu0 0
        %2278 = vmatmul.mubr.bf16.gmra.mrb[0].mxu0 %v2216
        %v2279 = vpop.f32.mrb[0].mxu0
        %v2280 = vadd.f32 0.0, %v2279
        %v2281 = vpop.f32.mrb[0].mxu0
        %v2282 = vpop.f32.mrb[0].mxu0
        %v2283 = vadd.f32 0.0, %v2282
        %v2284 = vpop.f32.mrb[0].mxu0
        %2285 = vmatprep.mubr.bf16.mxu0 0
        %2286 = vmatmul.mubr.bf16.gmra.mrb[0].mxu0 %v2217
        %v2287 = vpop.f32.mrb[0].mxu0
        %v2288 = vadd.f32 0.0, %v2287
        %v2289 = vpop.f32.mrb[0].mxu0
        %v2290 = vpop.f32.mrb[0].mxu0
        %v2291 = vadd.f32 0.0, %v2290
        %v2292 = vpop.f32.mrb[0].mxu0
        %2293 = vmatprep.mubr.bf16.mxu0 0
        %2294 = vmatmul.mubr.bf16.gmra.mrb[0].mxu0 %v2218
        %v2295 = vpop.f32.mrb[0].mxu0
        %v2296 = vadd.f32 0.0, %v2295
        %v2297 = vpop.f32.mrb[0].mxu0
        %v2298 = vpop.f32.mrb[0].mxu0
        %v2299 = vadd.f32 0.0, %v2298
        %v2300 = vpop.f32.mrb[0].mxu0
        %2301 = vmatprep.mubr.bf16.mxu0 0
        %2302 = vmatmul.mubr.bf16.gmra.mrb[0].mxu0 %v2219
        %v2303 = vpop.f32.mrb[0].mxu0
        %v2304 = vadd.f32 0.0, %v2303
        %v2305 = vpop.f32.mrb[0].mxu0
        %v2306 = vpop.f32.mrb[0].mxu0
        %v2307 = vadd.f32 0.0, %v2306
        %v2308 = vpop.f32.mrb[0].mxu0
        %2309 = vmatprep.mubr.bf16.mxu0 0
        %2310 = vmatmul.mubr.bf16.gmra.mrb[0].mxu0 %v2220
        %v2311 = vpop.f32.mrb[0].mxu0
        %v2312 = vadd.f32 0.0, %v2311
        %v2313 = vpop.f32.mrb[0].mxu0
        %v2314 = vpop.f32.mrb[0].mxu0
        %v2315 = vadd.f32 0.0, %v2314
        %v2316 = vpop.f32.mrb[0].mxu0
        %2317 = vdwg.mxu0
        %v2318 = vpack.c.bf16 %v2259, %v2256
        %v2319 = vpack.c.bf16 %v2267, %v2264
        %v2320 = vpack.c.bf16 %v2275, %v2272
        %v2321 = vpack.c.bf16 %v2283, %v2280
        %v2322 = vpack.c.bf16 %v2291, %v2288
        %v2323 = vpack.c.bf16 %v2299, %v2296
        %v2324 = vpack.c.bf16 %v2307, %v2304
        %v2325 = vpack.c.bf16 %v2315, %v2312
        %v2326 = vld [vmem:[#allocation7] sm:$0xff]
        %v2327 = vld [vmem:[#allocation7 + $0x8] sm:$0xff]
        %v2328 = vld [vmem:[#allocation7 + $0x10] sm:$0xff]
        %v2329 = vld [vmem:[#allocation7 + $0x18] sm:$0xff]
        %v2334 = vunpack.c.l.b16 %v2326
        %v2335 = vunpack.c.h.b16 %v2326
        %v2336 = vunpack.c.l.b16 %v2327
        %v2337 = vunpack.c.h.b16 %v2327
        %v2338 = vunpack.c.l.b16 %v2328
        %v2339 = vunpack.c.h.b16 %v2328
        %v2340 = vunpack.c.l.b16 %v2329
        %v2341 = vunpack.c.h.b16 %v2329
        %v2342 = vpack.c.b16 %v2336, %v2334
        %v2343 = vpack.c.b16 %v2337, %v2335
        %v2344 = vpack.c.b16 %v2340, %v2338
        %v2345 = vpack.c.b16 %v2341, %v2339
        %v2351 = vsel %vm1923, %v2318, 0
        %v2354 = vsel %vm1923, %v2319, 0
        %v2357 = vsel %vm1923, %v2320, 0
        %v2360 = vsel %vm1923, %v2321, 0
        %v2363 = vsel %vm1923, %v2322, 0
        %v2366 = vsel %vm1923, %v2323, 0
        %v2369 = vsel %vm1923, %v2324, 0
        %v2372 = vsel %vm1923, %v2325, 0
        %2374 = vmatprep.subr.bf16.mxu0 %v2343
        %2375 = vmatpush1.bf16.msra.mxu0 %v2342
        %2376 = vmatprep.subr.bf16.mxu0 %v2345
        %2377 = vmatpush1.bf16.msra.mxu0 %v2344
        %2378 = vmatprep.subr.bf16.mxu0 0
        %2379 = vmatpush1.bf16.msra.mxu0 0
        %2380 = vmatprep.subr.bf16.mxu0 0
        %2381 = vmatpush1.bf16.msra.mxu0 0
        %2382 = vmatprep.subr.bf16.mxu0 0
        %2383 = vmatpush1.bf16.msra.mxu0 0
        %2384 = vmatprep.subr.bf16.mxu0 0
        %2385 = vmatpush1.bf16.msra.mxu0 0
        %2386 = vmatprep.subr.bf16.mxu0 0
        %2387 = vmatpush1.bf16.msra.mxu0 0
        %2388 = vmatprep.subr.bf16.mxu0 0
        %2389 = vmatpush1.bf16.msra.mxu0 0
        %2390 = vmatprep.subr.bf16.mxu0 0
        %2391 = vmatpush1.bf16.msra.mxu0 0
        %2392 = vmatprep.subr.bf16.mxu0 0
        %2393 = vmatpush1.bf16.msra.mxu0 0
        %2394 = vmatprep.subr.bf16.mxu0 0
        %2395 = vmatpush1.bf16.msra.mxu0 0
        %2396 = vmatprep.subr.bf16.mxu0 0
        %2397 = vmatpush1.bf16.msra.mxu0 0
        %2398 = vmatprep.subr.bf16.mxu0 0
        %2399 = vmatpush1.bf16.msra.mxu0 0
        %2400 = vmatprep.subr.bf16.mxu0 0
        %2401 = vmatpush1.bf16.msra.mxu0 0
        %2402 = vmatprep.subr.bf16.mxu0 0
        %2403 = vmatpush1.bf16.msra.mxu0 0
        %2404 = vmatprep.subr.bf16.mxu0 0
        %2405 = vmatpush1.bf16.msra.mxu0 0
        %2406 = vmatprep.mubr.bf16.mxu0 0
        %2407 = vmatmul.mubr.bf16.gmra.mrb[0].mxu0 %v2351
        %v2408 = vpop.f32.mrb[0].mxu0
        %v2409 = vadd.f32 0.0, %v2408
        %v2410 = vpop.f32.mrb[0].mxu0
        %v2411 = vadd.f32 0.0, %v2410
        %v2412 = vpop.f32.mrb[0].mxu0
        %v2413 = vadd.f32 0.0, %v2412
        %v2414 = vpop.f32.mrb[0].mxu0
        %v2415 = vadd.f32 0.0, %v2414
        %2416 = vmatprep.mubr.bf16.mxu0 0
        %2417 = vmatmul.mubr.bf16.gmra.mrb[0].mxu0 %v2354
        %v2418 = vpop.f32.mrb[0].mxu0
        %v2419 = vadd.f32 0.0, %v2418
        %v2420 = vpop.f32.mrb[0].mxu0
        %v2421 = vadd.f32 0.0, %v2420
        %v2422 = vpop.f32.mrb[0].mxu0
        %v2423 = vadd.f32 0.0, %v2422
        %v2424 = vpop.f32.mrb[0].mxu0
        %v2425 = vadd.f32 0.0, %v2424
        %2426 = vmatprep.mubr.bf16.mxu0 0
        %2427 = vmatmul.mubr.bf16.gmra.mrb[0].mxu0 %v2357
        %v2428 = vpop.f32.mrb[0].mxu0
        %v2429 = vadd.f32 0.0, %v2428
        %v2430 = vpop.f32.mrb[0].mxu0
        %v2431 = vadd.f32 0.0, %v2430
        %v2432 = vpop.f32.mrb[0].mxu0
        %v2433 = vadd.f32 0.0, %v2432
        %v2434 = vpop.f32.mrb[0].mxu0
        %v2435 = vadd.f32 0.0, %v2434
        %2436 = vmatprep.mubr.bf16.mxu0 0
        %2437 = vmatmul.mubr.bf16.gmra.mrb[0].mxu0 %v2360
        %v2438 = vpop.f32.mrb[0].mxu0
        %v2439 = vadd.f32 0.0, %v2438
        %v2440 = vpop.f32.mrb[0].mxu0
        %v2441 = vadd.f32 0.0, %v2440
        %v2442 = vpop.f32.mrb[0].mxu0
        %v2443 = vadd.f32 0.0, %v2442
        %v2444 = vpop.f32.mrb[0].mxu0
        %v2445 = vadd.f32 0.0, %v2444
        %2446 = vmatprep.mubr.bf16.mxu0 0
        %2447 = vmatmul.mubr.bf16.gmra.mrb[0].mxu0 %v2363
        %v2448 = vpop.f32.mrb[0].mxu0
        %v2449 = vadd.f32 0.0, %v2448
        %v2450 = vpop.f32.mrb[0].mxu0
        %v2451 = vadd.f32 0.0, %v2450
        %v2452 = vpop.f32.mrb[0].mxu0
        %v2453 = vadd.f32 0.0, %v2452
        %v2454 = vpop.f32.mrb[0].mxu0
        %v2455 = vadd.f32 0.0, %v2454
        %2456 = vmatprep.mubr.bf16.mxu0 0
        %2457 = vmatmul.mubr.bf16.gmra.mrb[0].mxu0 %v2366
        %v2458 = vpop.f32.mrb[0].mxu0
        %v2459 = vadd.f32 0.0, %v2458
        %v2460 = vpop.f32.mrb[0].mxu0
        %v2461 = vadd.f32 0.0, %v2460
        %v2462 = vpop.f32.mrb[0].mxu0
        %v2463 = vadd.f32 0.0, %v2462
        %v2464 = vpop.f32.mrb[0].mxu0
        %v2465 = vadd.f32 0.0, %v2464
        %2466 = vmatprep.mubr.bf16.mxu0 0
        %2467 = vmatmul.mubr.bf16.gmra.mrb[0].mxu0 %v2369
        %v2468 = vpop.f32.mrb[0].mxu0
        %v2469 = vadd.f32 0.0, %v2468
        %v2470 = vpop.f32.mrb[0].mxu0
        %v2471 = vadd.f32 0.0, %v2470
        %v2472 = vpop.f32.mrb[0].mxu0
        %v2473 = vadd.f32 0.0, %v2472
        %v2474 = vpop.f32.mrb[0].mxu0
        %v2475 = vadd.f32 0.0, %v2474
        %2476 = vmatprep.mubr.bf16.mxu0 0
        %2477 = vmatmul.mubr.bf16.gmra.mrb[0].mxu0 %v2372
        %v2478 = vpop.f32.mrb[0].mxu0
        %v2479 = vadd.f32 0.0, %v2478
        %v2480 = vpop.f32.mrb[0].mxu0
        %v2481 = vadd.f32 0.0, %v2480
        %v2482 = vpop.f32.mrb[0].mxu0
        %v2483 = vadd.f32 0.0, %v2482
        %v2484 = vpop.f32.mrb[0].mxu0
        %v2485 = vadd.f32 0.0, %v2484
        %2486 = vdwg.mxu0
        %v2487 = vadd.f32 %v1891, %v2409
        %v2488 = vadd.f32 %v1892, %v2411
        %v2489 = vadd.f32 %v1893, %v2413
        %v2490 = vadd.f32 %v1894, %v2415
        %v2491 = vadd.f32 %v1895, %v2419
        %v2492 = vadd.f32 %v1896, %v2421
        %v2493 = vadd.f32 %v1897, %v2423
        %v2494 = vadd.f32 %v1898, %v2425
        %v2495 = vadd.f32 %v1899, %v2429
        %v2496 = vadd.f32 %v1900, %v2431
        %v2497 = vadd.f32 %v1901, %v2433
        %v2498 = vadd.f32 %v1902, %v2435
        %v2499 = vadd.f32 %v1903, %v2439
        %v2500 = vadd.f32 %v1904, %v2441
        %v2501 = vadd.f32 %v1905, %v2443
        %v2502 = vadd.f32 %v1906, %v2445
        %v2503 = vadd.f32 %v1907, %v2449
        %v2504 = vadd.f32 %v1908, %v2451
        %v2505 = vadd.f32 %v1909, %v2453
        %v2506 = vadd.f32 %v1910, %v2455
        %v2507 = vadd.f32 %v1911, %v2459
        %v2508 = vadd.f32 %v1912, %v2461
        %v2509 = vadd.f32 %v1913, %v2463
        %v2510 = vadd.f32 %v1914, %v2465
        %v2511 = vadd.f32 %v1915, %v2469
        %v2512 = vadd.f32 %v1916, %v2471
        %v2513 = vadd.f32 %v1917, %v2473
        %v2514 = vadd.f32 %v1918, %v2475
        %v2515 = vadd.f32 %v1919, %v2479
        %v2516 = vadd.f32 %v1920, %v2481
        %v2517 = vadd.f32 %v1921, %v2483
        %v2518 = vadd.f32 %v1922, %v2485
        %2527 = vrot.lane.b32.xlu0 %v1831, 96
        %v2528 = vpop.permute.xlu0 %2527
        %2529 = vrot.lane.b32.xlu0 %v1833, 96
        %v2530 = vpop.permute.xlu0 %2529
        %2531 = vrot.lane.b32.xlu0 %v1835, 96
        %v2532 = vpop.permute.xlu0 %2531
        %2533 = vrot.lane.b32.xlu0 %v1837, 96
        %v2534 = vpop.permute.xlu0 %2533
        %2535 = vrot.lane.b32.xlu0 %v1839, 96
        %v2536 = vpop.permute.xlu0 %2535
        %2537 = vrot.lane.b32.xlu0 %v1841, 96
        %v2538 = vpop.permute.xlu0 %2537
        %2539 = vrot.lane.b32.xlu0 %v1843, 96
        %v2540 = vpop.permute.xlu0 %2539
        %2541 = vrot.lane.b32.xlu0 %v1845, 96
        %v2542 = vpop.permute.xlu0 %2541
        %2551 = vrot.lane.b32.xlu0 %v1847, 96
        %v2552 = vpop.permute.xlu0 %2551
        %2553 = vrot.lane.b32.xlu0 %v1849, 96
        %v2554 = vpop.permute.xlu0 %2553
        %2555 = vrot.lane.b32.xlu0 %v1851, 96
        %v2556 = vpop.permute.xlu0 %2555
        %2557 = vrot.lane.b32.xlu0 %v1853, 96
        %v2558 = vpop.permute.xlu0 %2557
        %2559 = vrot.lane.b32.xlu0 %v1855, 96
        %v2560 = vpop.permute.xlu0 %2559
        %2561 = vrot.lane.b32.xlu0 %v1857, 96
        %v2562 = vpop.permute.xlu0 %2561
        %2563 = vrot.lane.b32.xlu0 %v1859, 96
        %v2564 = vpop.permute.xlu0 %2563
        %2565 = vrot.lane.b32.xlu0 %v1861, 96
        %v2566 = vpop.permute.xlu0 %2565
        %v2568 = vsel %vm1923, %v2528, 0
        %v2571 = vsel %vm1923, %v2530, 0
        %v2574 = vsel %vm1923, %v2532, 0
        %v2577 = vsel %vm1923, %v2534, 0
        %v2580 = vsel %vm1923, %v2536, 0
        %v2583 = vsel %vm1923, %v2538, 0
        %v2586 = vsel %vm1923, %v2540, 0
        %v2589 = vsel %vm1923, %v2542, 0
        %v2592 = vsel %vm1923, %v2552, 0
        %v2595 = vsel %vm1923, %v2554, 0
        %v2598 = vsel %vm1923, %v2556, 0
        %v2601 = vsel %vm1923, %v2558, 0
        %v2604 = vsel %vm1923, %v2560, 0
        %v2607 = vsel %vm1923, %v2562, 0
        %v2610 = vsel %vm1923, %v2564, 0
        %v2613 = vsel %vm1923, %v2566, 0
        %2615 = vmatprep.subr.bf16.mxu0 0
        %2616 = vmatpush1.bf16.xpose.msra.mxu0 %v2592
        %2617 = vmatprep.subr.bf16.mxu0 0
        %2618 = vmatpush1.bf16.xpose.msra.mxu0 %v2595
        %2619 = vmatprep.subr.bf16.mxu0 0
        %2620 = vmatpush1.bf16.xpose.msra.mxu0 %v2598
        %2621 = vmatprep.subr.bf16.mxu0 0
        %2622 = vmatpush1.bf16.xpose.msra.mxu0 %v2601
        %2623 = vmatprep.subr.bf16.mxu0 0
        %2624 = vmatpush1.bf16.xpose.msra.mxu0 %v2604
        %2625 = vmatprep.subr.bf16.mxu0 0
        %2626 = vmatpush1.bf16.xpose.msra.mxu0 %v2607
        %2627 = vmatprep.subr.bf16.mxu0 0
        %2628 = vmatpush1.bf16.xpose.msra.mxu0 %v2610
        %2629 = vmatprep.subr.bf16.mxu0 0
        %2630 = vmatpush1.bf16.xpose.msra.mxu0 %v2613
        %2631 = vmatprep.subr.bf16.mxu0 0
        %2632 = vmatpush1.bf16.xpose.msra.mxu0 0
        %2633 = vmatprep.subr.bf16.mxu0 0
        %2634 = vmatpush1.bf16.xpose.msra.mxu0 0
        %2635 = vmatprep.subr.bf16.mxu0 0
        %2636 = vmatpush1.bf16.xpose.msra.mxu0 0
        %2637 = vmatprep.subr.bf16.mxu0 0
        %2638 = vmatpush1.bf16.xpose.msra.mxu0 0
        %2639 = vmatprep.subr.bf16.mxu0 0
        %2640 = vmatpush1.bf16.xpose.msra.mxu0 0
        %2641 = vmatprep.subr.bf16.mxu0 0
        %2642 = vmatpush1.bf16.xpose.msra.mxu0 0
        %2643 = vmatprep.subr.bf16.mxu0 0
        %2644 = vmatpush1.bf16.xpose.msra.mxu0 0
        %2645 = vmatprep.subr.bf16.mxu0 0
        %2646 = vmatpush1.bf16.xpose.msra.mxu0 0
        %2647 = vmatprep.mubr.bf16.mxu0 0
        %2648 = vmatmul.mubr.bf16.gmra.mrb[0].mxu0 %v2568
        %v2649 = vpop.f32.mrb[0].mxu0
        %v2650 = vadd.f32 0.0, %v2649
        %v2651 = vpop.f32.mrb[0].mxu0
        %v2652 = vpop.f32.mrb[0].mxu0
        %v2653 = vadd.f32 0.0, %v2652
        %v2654 = vpop.f32.mrb[0].mxu0
        %2655 = vmatprep.mubr.bf16.mxu0 0
        %2656 = vmatmul.mubr.bf16.gmra.mrb[0].mxu0 %v2571
        %v2657 = vpop.f32.mrb[0].mxu0
        %v2658 = vadd.f32 0.0, %v2657
        %v2659 = vpop.f32.mrb[0].mxu0
        %v2660 = vpop.f32.mrb[0].mxu0
        %v2661 = vadd.f32 0.0, %v2660
        %v2662 = vpop.f32.mrb[0].mxu0
        %2663 = vmatprep.mubr.bf16.mxu0 0
        %2664 = vmatmul.mubr.bf16.gmra.mrb[0].mxu0 %v2574
        %v2665 = vpop.f32.mrb[0].mxu0
        %v2666 = vadd.f32 0.0, %v2665
        %v2667 = vpop.f32.mrb[0].mxu0
        %v2668 = vpop.f32.mrb[0].mxu0
        %v2669 = vadd.f32 0.0, %v2668
        %v2670 = vpop.f32.mrb[0].mxu0
        %2671 = vmatprep.mubr.bf16.mxu0 0
        %2672 = vmatmul.mubr.bf16.gmra.mrb[0].mxu0 %v2577
        %v2673 = vpop.f32.mrb[0].mxu0
        %v2674 = vadd.f32 0.0, %v2673
        %v2675 = vpop.f32.mrb[0].mxu0
        %v2676 = vpop.f32.mrb[0].mxu0
        %v2677 = vadd.f32 0.0, %v2676
        %v2678 = vpop.f32.mrb[0].mxu0
        %2679 = vmatprep.mubr.bf16.mxu0 0
        %2680 = vmatmul.mubr.bf16.gmra.mrb[0].mxu0 %v2580
        %v2681 = vpop.f32.mrb[0].mxu0
        %v2682 = vadd.f32 0.0, %v2681
        %v2683 = vpop.f32.mrb[0].mxu0
        %v2684 = vpop.f32.mrb[0].mxu0
        %v2685 = vadd.f32 0.0, %v2684
        %v2686 = vpop.f32.mrb[0].mxu0
        %2687 = vmatprep.mubr.bf16.mxu0 0
        %2688 = vmatmul.mubr.bf16.gmra.mrb[0].mxu0 %v2583
        %v2689 = vpop.f32.mrb[0].mxu0
        %v2690 = vadd.f32 0.0, %v2689
        %v2691 = vpop.f32.mrb[0].mxu0
        %v2692 = vpop.f32.mrb[0].mxu0
        %v2693 = vadd.f32 0.0, %v2692
        %v2694 = vpop.f32.mrb[0].mxu0
        %2695 = vmatprep.mubr.bf16.mxu0 0
        %2696 = vmatmul.mubr.bf16.gmra.mrb[0].mxu0 %v2586
        %v2697 = vpop.f32.mrb[0].mxu0
        %v2698 = vadd.f32 0.0, %v2697
        %v2699 = vpop.f32.mrb[0].mxu0
        %v2700 = vpop.f32.mrb[0].mxu0
        %v2701 = vadd.f32 0.0, %v2700
        %v2702 = vpop.f32.mrb[0].mxu0
        %2703 = vmatprep.mubr.bf16.mxu0 0
        %2704 = vmatmul.mubr.bf16.gmra.mrb[0].mxu0 %v2589
        %v2705 = vpop.f32.mrb[0].mxu0
        %v2706 = vadd.f32 0.0, %v2705
        %v2707 = vpop.f32.mrb[0].mxu0
        %v2708 = vpop.f32.mrb[0].mxu0
        %v2709 = vadd.f32 0.0, %v2708
        %v2710 = vpop.f32.mrb[0].mxu0
        %2711 = vdwg.mxu0
        %2712 = vmax.xlane.f32.xlu0 %v2650
        %v2713 = vpop.xlane.xlu0 %2712
        %2714 = vmax.xlane.f32.xlu0 %v2653
        %v2715 = vpop.xlane.xlu0 %2714
        %2716 = vmax.xlane.f32.xlu0 %v2658
        %v2717 = vpop.xlane.xlu0 %2716
        %2718 = vmax.xlane.f32.xlu0 %v2661
        %v2719 = vpop.xlane.xlu0 %2718
        %2720 = vmax.xlane.f32.xlu0 %v2666
        %v2721 = vpop.xlane.xlu0 %2720
        %2722 = vmax.xlane.f32.xlu0 %v2669
        %v2723 = vpop.xlane.xlu0 %2722
        %2724 = vmax.xlane.f32.xlu0 %v2674
        %v2725 = vpop.xlane.xlu0 %2724
        %2726 = vmax.xlane.f32.xlu0 %v2677
        %v2727 = vpop.xlane.xlu0 %2726
        %2728 = vmax.xlane.f32.xlu0 %v2682
        %v2729 = vpop.xlane.xlu0 %2728
        %2730 = vmax.xlane.f32.xlu0 %v2685
        %v2731 = vpop.xlane.xlu0 %2730
        %2732 = vmax.xlane.f32.xlu0 %v2690
        %v2733 = vpop.xlane.xlu0 %2732
        %2734 = vmax.xlane.f32.xlu0 %v2693
        %v2735 = vpop.xlane.xlu0 %2734
        %2736 = vmax.xlane.f32.xlu0 %v2698
        %v2737 = vpop.xlane.xlu0 %2736
        %2738 = vmax.xlane.f32.xlu0 %v2701
        %v2739 = vpop.xlane.xlu0 %2738
        %2740 = vmax.xlane.f32.xlu0 %v2706
        %v2741 = vpop.xlane.xlu0 %2740
        %2742 = vmax.xlane.f32.xlu0 %v2709
        %v2743 = vpop.xlane.xlu0 %2742
        %v2744 = vsub.f32 %v2650, %v2713
        %v2745 = vsub.f32 %v2653, %v2715
        %v2746 = vsub.f32 %v2658, %v2717
        %v2747 = vsub.f32 %v2661, %v2719
        %v2748 = vsub.f32 %v2666, %v2721
        %v2749 = vsub.f32 %v2669, %v2723
        %v2750 = vsub.f32 %v2674, %v2725
        %v2751 = vsub.f32 %v2677, %v2727
        %v2752 = vsub.f32 %v2682, %v2729
        %v2753 = vsub.f32 %v2685, %v2731
        %v2754 = vsub.f32 %v2690, %v2733
        %v2755 = vsub.f32 %v2693, %v2735
        %v2756 = vsub.f32 %v2698, %v2737
        %v2757 = vsub.f32 %v2701, %v2739
        %v2758 = vsub.f32 %v2706, %v2741
        %v2759 = vsub.f32 %v2709, %v2743
        %v2760 = vmul.f32 %v2744, 1.442695
        %v2761 = vpow.pop %v2760
        %v2762 = vmul.f32 %v2745, 1.442695
        %v2763 = vpow.pop %v2762
        %v2764 = vmul.f32 %v2746, 1.442695
        %v2765 = vpow.pop %v2764
        %v2766 = vmul.f32 %v2747, 1.442695
        %v2767 = vpow.pop %v2766
        %v2768 = vmul.f32 %v2748, 1.442695
        %v2769 = vpow.pop %v2768
        %v2770 = vmul.f32 %v2749, 1.442695
        %v2771 = vpow.pop %v2770
        %v2772 = vmul.f32 %v2750, 1.442695
        %v2773 = vpow.pop %v2772
        %v2774 = vmul.f32 %v2751, 1.442695
        %v2775 = vpow.pop %v2774
        %v2776 = vmul.f32 %v2752, 1.442695
        %v2777 = vpow.pop %v2776
        %v2778 = vmul.f32 %v2753, 1.442695
        %v2779 = vpow.pop %v2778
        %v2780 = vmul.f32 %v2754, 1.442695
        %v2781 = vpow.pop %v2780
        %v2782 = vmul.f32 %v2755, 1.442695
        %v2783 = vpow.pop %v2782
        %v2784 = vmul.f32 %v2756, 1.442695
        %v2785 = vpow.pop %v2784
        %v2786 = vmul.f32 %v2757, 1.442695
        %v2787 = vpow.pop %v2786
        %v2788 = vmul.f32 %v2758, 1.442695
        %v2789 = vpow.pop %v2788
        %v2790 = vmul.f32 %v2759, 1.442695
        %v2791 = vpow.pop %v2790
        %2792 = vadd.xlane.f32.xlu0 %v2761
        %v2793 = vpop.xlane.xlu0 %2792
        %2794 = vadd.xlane.f32.xlu0 %v2763
        %v2795 = vpop.xlane.xlu0 %2794
        %2796 = vadd.xlane.f32.xlu0 %v2765
        %v2797 = vpop.xlane.xlu0 %2796
        %2798 = vadd.xlane.f32.xlu0 %v2767
        %v2799 = vpop.xlane.xlu0 %2798
        %2800 = vadd.xlane.f32.xlu0 %v2769
        %v2801 = vpop.xlane.xlu0 %2800
        %2802 = vadd.xlane.f32.xlu0 %v2771
        %v2803 = vpop.xlane.xlu0 %2802
        %2804 = vadd.xlane.f32.xlu0 %v2773
        %v2805 = vpop.xlane.xlu0 %2804
        %2806 = vadd.xlane.f32.xlu0 %v2775
        %v2807 = vpop.xlane.xlu0 %2806
        %2808 = vadd.xlane.f32.xlu0 %v2777
        %v2809 = vpop.xlane.xlu0 %2808
        %2810 = vadd.xlane.f32.xlu0 %v2779
        %v2811 = vpop.xlane.xlu0 %2810
        %2812 = vadd.xlane.f32.xlu0 %v2781
        %v2813 = vpop.xlane.xlu0 %2812
        %2814 = vadd.xlane.f32.xlu0 %v2783
        %v2815 = vpop.xlane.xlu0 %2814
        %2816 = vadd.xlane.f32.xlu0 %v2785
        %v2817 = vpop.xlane.xlu0 %2816
        %2818 = vadd.xlane.f32.xlu0 %v2787
        %v2819 = vpop.xlane.xlu0 %2818
        %2820 = vadd.xlane.f32.xlu0 %v2789
        %v2821 = vpop.xlane.xlu0 %2820
        %2822 = vadd.xlane.f32.xlu0 %v2791
        %v2823 = vpop.xlane.xlu0 %2822
        %v2824 = vrcp.pop %v2793
        %v2825 = vrcp.pop %v2795
        %v2826 = vrcp.pop %v2797
        %v2827 = vrcp.pop %v2799
        %v2828 = vrcp.pop %v2801
        %v2829 = vrcp.pop %v2803
        %v2830 = vrcp.pop %v2805
        %v2831 = vrcp.pop %v2807
        %v2832 = vrcp.pop %v2809
        %v2833 = vrcp.pop %v2811
        %v2834 = vrcp.pop %v2813
        %v2835 = vrcp.pop %v2815
        %v2836 = vrcp.pop %v2817
        %v2837 = vrcp.pop %v2819
        %v2838 = vrcp.pop %v2821
        %v2839 = vrcp.pop %v2823
        %v2840 = vmul.f32 %v2761, %v2824
        %v2841 = vmul.f32 %v2763, %v2825
        %v2842 = vmul.f32 %v2765, %v2826
        %v2843 = vmul.f32 %v2767, %v2827
        %v2844 = vmul.f32 %v2769, %v2828
        %v2845 = vmul.f32 %v2771, %v2829
        %v2846 = vmul.f32 %v2773, %v2830
        %v2847 = vmul.f32 %v2775, %v2831
        %v2848 = vmul.f32 %v2777, %v2832
        %v2849 = vmul.f32 %v2779, %v2833
        %v2850 = vmul.f32 %v2781, %v2834
        %v2851 = vmul.f32 %v2783, %v2835
        %v2852 = vmul.f32 %v2785, %v2836
        %v2853 = vmul.f32 %v2787, %v2837
        %v2854 = vmul.f32 %v2789, %v2838
        %v2855 = vmul.f32 %v2791, %v2839
        %v2856 = vpack.c.bf16 %v2841, %v2840
        %v2857 = vpack.c.bf16 %v2843, %v2842
        %v2858 = vpack.c.bf16 %v2845, %v2844
        %v2859 = vpack.c.bf16 %v2847, %v2846
        %v2860 = vpack.c.bf16 %v2849, %v2848
        %v2861 = vpack.c.bf16 %v2851, %v2850
        %v2862 = vpack.c.bf16 %v2853, %v2852
        %v2863 = vpack.c.bf16 %v2855, %v2854
        %2872 = vrot.lane.b32.xlu0 %v1863, 96
        %v2873 = vpop.permute.xlu0 %2872
        %2874 = vrot.lane.b32.xlu0 %v1865, 96
        %v2875 = vpop.permute.xlu0 %2874
        %2876 = vrot.lane.b32.xlu0 %v1867, 96
        %v2877 = vpop.permute.xlu0 %2876
        %2878 = vrot.lane.b32.xlu0 %v1869, 96
        %v2879 = vpop.permute.xlu0 %2878
        %2880 = vrot.lane.b32.xlu0 %v1871, 96
        %v2881 = vpop.permute.xlu0 %2880
        %2882 = vrot.lane.b32.xlu0 %v1873, 96
        %v2883 = vpop.permute.xlu0 %2882
        %2884 = vrot.lane.b32.xlu0 %v1875, 96
        %v2885 = vpop.permute.xlu0 %2884
        %2886 = vrot.lane.b32.xlu0 %v1877, 96
        %v2887 = vpop.permute.xlu0 %2886
        %2896 = vmatprep.subr.bf16.mxu0 0
        %2897 = vmatpush1.bf16.msra.mxu0 %v2873
        %2898 = vmatprep.subr.bf16.mxu0 0
        %2899 = vmatpush1.bf16.msra.mxu0 %v2875
        %2900 = vmatprep.subr.bf16.mxu0 0
        %2901 = vmatpush1.bf16.msra.mxu0 %v2877
        %2902 = vmatprep.subr.bf16.mxu0 0
        %2903 = vmatpush1.bf16.msra.mxu0 %v2879
        %2904 = vmatprep.subr.bf16.mxu0 0
        %2905 = vmatpush1.bf16.msra.mxu0 %v2881
        %2906 = vmatprep.subr.bf16.mxu0 0
        %2907 = vmatpush1.bf16.msra.mxu0 %v2883
        %2908 = vmatprep.subr.bf16.mxu0 0
        %2909 = vmatpush1.bf16.msra.mxu0 %v2885
        %2910 = vmatprep.subr.bf16.mxu0 0
        %2911 = vmatpush1.bf16.msra.mxu0 %v2887
        %2912 = vmatprep.subr.bf16.mxu0 0
        %2913 = vmatpush1.bf16.msra.mxu0 0
        %2914 = vmatprep.subr.bf16.mxu0 0
        %2915 = vmatpush1.bf16.msra.mxu0 0
        %2916 = vmatprep.subr.bf16.mxu0 0
        %2917 = vmatpush1.bf16.msra.mxu0 0
        %2918 = vmatprep.subr.bf16.mxu0 0
        %2919 = vmatpush1.bf16.msra.mxu0 0
        %2920 = vmatprep.subr.bf16.mxu0 0
        %2921 = vmatpush1.bf16.msra.mxu0 0
        %2922 = vmatprep.subr.bf16.mxu0 0
        %2923 = vmatpush1.bf16.msra.mxu0 0
        %2924 = vmatprep.subr.bf16.mxu0 0
        %2925 = vmatpush1.bf16.msra.mxu0 0
        %2926 = vmatprep.subr.bf16.mxu0 0
        %2927 = vmatpush1.bf16.msra.mxu0 0
        %2928 = vmatprep.mubr.bf16.mxu0 0
        %2929 = vmatmul.mubr.bf16.gmra.mrb[0].mxu0 %v2856
        %v2930 = vpop.f32.mrb[0].mxu0
        %v2931 = vadd.f32 0.0, %v2930
        %v2932 = vpop.f32.mrb[0].mxu0
        %v2933 = vpop.f32.mrb[0].mxu0
        %v2934 = vadd.f32 0.0, %v2933
        %v2935 = vpop.f32.mrb[0].mxu0
        %2936 = vmatprep.mubr.bf16.mxu0 0
        %2937 = vmatmul.mubr.bf16.gmra.mrb[0].mxu0 %v2857
        %v2938 = vpop.f32.mrb[0].mxu0
        %v2939 = vadd.f32 0.0, %v2938
        %v2940 = vpop.f32.mrb[0].mxu0
        %v2941 = vpop.f32.mrb[0].mxu0
        %v2942 = vadd.f32 0.0, %v2941
        %v2943 = vpop.f32.mrb[0].mxu0
        %2944 = vmatprep.mubr.bf16.mxu0 0
        %2945 = vmatmul.mubr.bf16.gmra.mrb[0].mxu0 %v2858
        %v2946 = vpop.f32.mrb[0].mxu0
        %v2947 = vadd.f32 0.0, %v2946
        %v2948 = vpop.f32.mrb[0].mxu0
        %v2949 = vpop.f32.mrb[0].mxu0
        %v2950 = vadd.f32 0.0, %v2949
        %v2951 = vpop.f32.mrb[0].mxu0
        %2952 = vmatprep.mubr.bf16.mxu0 0
        %2953 = vmatmul.mubr.bf16.gmra.mrb[0].mxu0 %v2859
        %v2954 = vpop.f32.mrb[0].mxu0
        %v2955 = vadd.f32 0.0, %v2954
        %v2956 = vpop.f32.mrb[0].mxu0
        %v2957 = vpop.f32.mrb[0].mxu0
        %v2958 = vadd.f32 0.0, %v2957
        %v2959 = vpop.f32.mrb[0].mxu0
        %2960 = vmatprep.mubr.bf16.mxu0 0
        %2961 = vmatmul.mubr.bf16.gmra.mrb[0].mxu0 %v2860
        %v2962 = vpop.f32.mrb[0].mxu0
        %v2963 = vadd.f32 0.0, %v2962
        %v2964 = vpop.f32.mrb[0].mxu0
        %v2965 = vpop.f32.mrb[0].mxu0
        %v2966 = vadd.f32 0.0, %v2965
        %v2967 = vpop.f32.mrb[0].mxu0
        %2968 = vmatprep.mubr.bf16.mxu0 0
        %2969 = vmatmul.mubr.bf16.gmra.mrb[0].mxu0 %v2861
        %v2970 = vpop.f32.mrb[0].mxu0
        %v2971 = vadd.f32 0.0, %v2970
        %v2972 = vpop.f32.mrb[0].mxu0
        %v2973 = vpop.f32.mrb[0].mxu0
        %v2974 = vadd.f32 0.0, %v2973
        %v2975 = vpop.f32.mrb[0].mxu0
        %2976 = vmatprep.mubr.bf16.mxu0 0
        %2977 = vmatmul.mubr.bf16.gmra.mrb[0].mxu0 %v2862
        %v2978 = vpop.f32.mrb[0].mxu0
        %v2979 = vadd.f32 0.0, %v2978
        %v2980 = vpop.f32.mrb[0].mxu0
        %v2981 = vpop.f32.mrb[0].mxu0
        %v2982 = vadd.f32 0.0, %v2981
        %v2983 = vpop.f32.mrb[0].mxu0
        %2984 = vmatprep.mubr.bf16.mxu0 0
        %2985 = vmatmul.mubr.bf16.gmra.mrb[0].mxu0 %v2863
        %v2986 = vpop.f32.mrb[0].mxu0
        %v2987 = vadd.f32 0.0, %v2986
        %v2988 = vpop.f32.mrb[0].mxu0
        %v2989 = vpop.f32.mrb[0].mxu0
        %v2990 = vadd.f32 0.0, %v2989
        %v2991 = vpop.f32.mrb[0].mxu0
        %2992 = vdwg.mxu0
        %v2993 = vpack.c.bf16 %v2934, %v2931
        %v2994 = vpack.c.bf16 %v2942, %v2939
        %v2995 = vpack.c.bf16 %v2950, %v2947
        %v2996 = vpack.c.bf16 %v2958, %v2955
        %v2997 = vpack.c.bf16 %v2966, %v2963
        %v2998 = vpack.c.bf16 %v2974, %v2971
        %v2999 = vpack.c.bf16 %v2982, %v2979
        %v3000 = vpack.c.bf16 %v2990, %v2987
        %s3001 = scalar_lea.vmem [#allocation7], 32
        %v3002 = vld [vmem:[%s3001] sm:$0xff]
        %v3003 = vld [vmem:[%s3001 + $0x8] sm:$0xff]
        %v3004 = vld [vmem:[%s3001 + $0x10] sm:$0xff]
        %v3005 = vld [vmem:[%s3001 + $0x18] sm:$0xff]
        %v3010 = vunpack.c.l.b16 %v3002
        %v3011 = vunpack.c.h.b16 %v3002
        %v3012 = vunpack.c.l.b16 %v3003
        %v3013 = vunpack.c.h.b16 %v3003
        %v3014 = vunpack.c.l.b16 %v3004
        %v3015 = vunpack.c.h.b16 %v3004
        %v3016 = vunpack.c.l.b16 %v3005
        %v3017 = vunpack.c.h.b16 %v3005
        %v3018 = vpack.c.b16 %v3012, %v3010
        %v3019 = vpack.c.b16 %v3013, %v3011
        %v3020 = vpack.c.b16 %v3016, %v3014
        %v3021 = vpack.c.b16 %v3017, %v3015
        %v3027 = vsel %vm1923, %v2993, 0
        %v3030 = vsel %vm1923, %v2994, 0
        %v3033 = vsel %vm1923, %v2995, 0
        %v3036 = vsel %vm1923, %v2996, 0
        %v3039 = vsel %vm1923, %v2997, 0
        %v3042 = vsel %vm1923, %v2998, 0
        %v3045 = vsel %vm1923, %v2999, 0
        %v3048 = vsel %vm1923, %v3000, 0
        %3050 = vmatprep.subr.bf16.mxu0 %v3019
        %3051 = vmatpush1.bf16.msra.mxu0 %v3018
        %3052 = vmatprep.subr.bf16.mxu0 %v3021
        %3053 = vmatpush1.bf16.msra.mxu0 %v3020
        %3054 = vmatprep.subr.bf16.mxu0 0
        %3055 = vmatpush1.bf16.msra.mxu0 0
        %3056 = vmatprep.subr.bf16.mxu0 0
        %3057 = vmatpush1.bf16.msra.mxu0 0
        %3058 = vmatprep.subr.bf16.mxu0 0
        %3059 = vmatpush1.bf16.msra.mxu0 0
        %3060 = vmatprep.subr.bf16.mxu0 0
        %3061 = vmatpush1.bf16.msra.mxu0 0
        %3062 = vmatprep.subr.bf16.mxu0 0
        %3063 = vmatpush1.bf16.msra.mxu0 0
        %3064 = vmatprep.subr.bf16.mxu0 0
        %3065 = vmatpush1.bf16.msra.mxu0 0
        %3066 = vmatprep.subr.bf16.mxu0 0
        %3067 = vmatpush1.bf16.msra.mxu0 0
        %3068 = vmatprep.subr.bf16.mxu0 0
        %3069 = vmatpush1.bf16.msra.mxu0 0
        %3070 = vmatprep.subr.bf16.mxu0 0
        %3071 = vmatpush1.bf16.msra.mxu0 0
        %3072 = vmatprep.subr.bf16.mxu0 0
        %3073 = vmatpush1.bf16.msra.mxu0 0
        %3074 = vmatprep.subr.bf16.mxu0 0
        %3075 = vmatpush1.bf16.msra.mxu0 0
        %3076 = vmatprep.subr.bf16.mxu0 0
        %3077 = vmatpush1.bf16.msra.mxu0 0
        %3078 = vmatprep.subr.bf16.mxu0 0
        %3079 = vmatpush1.bf16.msra.mxu0 0
        %3080 = vmatprep.subr.bf16.mxu0 0
        %3081 = vmatpush1.bf16.msra.mxu0 0
        %3082 = vmatprep.mubr.bf16.mxu0 0
        %3083 = vmatmul.mubr.bf16.gmra.mrb[0].mxu0 %v3027
        %v3084 = vpop.f32.mrb[0].mxu0
        %v3085 = vadd.f32 0.0, %v3084
        %v3086 = vpop.f32.mrb[0].mxu0
        %v3087 = vadd.f32 0.0, %v3086
        %v3088 = vpop.f32.mrb[0].mxu0
        %v3089 = vadd.f32 0.0, %v3088
        %v3090 = vpop.f32.mrb[0].mxu0
        %v3091 = vadd.f32 0.0, %v3090
        %3092 = vmatprep.mubr.bf16.mxu0 0
        %3093 = vmatmul.mubr.bf16.gmra.mrb[0].mxu0 %v3030
        %v3094 = vpop.f32.mrb[0].mxu0
        %v3095 = vadd.f32 0.0, %v3094
        %v3096 = vpop.f32.mrb[0].mxu0
        %v3097 = vadd.f32 0.0, %v3096
        %v3098 = vpop.f32.mrb[0].mxu0
        %v3099 = vadd.f32 0.0, %v3098
        %v3100 = vpop.f32.mrb[0].mxu0
        %v3101 = vadd.f32 0.0, %v3100
        %3102 = vmatprep.mubr.bf16.mxu0 0
        %3103 = vmatmul.mubr.bf16.gmra.mrb[0].mxu0 %v3033
        %v3104 = vpop.f32.mrb[0].mxu0
        %v3105 = vadd.f32 0.0, %v3104
        %v3106 = vpop.f32.mrb[0].mxu0
        %v3107 = vadd.f32 0.0, %v3106
        %v3108 = vpop.f32.mrb[0].mxu0
        %v3109 = vadd.f32 0.0, %v3108
        %v3110 = vpop.f32.mrb[0].mxu0
        %v3111 = vadd.f32 0.0, %v3110
        %3112 = vmatprep.mubr.bf16.mxu0 0
        %3113 = vmatmul.mubr.bf16.gmra.mrb[0].mxu0 %v3036
        %v3114 = vpop.f32.mrb[0].mxu0
        %v3115 = vadd.f32 0.0, %v3114
        %v3116 = vpop.f32.mrb[0].mxu0
        %v3117 = vadd.f32 0.0, %v3116
        %v3118 = vpop.f32.mrb[0].mxu0
        %v3119 = vadd.f32 0.0, %v3118
        %v3120 = vpop.f32.mrb[0].mxu0
        %v3121 = vadd.f32 0.0, %v3120
        %3122 = vmatprep.mubr.bf16.mxu0 0
        %3123 = vmatmul.mubr.bf16.gmra.mrb[0].mxu0 %v3039
        %v3124 = vpop.f32.mrb[0].mxu0
        %v3125 = vadd.f32 0.0, %v3124
        %v3126 = vpop.f32.mrb[0].mxu0
        %v3127 = vadd.f32 0.0, %v3126
        %v3128 = vpop.f32.mrb[0].mxu0
        %v3129 = vadd.f32 0.0, %v3128
        %v3130 = vpop.f32.mrb[0].mxu0
        %v3131 = vadd.f32 0.0, %v3130
        %3132 = vmatprep.mubr.bf16.mxu0 0
        %3133 = vmatmul.mubr.bf16.gmra.mrb[0].mxu0 %v3042
        %v3134 = vpop.f32.mrb[0].mxu0
        %v3135 = vadd.f32 0.0, %v3134
        %v3136 = vpop.f32.mrb[0].mxu0
        %v3137 = vadd.f32 0.0, %v3136
        %v3138 = vpop.f32.mrb[0].mxu0
        %v3139 = vadd.f32 0.0, %v3138
        %v3140 = vpop.f32.mrb[0].mxu0
        %v3141 = vadd.f32 0.0, %v3140
        %3142 = vmatprep.mubr.bf16.mxu0 0
        %3143 = vmatmul.mubr.bf16.gmra.mrb[0].mxu0 %v3045
        %v3144 = vpop.f32.mrb[0].mxu0
        %v3145 = vadd.f32 0.0, %v3144
        %v3146 = vpop.f32.mrb[0].mxu0
        %v3147 = vadd.f32 0.0, %v3146
        %v3148 = vpop.f32.mrb[0].mxu0
        %v3149 = vadd.f32 0.0, %v3148
        %v3150 = vpop.f32.mrb[0].mxu0
        %v3151 = vadd.f32 0.0, %v3150
        %3152 = vmatprep.mubr.bf16.mxu0 0
        %3153 = vmatmul.mubr.bf16.gmra.mrb[0].mxu0 %v3048
        %v3154 = vpop.f32.mrb[0].mxu0
        %v3155 = vadd.f32 0.0, %v3154
        %v3156 = vpop.f32.mrb[0].mxu0
        %v3157 = vadd.f32 0.0, %v3156
        %v3158 = vpop.f32.mrb[0].mxu0
        %v3159 = vadd.f32 0.0, %v3158
        %v3160 = vpop.f32.mrb[0].mxu0
        %v3161 = vadd.f32 0.0, %v3160
        %3162 = vdwg.mxu0
        %v3163 = vadd.f32 %v2487, %v3085
        %v3164 = vadd.f32 %v2488, %v3087
        %v3165 = vadd.f32 %v2489, %v3089
        %v3166 = vadd.f32 %v2490, %v3091
        %v3167 = vadd.f32 %v2491, %v3095
        %v3168 = vadd.f32 %v2492, %v3097
        %v3169 = vadd.f32 %v2493, %v3099
        %v3170 = vadd.f32 %v2494, %v3101
        %v3171 = vadd.f32 %v2495, %v3105
        %v3172 = vadd.f32 %v2496, %v3107
        %v3173 = vadd.f32 %v2497, %v3109
        %v3174 = vadd.f32 %v2498, %v3111
        %v3175 = vadd.f32 %v2499, %v3115
        %v3176 = vadd.f32 %v2500, %v3117
        %v3177 = vadd.f32 %v2501, %v3119
        %v3178 = vadd.f32 %v2502, %v3121
        %v3179 = vadd.f32 %v2503, %v3125
        %v3180 = vadd.f32 %v2504, %v3127
        %v3181 = vadd.f32 %v2505, %v3129
        %v3182 = vadd.f32 %v2506, %v3131
        %v3183 = vadd.f32 %v2507, %v3135
        %v3184 = vadd.f32 %v2508, %v3137
        %v3185 = vadd.f32 %v2509, %v3139
        %v3186 = vadd.f32 %v2510, %v3141
        %v3187 = vadd.f32 %v2511, %v3145
        %v3188 = vadd.f32 %v2512, %v3147
        %v3189 = vadd.f32 %v2513, %v3149
        %v3190 = vadd.f32 %v2514, %v3151
        %v3191 = vadd.f32 %v2515, %v3155
        %v3192 = vadd.f32 %v2516, %v3157
        %v3193 = vadd.f32 %v2517, %v3159
        %v3194 = vadd.f32 %v2518, %v3161
        %3195 = vrot.lane.b32.xlu0 %v1831, 64
        %v3196 = vpop.permute.xlu0 %3195
        %3197 = vrot.lane.b32.xlu0 %v1833, 64
        %v3198 = vpop.permute.xlu0 %3197
        %3199 = vrot.lane.b32.xlu0 %v1835, 64
        %v3200 = vpop.permute.xlu0 %3199
        %3201 = vrot.lane.b32.xlu0 %v1837, 64
        %v3202 = vpop.permute.xlu0 %3201
        %3203 = vrot.lane.b32.xlu0 %v1839, 64
        %v3204 = vpop.permute.xlu0 %3203
        %3205 = vrot.lane.b32.xlu0 %v1841, 64
        %v3206 = vpop.permute.xlu0 %3205
        %3207 = vrot.lane.b32.xlu0 %v1843, 64
        %v3208 = vpop.permute.xlu0 %3207
        %3209 = vrot.lane.b32.xlu0 %v1845, 64
        %v3210 = vpop.permute.xlu0 %3209
        %3211 = vrot.lane.b32.xlu0 %v1847, 64
        %v3212 = vpop.permute.xlu0 %3211
        %3213 = vrot.lane.b32.xlu0 %v1849, 64
        %v3214 = vpop.permute.xlu0 %3213
        %3215 = vrot.lane.b32.xlu0 %v1851, 64
        %v3216 = vpop.permute.xlu0 %3215
        %3217 = vrot.lane.b32.xlu0 %v1853, 64
        %v3218 = vpop.permute.xlu0 %3217
        %3219 = vrot.lane.b32.xlu0 %v1855, 64
        %v3220 = vpop.permute.xlu0 %3219
        %3221 = vrot.lane.b32.xlu0 %v1857, 64
        %v3222 = vpop.permute.xlu0 %3221
        %3223 = vrot.lane.b32.xlu0 %v1859, 64
        %v3224 = vpop.permute.xlu0 %3223
        %3225 = vrot.lane.b32.xlu0 %v1861, 64
        %v3226 = vpop.permute.xlu0 %3225
        %v3228 = vsel %vm1923, %v3196, 0
        %v3231 = vsel %vm1923, %v3198, 0
        %v3234 = vsel %vm1923, %v3200, 0
        %v3237 = vsel %vm1923, %v3202, 0
        %v3240 = vsel %vm1923, %v3204, 0
        %v3243 = vsel %vm1923, %v3206, 0
        %v3246 = vsel %vm1923, %v3208, 0
        %v3249 = vsel %vm1923, %v3210, 0
        %v3252 = vsel %vm1923, %v3212, 0
        %v3255 = vsel %vm1923, %v3214, 0
        %v3258 = vsel %vm1923, %v3216, 0
        %v3261 = vsel %vm1923, %v3218, 0
        %v3264 = vsel %vm1923, %v3220, 0
        %v3267 = vsel %vm1923, %v3222, 0
        %v3270 = vsel %vm1923, %v3224, 0
        %v3273 = vsel %vm1923, %v3226, 0
        %3275 = vmatprep.subr.bf16.mxu0 0
        %3276 = vmatpush1.bf16.xpose.msra.mxu0 %v3252
        %3277 = vmatprep.subr.bf16.mxu0 0
        %3278 = vmatpush1.bf16.xpose.msra.mxu0 %v3255
        %3279 = vmatprep.subr.bf16.mxu0 0
        %3280 = vmatpush1.bf16.xpose.msra.mxu0 %v3258
        %3281 = vmatprep.subr.bf16.mxu0 0
        %3282 = vmatpush1.bf16.xpose.msra.mxu0 %v3261
        %3283 = vmatprep.subr.bf16.mxu0 0
        %3284 = vmatpush1.bf16.xpose.msra.mxu0 %v3264
        %3285 = vmatprep.subr.bf16.mxu0 0
        %3286 = vmatpush1.bf16.xpose.msra.mxu0 %v3267
        %3287 = vmatprep.subr.bf16.mxu0 0
        %3288 = vmatpush1.bf16.xpose.msra.mxu0 %v3270
        %3289 = vmatprep.subr.bf16.mxu0 0
        %3290 = vmatpush1.bf16.xpose.msra.mxu0 %v3273
        %3291 = vmatprep.subr.bf16.mxu0 0
        %3292 = vmatpush1.bf16.xpose.msra.mxu0 0
        %3293 = vmatprep.subr.bf16.mxu0 0
        %3294 = vmatpush1.bf16.xpose.msra.mxu0 0
        %3295 = vmatprep.subr.bf16.mxu0 0
        %3296 = vmatpush1.bf16.xpose.msra.mxu0 0
        %3297 = vmatprep.subr.bf16.mxu0 0
        %3298 = vmatpush1.bf16.xpose.msra.mxu0 0
        %3299 = vmatprep.subr.bf16.mxu0 0
        %3300 = vmatpush1.bf16.xpose.msra.mxu0 0
        %3301 = vmatprep.subr.bf16.mxu0 0
        %3302 = vmatpush1.bf16.xpose.msra.mxu0 0
        %3303 = vmatprep.subr.bf16.mxu0 0
        %3304 = vmatpush1.bf16.xpose.msra.mxu0 0
        %3305 = vmatprep.subr.bf16.mxu0 0
        %3306 = vmatpush1.bf16.xpose.msra.mxu0 0
        %3307 = vmatprep.mubr.bf16.mxu0 0
        %3308 = vmatmul.mubr.bf16.gmra.mrb[0].mxu0 %v3228
        %v3309 = vpop.f32.mrb[0].mxu0
        %v3310 = vadd.f32 0.0, %v3309
        %v3311 = vpop.f32.mrb[0].mxu0
        %v3312 = vpop.f32.mrb[0].mxu0
        %v3313 = vadd.f32 0.0, %v3312
        %v3314 = vpop.f32.mrb[0].mxu0
        %3315 = vmatprep.mubr.bf16.mxu0 0
        %3316 = vmatmul.mubr.bf16.gmra.mrb[0].mxu0 %v3231
        %v3317 = vpop.f32.mrb[0].mxu0
        %v3318 = vadd.f32 0.0, %v3317
        %v3319 = vpop.f32.mrb[0].mxu0
        %v3320 = vpop.f32.mrb[0].mxu0
        %v3321 = vadd.f32 0.0, %v3320
        %v3322 = vpop.f32.mrb[0].mxu0
        %3323 = vmatprep.mubr.bf16.mxu0 0
        %3324 = vmatmul.mubr.bf16.gmra.mrb[0].mxu0 %v3234
        %v3325 = vpop.f32.mrb[0].mxu0
        %v3326 = vadd.f32 0.0, %v3325
        %v3327 = vpop.f32.mrb[0].mxu0
        %v3328 = vpop.f32.mrb[0].mxu0
        %v3329 = vadd.f32 0.0, %v3328
        %v3330 = vpop.f32.mrb[0].mxu0
        %3331 = vmatprep.mubr.bf16.mxu0 0
        %3332 = vmatmul.mubr.bf16.gmra.mrb[0].mxu0 %v3237
        %v3333 = vpop.f32.mrb[0].mxu0
        %v3334 = vadd.f32 0.0, %v3333
        %v3335 = vpop.f32.mrb[0].mxu0
        %v3336 = vpop.f32.mrb[0].mxu0
        %v3337 = vadd.f32 0.0, %v3336
        %v3338 = vpop.f32.mrb[0].mxu0
        %3339 = vmatprep.mubr.bf16.mxu0 0
        %3340 = vmatmul.mubr.bf16.gmra.mrb[0].mxu0 %v3240
        %v3341 = vpop.f32.mrb[0].mxu0
        %v3342 = vadd.f32 0.0, %v3341
        %v3343 = vpop.f32.mrb[0].mxu0
        %v3344 = vpop.f32.mrb[0].mxu0
        %v3345 = vadd.f32 0.0, %v3344
        %v3346 = vpop.f32.mrb[0].mxu0
        %3347 = vmatprep.mubr.bf16.mxu0 0
        %3348 = vmatmul.mubr.bf16.gmra.mrb[0].mxu0 %v3243
        %v3349 = vpop.f32.mrb[0].mxu0
        %v3350 = vadd.f32 0.0, %v3349
        %v3351 = vpop.f32.mrb[0].mxu0
        %v3352 = vpop.f32.mrb[0].mxu0
        %v3353 = vadd.f32 0.0, %v3352
        %v3354 = vpop.f32.mrb[0].mxu0
        %3355 = vmatprep.mubr.bf16.mxu0 0
        %3356 = vmatmul.mubr.bf16.gmra.mrb[0].mxu0 %v3246
        %v3357 = vpop.f32.mrb[0].mxu0
        %v3358 = vadd.f32 0.0, %v3357
        %v3359 = vpop.f32.mrb[0].mxu0
        %v3360 = vpop.f32.mrb[0].mxu0
        %v3361 = vadd.f32 0.0, %v3360
        %v3362 = vpop.f32.mrb[0].mxu0
        %3363 = vmatprep.mubr.bf16.mxu0 0
        %3364 = vmatmul.mubr.bf16.gmra.mrb[0].mxu0 %v3249
        %v3365 = vpop.f32.mrb[0].mxu0
        %v3366 = vadd.f32 0.0, %v3365
        %v3367 = vpop.f32.mrb[0].mxu0
        %v3368 = vpop.f32.mrb[0].mxu0
        %v3369 = vadd.f32 0.0, %v3368
        %v3370 = vpop.f32.mrb[0].mxu0
        %3371 = vdwg.mxu0
        %3372 = vmax.xlane.f32.xlu0 %v3310
        %v3373 = vpop.xlane.xlu0 %3372
        %3374 = vmax.xlane.f32.xlu0 %v3313
        %v3375 = vpop.xlane.xlu0 %3374
        %3376 = vmax.xlane.f32.xlu0 %v3318
        %v3377 = vpop.xlane.xlu0 %3376
        %3378 = vmax.xlane.f32.xlu0 %v3321
        %v3379 = vpop.xlane.xlu0 %3378
        %3380 = vmax.xlane.f32.xlu0 %v3326
        %v3381 = vpop.xlane.xlu0 %3380
        %3382 = vmax.xlane.f32.xlu0 %v3329
        %v3383 = vpop.xlane.xlu0 %3382
        %3384 = vmax.xlane.f32.xlu0 %v3334
        %v3385 = vpop.xlane.xlu0 %3384
        %3386 = vmax.xlane.f32.xlu0 %v3337
        %v3387 = vpop.xlane.xlu0 %3386
        %3388 = vmax.xlane.f32.xlu0 %v3342
        %v3389 = vpop.xlane.xlu0 %3388
        %3390 = vmax.xlane.f32.xlu0 %v3345
        %v3391 = vpop.xlane.xlu0 %3390
        %3392 = vmax.xlane.f32.xlu0 %v3350
        %v3393 = vpop.xlane.xlu0 %3392
        %3394 = vmax.xlane.f32.xlu0 %v3353
        %v3395 = vpop.xlane.xlu0 %3394
        %3396 = vmax.xlane.f32.xlu0 %v3358
        %v3397 = vpop.xlane.xlu0 %3396
        %3398 = vmax.xlane.f32.xlu0 %v3361
        %v3399 = vpop.xlane.xlu0 %3398
        %3400 = vmax.xlane.f32.xlu0 %v3366
        %v3401 = vpop.xlane.xlu0 %3400
        %3402 = vmax.xlane.f32.xlu0 %v3369
        %v3403 = vpop.xlane.xlu0 %3402
        %v3404 = vsub.f32 %v3310, %v3373
        %v3405 = vsub.f32 %v3313, %v3375
        %v3406 = vsub.f32 %v3318, %v3377
        %v3407 = vsub.f32 %v3321, %v3379
        %v3408 = vsub.f32 %v3326, %v3381
        %v3409 = vsub.f32 %v3329, %v3383
        %v3410 = vsub.f32 %v3334, %v3385
        %v3411 = vsub.f32 %v3337, %v3387
        %v3412 = vsub.f32 %v3342, %v3389
        %v3413 = vsub.f32 %v3345, %v3391
        %v3414 = vsub.f32 %v3350, %v3393
        %v3415 = vsub.f32 %v3353, %v3395
        %v3416 = vsub.f32 %v3358, %v3397
        %v3417 = vsub.f32 %v3361, %v3399
        %v3418 = vsub.f32 %v3366, %v3401
        %v3419 = vsub.f32 %v3369, %v3403
        %v3420 = vmul.f32 %v3404, 1.442695
        %v3421 = vpow.pop %v3420
        %v3422 = vmul.f32 %v3405, 1.442695
        %v3423 = vpow.pop %v3422
        %v3424 = vmul.f32 %v3406, 1.442695
        %v3425 = vpow.pop %v3424
        %v3426 = vmul.f32 %v3407, 1.442695
        %v3427 = vpow.pop %v3426
        %v3428 = vmul.f32 %v3408, 1.442695
        %v3429 = vpow.pop %v3428
        %v3430 = vmul.f32 %v3409, 1.442695
        %v3431 = vpow.pop %v3430
        %v3432 = vmul.f32 %v3410, 1.442695
        %v3433 = vpow.pop %v3432
        %v3434 = vmul.f32 %v3411, 1.442695
        %v3435 = vpow.pop %v3434
        %v3436 = vmul.f32 %v3412, 1.442695
        %v3437 = vpow.pop %v3436
        %v3438 = vmul.f32 %v3413, 1.442695
        %v3439 = vpow.pop %v3438
        %v3440 = vmul.f32 %v3414, 1.442695
        %v3441 = vpow.pop %v3440
        %v3442 = vmul.f32 %v3415, 1.442695
        %v3443 = vpow.pop %v3442
        %v3444 = vmul.f32 %v3416, 1.442695
        %v3445 = vpow.pop %v3444
        %v3446 = vmul.f32 %v3417, 1.442695
        %v3447 = vpow.pop %v3446
        %v3448 = vmul.f32 %v3418, 1.442695
        %v3449 = vpow.pop %v3448
        %v3450 = vmul.f32 %v3419, 1.442695
        %v3451 = vpow.pop %v3450
        %3452 = vadd.xlane.f32.xlu0 %v3421
        %v3453 = vpop.xlane.xlu0 %3452
        %3454 = vadd.xlane.f32.xlu0 %v3423
        %v3455 = vpop.xlane.xlu0 %3454
        %3456 = vadd.xlane.f32.xlu0 %v3425
        %v3457 = vpop.xlane.xlu0 %3456
        %3458 = vadd.xlane.f32.xlu0 %v3427
        %v3459 = vpop.xlane.xlu0 %3458
        %3460 = vadd.xlane.f32.xlu0 %v3429
        %v3461 = vpop.xlane.xlu0 %3460
        %3462 = vadd.xlane.f32.xlu0 %v3431
        %v3463 = vpop.xlane.xlu0 %3462
        %3464 = vadd.xlane.f32.xlu0 %v3433
        %v3465 = vpop.xlane.xlu0 %3464
        %3466 = vadd.xlane.f32.xlu0 %v3435
        %v3467 = vpop.xlane.xlu0 %3466
        %3468 = vadd.xlane.f32.xlu0 %v3437
        %v3469 = vpop.xlane.xlu0 %3468
        %3470 = vadd.xlane.f32.xlu0 %v3439
        %v3471 = vpop.xlane.xlu0 %3470
        %3472 = vadd.xlane.f32.xlu0 %v3441
        %v3473 = vpop.xlane.xlu0 %3472
        %3474 = vadd.xlane.f32.xlu0 %v3443
        %v3475 = vpop.xlane.xlu0 %3474
        %3476 = vadd.xlane.f32.xlu0 %v3445
        %v3477 = vpop.xlane.xlu0 %3476
        %3478 = vadd.xlane.f32.xlu0 %v3447
        %v3479 = vpop.xlane.xlu0 %3478
        %3480 = vadd.xlane.f32.xlu0 %v3449
        %v3481 = vpop.xlane.xlu0 %3480
        %3482 = vadd.xlane.f32.xlu0 %v3451
        %v3483 = vpop.xlane.xlu0 %3482
        %v3484 = vrcp.pop %v3453
        %v3485 = vrcp.pop %v3455
        %v3486 = vrcp.pop %v3457
        %v3487 = vrcp.pop %v3459
        %v3488 = vrcp.pop %v3461
        %v3489 = vrcp.pop %v3463
        %v3490 = vrcp.pop %v3465
        %v3491 = vrcp.pop %v3467
        %v3492 = vrcp.pop %v3469
        %v3493 = vrcp.pop %v3471
        %v3494 = vrcp.pop %v3473
        %v3495 = vrcp.pop %v3475
        %v3496 = vrcp.pop %v3477
        %v3497 = vrcp.pop %v3479
        %v3498 = vrcp.pop %v3481
        %v3499 = vrcp.pop %v3483
        %v3500 = vmul.f32 %v3421, %v3484
        %v3501 = vmul.f32 %v3423, %v3485
        %v3502 = vmul.f32 %v3425, %v3486
        %v3503 = vmul.f32 %v3427, %v3487
        %v3504 = vmul.f32 %v3429, %v3488
        %v3505 = vmul.f32 %v3431, %v3489
        %v3506 = vmul.f32 %v3433, %v3490
        %v3507 = vmul.f32 %v3435, %v3491
        %v3508 = vmul.f32 %v3437, %v3492
        %v3509 = vmul.f32 %v3439, %v3493
        %v3510 = vmul.f32 %v3441, %v3494
        %v3511 = vmul.f32 %v3443, %v3495
        %v3512 = vmul.f32 %v3445, %v3496
        %v3513 = vmul.f32 %v3447, %v3497
        %v3514 = vmul.f32 %v3449, %v3498
        %v3515 = vmul.f32 %v3451, %v3499
        %v3516 = vpack.c.bf16 %v3501, %v3500
        %v3517 = vpack.c.bf16 %v3503, %v3502
        %v3518 = vpack.c.bf16 %v3505, %v3504
        %v3519 = vpack.c.bf16 %v3507, %v3506
        %v3520 = vpack.c.bf16 %v3509, %v3508
        %v3521 = vpack.c.bf16 %v3511, %v3510
        %v3522 = vpack.c.bf16 %v3513, %v3512
        %v3523 = vpack.c.bf16 %v3515, %v3514
        %3524 = vrot.lane.b32.xlu0 %v1863, 64
        %v3525 = vpop.permute.xlu0 %3524
        %3526 = vrot.lane.b32.xlu0 %v1865, 64
        %v3527 = vpop.permute.xlu0 %3526
        %3528 = vrot.lane.b32.xlu0 %v1867, 64
        %v3529 = vpop.permute.xlu0 %3528
        %3530 = vrot.lane.b32.xlu0 %v1869, 64
        %v3531 = vpop.permute.xlu0 %3530
        %3532 = vrot.lane.b32.xlu0 %v1871, 64
        %v3533 = vpop.permute.xlu0 %3532
        %3534 = vrot.lane.b32.xlu0 %v1873, 64
        %v3535 = vpop.permute.xlu0 %3534
        %3536 = vrot.lane.b32.xlu0 %v1875, 64
        %v3537 = vpop.permute.xlu0 %3536
        %3538 = vrot.lane.b32.xlu0 %v1877, 64
        %v3539 = vpop.permute.xlu0 %3538
        %3548 = vmatprep.subr.bf16.mxu0 0
        %3549 = vmatpush1.bf16.msra.mxu0 %v3525
        %3550 = vmatprep.subr.bf16.mxu0 0
        %3551 = vmatpush1.bf16.msra.mxu0 %v3527
        %3552 = vmatprep.subr.bf16.mxu0 0
        %3553 = vmatpush1.bf16.msra.mxu0 %v3529
        %3554 = vmatprep.subr.bf16.mxu0 0
        %3555 = vmatpush1.bf16.msra.mxu0 %v3531
        %3556 = vmatprep.subr.bf16.mxu0 0
        %3557 = vmatpush1.bf16.msra.mxu0 %v3533
        %3558 = vmatprep.subr.bf16.mxu0 0
        %3559 = vmatpush1.bf16.msra.mxu0 %v3535
        %3560 = vmatprep.subr.bf16.mxu0 0
        %3561 = vmatpush1.bf16.msra.mxu0 %v3537
        %3562 = vmatprep.subr.bf16.mxu0 0
        %3563 = vmatpush1.bf16.msra.mxu0 %v3539
        %3564 = vmatprep.subr.bf16.mxu0 0
        %3565 = vmatpush1.bf16.msra.mxu0 0
        %3566 = vmatprep.subr.bf16.mxu0 0
        %3567 = vmatpush1.bf16.msra.mxu0 0
        %3568 = vmatprep.subr.bf16.mxu0 0
        %3569 = vmatpush1.bf16.msra.mxu0 0
        %3570 = vmatprep.subr.bf16.mxu0 0
        %3571 = vmatpush1.bf16.msra.mxu0 0
        %3572 = vmatprep.subr.bf16.mxu0 0
        %3573 = vmatpush1.bf16.msra.mxu0 0
        %3574 = vmatprep.subr.bf16.mxu0 0
        %3575 = vmatpush1.bf16.msra.mxu0 0
        %3576 = vmatprep.subr.bf16.mxu0 0
        %3577 = vmatpush1.bf16.msra.mxu0 0
        %3578 = vmatprep.subr.bf16.mxu0 0
        %3579 = vmatpush1.bf16.msra.mxu0 0
        %3580 = vmatprep.mubr.bf16.mxu0 0
        %3581 = vmatmul.mubr.bf16.gmra.mrb[0].mxu0 %v3516
        %v3582 = vpop.f32.mrb[0].mxu0
        %v3583 = vadd.f32 0.0, %v3582
        %v3584 = vpop.f32.mrb[0].mxu0
        %v3585 = vpop.f32.mrb[0].mxu0
        %v3586 = vadd.f32 0.0, %v3585
        %v3587 = vpop.f32.mrb[0].mxu0
        %3588 = vmatprep.mubr.bf16.mxu0 0
        %3589 = vmatmul.mubr.bf16.gmra.mrb[0].mxu0 %v3517
        %v3590 = vpop.f32.mrb[0].mxu0
        %v3591 = vadd.f32 0.0, %v3590
        %v3592 = vpop.f32.mrb[0].mxu0
        %v3593 = vpop.f32.mrb[0].mxu0
        %v3594 = vadd.f32 0.0, %v3593
        %v3595 = vpop.f32.mrb[0].mxu0
        %3596 = vmatprep.mubr.bf16.mxu0 0
        %3597 = vmatmul.mubr.bf16.gmra.mrb[0].mxu0 %v3518
        %v3598 = vpop.f32.mrb[0].mxu0
        %v3599 = vadd.f32 0.0, %v3598
        %v3600 = vpop.f32.mrb[0].mxu0
        %v3601 = vpop.f32.mrb[0].mxu0
        %v3602 = vadd.f32 0.0, %v3601
        %v3603 = vpop.f32.mrb[0].mxu0
        %3604 = vmatprep.mubr.bf16.mxu0 0
        %3605 = vmatmul.mubr.bf16.gmra.mrb[0].mxu0 %v3519
        %v3606 = vpop.f32.mrb[0].mxu0
        %v3607 = vadd.f32 0.0, %v3606
        %v3608 = vpop.f32.mrb[0].mxu0
        %v3609 = vpop.f32.mrb[0].mxu0
        %v3610 = vadd.f32 0.0, %v3609
        %v3611 = vpop.f32.mrb[0].mxu0
        %3612 = vmatprep.mubr.bf16.mxu0 0
        %3613 = vmatmul.mubr.bf16.gmra.mrb[0].mxu0 %v3520
        %v3614 = vpop.f32.mrb[0].mxu0
        %v3615 = vadd.f32 0.0, %v3614
        %v3616 = vpop.f32.mrb[0].mxu0
        %v3617 = vpop.f32.mrb[0].mxu0
        %v3618 = vadd.f32 0.0, %v3617
        %v3619 = vpop.f32.mrb[0].mxu0
        %3620 = vmatprep.mubr.bf16.mxu0 0
        %3621 = vmatmul.mubr.bf16.gmra.mrb[0].mxu0 %v3521
        %v3622 = vpop.f32.mrb[0].mxu0
        %v3623 = vadd.f32 0.0, %v3622
        %v3624 = vpop.f32.mrb[0].mxu0
        %v3625 = vpop.f32.mrb[0].mxu0
        %v3626 = vadd.f32 0.0, %v3625
        %v3627 = vpop.f32.mrb[0].mxu0
        %3628 = vmatprep.mubr.bf16.mxu0 0
        %3629 = vmatmul.mubr.bf16.gmra.mrb[0].mxu0 %v3522
        %v3630 = vpop.f32.mrb[0].mxu0
        %v3631 = vadd.f32 0.0, %v3630
        %v3632 = vpop.f32.mrb[0].mxu0
        %v3633 = vpop.f32.mrb[0].mxu0
        %v3634 = vadd.f32 0.0, %v3633
        %v3635 = vpop.f32.mrb[0].mxu0
        %3636 = vmatprep.mubr.bf16.mxu0 0
        %3637 = vmatmul.mubr.bf16.gmra.mrb[0].mxu0 %v3523
        %v3638 = vpop.f32.mrb[0].mxu0
        %v3639 = vadd.f32 0.0, %v3638
        %v3640 = vpop.f32.mrb[0].mxu0
        %v3641 = vpop.f32.mrb[0].mxu0
        %v3642 = vadd.f32 0.0, %v3641
        %v3643 = vpop.f32.mrb[0].mxu0
        %3644 = vdwg.mxu0
        %v3645 = vpack.c.bf16 %v3586, %v3583
        %v3646 = vpack.c.bf16 %v3594, %v3591
        %v3647 = vpack.c.bf16 %v3602, %v3599
        %v3648 = vpack.c.bf16 %v3610, %v3607
        %v3649 = vpack.c.bf16 %v3618, %v3615
        %v3650 = vpack.c.bf16 %v3626, %v3623
        %v3651 = vpack.c.bf16 %v3634, %v3631
        %v3652 = vpack.c.bf16 %v3642, %v3639
        %s3653 = scalar_lea.vmem [#allocation7], 64
        %v3654 = vld [vmem:[%s3653] sm:$0xff]
        %v3655 = vld [vmem:[%s3653 + $0x8] sm:$0xff]
        %v3656 = vld [vmem:[%s3653 + $0x10] sm:$0xff]
        %v3657 = vld [vmem:[%s3653 + $0x18] sm:$0xff]
        %v3662 = vunpack.c.l.b16 %v3654
        %v3663 = vunpack.c.h.b16 %v3654
        %v3664 = vunpack.c.l.b16 %v3655
        %v3665 = vunpack.c.h.b16 %v3655
        %v3666 = vunpack.c.l.b16 %v3656
        %v3667 = vunpack.c.h.b16 %v3656
        %v3668 = vunpack.c.l.b16 %v3657
        %v3669 = vunpack.c.h.b16 %v3657
        %v3670 = vpack.c.b16 %v3664, %v3662
        %v3671 = vpack.c.b16 %v3665, %v3663
        %v3672 = vpack.c.b16 %v3668, %v3666
        %v3673 = vpack.c.b16 %v3669, %v3667
        %v3679 = vsel %vm1923, %v3645, 0
        %v3682 = vsel %vm1923, %v3646, 0
        %v3685 = vsel %vm1923, %v3647, 0
        %v3688 = vsel %vm1923, %v3648, 0
        %v3691 = vsel %vm1923, %v3649, 0
        %v3694 = vsel %vm1923, %v3650, 0
        %v3697 = vsel %vm1923, %v3651, 0
        %v3700 = vsel %vm1923, %v3652, 0
        %3702 = vmatprep.subr.bf16.mxu0 %v3671
        %3703 = vmatpush1.bf16.msra.mxu0 %v3670
        %3704 = vmatprep.subr.bf16.mxu0 %v3673
        %3705 = vmatpush1.bf16.msra.mxu0 %v3672
        %3706 = vmatprep.subr.bf16.mxu0 0
        %3707 = vmatpush1.bf16.msra.mxu0 0
        %3708 = vmatprep.subr.bf16.mxu0 0
        %3709 = vmatpush1.bf16.msra.mxu0 0
        %3710 = vmatprep.subr.bf16.mxu0 0
        %3711 = vmatpush1.bf16.msra.mxu0 0
        %3712 = vmatprep.subr.bf16.mxu0 0
        %3713 = vmatpush1.bf16.msra.mxu0 0
        %3714 = vmatprep.subr.bf16.mxu0 0
        %3715 = vmatpush1.bf16.msra.mxu0 0
        %3716 = vmatprep.subr.bf16.mxu0 0
        %3717 = vmatpush1.bf16.msra.mxu0 0
        %3718 = vmatprep.subr.bf16.mxu0 0
        %3719 = vmatpush1.bf16.msra.mxu0 0
        %3720 = vmatprep.subr.bf16.mxu0 0
        %3721 = vmatpush1.bf16.msra.mxu0 0
        %3722 = vmatprep.subr.bf16.mxu0 0
        %3723 = vmatpush1.bf16.msra.mxu0 0
        %3724 = vmatprep.subr.bf16.mxu0 0
        %3725 = vmatpush1.bf16.msra.mxu0 0
        %3726 = vmatprep.subr.bf16.mxu0 0
        %3727 = vmatpush1.bf16.msra.mxu0 0
        %3728 = vmatprep.subr.bf16.mxu0 0
        %3729 = vmatpush1.bf16.msra.mxu0 0
        %3730 = vmatprep.subr.bf16.mxu0 0
        %3731 = vmatpush1.bf16.msra.mxu0 0
        %3732 = vmatprep.subr.bf16.mxu0 0
        %3733 = vmatpush1.bf16.msra.mxu0 0
        %3734 = vmatprep.mubr.bf16.mxu0 0
        %3735 = vmatmul.mubr.bf16.gmra.mrb[0].mxu0 %v3679
        %v3736 = vpop.f32.mrb[0].mxu0
        %v3737 = vadd.f32 0.0, %v3736
        %v3738 = vpop.f32.mrb[0].mxu0
        %v3739 = vadd.f32 0.0, %v3738
        %v3740 = vpop.f32.mrb[0].mxu0
        %v3741 = vadd.f32 0.0, %v3740
        %v3742 = vpop.f32.mrb[0].mxu0
        %v3743 = vadd.f32 0.0, %v3742
        %3744 = vmatprep.mubr.bf16.mxu0 0
        %3745 = vmatmul.mubr.bf16.gmra.mrb[0].mxu0 %v3682
        %v3746 = vpop.f32.mrb[0].mxu0
        %v3747 = vadd.f32 0.0, %v3746
        %v3748 = vpop.f32.mrb[0].mxu0
        %v3749 = vadd.f32 0.0, %v3748
        %v3750 = vpop.f32.mrb[0].mxu0
        %v3751 = vadd.f32 0.0, %v3750
        %v3752 = vpop.f32.mrb[0].mxu0
        %v3753 = vadd.f32 0.0, %v3752
        %3754 = vmatprep.mubr.bf16.mxu0 0
        %3755 = vmatmul.mubr.bf16.gmra.mrb[0].mxu0 %v3685
        %v3756 = vpop.f32.mrb[0].mxu0
        %v3757 = vadd.f32 0.0, %v3756
        %v3758 = vpop.f32.mrb[0].mxu0
        %v3759 = vadd.f32 0.0, %v3758
        %v3760 = vpop.f32.mrb[0].mxu0
        %v3761 = vadd.f32 0.0, %v3760
        %v3762 = vpop.f32.mrb[0].mxu0
        %v3763 = vadd.f32 0.0, %v3762
        %3764 = vmatprep.mubr.bf16.mxu0 0
        %3765 = vmatmul.mubr.bf16.gmra.mrb[0].mxu0 %v3688
        %v3766 = vpop.f32.mrb[0].mxu0
        %v3767 = vadd.f32 0.0, %v3766
        %v3768 = vpop.f32.mrb[0].mxu0
        %v3769 = vadd.f32 0.0, %v3768
        %v3770 = vpop.f32.mrb[0].mxu0
        %v3771 = vadd.f32 0.0, %v3770
        %v3772 = vpop.f32.mrb[0].mxu0
        %v3773 = vadd.f32 0.0, %v3772
        %3774 = vmatprep.mubr.bf16.mxu0 0
        %3775 = vmatmul.mubr.bf16.gmra.mrb[0].mxu0 %v3691
        %v3776 = vpop.f32.mrb[0].mxu0
        %v3777 = vadd.f32 0.0, %v3776
        %v3778 = vpop.f32.mrb[0].mxu0
        %v3779 = vadd.f32 0.0, %v3778
        %v3780 = vpop.f32.mrb[0].mxu0
        %v3781 = vadd.f32 0.0, %v3780
        %v3782 = vpop.f32.mrb[0].mxu0
        %v3783 = vadd.f32 0.0, %v3782
        %3784 = vmatprep.mubr.bf16.mxu0 0
        %3785 = vmatmul.mubr.bf16.gmra.mrb[0].mxu0 %v3694
        %v3786 = vpop.f32.mrb[0].mxu0
        %v3787 = vadd.f32 0.0, %v3786
        %v3788 = vpop.f32.mrb[0].mxu0
        %v3789 = vadd.f32 0.0, %v3788
        %v3790 = vpop.f32.mrb[0].mxu0
        %v3791 = vadd.f32 0.0, %v3790
        %v3792 = vpop.f32.mrb[0].mxu0
        %v3793 = vadd.f32 0.0, %v3792
        %3794 = vmatprep.mubr.bf16.mxu0 0
        %3795 = vmatmul.mubr.bf16.gmra.mrb[0].mxu0 %v3697
        %v3796 = vpop.f32.mrb[0].mxu0
        %v3797 = vadd.f32 0.0, %v3796
        %v3798 = vpop.f32.mrb[0].mxu0
        %v3799 = vadd.f32 0.0, %v3798
        %v3800 = vpop.f32.mrb[0].mxu0
        %v3801 = vadd.f32 0.0, %v3800
        %v3802 = vpop.f32.mrb[0].mxu0
        %v3803 = vadd.f32 0.0, %v3802
        %3804 = vmatprep.mubr.bf16.mxu0 0
        %3805 = vmatmul.mubr.bf16.gmra.mrb[0].mxu0 %v3700
        %v3806 = vpop.f32.mrb[0].mxu0
        %v3807 = vadd.f32 0.0, %v3806
        %v3808 = vpop.f32.mrb[0].mxu0
        %v3809 = vadd.f32 0.0, %v3808
        %v3810 = vpop.f32.mrb[0].mxu0
        %v3811 = vadd.f32 0.0, %v3810
        %v3812 = vpop.f32.mrb[0].mxu0
        %v3813 = vadd.f32 0.0, %v3812
        %3814 = vdwg.mxu0
        %v3815 = vadd.f32 %v3163, %v3737
        %v3816 = vadd.f32 %v3164, %v3739
        %v3817 = vadd.f32 %v3165, %v3741
        %v3818 = vadd.f32 %v3166, %v3743
        %v3819 = vadd.f32 %v3167, %v3747
        %v3820 = vadd.f32 %v3168, %v3749
        %v3821 = vadd.f32 %v3169, %v3751
        %v3822 = vadd.f32 %v3170, %v3753
        %v3823 = vadd.f32 %v3171, %v3757
        %v3824 = vadd.f32 %v3172, %v3759
        %v3825 = vadd.f32 %v3173, %v3761
        %v3826 = vadd.f32 %v3174, %v3763
        %v3827 = vadd.f32 %v3175, %v3767
        %v3828 = vadd.f32 %v3176, %v3769
        %v3829 = vadd.f32 %v3177, %v3771
        %v3830 = vadd.f32 %v3178, %v3773
        %v3831 = vadd.f32 %v3179, %v3777
        %v3832 = vadd.f32 %v3180, %v3779
        %v3833 = vadd.f32 %v3181, %v3781
        %v3834 = vadd.f32 %v3182, %v3783
        %v3835 = vadd.f32 %v3183, %v3787
        %v3836 = vadd.f32 %v3184, %v3789
        %v3837 = vadd.f32 %v3185, %v3791
        %v3838 = vadd.f32 %v3186, %v3793
        %v3839 = vadd.f32 %v3187, %v3797
        %v3840 = vadd.f32 %v3188, %v3799
        %v3841 = vadd.f32 %v3189, %v3801
        %v3842 = vadd.f32 %v3190, %v3803
        %v3843 = vadd.f32 %v3191, %v3807
        %v3844 = vadd.f32 %v3192, %v3809
        %v3845 = vadd.f32 %v3193, %v3811
        %v3846 = vadd.f32 %v3194, %v3813
        %3847 = vrot.lane.b32.xlu0 %v1831, 32
        %v3848 = vpop.permute.xlu0 %3847
        %3849 = vrot.lane.b32.xlu0 %v1833, 32
        %v3850 = vpop.permute.xlu0 %3849
        %3851 = vrot.lane.b32.xlu0 %v1835, 32
        %v3852 = vpop.permute.xlu0 %3851
        %3853 = vrot.lane.b32.xlu0 %v1837, 32
        %v3854 = vpop.permute.xlu0 %3853
        %3855 = vrot.lane.b32.xlu0 %v1839, 32
        %v3856 = vpop.permute.xlu0 %3855
        %3857 = vrot.lane.b32.xlu0 %v1841, 32
        %v3858 = vpop.permute.xlu0 %3857
        %3859 = vrot.lane.b32.xlu0 %v1843, 32
        %v3860 = vpop.permute.xlu0 %3859
        %3861 = vrot.lane.b32.xlu0 %v1845, 32
        %v3862 = vpop.permute.xlu0 %3861
        %3863 = vrot.lane.b32.xlu0 %v1847, 32
        %v3864 = vpop.permute.xlu0 %3863
        %3865 = vrot.lane.b32.xlu0 %v1849, 32
        %v3866 = vpop.permute.xlu0 %3865
        %3867 = vrot.lane.b32.xlu0 %v1851, 32
        %v3868 = vpop.permute.xlu0 %3867
        %3869 = vrot.lane.b32.xlu0 %v1853, 32
        %v3870 = vpop.permute.xlu0 %3869
        %3871 = vrot.lane.b32.xlu0 %v1855, 32
        %v3872 = vpop.permute.xlu0 %3871
        %3873 = vrot.lane.b32.xlu0 %v1857, 32
        %v3874 = vpop.permute.xlu0 %3873
        %3875 = vrot.lane.b32.xlu0 %v1859, 32
        %v3876 = vpop.permute.xlu0 %3875
        %3877 = vrot.lane.b32.xlu0 %v1861, 32
        %v3878 = vpop.permute.xlu0 %3877
        %v3880 = vsel %vm1923, %v3848, 0
        %v3883 = vsel %vm1923, %v3850, 0
        %v3886 = vsel %vm1923, %v3852, 0
        %v3889 = vsel %vm1923, %v3854, 0
        %v3892 = vsel %vm1923, %v3856, 0
        %v3895 = vsel %vm1923, %v3858, 0
        %v3898 = vsel %vm1923, %v3860, 0
        %v3901 = vsel %vm1923, %v3862, 0
        %v3904 = vsel %vm1923, %v3864, 0
        %v3907 = vsel %vm1923, %v3866, 0
        %v3910 = vsel %vm1923, %v3868, 0
        %v3913 = vsel %vm1923, %v3870, 0
        %v3916 = vsel %vm1923, %v3872, 0
        %v3919 = vsel %vm1923, %v3874, 0
        %v3922 = vsel %vm1923, %v3876, 0
        %v3925 = vsel %vm1923, %v3878, 0
        %3927 = vmatprep.subr.bf16.mxu0 0
        %3928 = vmatpush1.bf16.xpose.msra.mxu0 %v3904
        %3929 = vmatprep.subr.bf16.mxu0 0
        %3930 = vmatpush1.bf16.xpose.msra.mxu0 %v3907
        %3931 = vmatprep.subr.bf16.mxu0 0
        %3932 = vmatpush1.bf16.xpose.msra.mxu0 %v3910
        %3933 = vmatprep.subr.bf16.mxu0 0
        %3934 = vmatpush1.bf16.xpose.msra.mxu0 %v3913
        %3935 = vmatprep.subr.bf16.mxu0 0
        %3936 = vmatpush1.bf16.xpose.msra.mxu0 %v3916
        %3937 = vmatprep.subr.bf16.mxu0 0
        %3938 = vmatpush1.bf16.xpose.msra.mxu0 %v3919
        %3939 = vmatprep.subr.bf16.mxu0 0
        %3940 = vmatpush1.bf16.xpose.msra.mxu0 %v3922
        %3941 = vmatprep.subr.bf16.mxu0 0
        %3942 = vmatpush1.bf16.xpose.msra.mxu0 %v3925
        %3943 = vmatprep.subr.bf16.mxu0 0
        %3944 = vmatpush1.bf16.xpose.msra.mxu0 0
        %3945 = vmatprep.subr.bf16.mxu0 0
        %3946 = vmatpush1.bf16.xpose.msra.mxu0 0
        %3947 = vmatprep.subr.bf16.mxu0 0
        %3948 = vmatpush1.bf16.xpose.msra.mxu0 0
        %3949 = vmatprep.subr.bf16.mxu0 0
        %3950 = vmatpush1.bf16.xpose.msra.mxu0 0
        %3951 = vmatprep.subr.bf16.mxu0 0
        %3952 = vmatpush1.bf16.xpose.msra.mxu0 0
        %3953 = vmatprep.subr.bf16.mxu0 0
        %3954 = vmatpush1.bf16.xpose.msra.mxu0 0
        %3955 = vmatprep.subr.bf16.mxu0 0
        %3956 = vmatpush1.bf16.xpose.msra.mxu0 0
        %3957 = vmatprep.subr.bf16.mxu0 0
        %3958 = vmatpush1.bf16.xpose.msra.mxu0 0
        %3959 = vmatprep.mubr.bf16.mxu0 0
        %3960 = vmatmul.mubr.bf16.gmra.mrb[0].mxu0 %v3880
        %v3961 = vpop.f32.mrb[0].mxu0
        %v3962 = vadd.f32 0.0, %v3961
        %v3963 = vpop.f32.mrb[0].mxu0
        %v3964 = vpop.f32.mrb[0].mxu0
        %v3965 = vadd.f32 0.0, %v3964
        %v3966 = vpop.f32.mrb[0].mxu0
        %3967 = vmatprep.mubr.bf16.mxu0 0
        %3968 = vmatmul.mubr.bf16.gmra.mrb[0].mxu0 %v3883
        %v3969 = vpop.f32.mrb[0].mxu0
        %v3970 = vadd.f32 0.0, %v3969
        %v3971 = vpop.f32.mrb[0].mxu0
        %v3972 = vpop.f32.mrb[0].mxu0
        %v3973 = vadd.f32 0.0, %v3972
        %v3974 = vpop.f32.mrb[0].mxu0
        %3975 = vmatprep.mubr.bf16.mxu0 0
        %3976 = vmatmul.mubr.bf16.gmra.mrb[0].mxu0 %v3886
        %v3977 = vpop.f32.mrb[0].mxu0
        %v3978 = vadd.f32 0.0, %v3977
        %v3979 = vpop.f32.mrb[0].mxu0
        %v3980 = vpop.f32.mrb[0].mxu0
        %v3981 = vadd.f32 0.0, %v3980
        %v3982 = vpop.f32.mrb[0].mxu0
        %3983 = vmatprep.mubr.bf16.mxu0 0
        %3984 = vmatmul.mubr.bf16.gmra.mrb[0].mxu0 %v3889
        %v3985 = vpop.f32.mrb[0].mxu0
        %v3986 = vadd.f32 0.0, %v3985
        %v3987 = vpop.f32.mrb[0].mxu0
        %v3988 = vpop.f32.mrb[0].mxu0
        %v3989 = vadd.f32 0.0, %v3988
        %v3990 = vpop.f32.mrb[0].mxu0
        %3991 = vmatprep.mubr.bf16.mxu0 0
        %3992 = vmatmul.mubr.bf16.gmra.mrb[0].mxu0 %v3892
        %v3993 = vpop.f32.mrb[0].mxu0
        %v3994 = vadd.f32 0.0, %v3993
        %v3995 = vpop.f32.mrb[0].mxu0
        %v3996 = vpop.f32.mrb[0].mxu0
        %v3997 = vadd.f32 0.0, %v3996
        %v3998 = vpop.f32.mrb[0].mxu0
        %3999 = vmatprep.mubr.bf16.mxu0 0
        %4000 = vmatmul.mubr.bf16.gmra.mrb[0].mxu0 %v3895
        %v4001 = vpop.f32.mrb[0].mxu0
        %v4002 = vadd.f32 0.0, %v4001
        %v4003 = vpop.f32.mrb[0].mxu0
        %v4004 = vpop.f32.mrb[0].mxu0
        %v4005 = vadd.f32 0.0, %v4004
        %v4006 = vpop.f32.mrb[0].mxu0
        %4007 = vmatprep.mubr.bf16.mxu0 0
        %4008 = vmatmul.mubr.bf16.gmra.mrb[0].mxu0 %v3898
        %v4009 = vpop.f32.mrb[0].mxu0
        %v4010 = vadd.f32 0.0, %v4009
        %v4011 = vpop.f32.mrb[0].mxu0
        %v4012 = vpop.f32.mrb[0].mxu0
        %v4013 = vadd.f32 0.0, %v4012
        %v4014 = vpop.f32.mrb[0].mxu0
        %4015 = vmatprep.mubr.bf16.mxu0 0
        %4016 = vmatmul.mubr.bf16.gmra.mrb[0].mxu0 %v3901
        %v4017 = vpop.f32.mrb[0].mxu0
        %v4018 = vadd.f32 0.0, %v4017
        %v4019 = vpop.f32.mrb[0].mxu0
        %v4020 = vpop.f32.mrb[0].mxu0
        %v4021 = vadd.f32 0.0, %v4020
        %v4022 = vpop.f32.mrb[0].mxu0
        %4023 = vdwg.mxu0
        %4024 = vmax.xlane.f32.xlu0 %v3962
        %v4025 = vpop.xlane.xlu0 %4024
        %4026 = vmax.xlane.f32.xlu0 %v3965
        %v4027 = vpop.xlane.xlu0 %4026
        %4028 = vmax.xlane.f32.xlu0 %v3970
        %v4029 = vpop.xlane.xlu0 %4028
        %4030 = vmax.xlane.f32.xlu0 %v3973
        %v4031 = vpop.xlane.xlu0 %4030
        %4032 = vmax.xlane.f32.xlu0 %v3978
        %v4033 = vpop.xlane.xlu0 %4032
        %4034 = vmax.xlane.f32.xlu0 %v3981
        %v4035 = vpop.xlane.xlu0 %4034
        %4036 = vmax.xlane.f32.xlu0 %v3986
        %v4037 = vpop.xlane.xlu0 %4036
        %4038 = vmax.xlane.f32.xlu0 %v3989
        %v4039 = vpop.xlane.xlu0 %4038
        %4040 = vmax.xlane.f32.xlu0 %v3994
        %v4041 = vpop.xlane.xlu0 %4040
        %4042 = vmax.xlane.f32.xlu0 %v3997
        %v4043 = vpop.xlane.xlu0 %4042
        %4044 = vmax.xlane.f32.xlu0 %v4002
        %v4045 = vpop.xlane.xlu0 %4044
        %4046 = vmax.xlane.f32.xlu0 %v4005
        %v4047 = vpop.xlane.xlu0 %4046
        %4048 = vmax.xlane.f32.xlu0 %v4010
        %v4049 = vpop.xlane.xlu0 %4048
        %4050 = vmax.xlane.f32.xlu0 %v4013
        %v4051 = vpop.xlane.xlu0 %4050
        %4052 = vmax.xlane.f32.xlu0 %v4018
        %v4053 = vpop.xlane.xlu0 %4052
        %4054 = vmax.xlane.f32.xlu0 %v4021
        %v4055 = vpop.xlane.xlu0 %4054
        %v4056 = vsub.f32 %v3962, %v4025
        %v4057 = vsub.f32 %v3965, %v4027
        %v4058 = vsub.f32 %v3970, %v4029
        %v4059 = vsub.f32 %v3973, %v4031
        %v4060 = vsub.f32 %v3978, %v4033
        %v4061 = vsub.f32 %v3981, %v4035
        %v4062 = vsub.f32 %v3986, %v4037
        %v4063 = vsub.f32 %v3989, %v4039
        %v4064 = vsub.f32 %v3994, %v4041
        %v4065 = vsub.f32 %v3997, %v4043
        %v4066 = vsub.f32 %v4002, %v4045
        %v4067 = vsub.f32 %v4005, %v4047
        %v4068 = vsub.f32 %v4010, %v4049
        %v4069 = vsub.f32 %v4013, %v4051
        %v4070 = vsub.f32 %v4018, %v4053
        %v4071 = vsub.f32 %v4021, %v4055
        %v4072 = vmul.f32 %v4056, 1.442695
        %v4073 = vpow.pop %v4072
        %v4074 = vmul.f32 %v4057, 1.442695
        %v4075 = vpow.pop %v4074
        %v4076 = vmul.f32 %v4058, 1.442695
        %v4077 = vpow.pop %v4076
        %v4078 = vmul.f32 %v4059, 1.442695
        %v4079 = vpow.pop %v4078
        %v4080 = vmul.f32 %v4060, 1.442695
        %v4081 = vpow.pop %v4080
        %v4082 = vmul.f32 %v4061, 1.442695
        %v4083 = vpow.pop %v4082
        %v4084 = vmul.f32 %v4062, 1.442695
        %v4085 = vpow.pop %v4084
        %v4086 = vmul.f32 %v4063, 1.442695
        %v4087 = vpow.pop %v4086
        %v4088 = vmul.f32 %v4064, 1.442695
        %v4089 = vpow.pop %v4088
        %v4090 = vmul.f32 %v4065, 1.442695
        %v4091 = vpow.pop %v4090
        %v4092 = vmul.f32 %v4066, 1.442695
        %v4093 = vpow.pop %v4092
        %v4094 = vmul.f32 %v4067, 1.442695
        %v4095 = vpow.pop %v4094
        %v4096 = vmul.f32 %v4068, 1.442695
        %v4097 = vpow.pop %v4096
        %v4098 = vmul.f32 %v4069, 1.442695
        %v4099 = vpow.pop %v4098
        %v4100 = vmul.f32 %v4070, 1.442695
        %v4101 = vpow.pop %v4100
        %v4102 = vmul.f32 %v4071, 1.442695
        %v4103 = vpow.pop %v4102
        %4104 = vadd.xlane.f32.xlu0 %v4073
        %v4105 = vpop.xlane.xlu0 %4104
        %4106 = vadd.xlane.f32.xlu0 %v4075
        %v4107 = vpop.xlane.xlu0 %4106
        %4108 = vadd.xlane.f32.xlu0 %v4077
        %v4109 = vpop.xlane.xlu0 %4108
        %4110 = vadd.xlane.f32.xlu0 %v4079
        %v4111 = vpop.xlane.xlu0 %4110
        %4112 = vadd.xlane.f32.xlu0 %v4081
        %v4113 = vpop.xlane.xlu0 %4112
        %4114 = vadd.xlane.f32.xlu0 %v4083
        %v4115 = vpop.xlane.xlu0 %4114
        %4116 = vadd.xlane.f32.xlu0 %v4085
        %v4117 = vpop.xlane.xlu0 %4116
        %4118 = vadd.xlane.f32.xlu0 %v4087
        %v4119 = vpop.xlane.xlu0 %4118
        %4120 = vadd.xlane.f32.xlu0 %v4089
        %v4121 = vpop.xlane.xlu0 %4120
        %4122 = vadd.xlane.f32.xlu0 %v4091
        %v4123 = vpop.xlane.xlu0 %4122
        %4124 = vadd.xlane.f32.xlu0 %v4093
        %v4125 = vpop.xlane.xlu0 %4124
        %4126 = vadd.xlane.f32.xlu0 %v4095
        %v4127 = vpop.xlane.xlu0 %4126
        %4128 = vadd.xlane.f32.xlu0 %v4097
        %v4129 = vpop.xlane.xlu0 %4128
        %4130 = vadd.xlane.f32.xlu0 %v4099
        %v4131 = vpop.xlane.xlu0 %4130
        %4132 = vadd.xlane.f32.xlu0 %v4101
        %v4133 = vpop.xlane.xlu0 %4132
        %4134 = vadd.xlane.f32.xlu0 %v4103
        %v4135 = vpop.xlane.xlu0 %4134
        %v4136 = vrcp.pop %v4105
        %v4137 = vrcp.pop %v4107
        %v4138 = vrcp.pop %v4109
        %v4139 = vrcp.pop %v4111
        %v4140 = vrcp.pop %v4113
        %v4141 = vrcp.pop %v4115
        %v4142 = vrcp.pop %v4117
        %v4143 = vrcp.pop %v4119
        %v4144 = vrcp.pop %v4121
        %v4145 = vrcp.pop %v4123
        %v4146 = vrcp.pop %v4125
        %v4147 = vrcp.pop %v4127
        %v4148 = vrcp.pop %v4129
        %v4149 = vrcp.pop %v4131
        %v4150 = vrcp.pop %v4133
        %v4151 = vrcp.pop %v4135
        %v4152 = vmul.f32 %v4073, %v4136
        %v4153 = vmul.f32 %v4075, %v4137
        %v4154 = vmul.f32 %v4077, %v4138
        %v4155 = vmul.f32 %v4079, %v4139
        %v4156 = vmul.f32 %v4081, %v4140
        %v4157 = vmul.f32 %v4083, %v4141
        %v4158 = vmul.f32 %v4085, %v4142
        %v4159 = vmul.f32 %v4087, %v4143
        %v4160 = vmul.f32 %v4089, %v4144
        %v4161 = vmul.f32 %v4091, %v4145
        %v4162 = vmul.f32 %v4093, %v4146
        %v4163 = vmul.f32 %v4095, %v4147
        %v4164 = vmul.f32 %v4097, %v4148
        %v4165 = vmul.f32 %v4099, %v4149
        %v4166 = vmul.f32 %v4101, %v4150
        %v4167 = vmul.f32 %v4103, %v4151
        %v4168 = vpack.c.bf16 %v4153, %v4152
        %v4169 = vpack.c.bf16 %v4155, %v4154
        %v4170 = vpack.c.bf16 %v4157, %v4156
        %v4171 = vpack.c.bf16 %v4159, %v4158
        %v4172 = vpack.c.bf16 %v4161, %v4160
        %v4173 = vpack.c.bf16 %v4163, %v4162
        %v4174 = vpack.c.bf16 %v4165, %v4164
        %v4175 = vpack.c.bf16 %v4167, %v4166
        %4176 = vrot.lane.b32.xlu0 %v1863, 32
        %v4177 = vpop.permute.xlu0 %4176
        %4178 = vrot.lane.b32.xlu0 %v1865, 32
        %v4179 = vpop.permute.xlu0 %4178
        %4180 = vrot.lane.b32.xlu0 %v1867, 32
        %v4181 = vpop.permute.xlu0 %4180
        %4182 = vrot.lane.b32.xlu0 %v1869, 32
        %v4183 = vpop.permute.xlu0 %4182
        %4184 = vrot.lane.b32.xlu0 %v1871, 32
        %v4185 = vpop.permute.xlu0 %4184
        %4186 = vrot.lane.b32.xlu0 %v1873, 32
        %v4187 = vpop.permute.xlu0 %4186
        %4188 = vrot.lane.b32.xlu0 %v1875, 32
        %v4189 = vpop.permute.xlu0 %4188
        %4190 = vrot.lane.b32.xlu0 %v1877, 32
        %v4191 = vpop.permute.xlu0 %4190
        %4200 = vmatprep.subr.bf16.mxu0 0
        %4201 = vmatpush1.bf16.msra.mxu0 %v4177
        %4202 = vmatprep.subr.bf16.mxu0 0
        %4203 = vmatpush1.bf16.msra.mxu0 %v4179
        %4204 = vmatprep.subr.bf16.mxu0 0
        %4205 = vmatpush1.bf16.msra.mxu0 %v4181
        %4206 = vmatprep.subr.bf16.mxu0 0
        %4207 = vmatpush1.bf16.msra.mxu0 %v4183
        %4208 = vmatprep.subr.bf16.mxu0 0
        %4209 = vmatpush1.bf16.msra.mxu0 %v4185
        %4210 = vmatprep.subr.bf16.mxu0 0
        %4211 = vmatpush1.bf16.msra.mxu0 %v4187
        %4212 = vmatprep.subr.bf16.mxu0 0
        %4213 = vmatpush1.bf16.msra.mxu0 %v4189
        %4214 = vmatprep.subr.bf16.mxu0 0
        %4215 = vmatpush1.bf16.msra.mxu0 %v4191
        %4216 = vmatprep.subr.bf16.mxu0 0
        %4217 = vmatpush1.bf16.msra.mxu0 0
        %4218 = vmatprep.subr.bf16.mxu0 0
        %4219 = vmatpush1.bf16.msra.mxu0 0
        %4220 = vmatprep.subr.bf16.mxu0 0
        %4221 = vmatpush1.bf16.msra.mxu0 0
        %4222 = vmatprep.subr.bf16.mxu0 0
        %4223 = vmatpush1.bf16.msra.mxu0 0
        %4224 = vmatprep.subr.bf16.mxu0 0
        %4225 = vmatpush1.bf16.msra.mxu0 0
        %4226 = vmatprep.subr.bf16.mxu0 0
        %4227 = vmatpush1.bf16.msra.mxu0 0
        %4228 = vmatprep.subr.bf16.mxu0 0
        %4229 = vmatpush1.bf16.msra.mxu0 0
        %4230 = vmatprep.subr.bf16.mxu0 0
        %4231 = vmatpush1.bf16.msra.mxu0 0
        %4232 = vmatprep.mubr.bf16.mxu0 0
        %4233 = vmatmul.mubr.bf16.gmra.mrb[0].mxu0 %v4168
        %v4234 = vpop.f32.mrb[0].mxu0
        %v4235 = vadd.f32 0.0, %v4234
        %v4236 = vpop.f32.mrb[0].mxu0
        %v4237 = vpop.f32.mrb[0].mxu0
        %v4238 = vadd.f32 0.0, %v4237
        %v4239 = vpop.f32.mrb[0].mxu0
        %4240 = vmatprep.mubr.bf16.mxu0 0
        %4241 = vmatmul.mubr.bf16.gmra.mrb[0].mxu0 %v4169
        %v4242 = vpop.f32.mrb[0].mxu0
        %v4243 = vadd.f32 0.0, %v4242
        %v4244 = vpop.f32.mrb[0].mxu0
        %v4245 = vpop.f32.mrb[0].mxu0
        %v4246 = vadd.f32 0.0, %v4245
        %v4247 = vpop.f32.mrb[0].mxu0
        %4248 = vmatprep.mubr.bf16.mxu0 0
        %4249 = vmatmul.mubr.bf16.gmra.mrb[0].mxu0 %v4170
        %v4250 = vpop.f32.mrb[0].mxu0
        %v4251 = vadd.f32 0.0, %v4250
        %v4252 = vpop.f32.mrb[0].mxu0
        %v4253 = vpop.f32.mrb[0].mxu0
        %v4254 = vadd.f32 0.0, %v4253
        %v4255 = vpop.f32.mrb[0].mxu0
        %4256 = vmatprep.mubr.bf16.mxu0 0
        %4257 = vmatmul.mubr.bf16.gmra.mrb[0].mxu0 %v4171
        %v4258 = vpop.f32.mrb[0].mxu0
        %v4259 = vadd.f32 0.0, %v4258
        %v4260 = vpop.f32.mrb[0].mxu0
        %v4261 = vpop.f32.mrb[0].mxu0
        %v4262 = vadd.f32 0.0, %v4261
        %v4263 = vpop.f32.mrb[0].mxu0
        %4264 = vmatprep.mubr.bf16.mxu0 0
        %4265 = vmatmul.mubr.bf16.gmra.mrb[0].mxu0 %v4172
        %v4266 = vpop.f32.mrb[0].mxu0
        %v4267 = vadd.f32 0.0, %v4266
        %v4268 = vpop.f32.mrb[0].mxu0
        %v4269 = vpop.f32.mrb[0].mxu0
        %v4270 = vadd.f32 0.0, %v4269
        %v4271 = vpop.f32.mrb[0].mxu0
        %4272 = vmatprep.mubr.bf16.mxu0 0
        %4273 = vmatmul.mubr.bf16.gmra.mrb[0].mxu0 %v4173
        %v4274 = vpop.f32.mrb[0].mxu0
        %v4275 = vadd.f32 0.0, %v4274
        %v4276 = vpop.f32.mrb[0].mxu0
        %v4277 = vpop.f32.mrb[0].mxu0
        %v4278 = vadd.f32 0.0, %v4277
        %v4279 = vpop.f32.mrb[0].mxu0
        %4280 = vmatprep.mubr.bf16.mxu0 0
        %4281 = vmatmul.mubr.bf16.gmra.mrb[0].mxu0 %v4174
        %v4282 = vpop.f32.mrb[0].mxu0
        %v4283 = vadd.f32 0.0, %v4282
        %v4284 = vpop.f32.mrb[0].mxu0
        %v4285 = vpop.f32.mrb[0].mxu0
        %v4286 = vadd.f32 0.0, %v4285
        %v4287 = vpop.f32.mrb[0].mxu0
        %4288 = vmatprep.mubr.bf16.mxu0 0
        %4289 = vmatmul.mubr.bf16.gmra.mrb[0].mxu0 %v4175
        %v4290 = vpop.f32.mrb[0].mxu0
        %v4291 = vadd.f32 0.0, %v4290
        %v4292 = vpop.f32.mrb[0].mxu0
        %v4293 = vpop.f32.mrb[0].mxu0
        %v4294 = vadd.f32 0.0, %v4293
        %v4295 = vpop.f32.mrb[0].mxu0
        %4296 = vdwg.mxu0
        %v4297 = vpack.c.bf16 %v4238, %v4235
        %v4298 = vpack.c.bf16 %v4246, %v4243
        %v4299 = vpack.c.bf16 %v4254, %v4251
        %v4300 = vpack.c.bf16 %v4262, %v4259
        %v4301 = vpack.c.bf16 %v4270, %v4267
        %v4302 = vpack.c.bf16 %v4278, %v4275
        %v4303 = vpack.c.bf16 %v4286, %v4283
        %v4304 = vpack.c.bf16 %v4294, %v4291
        %s4305 = scalar_lea.vmem [#allocation7], 96
        %v4306 = vld [vmem:[%s4305] sm:$0xff]
        %v4307 = vld [vmem:[%s4305 + $0x8] sm:$0xff]
        %v4308 = vld [vmem:[%s4305 + $0x10] sm:$0xff]
        %v4309 = vld [vmem:[%s4305 + $0x18] sm:$0xff]
        %v4314 = vunpack.c.l.b16 %v4306
        %v4315 = vunpack.c.h.b16 %v4306
        %v4316 = vunpack.c.l.b16 %v4307
        %v4317 = vunpack.c.h.b16 %v4307
        %v4318 = vunpack.c.l.b16 %v4308
        %v4319 = vunpack.c.h.b16 %v4308
        %v4320 = vunpack.c.l.b16 %v4309
        %v4321 = vunpack.c.h.b16 %v4309
        %v4322 = vpack.c.b16 %v4316, %v4314
        %v4323 = vpack.c.b16 %v4317, %v4315
        %v4324 = vpack.c.b16 %v4320, %v4318
        %v4325 = vpack.c.b16 %v4321, %v4319
        %v4331 = vsel %vm1923, %v4297, 0
        %v4334 = vsel %vm1923, %v4298, 0
        %v4337 = vsel %vm1923, %v4299, 0
        %v4340 = vsel %vm1923, %v4300, 0
        %v4343 = vsel %vm1923, %v4301, 0
        %v4346 = vsel %vm1923, %v4302, 0
        %v4349 = vsel %vm1923, %v4303, 0
        %v4352 = vsel %vm1923, %v4304, 0
        %4354 = vmatprep.subr.bf16.mxu0 %v4323
        %4355 = vmatpush1.bf16.msra.mxu0 %v4322
        %4356 = vmatprep.subr.bf16.mxu0 %v4325
        %4357 = vmatpush1.bf16.msra.mxu0 %v4324
        %4358 = vmatprep.subr.bf16.mxu0 0
        %4359 = vmatpush1.bf16.msra.mxu0 0
        %4360 = vmatprep.subr.bf16.mxu0 0
        %4361 = vmatpush1.bf16.msra.mxu0 0
        %4362 = vmatprep.subr.bf16.mxu0 0
        %4363 = vmatpush1.bf16.msra.mxu0 0
        %4364 = vmatprep.subr.bf16.mxu0 0
        %4365 = vmatpush1.bf16.msra.mxu0 0
        %4366 = vmatprep.subr.bf16.mxu0 0
        %4367 = vmatpush1.bf16.msra.mxu0 0
        %4368 = vmatprep.subr.bf16.mxu0 0
        %4369 = vmatpush1.bf16.msra.mxu0 0
        %4370 = vmatprep.subr.bf16.mxu0 0
        %4371 = vmatpush1.bf16.msra.mxu0 0
        %4372 = vmatprep.subr.bf16.mxu0 0
        %4373 = vmatpush1.bf16.msra.mxu0 0
        %4374 = vmatprep.subr.bf16.mxu0 0
        %4375 = vmatpush1.bf16.msra.mxu0 0
        %4376 = vmatprep.subr.bf16.mxu0 0
        %4377 = vmatpush1.bf16.msra.mxu0 0
        %4378 = vmatprep.subr.bf16.mxu0 0
        %4379 = vmatpush1.bf16.msra.mxu0 0
        %4380 = vmatprep.subr.bf16.mxu0 0
        %4381 = vmatpush1.bf16.msra.mxu0 0
        %4382 = vmatprep.subr.bf16.mxu0 0
        %4383 = vmatpush1.bf16.msra.mxu0 0
        %4384 = vmatprep.subr.bf16.mxu0 0
        %4385 = vmatpush1.bf16.msra.mxu0 0
        %4386 = vmatprep.mubr.bf16.mxu0 0
        %4387 = vmatmul.mubr.bf16.gmra.mrb[0].mxu0 %v4331
        %v4388 = vpop.f32.mrb[0].mxu0
        %v4389 = vadd.f32 0.0, %v4388
        %v4390 = vpop.f32.mrb[0].mxu0
        %v4391 = vadd.f32 0.0, %v4390
        %v4392 = vpop.f32.mrb[0].mxu0
        %v4393 = vadd.f32 0.0, %v4392
        %v4394 = vpop.f32.mrb[0].mxu0
        %v4395 = vadd.f32 0.0, %v4394
        %4396 = vmatprep.mubr.bf16.mxu0 0
        %4397 = vmatmul.mubr.bf16.gmra.mrb[0].mxu0 %v4334
        %v4398 = vpop.f32.mrb[0].mxu0
        %v4399 = vadd.f32 0.0, %v4398
        %v4400 = vpop.f32.mrb[0].mxu0
        %v4401 = vadd.f32 0.0, %v4400
        %v4402 = vpop.f32.mrb[0].mxu0
        %v4403 = vadd.f32 0.0, %v4402
        %v4404 = vpop.f32.mrb[0].mxu0
        %v4405 = vadd.f32 0.0, %v4404
        %4406 = vmatprep.mubr.bf16.mxu0 0
        %4407 = vmatmul.mubr.bf16.gmra.mrb[0].mxu0 %v4337
        %v4408 = vpop.f32.mrb[0].mxu0
        %v4409 = vadd.f32 0.0, %v4408
        %v4410 = vpop.f32.mrb[0].mxu0
        %v4411 = vadd.f32 0.0, %v4410
        %v4412 = vpop.f32.mrb[0].mxu0
        %v4413 = vadd.f32 0.0, %v4412
        %v4414 = vpop.f32.mrb[0].mxu0
        %v4415 = vadd.f32 0.0, %v4414
        %4416 = vmatprep.mubr.bf16.mxu0 0
        %4417 = vmatmul.mubr.bf16.gmra.mrb[0].mxu0 %v4340
        %v4418 = vpop.f32.mrb[0].mxu0
        %v4419 = vadd.f32 0.0, %v4418
        %v4420 = vpop.f32.mrb[0].mxu0
        %v4421 = vadd.f32 0.0, %v4420
        %v4422 = vpop.f32.mrb[0].mxu0
        %v4423 = vadd.f32 0.0, %v4422
        %v4424 = vpop.f32.mrb[0].mxu0
        %v4425 = vadd.f32 0.0, %v4424
        %4426 = vmatprep.mubr.bf16.mxu0 0
        %4427 = vmatmul.mubr.bf16.gmra.mrb[0].mxu0 %v4343
        %v4428 = vpop.f32.mrb[0].mxu0
        %v4429 = vadd.f32 0.0, %v4428
        %v4430 = vpop.f32.mrb[0].mxu0
        %v4431 = vadd.f32 0.0, %v4430
        %v4432 = vpop.f32.mrb[0].mxu0
        %v4433 = vadd.f32 0.0, %v4432
        %v4434 = vpop.f32.mrb[0].mxu0
        %v4435 = vadd.f32 0.0, %v4434
        %4436 = vmatprep.mubr.bf16.mxu0 0
        %4437 = vmatmul.mubr.bf16.gmra.mrb[0].mxu0 %v4346
        %v4438 = vpop.f32.mrb[0].mxu0
        %v4439 = vadd.f32 0.0, %v4438
        %v4440 = vpop.f32.mrb[0].mxu0
        %v4441 = vadd.f32 0.0, %v4440
        %v4442 = vpop.f32.mrb[0].mxu0
        %v4443 = vadd.f32 0.0, %v4442
        %v4444 = vpop.f32.mrb[0].mxu0
        %v4445 = vadd.f32 0.0, %v4444
        %4446 = vmatprep.mubr.bf16.mxu0 0
        %4447 = vmatmul.mubr.bf16.gmra.mrb[0].mxu0 %v4349
        %v4448 = vpop.f32.mrb[0].mxu0
        %v4449 = vadd.f32 0.0, %v4448
        %v4450 = vpop.f32.mrb[0].mxu0
        %v4451 = vadd.f32 0.0, %v4450
        %v4452 = vpop.f32.mrb[0].mxu0
        %v4453 = vadd.f32 0.0, %v4452
        %v4454 = vpop.f32.mrb[0].mxu0
        %v4455 = vadd.f32 0.0, %v4454
        %4456 = vmatprep.mubr.bf16.mxu0 0
        %4457 = vmatmul.mubr.bf16.gmra.mrb[0].mxu0 %v4352
        %v4458 = vpop.f32.mrb[0].mxu0
        %v4459 = vadd.f32 0.0, %v4458
        %v4460 = vpop.f32.mrb[0].mxu0
        %v4461 = vadd.f32 0.0, %v4460
        %v4462 = vpop.f32.mrb[0].mxu0
        %v4463 = vadd.f32 0.0, %v4462
        %v4464 = vpop.f32.mrb[0].mxu0
        %v4465 = vadd.f32 0.0, %v4464
        %4466 = vdwg.mxu0
        %v4467 = vadd.f32 %v3815, %v4389
        %v4468 = vadd.f32 %v3816, %v4391
        %v4469 = vadd.f32 %v3817, %v4393
        %v4470 = vadd.f32 %v3818, %v4395
        %v4471 = vadd.f32 %v3819, %v4399
        %v4472 = vadd.f32 %v3820, %v4401
        %v4473 = vadd.f32 %v3821, %v4403
        %v4474 = vadd.f32 %v3822, %v4405
        %v4475 = vadd.f32 %v3823, %v4409
        %v4476 = vadd.f32 %v3824, %v4411
        %v4477 = vadd.f32 %v3825, %v4413
        %v4478 = vadd.f32 %v3826, %v4415
        %v4479 = vadd.f32 %v3827, %v4419
        %v4480 = vadd.f32 %v3828, %v4421
        %v4481 = vadd.f32 %v3829, %v4423
        %v4482 = vadd.f32 %v3830, %v4425
        %v4483 = vadd.f32 %v3831, %v4429
        %v4484 = vadd.f32 %v3832, %v4431
        %v4485 = vadd.f32 %v3833, %v4433
        %v4486 = vadd.f32 %v3834, %v4435
        %v4487 = vadd.f32 %v3835, %v4439
        %v4488 = vadd.f32 %v3836, %v4441
        %v4489 = vadd.f32 %v3837, %v4443
        %v4490 = vadd.f32 %v3838, %v4445
        %v4491 = vadd.f32 %v3839, %v4449
        %v4492 = vadd.f32 %v3840, %v4451
        %v4493 = vadd.f32 %v3841, %v4453
        %v4494 = vadd.f32 %v3842, %v4455
        %v4495 = vadd.f32 %v3843, %v4459
        %v4496 = vadd.f32 %v3844, %v4461
        %v4497 = vadd.f32 %v3845, %v4463
        %v4498 = vadd.f32 %v3846, %v4465
        %v4500 = vsel %vm1923, %v1832, 0
        %v4503 = vsel %vm1923, %v1834, 0
        %v4506 = vsel %vm1923, %v1836, 0
        %v4509 = vsel %vm1923, %v1838, 0
        %v4512 = vsel %vm1923, %v1840, 0
        %v4515 = vsel %vm1923, %v1842, 0
        %v4518 = vsel %vm1923, %v1844, 0
        %v4521 = vsel %vm1923, %v1846, 0
        %v4524 = vsel %vm1923, %v1848, 0
        %v4527 = vsel %vm1923, %v1850, 0
        %v4530 = vsel %vm1923, %v1852, 0
        %v4533 = vsel %vm1923, %v1854, 0
        %v4536 = vsel %vm1923, %v1856, 0
        %v4539 = vsel %vm1923, %v1858, 0
        %v4542 = vsel %vm1923, %v1860, 0
        %v4545 = vsel %vm1923, %v1862, 0
        %4547 = vmatprep.subr.bf16.mxu0 0
        %4548 = vmatpush1.bf16.xpose.msra.mxu0 %v4524
        %4549 = vmatprep.subr.bf16.mxu0 0
        %4550 = vmatpush1.bf16.xpose.msra.mxu0 %v4527
        %4551 = vmatprep.subr.bf16.mxu0 0
        %4552 = vmatpush1.bf16.xpose.msra.mxu0 %v4530
        %4553 = vmatprep.subr.bf16.mxu0 0
        %4554 = vmatpush1.bf16.xpose.msra.mxu0 %v4533
        %4555 = vmatprep.subr.bf16.mxu0 0
        %4556 = vmatpush1.bf16.xpose.msra.mxu0 %v4536
        %4557 = vmatprep.subr.bf16.mxu0 0
        %4558 = vmatpush1.bf16.xpose.msra.mxu0 %v4539
        %4559 = vmatprep.subr.bf16.mxu0 0
        %4560 = vmatpush1.bf16.xpose.msra.mxu0 %v4542
        %4561 = vmatprep.subr.bf16.mxu0 0
        %4562 = vmatpush1.bf16.xpose.msra.mxu0 %v4545
        %4563 = vmatprep.subr.bf16.mxu0 0
        %4564 = vmatpush1.bf16.xpose.msra.mxu0 0
        %4565 = vmatprep.subr.bf16.mxu0 0
        %4566 = vmatpush1.bf16.xpose.msra.mxu0 0
        %4567 = vmatprep.subr.bf16.mxu0 0
        %4568 = vmatpush1.bf16.xpose.msra.mxu0 0
        %4569 = vmatprep.subr.bf16.mxu0 0
        %4570 = vmatpush1.bf16.xpose.msra.mxu0 0
        %4571 = vmatprep.subr.bf16.mxu0 0
        %4572 = vmatpush1.bf16.xpose.msra.mxu0 0
        %4573 = vmatprep.subr.bf16.mxu0 0
        %4574 = vmatpush1.bf16.xpose.msra.mxu0 0
        %4575 = vmatprep.subr.bf16.mxu0 0
        %4576 = vmatpush1.bf16.xpose.msra.mxu0 0
        %4577 = vmatprep.subr.bf16.mxu0 0
        %4578 = vmatpush1.bf16.xpose.msra.mxu0 0
        %4579 = vmatprep.mubr.bf16.mxu0 0
        %4580 = vmatmul.mubr.bf16.gmra.mrb[0].mxu0 %v4500
        %v4581 = vpop.f32.mrb[0].mxu0
        %v4582 = vadd.f32 0.0, %v4581
        %v4583 = vpop.f32.mrb[0].mxu0
        %v4584 = vpop.f32.mrb[0].mxu0
        %v4585 = vadd.f32 0.0, %v4584
        %v4586 = vpop.f32.mrb[0].mxu0
        %4587 = vmatprep.mubr.bf16.mxu0 0
        %4588 = vmatmul.mubr.bf16.gmra.mrb[0].mxu0 %v4503
        %v4589 = vpop.f32.mrb[0].mxu0
        %v4590 = vadd.f32 0.0, %v4589
        %v4591 = vpop.f32.mrb[0].mxu0
        %v4592 = vpop.f32.mrb[0].mxu0
        %v4593 = vadd.f32 0.0, %v4592
        %v4594 = vpop.f32.mrb[0].mxu0
        %4595 = vmatprep.mubr.bf16.mxu0 0
        %4596 = vmatmul.mubr.bf16.gmra.mrb[0].mxu0 %v4506
        %v4597 = vpop.f32.mrb[0].mxu0
        %v4598 = vadd.f32 0.0, %v4597
        %v4599 = vpop.f32.mrb[0].mxu0
        %v4600 = vpop.f32.mrb[0].mxu0
        %v4601 = vadd.f32 0.0, %v4600
        %v4602 = vpop.f32.mrb[0].mxu0
        %4603 = vmatprep.mubr.bf16.mxu0 0
        %4604 = vmatmul.mubr.bf16.gmra.mrb[0].mxu0 %v4509
        %v4605 = vpop.f32.mrb[0].mxu0
        %v4606 = vadd.f32 0.0, %v4605
        %v4607 = vpop.f32.mrb[0].mxu0
        %v4608 = vpop.f32.mrb[0].mxu0
        %v4609 = vadd.f32 0.0, %v4608
        %v4610 = vpop.f32.mrb[0].mxu0
        %4611 = vmatprep.mubr.bf16.mxu0 0
        %4612 = vmatmul.mubr.bf16.gmra.mrb[0].mxu0 %v4512
        %v4613 = vpop.f32.mrb[0].mxu0
        %v4614 = vadd.f32 0.0, %v4613
        %v4615 = vpop.f32.mrb[0].mxu0
        %v4616 = vpop.f32.mrb[0].mxu0
        %v4617 = vadd.f32 0.0, %v4616
        %v4618 = vpop.f32.mrb[0].mxu0
        %4619 = vmatprep.mubr.bf16.mxu0 0
        %4620 = vmatmul.mubr.bf16.gmra.mrb[0].mxu0 %v4515
        %v4621 = vpop.f32.mrb[0].mxu0
        %v4622 = vadd.f32 0.0, %v4621
        %v4623 = vpop.f32.mrb[0].mxu0
        %v4624 = vpop.f32.mrb[0].mxu0
        %v4625 = vadd.f32 0.0, %v4624
        %v4626 = vpop.f32.mrb[0].mxu0
        %4627 = vmatprep.mubr.bf16.mxu0 0
        %4628 = vmatmul.mubr.bf16.gmra.mrb[0].mxu0 %v4518
        %v4629 = vpop.f32.mrb[0].mxu0
        %v4630 = vadd.f32 0.0, %v4629
        %v4631 = vpop.f32.mrb[0].mxu0
        %v4632 = vpop.f32.mrb[0].mxu0
        %v4633 = vadd.f32 0.0, %v4632
        %v4634 = vpop.f32.mrb[0].mxu0
        %4635 = vmatprep.mubr.bf16.mxu0 0
        %4636 = vmatmul.mubr.bf16.gmra.mrb[0].mxu0 %v4521
        %v4637 = vpop.f32.mrb[0].mxu0
        %v4638 = vadd.f32 0.0, %v4637
        %v4639 = vpop.f32.mrb[0].mxu0
        %v4640 = vpop.f32.mrb[0].mxu0
        %v4641 = vadd.f32 0.0, %v4640
        %v4642 = vpop.f32.mrb[0].mxu0
        %4643 = vdwg.mxu0
        %4644 = vmax.xlane.f32.xlu0 %v4582
        %v4645 = vpop.xlane.xlu0 %4644
        %4646 = vmax.xlane.f32.xlu0 %v4585
        %v4647 = vpop.xlane.xlu0 %4646
        %4648 = vmax.xlane.f32.xlu0 %v4590
        %v4649 = vpop.xlane.xlu0 %4648
        %4650 = vmax.xlane.f32.xlu0 %v4593
        %v4651 = vpop.xlane.xlu0 %4650
        %4652 = vmax.xlane.f32.xlu0 %v4598
        %v4653 = vpop.xlane.xlu0 %4652
        %4654 = vmax.xlane.f32.xlu0 %v4601
        %v4655 = vpop.xlane.xlu0 %4654
        %4656 = vmax.xlane.f32.xlu0 %v4606
        %v4657 = vpop.xlane.xlu0 %4656
        %4658 = vmax.xlane.f32.xlu0 %v4609
        %v4659 = vpop.xlane.xlu0 %4658
        %4660 = vmax.xlane.f32.xlu0 %v4614
        %v4661 = vpop.xlane.xlu0 %4660
        %4662 = vmax.xlane.f32.xlu0 %v4617
        %v4663 = vpop.xlane.xlu0 %4662
        %4664 = vmax.xlane.f32.xlu0 %v4622
        %v4665 = vpop.xlane.xlu0 %4664
        %4666 = vmax.xlane.f32.xlu0 %v4625
        %v4667 = vpop.xlane.xlu0 %4666
        %4668 = vmax.xlane.f32.xlu0 %v4630
        %v4669 = vpop.xlane.xlu0 %4668
        %4670 = vmax.xlane.f32.xlu0 %v4633
        %v4671 = vpop.xlane.xlu0 %4670
        %4672 = vmax.xlane.f32.xlu0 %v4638
        %v4673 = vpop.xlane.xlu0 %4672
        %4674 = vmax.xlane.f32.xlu0 %v4641
        %v4675 = vpop.xlane.xlu0 %4674
        %v4676 = vsub.f32 %v4582, %v4645
        %v4677 = vsub.f32 %v4585, %v4647
        %v4678 = vsub.f32 %v4590, %v4649
        %v4679 = vsub.f32 %v4593, %v4651
        %v4680 = vsub.f32 %v4598, %v4653
        %v4681 = vsub.f32 %v4601, %v4655
        %v4682 = vsub.f32 %v4606, %v4657
        %v4683 = vsub.f32 %v4609, %v4659
        %v4684 = vsub.f32 %v4614, %v4661
        %v4685 = vsub.f32 %v4617, %v4663
        %v4686 = vsub.f32 %v4622, %v4665
        %v4687 = vsub.f32 %v4625, %v4667
        %v4688 = vsub.f32 %v4630, %v4669
        %v4689 = vsub.f32 %v4633, %v4671
        %v4690 = vsub.f32 %v4638, %v4673
        %v4691 = vsub.f32 %v4641, %v4675
        %v4692 = vmul.f32 %v4676, 1.442695
        %v4693 = vpow.pop %v4692
        %v4694 = vmul.f32 %v4677, 1.442695
        %v4695 = vpow.pop %v4694
        %v4696 = vmul.f32 %v4678, 1.442695
        %v4697 = vpow.pop %v4696
        %v4698 = vmul.f32 %v4679, 1.442695
        %v4699 = vpow.pop %v4698
        %v4700 = vmul.f32 %v4680, 1.442695
        %v4701 = vpow.pop %v4700
        %v4702 = vmul.f32 %v4681, 1.442695
        %v4703 = vpow.pop %v4702
        %v4704 = vmul.f32 %v4682, 1.442695
        %v4705 = vpow.pop %v4704
        %v4706 = vmul.f32 %v4683, 1.442695
        %v4707 = vpow.pop %v4706
        %v4708 = vmul.f32 %v4684, 1.442695
        %v4709 = vpow.pop %v4708
        %v4710 = vmul.f32 %v4685, 1.442695
        %v4711 = vpow.pop %v4710
        %v4712 = vmul.f32 %v4686, 1.442695
        %v4713 = vpow.pop %v4712
        %v4714 = vmul.f32 %v4687, 1.442695
        %v4715 = vpow.pop %v4714
        %v4716 = vmul.f32 %v4688, 1.442695
        %v4717 = vpow.pop %v4716
        %v4718 = vmul.f32 %v4689, 1.442695
        %v4719 = vpow.pop %v4718
        %v4720 = vmul.f32 %v4690, 1.442695
        %v4721 = vpow.pop %v4720
        %v4722 = vmul.f32 %v4691, 1.442695
        %v4723 = vpow.pop %v4722
        %4724 = vadd.xlane.f32.xlu0 %v4693
        %v4725 = vpop.xlane.xlu0 %4724
        %4726 = vadd.xlane.f32.xlu0 %v4695
        %v4727 = vpop.xlane.xlu0 %4726
        %4728 = vadd.xlane.f32.xlu0 %v4697
        %v4729 = vpop.xlane.xlu0 %4728
        %4730 = vadd.xlane.f32.xlu0 %v4699
        %v4731 = vpop.xlane.xlu0 %4730
        %4732 = vadd.xlane.f32.xlu0 %v4701
        %v4733 = vpop.xlane.xlu0 %4732
        %4734 = vadd.xlane.f32.xlu0 %v4703
        %v4735 = vpop.xlane.xlu0 %4734
        %4736 = vadd.xlane.f32.xlu0 %v4705
        %v4737 = vpop.xlane.xlu0 %4736
        %4738 = vadd.xlane.f32.xlu0 %v4707
        %v4739 = vpop.xlane.xlu0 %4738
        %4740 = vadd.xlane.f32.xlu0 %v4709
        %v4741 = vpop.xlane.xlu0 %4740
        %4742 = vadd.xlane.f32.xlu0 %v4711
        %v4743 = vpop.xlane.xlu0 %4742
        %4744 = vadd.xlane.f32.xlu0 %v4713
        %v4745 = vpop.xlane.xlu0 %4744
        %4746 = vadd.xlane.f32.xlu0 %v4715
        %v4747 = vpop.xlane.xlu0 %4746
        %4748 = vadd.xlane.f32.xlu0 %v4717
        %v4749 = vpop.xlane.xlu0 %4748
        %4750 = vadd.xlane.f32.xlu0 %v4719
        %v4751 = vpop.xlane.xlu0 %4750
        %4752 = vadd.xlane.f32.xlu0 %v4721
        %v4753 = vpop.xlane.xlu0 %4752
        %4754 = vadd.xlane.f32.xlu0 %v4723
        %v4755 = vpop.xlane.xlu0 %4754
        %v4756 = vrcp.pop %v4725
        %v4757 = vrcp.pop %v4727
        %v4758 = vrcp.pop %v4729
        %v4759 = vrcp.pop %v4731
        %v4760 = vrcp.pop %v4733
        %v4761 = vrcp.pop %v4735
        %v4762 = vrcp.pop %v4737
        %v4763 = vrcp.pop %v4739
        %v4764 = vrcp.pop %v4741
        %v4765 = vrcp.pop %v4743
        %v4766 = vrcp.pop %v4745
        %v4767 = vrcp.pop %v4747
        %v4768 = vrcp.pop %v4749
        %v4769 = vrcp.pop %v4751
        %v4770 = vrcp.pop %v4753
        %v4771 = vrcp.pop %v4755
        %v4772 = vmul.f32 %v4693, %v4756
        %v4773 = vmul.f32 %v4695, %v4757
        %v4774 = vmul.f32 %v4697, %v4758
        %v4775 = vmul.f32 %v4699, %v4759
        %v4776 = vmul.f32 %v4701, %v4760
        %v4777 = vmul.f32 %v4703, %v4761
        %v4778 = vmul.f32 %v4705, %v4762
        %v4779 = vmul.f32 %v4707, %v4763
        %v4780 = vmul.f32 %v4709, %v4764
        %v4781 = vmul.f32 %v4711, %v4765
        %v4782 = vmul.f32 %v4713, %v4766
        %v4783 = vmul.f32 %v4715, %v4767
        %v4784 = vmul.f32 %v4717, %v4768
        %v4785 = vmul.f32 %v4719, %v4769
        %v4786 = vmul.f32 %v4721, %v4770
        %v4787 = vmul.f32 %v4723, %v4771
        %v4788 = vpack.c.bf16 %v4773, %v4772
        %v4789 = vpack.c.bf16 %v4775, %v4774
        %v4790 = vpack.c.bf16 %v4777, %v4776
        %v4791 = vpack.c.bf16 %v4779, %v4778
        %v4792 = vpack.c.bf16 %v4781, %v4780
        %v4793 = vpack.c.bf16 %v4783, %v4782
        %v4794 = vpack.c.bf16 %v4785, %v4784
        %v4795 = vpack.c.bf16 %v4787, %v4786
        %4796 = vmatprep.subr.bf16.mxu0 0
        %4797 = vmatpush1.bf16.msra.mxu0 %v1864
        %4798 = vmatprep.subr.bf16.mxu0 0
        %4799 = vmatpush1.bf16.msra.mxu0 %v1866
        %4800 = vmatprep.subr.bf16.mxu0 0
        %4801 = vmatpush1.bf16.msra.mxu0 %v1868
        %4802 = vmatprep.subr.bf16.mxu0 0
        %4803 = vmatpush1.bf16.msra.mxu0 %v1870
        %4804 = vmatprep.subr.bf16.mxu0 0
        %4805 = vmatpush1.bf16.msra.mxu0 %v1872
        %4806 = vmatprep.subr.bf16.mxu0 0
        %4807 = vmatpush1.bf16.msra.mxu0 %v1874
        %4808 = vmatprep.subr.bf16.mxu0 0
        %4809 = vmatpush1.bf16.msra.mxu0 %v1876
        %4810 = vmatprep.subr.bf16.mxu0 0
        %4811 = vmatpush1.bf16.msra.mxu0 %v1878
        %4812 = vmatprep.subr.bf16.mxu0 0
        %4813 = vmatpush1.bf16.msra.mxu0 0
        %4814 = vmatprep.subr.bf16.mxu0 0
        %4815 = vmatpush1.bf16.msra.mxu0 0
        %4816 = vmatprep.subr.bf16.mxu0 0
        %4817 = vmatpush1.bf16.msra.mxu0 0
        %4818 = vmatprep.subr.bf16.mxu0 0
        %4819 = vmatpush1.bf16.msra.mxu0 0
        %4820 = vmatprep.subr.bf16.mxu0 0
        %4821 = vmatpush1.bf16.msra.mxu0 0
        %4822 = vmatprep.subr.bf16.mxu0 0
        %4823 = vmatpush1.bf16.msra.mxu0 0
        %4824 = vmatprep.subr.bf16.mxu0 0
        %4825 = vmatpush1.bf16.msra.mxu0 0
        %4826 = vmatprep.subr.bf16.mxu0 0
        %4827 = vmatpush1.bf16.msra.mxu0 0
        %4828 = vmatprep.mubr.bf16.mxu0 0
        %4829 = vmatmul.mubr.bf16.gmra.mrb[0].mxu0 %v4788
        %v4830 = vpop.f32.mrb[0].mxu0
        %v4831 = vadd.f32 0.0, %v4830
        %v4832 = vpop.f32.mrb[0].mxu0
        %v4833 = vpop.f32.mrb[0].mxu0
        %v4834 = vadd.f32 0.0, %v4833
        %v4835 = vpop.f32.mrb[0].mxu0
        %4836 = vmatprep.mubr.bf16.mxu0 0
        %4837 = vmatmul.mubr.bf16.gmra.mrb[0].mxu0 %v4789
        %v4838 = vpop.f32.mrb[0].mxu0
        %v4839 = vadd.f32 0.0, %v4838
        %v4840 = vpop.f32.mrb[0].mxu0
        %v4841 = vpop.f32.mrb[0].mxu0
        %v4842 = vadd.f32 0.0, %v4841
        %v4843 = vpop.f32.mrb[0].mxu0
        %4844 = vmatprep.mubr.bf16.mxu0 0
        %4845 = vmatmul.mubr.bf16.gmra.mrb[0].mxu0 %v4790
        %v4846 = vpop.f32.mrb[0].mxu0
        %v4847 = vadd.f32 0.0, %v4846
        %v4848 = vpop.f32.mrb[0].mxu0
        %v4849 = vpop.f32.mrb[0].mxu0
        %v4850 = vadd.f32 0.0, %v4849
        %v4851 = vpop.f32.mrb[0].mxu0
        %4852 = vmatprep.mubr.bf16.mxu0 0
        %4853 = vmatmul.mubr.bf16.gmra.mrb[0].mxu0 %v4791
        %v4854 = vpop.f32.mrb[0].mxu0
        %v4855 = vadd.f32 0.0, %v4854
        %v4856 = vpop.f32.mrb[0].mxu0
        %v4857 = vpop.f32.mrb[0].mxu0
        %v4858 = vadd.f32 0.0, %v4857
        %v4859 = vpop.f32.mrb[0].mxu0
        %4860 = vmatprep.mubr.bf16.mxu0 0
        %4861 = vmatmul.mubr.bf16.gmra.mrb[0].mxu0 %v4792
        %v4862 = vpop.f32.mrb[0].mxu0
        %v4863 = vadd.f32 0.0, %v4862
        %v4864 = vpop.f32.mrb[0].mxu0
        %v4865 = vpop.f32.mrb[0].mxu0
        %v4866 = vadd.f32 0.0, %v4865
        %v4867 = vpop.f32.mrb[0].mxu0
        %4868 = vmatprep.mubr.bf16.mxu0 0
        %4869 = vmatmul.mubr.bf16.gmra.mrb[0].mxu0 %v4793
        %v4870 = vpop.f32.mrb[0].mxu0
        %v4871 = vadd.f32 0.0, %v4870
        %v4872 = vpop.f32.mrb[0].mxu0
        %v4873 = vpop.f32.mrb[0].mxu0
        %v4874 = vadd.f32 0.0, %v4873
        %v4875 = vpop.f32.mrb[0].mxu0
        %4876 = vmatprep.mubr.bf16.mxu0 0
        %4877 = vmatmul.mubr.bf16.gmra.mrb[0].mxu0 %v4794
        %v4878 = vpop.f32.mrb[0].mxu0
        %v4879 = vadd.f32 0.0, %v4878
        %v4880 = vpop.f32.mrb[0].mxu0
        %v4881 = vpop.f32.mrb[0].mxu0
        %v4882 = vadd.f32 0.0, %v4881
        %v4883 = vpop.f32.mrb[0].mxu0
        %4884 = vmatprep.mubr.bf16.mxu0 0
        %4885 = vmatmul.mubr.bf16.gmra.mrb[0].mxu0 %v4795
        %v4886 = vpop.f32.mrb[0].mxu0
        %v4887 = vadd.f32 0.0, %v4886
        %v4888 = vpop.f32.mrb[0].mxu0
        %v4889 = vpop.f32.mrb[0].mxu0
        %v4890 = vadd.f32 0.0, %v4889
        %v4891 = vpop.f32.mrb[0].mxu0
        %4892 = vdwg.mxu0
        %v4893 = vpack.c.bf16 %v4834, %v4831
        %v4894 = vpack.c.bf16 %v4842, %v4839
        %v4895 = vpack.c.bf16 %v4850, %v4847
        %v4896 = vpack.c.bf16 %v4858, %v4855
        %v4897 = vpack.c.bf16 %v4866, %v4863
        %v4898 = vpack.c.bf16 %v4874, %v4871
        %v4899 = vpack.c.bf16 %v4882, %v4879
        %v4900 = vpack.c.bf16 %v4890, %v4887
        %s4901 = scalar_lea.vmem [#allocation7], 128
        %v4902 = vld [vmem:[%s4901] sm:$0xff]
        %v4903 = vld [vmem:[%s4901 + $0x8] sm:$0xff]
        %v4904 = vld [vmem:[%s4901 + $0x10] sm:$0xff]
        %v4905 = vld [vmem:[%s4901 + $0x18] sm:$0xff]
        %v4910 = vunpack.c.l.b16 %v4902
        %v4911 = vunpack.c.h.b16 %v4902
        %v4912 = vunpack.c.l.b16 %v4903
        %v4913 = vunpack.c.h.b16 %v4903
        %v4914 = vunpack.c.l.b16 %v4904
        %v4915 = vunpack.c.h.b16 %v4904
        %v4916 = vunpack.c.l.b16 %v4905
        %v4917 = vunpack.c.h.b16 %v4905
        %v4918 = vpack.c.b16 %v4912, %v4910
        %v4919 = vpack.c.b16 %v4913, %v4911
        %v4920 = vpack.c.b16 %v4916, %v4914
        %v4921 = vpack.c.b16 %v4917, %v4915
        %v4927 = vsel %vm1923, %v4893, 0
        %v4930 = vsel %vm1923, %v4894, 0
        %v4933 = vsel %vm1923, %v4895, 0
        %v4936 = vsel %vm1923, %v4896, 0
        %v4939 = vsel %vm1923, %v4897, 0
        %v4942 = vsel %vm1923, %v4898, 0
        %v4945 = vsel %vm1923, %v4899, 0
        %v4948 = vsel %vm1923, %v4900, 0
        %4950 = vmatprep.subr.bf16.mxu0 %v4919
        %4951 = vmatpush1.bf16.msra.mxu0 %v4918
        %4952 = vmatprep.subr.bf16.mxu0 %v4921
        %4953 = vmatpush1.bf16.msra.mxu0 %v4920
        %4954 = vmatprep.subr.bf16.mxu0 0
        %4955 = vmatpush1.bf16.msra.mxu0 0
        %4956 = vmatprep.subr.bf16.mxu0 0
        %4957 = vmatpush1.bf16.msra.mxu0 0
        %4958 = vmatprep.subr.bf16.mxu0 0
        %4959 = vmatpush1.bf16.msra.mxu0 0
        %4960 = vmatprep.subr.bf16.mxu0 0
        %4961 = vmatpush1.bf16.msra.mxu0 0
        %4962 = vmatprep.subr.bf16.mxu0 0
        %4963 = vmatpush1.bf16.msra.mxu0 0
        %4964 = vmatprep.subr.bf16.mxu0 0
        %4965 = vmatpush1.bf16.msra.mxu0 0
        %4966 = vmatprep.subr.bf16.mxu0 0
        %4967 = vmatpush1.bf16.msra.mxu0 0
        %4968 = vmatprep.subr.bf16.mxu0 0
        %4969 = vmatpush1.bf16.msra.mxu0 0
        %4970 = vmatprep.subr.bf16.mxu0 0
        %4971 = vmatpush1.bf16.msra.mxu0 0
        %4972 = vmatprep.subr.bf16.mxu0 0
        %4973 = vmatpush1.bf16.msra.mxu0 0
        %4974 = vmatprep.subr.bf16.mxu0 0
        %4975 = vmatpush1.bf16.msra.mxu0 0
        %4976 = vmatprep.subr.bf16.mxu0 0
        %4977 = vmatpush1.bf16.msra.mxu0 0
        %4978 = vmatprep.subr.bf16.mxu0 0
        %4979 = vmatpush1.bf16.msra.mxu0 0
        %4980 = vmatprep.subr.bf16.mxu0 0
        %4981 = vmatpush1.bf16.msra.mxu0 0
        %4982 = vmatprep.mubr.bf16.mxu0 0
        %4983 = vmatmul.mubr.bf16.gmra.mrb[0].mxu0 %v4927
        %v4984 = vpop.f32.mrb[0].mxu0
        %v4985 = vadd.f32 0.0, %v4984
        %v4986 = vpop.f32.mrb[0].mxu0
        %v4987 = vadd.f32 0.0, %v4986
        %v4988 = vpop.f32.mrb[0].mxu0
        %v4989 = vadd.f32 0.0, %v4988
        %v4990 = vpop.f32.mrb[0].mxu0
        %v4991 = vadd.f32 0.0, %v4990
        %4992 = vmatprep.mubr.bf16.mxu0 0
        %4993 = vmatmul.mubr.bf16.gmra.mrb[0].mxu0 %v4930
        %v4994 = vpop.f32.mrb[0].mxu0
        %v4995 = vadd.f32 0.0, %v4994
        %v4996 = vpop.f32.mrb[0].mxu0
        %v4997 = vadd.f32 0.0, %v4996
        %v4998 = vpop.f32.mrb[0].mxu0
        %v4999 = vadd.f32 0.0, %v4998
        %v5000 = vpop.f32.mrb[0].mxu0
        %v5001 = vadd.f32 0.0, %v5000
        %5002 = vmatprep.mubr.bf16.mxu0 0
        %5003 = vmatmul.mubr.bf16.gmra.mrb[0].mxu0 %v4933
        %v5004 = vpop.f32.mrb[0].mxu0
        %v5005 = vadd.f32 0.0, %v5004
        %v5006 = vpop.f32.mrb[0].mxu0
        %v5007 = vadd.f32 0.0, %v5006
        %v5008 = vpop.f32.mrb[0].mxu0
        %v5009 = vadd.f32 0.0, %v5008
        %v5010 = vpop.f32.mrb[0].mxu0
        %v5011 = vadd.f32 0.0, %v5010
        %5012 = vmatprep.mubr.bf16.mxu0 0
        %5013 = vmatmul.mubr.bf16.gmra.mrb[0].mxu0 %v4936
        %v5014 = vpop.f32.mrb[0].mxu0
        %v5015 = vadd.f32 0.0, %v5014
        %v5016 = vpop.f32.mrb[0].mxu0
        %v5017 = vadd.f32 0.0, %v5016
        %v5018 = vpop.f32.mrb[0].mxu0
        %v5019 = vadd.f32 0.0, %v5018
        %v5020 = vpop.f32.mrb[0].mxu0
        %v5021 = vadd.f32 0.0, %v5020
        %5022 = vmatprep.mubr.bf16.mxu0 0
        %5023 = vmatmul.mubr.bf16.gmra.mrb[0].mxu0 %v4939
        %v5024 = vpop.f32.mrb[0].mxu0
        %v5025 = vadd.f32 0.0, %v5024
        %v5026 = vpop.f32.mrb[0].mxu0
        %v5027 = vadd.f32 0.0, %v5026
        %v5028 = vpop.f32.mrb[0].mxu0
        %v5029 = vadd.f32 0.0, %v5028
        %v5030 = vpop.f32.mrb[0].mxu0
        %v5031 = vadd.f32 0.0, %v5030
        %5032 = vmatprep.mubr.bf16.mxu0 0
        %5033 = vmatmul.mubr.bf16.gmra.mrb[0].mxu0 %v4942
        %v5034 = vpop.f32.mrb[0].mxu0
        %v5035 = vadd.f32 0.0, %v5034
        %v5036 = vpop.f32.mrb[0].mxu0
        %v5037 = vadd.f32 0.0, %v5036
        %v5038 = vpop.f32.mrb[0].mxu0
        %v5039 = vadd.f32 0.0, %v5038
        %v5040 = vpop.f32.mrb[0].mxu0
        %v5041 = vadd.f32 0.0, %v5040
        %5042 = vmatprep.mubr.bf16.mxu0 0
        %5043 = vmatmul.mubr.bf16.gmra.mrb[0].mxu0 %v4945
        %v5044 = vpop.f32.mrb[0].mxu0
        %v5045 = vadd.f32 0.0, %v5044
        %v5046 = vpop.f32.mrb[0].mxu0
        %v5047 = vadd.f32 0.0, %v5046
        %v5048 = vpop.f32.mrb[0].mxu0
        %v5049 = vadd.f32 0.0, %v5048
        %v5050 = vpop.f32.mrb[0].mxu0
        %v5051 = vadd.f32 0.0, %v5050
        %5052 = vmatprep.mubr.bf16.mxu0 0
        %5053 = vmatmul.mubr.bf16.gmra.mrb[0].mxu0 %v4948
        %v5054 = vpop.f32.mrb[0].mxu0
        %v5055 = vadd.f32 0.0, %v5054
        %v5056 = vpop.f32.mrb[0].mxu0
        %v5057 = vadd.f32 0.0, %v5056
        %v5058 = vpop.f32.mrb[0].mxu0
        %v5059 = vadd.f32 0.0, %v5058
        %v5060 = vpop.f32.mrb[0].mxu0
        %v5061 = vadd.f32 0.0, %v5060
        %5062 = vdwg.mxu0
        %v5063 = vadd.f32 %v4467, %v4985
        %v5064 = vadd.f32 %v4468, %v4987
        %v5065 = vadd.f32 %v4469, %v4989
        %v5066 = vadd.f32 %v4470, %v4991
        %v5067 = vadd.f32 %v4471, %v4995
        %v5068 = vadd.f32 %v4472, %v4997
        %v5069 = vadd.f32 %v4473, %v4999
        %v5070 = vadd.f32 %v4474, %v5001
        %v5071 = vadd.f32 %v4475, %v5005
        %v5072 = vadd.f32 %v4476, %v5007
        %v5073 = vadd.f32 %v4477, %v5009
        %v5074 = vadd.f32 %v4478, %v5011
        %v5075 = vadd.f32 %v4479, %v5015
        %v5076 = vadd.f32 %v4480, %v5017
        %v5077 = vadd.f32 %v4481, %v5019
        %v5078 = vadd.f32 %v4482, %v5021
        %v5079 = vadd.f32 %v4483, %v5025
        %v5080 = vadd.f32 %v4484, %v5027
        %v5081 = vadd.f32 %v4485, %v5029
        %v5082 = vadd.f32 %v4486, %v5031
        %v5083 = vadd.f32 %v4487, %v5035
        %v5084 = vadd.f32 %v4488, %v5037
        %v5085 = vadd.f32 %v4489, %v5039
        %v5086 = vadd.f32 %v4490, %v5041
        %v5087 = vadd.f32 %v4491, %v5045
        %v5088 = vadd.f32 %v4492, %v5047
        %v5089 = vadd.f32 %v4493, %v5049
        %v5090 = vadd.f32 %v4494, %v5051
        %v5091 = vadd.f32 %v4495, %v5055
        %v5092 = vadd.f32 %v4496, %v5057
        %v5093 = vadd.f32 %v4497, %v5059
        %v5094 = vadd.f32 %v4498, %v5061
        %5103 = vrot.lane.b32.xlu0 %v1832, 96
        %v5104 = vpop.permute.xlu0 %5103
        %5105 = vrot.lane.b32.xlu0 %v1834, 96
        %v5106 = vpop.permute.xlu0 %5105
        %5107 = vrot.lane.b32.xlu0 %v1836, 96
        %v5108 = vpop.permute.xlu0 %5107
        %5109 = vrot.lane.b32.xlu0 %v1838, 96
        %v5110 = vpop.permute.xlu0 %5109
        %5111 = vrot.lane.b32.xlu0 %v1840, 96
        %v5112 = vpop.permute.xlu0 %5111
        %5113 = vrot.lane.b32.xlu0 %v1842, 96
        %v5114 = vpop.permute.xlu0 %5113
        %5115 = vrot.lane.b32.xlu0 %v1844, 96
        %v5116 = vpop.permute.xlu0 %5115
        %5117 = vrot.lane.b32.xlu0 %v1846, 96
        %v5118 = vpop.permute.xlu0 %5117
        %5127 = vrot.lane.b32.xlu0 %v1848, 96
        %v5128 = vpop.permute.xlu0 %5127
        %5129 = vrot.lane.b32.xlu0 %v1850, 96
        %v5130 = vpop.permute.xlu0 %5129
        %5131 = vrot.lane.b32.xlu0 %v1852, 96
        %v5132 = vpop.permute.xlu0 %5131
        %5133 = vrot.lane.b32.xlu0 %v1854, 96
        %v5134 = vpop.permute.xlu0 %5133
        %5135 = vrot.lane.b32.xlu0 %v1856, 96
        %v5136 = vpop.permute.xlu0 %5135
        %5137 = vrot.lane.b32.xlu0 %v1858, 96
        %v5138 = vpop.permute.xlu0 %5137
        %5139 = vrot.lane.b32.xlu0 %v1860, 96
        %v5140 = vpop.permute.xlu0 %5139
        %5141 = vrot.lane.b32.xlu0 %v1862, 96
        %v5142 = vpop.permute.xlu0 %5141
        %v5144 = vsel %vm1923, %v5104, 0
        %v5147 = vsel %vm1923, %v5106, 0
        %v5150 = vsel %vm1923, %v5108, 0
        %v5153 = vsel %vm1923, %v5110, 0
        %v5156 = vsel %vm1923, %v5112, 0
        %v5159 = vsel %vm1923, %v5114, 0
        %v5162 = vsel %vm1923, %v5116, 0
        %v5165 = vsel %vm1923, %v5118, 0
        %v5168 = vsel %vm1923, %v5128, 0
        %v5171 = vsel %vm1923, %v5130, 0
        %v5174 = vsel %vm1923, %v5132, 0
        %v5177 = vsel %vm1923, %v5134, 0
        %v5180 = vsel %vm1923, %v5136, 0
        %v5183 = vsel %vm1923, %v5138, 0
        %v5186 = vsel %vm1923, %v5140, 0
        %v5189 = vsel %vm1923, %v5142, 0
        %5191 = vmatprep.subr.bf16.mxu0 0
        %5192 = vmatpush1.bf16.xpose.msra.mxu0 %v5168
        %5193 = vmatprep.subr.bf16.mxu0 0
        %5194 = vmatpush1.bf16.xpose.msra.mxu0 %v5171
        %5195 = vmatprep.subr.bf16.mxu0 0
        %5196 = vmatpush1.bf16.xpose.msra.mxu0 %v5174
        %5197 = vmatprep.subr.bf16.mxu0 0
        %5198 = vmatpush1.bf16.xpose.msra.mxu0 %v5177
        %5199 = vmatprep.subr.bf16.mxu0 0
        %5200 = vmatpush1.bf16.xpose.msra.mxu0 %v5180
        %5201 = vmatprep.subr.bf16.mxu0 0
        %5202 = vmatpush1.bf16.xpose.msra.mxu0 %v5183
        %5203 = vmatprep.subr.bf16.mxu0 0
        %5204 = vmatpush1.bf16.xpose.msra.mxu0 %v5186
        %5205 = vmatprep.subr.bf16.mxu0 0
        %5206 = vmatpush1.bf16.xpose.msra.mxu0 %v5189
        %5207 = vmatprep.subr.bf16.mxu0 0
        %5208 = vmatpush1.bf16.xpose.msra.mxu0 0
        %5209 = vmatprep.subr.bf16.mxu0 0
        %5210 = vmatpush1.bf16.xpose.msra.mxu0 0
        %5211 = vmatprep.subr.bf16.mxu0 0
        %5212 = vmatpush1.bf16.xpose.msra.mxu0 0
        %5213 = vmatprep.subr.bf16.mxu0 0
        %5214 = vmatpush1.bf16.xpose.msra.mxu0 0
        %5215 = vmatprep.subr.bf16.mxu0 0
        %5216 = vmatpush1.bf16.xpose.msra.mxu0 0
        %5217 = vmatprep.subr.bf16.mxu0 0
        %5218 = vmatpush1.bf16.xpose.msra.mxu0 0
        %5219 = vmatprep.subr.bf16.mxu0 0
        %5220 = vmatpush1.bf16.xpose.msra.mxu0 0
        %5221 = vmatprep.subr.bf16.mxu0 0
        %5222 = vmatpush1.bf16.xpose.msra.mxu0 0
        %5223 = vmatprep.mubr.bf16.mxu0 0
        %5224 = vmatmul.mubr.bf16.gmra.mrb[0].mxu0 %v5144
        %v5225 = vpop.f32.mrb[0].mxu0
        %v5226 = vadd.f32 0.0, %v5225
        %v5227 = vpop.f32.mrb[0].mxu0
        %v5228 = vpop.f32.mrb[0].mxu0
        %v5229 = vadd.f32 0.0, %v5228
        %v5230 = vpop.f32.mrb[0].mxu0
        %5231 = vmatprep.mubr.bf16.mxu0 0
        %5232 = vmatmul.mubr.bf16.gmra.mrb[0].mxu0 %v5147
        %v5233 = vpop.f32.mrb[0].mxu0
        %v5234 = vadd.f32 0.0, %v5233
        %v5235 = vpop.f32.mrb[0].mxu0
        %v5236 = vpop.f32.mrb[0].mxu0
        %v5237 = vadd.f32 0.0, %v5236
        %v5238 = vpop.f32.mrb[0].mxu0
        %5239 = vmatprep.mubr.bf16.mxu0 0
        %5240 = vmatmul.mubr.bf16.gmra.mrb[0].mxu0 %v5150
        %v5241 = vpop.f32.mrb[0].mxu0
        %v5242 = vadd.f32 0.0, %v5241
        %v5243 = vpop.f32.mrb[0].mxu0
        %v5244 = vpop.f32.mrb[0].mxu0
        %v5245 = vadd.f32 0.0, %v5244
        %v5246 = vpop.f32.mrb[0].mxu0
        %5247 = vmatprep.mubr.bf16.mxu0 0
        %5248 = vmatmul.mubr.bf16.gmra.mrb[0].mxu0 %v5153
        %v5249 = vpop.f32.mrb[0].mxu0
        %v5250 = vadd.f32 0.0, %v5249
        %v5251 = vpop.f32.mrb[0].mxu0
        %v5252 = vpop.f32.mrb[0].mxu0
        %v5253 = vadd.f32 0.0, %v5252
        %v5254 = vpop.f32.mrb[0].mxu0
        %5255 = vmatprep.mubr.bf16.mxu0 0
        %5256 = vmatmul.mubr.bf16.gmra.mrb[0].mxu0 %v5156
        %v5257 = vpop.f32.mrb[0].mxu0
        %v5258 = vadd.f32 0.0, %v5257
        %v5259 = vpop.f32.mrb[0].mxu0
        %v5260 = vpop.f32.mrb[0].mxu0
        %v5261 = vadd.f32 0.0, %v5260
        %v5262 = vpop.f32.mrb[0].mxu0
        %5263 = vmatprep.mubr.bf16.mxu0 0
        %5264 = vmatmul.mubr.bf16.gmra.mrb[0].mxu0 %v5159
        %v5265 = vpop.f32.mrb[0].mxu0
        %v5266 = vadd.f32 0.0, %v5265
        %v5267 = vpop.f32.mrb[0].mxu0
        %v5268 = vpop.f32.mrb[0].mxu0
        %v5269 = vadd.f32 0.0, %v5268
        %v5270 = vpop.f32.mrb[0].mxu0
        %5271 = vmatprep.mubr.bf16.mxu0 0
        %5272 = vmatmul.mubr.bf16.gmra.mrb[0].mxu0 %v5162
        %v5273 = vpop.f32.mrb[0].mxu0
        %v5274 = vadd.f32 0.0, %v5273
        %v5275 = vpop.f32.mrb[0].mxu0
        %v5276 = vpop.f32.mrb[0].mxu0
        %v5277 = vadd.f32 0.0, %v5276
        %v5278 = vpop.f32.mrb[0].mxu0
        %5279 = vmatprep.mubr.bf16.mxu0 0
        %5280 = vmatmul.mubr.bf16.gmra.mrb[0].mxu0 %v5165
        %v5281 = vpop.f32.mrb[0].mxu0
        %v5282 = vadd.f32 0.0, %v5281
        %v5283 = vpop.f32.mrb[0].mxu0
        %v5284 = vpop.f32.mrb[0].mxu0
        %v5285 = vadd.f32 0.0, %v5284
        %v5286 = vpop.f32.mrb[0].mxu0
        %5287 = vdwg.mxu0
        %5288 = vmax.xlane.f32.xlu0 %v5226
        %v5289 = vpop.xlane.xlu0 %5288
        %5290 = vmax.xlane.f32.xlu0 %v5229
        %v5291 = vpop.xlane.xlu0 %5290
        %5292 = vmax.xlane.f32.xlu0 %v5234
        %v5293 = vpop.xlane.xlu0 %5292
        %5294 = vmax.xlane.f32.xlu0 %v5237
        %v5295 = vpop.xlane.xlu0 %5294
        %5296 = vmax.xlane.f32.xlu0 %v5242
        %v5297 = vpop.xlane.xlu0 %5296
        %5298 = vmax.xlane.f32.xlu0 %v5245
        %v5299 = vpop.xlane.xlu0 %5298
        %5300 = vmax.xlane.f32.xlu0 %v5250
        %v5301 = vpop.xlane.xlu0 %5300
        %5302 = vmax.xlane.f32.xlu0 %v5253
        %v5303 = vpop.xlane.xlu0 %5302
        %5304 = vmax.xlane.f32.xlu0 %v5258
        %v5305 = vpop.xlane.xlu0 %5304
        %5306 = vmax.xlane.f32.xlu0 %v5261
        %v5307 = vpop.xlane.xlu0 %5306
        %5308 = vmax.xlane.f32.xlu0 %v5266
        %v5309 = vpop.xlane.xlu0 %5308
        %5310 = vmax.xlane.f32.xlu0 %v5269
        %v5311 = vpop.xlane.xlu0 %5310
        %5312 = vmax.xlane.f32.xlu0 %v5274
        %v5313 = vpop.xlane.xlu0 %5312
        %5314 = vmax.xlane.f32.xlu0 %v5277
        %v5315 = vpop.xlane.xlu0 %5314
        %5316 = vmax.xlane.f32.xlu0 %v5282
        %v5317 = vpop.xlane.xlu0 %5316
        %5318 = vmax.xlane.f32.xlu0 %v5285
        %v5319 = vpop.xlane.xlu0 %5318
        %v5320 = vsub.f32 %v5226, %v5289
        %v5321 = vsub.f32 %v5229, %v5291
        %v5322 = vsub.f32 %v5234, %v5293
        %v5323 = vsub.f32 %v5237, %v5295
        %v5324 = vsub.f32 %v5242, %v5297
        %v5325 = vsub.f32 %v5245, %v5299
        %v5326 = vsub.f32 %v5250, %v5301
        %v5327 = vsub.f32 %v5253, %v5303
        %v5328 = vsub.f32 %v5258, %v5305
        %v5329 = vsub.f32 %v5261, %v5307
        %v5330 = vsub.f32 %v5266, %v5309
        %v5331 = vsub.f32 %v5269, %v5311
        %v5332 = vsub.f32 %v5274, %v5313
        %v5333 = vsub.f32 %v5277, %v5315
        %v5334 = vsub.f32 %v5282, %v5317
        %v5335 = vsub.f32 %v5285, %v5319
        %v5336 = vmul.f32 %v5320, 1.442695
        %v5337 = vpow.pop %v5336
        %v5338 = vmul.f32 %v5321, 1.442695
        %v5339 = vpow.pop %v5338
        %v5340 = vmul.f32 %v5322, 1.442695
        %v5341 = vpow.pop %v5340
        %v5342 = vmul.f32 %v5323, 1.442695
        %v5343 = vpow.pop %v5342
        %v5344 = vmul.f32 %v5324, 1.442695
        %v5345 = vpow.pop %v5344
        %v5346 = vmul.f32 %v5325, 1.442695
        %v5347 = vpow.pop %v5346
        %v5348 = vmul.f32 %v5326, 1.442695
        %v5349 = vpow.pop %v5348
        %v5350 = vmul.f32 %v5327, 1.442695
        %v5351 = vpow.pop %v5350
        %v5352 = vmul.f32 %v5328, 1.442695
        %v5353 = vpow.pop %v5352
        %v5354 = vmul.f32 %v5329, 1.442695
        %v5355 = vpow.pop %v5354
        %v5356 = vmul.f32 %v5330, 1.442695
        %v5357 = vpow.pop %v5356
        %v5358 = vmul.f32 %v5331, 1.442695
        %v5359 = vpow.pop %v5358
        %v5360 = vmul.f32 %v5332, 1.442695
        %v5361 = vpow.pop %v5360
        %v5362 = vmul.f32 %v5333, 1.442695
        %v5363 = vpow.pop %v5362
        %v5364 = vmul.f32 %v5334, 1.442695
        %v5365 = vpow.pop %v5364
        %v5366 = vmul.f32 %v5335, 1.442695
        %v5367 = vpow.pop %v5366
        %5368 = vadd.xlane.f32.xlu0 %v5337
        %v5369 = vpop.xlane.xlu0 %5368
        %5370 = vadd.xlane.f32.xlu0 %v5339
        %v5371 = vpop.xlane.xlu0 %5370
        %5372 = vadd.xlane.f32.xlu0 %v5341
        %v5373 = vpop.xlane.xlu0 %5372
        %5374 = vadd.xlane.f32.xlu0 %v5343
        %v5375 = vpop.xlane.xlu0 %5374
        %5376 = vadd.xlane.f32.xlu0 %v5345
        %v5377 = vpop.xlane.xlu0 %5376
        %5378 = vadd.xlane.f32.xlu0 %v5347
        %v5379 = vpop.xlane.xlu0 %5378
        %5380 = vadd.xlane.f32.xlu0 %v5349
        %v5381 = vpop.xlane.xlu0 %5380
        %5382 = vadd.xlane.f32.xlu0 %v5351
        %v5383 = vpop.xlane.xlu0 %5382
        %5384 = vadd.xlane.f32.xlu0 %v5353
        %v5385 = vpop.xlane.xlu0 %5384
        %5386 = vadd.xlane.f32.xlu0 %v5355
        %v5387 = vpop.xlane.xlu0 %5386
        %5388 = vadd.xlane.f32.xlu0 %v5357
        %v5389 = vpop.xlane.xlu0 %5388
        %5390 = vadd.xlane.f32.xlu0 %v5359
        %v5391 = vpop.xlane.xlu0 %5390
        %5392 = vadd.xlane.f32.xlu0 %v5361
        %v5393 = vpop.xlane.xlu0 %5392
        %5394 = vadd.xlane.f32.xlu0 %v5363
        %v5395 = vpop.xlane.xlu0 %5394
        %5396 = vadd.xlane.f32.xlu0 %v5365
        %v5397 = vpop.xlane.xlu0 %5396
        %5398 = vadd.xlane.f32.xlu0 %v5367
        %v5399 = vpop.xlane.xlu0 %5398
        %v5400 = vrcp.pop %v5369
        %v5401 = vrcp.pop %v5371
        %v5402 = vrcp.pop %v5373
        %v5403 = vrcp.pop %v5375
        %v5404 = vrcp.pop %v5377
        %v5405 = vrcp.pop %v5379
        %v5406 = vrcp.pop %v5381
        %v5407 = vrcp.pop %v5383
        %v5408 = vrcp.pop %v5385
        %v5409 = vrcp.pop %v5387
        %v5410 = vrcp.pop %v5389
        %v5411 = vrcp.pop %v5391
        %v5412 = vrcp.pop %v5393
        %v5413 = vrcp.pop %v5395
        %v5414 = vrcp.pop %v5397
        %v5415 = vrcp.pop %v5399
        %v5416 = vmul.f32 %v5337, %v5400
        %v5417 = vmul.f32 %v5339, %v5401
        %v5418 = vmul.f32 %v5341, %v5402
        %v5419 = vmul.f32 %v5343, %v5403
        %v5420 = vmul.f32 %v5345, %v5404
        %v5421 = vmul.f32 %v5347, %v5405
        %v5422 = vmul.f32 %v5349, %v5406
        %v5423 = vmul.f32 %v5351, %v5407
        %v5424 = vmul.f32 %v5353, %v5408
        %v5425 = vmul.f32 %v5355, %v5409
        %v5426 = vmul.f32 %v5357, %v5410
        %v5427 = vmul.f32 %v5359, %v5411
        %v5428 = vmul.f32 %v5361, %v5412
        %v5429 = vmul.f32 %v5363, %v5413
        %v5430 = vmul.f32 %v5365, %v5414
        %v5431 = vmul.f32 %v5367, %v5415
        %v5432 = vpack.c.bf16 %v5417, %v5416
        %v5433 = vpack.c.bf16 %v5419, %v5418
        %v5434 = vpack.c.bf16 %v5421, %v5420
        %v5435 = vpack.c.bf16 %v5423, %v5422
        %v5436 = vpack.c.bf16 %v5425, %v5424
        %v5437 = vpack.c.bf16 %v5427, %v5426
        %v5438 = vpack.c.bf16 %v5429, %v5428
        %v5439 = vpack.c.bf16 %v5431, %v5430
        %5448 = vrot.lane.b32.xlu0 %v1864, 96
        %v5449 = vpop.permute.xlu0 %5448
        %5450 = vrot.lane.b32.xlu0 %v1866, 96
        %v5451 = vpop.permute.xlu0 %5450
        %5452 = vrot.lane.b32.xlu0 %v1868, 96
        %v5453 = vpop.permute.xlu0 %5452
        %5454 = vrot.lane.b32.xlu0 %v1870, 96
        %v5455 = vpop.permute.xlu0 %5454
        %5456 = vrot.lane.b32.xlu0 %v1872, 96
        %v5457 = vpop.permute.xlu0 %5456
        %5458 = vrot.lane.b32.xlu0 %v1874, 96
        %v5459 = vpop.permute.xlu0 %5458
        %5460 = vrot.lane.b32.xlu0 %v1876, 96
        %v5461 = vpop.permute.xlu0 %5460
        %5462 = vrot.lane.b32.xlu0 %v1878, 96
        %v5463 = vpop.permute.xlu0 %5462
        %5472 = vmatprep.subr.bf16.mxu0 0
        %5473 = vmatpush1.bf16.msra.mxu0 %v5449
        %5474 = vmatprep.subr.bf16.mxu0 0
        %5475 = vmatpush1.bf16.msra.mxu0 %v5451
        %5476 = vmatprep.subr.bf16.mxu0 0
        %5477 = vmatpush1.bf16.msra.mxu0 %v5453
        %5478 = vmatprep.subr.bf16.mxu0 0
        %5479 = vmatpush1.bf16.msra.mxu0 %v5455
        %5480 = vmatprep.subr.bf16.mxu0 0
        %5481 = vmatpush1.bf16.msra.mxu0 %v5457
        %5482 = vmatprep.subr.bf16.mxu0 0
        %5483 = vmatpush1.bf16.msra.mxu0 %v5459
        %5484 = vmatprep.subr.bf16.mxu0 0
        %5485 = vmatpush1.bf16.msra.mxu0 %v5461
        %5486 = vmatprep.subr.bf16.mxu0 0
        %5487 = vmatpush1.bf16.msra.mxu0 %v5463
        %5488 = vmatprep.subr.bf16.mxu0 0
        %5489 = vmatpush1.bf16.msra.mxu0 0
        %5490 = vmatprep.subr.bf16.mxu0 0
        %5491 = vmatpush1.bf16.msra.mxu0 0
        %5492 = vmatprep.subr.bf16.mxu0 0
        %5493 = vmatpush1.bf16.msra.mxu0 0
        %5494 = vmatprep.subr.bf16.mxu0 0
        %5495 = vmatpush1.bf16.msra.mxu0 0
        %5496 = vmatprep.subr.bf16.mxu0 0
        %5497 = vmatpush1.bf16.msra.mxu0 0
        %5498 = vmatprep.subr.bf16.mxu0 0
        %5499 = vmatpush1.bf16.msra.mxu0 0
        %5500 = vmatprep.subr.bf16.mxu0 0
        %5501 = vmatpush1.bf16.msra.mxu0 0
        %5502 = vmatprep.subr.bf16.mxu0 0
        %5503 = vmatpush1.bf16.msra.mxu0 0
        %5504 = vmatprep.mubr.bf16.mxu0 0
        %5505 = vmatmul.mubr.bf16.gmra.mrb[0].mxu0 %v5432
        %v5506 = vpop.f32.mrb[0].mxu0
        %v5507 = vadd.f32 0.0, %v5506
        %v5508 = vpop.f32.mrb[0].mxu0
        %v5509 = vpop.f32.mrb[0].mxu0
        %v5510 = vadd.f32 0.0, %v5509
        %v5511 = vpop.f32.mrb[0].mxu0
        %5512 = vmatprep.mubr.bf16.mxu0 0
        %5513 = vmatmul.mubr.bf16.gmra.mrb[0].mxu0 %v5433
        %v5514 = vpop.f32.mrb[0].mxu0
        %v5515 = vadd.f32 0.0, %v5514
        %v5516 = vpop.f32.mrb[0].mxu0
        %v5517 = vpop.f32.mrb[0].mxu0
        %v5518 = vadd.f32 0.0, %v5517
        %v5519 = vpop.f32.mrb[0].mxu0
        %5520 = vmatprep.mubr.bf16.mxu0 0
        %5521 = vmatmul.mubr.bf16.gmra.mrb[0].mxu0 %v5434
        %v5522 = vpop.f32.mrb[0].mxu0
        %v5523 = vadd.f32 0.0, %v5522
        %v5524 = vpop.f32.mrb[0].mxu0
        %v5525 = vpop.f32.mrb[0].mxu0
        %v5526 = vadd.f32 0.0, %v5525
        %v5527 = vpop.f32.mrb[0].mxu0
        %5528 = vmatprep.mubr.bf16.mxu0 0
        %5529 = vmatmul.mubr.bf16.gmra.mrb[0].mxu0 %v5435
        %v5530 = vpop.f32.mrb[0].mxu0
        %v5531 = vadd.f32 0.0, %v5530
        %v5532 = vpop.f32.mrb[0].mxu0
        %v5533 = vpop.f32.mrb[0].mxu0
        %v5534 = vadd.f32 0.0, %v5533
        %v5535 = vpop.f32.mrb[0].mxu0
        %5536 = vmatprep.mubr.bf16.mxu0 0
        %5537 = vmatmul.mubr.bf16.gmra.mrb[0].mxu0 %v5436
        %v5538 = vpop.f32.mrb[0].mxu0
        %v5539 = vadd.f32 0.0, %v5538
        %v5540 = vpop.f32.mrb[0].mxu0
        %v5541 = vpop.f32.mrb[0].mxu0
        %v5542 = vadd.f32 0.0, %v5541
        %v5543 = vpop.f32.mrb[0].mxu0
        %5544 = vmatprep.mubr.bf16.mxu0 0
        %5545 = vmatmul.mubr.bf16.gmra.mrb[0].mxu0 %v5437
        %v5546 = vpop.f32.mrb[0].mxu0
        %v5547 = vadd.f32 0.0, %v5546
        %v5548 = vpop.f32.mrb[0].mxu0
        %v5549 = vpop.f32.mrb[0].mxu0
        %v5550 = vadd.f32 0.0, %v5549
        %v5551 = vpop.f32.mrb[0].mxu0
        %5552 = vmatprep.mubr.bf16.mxu0 0
        %5553 = vmatmul.mubr.bf16.gmra.mrb[0].mxu0 %v5438
        %v5554 = vpop.f32.mrb[0].mxu0
        %v5555 = vadd.f32 0.0, %v5554
        %v5556 = vpop.f32.mrb[0].mxu0
        %v5557 = vpop.f32.mrb[0].mxu0
        %v5558 = vadd.f32 0.0, %v5557
        %v5559 = vpop.f32.mrb[0].mxu0
        %5560 = vmatprep.mubr.bf16.mxu0 0
        %5561 = vmatmul.mubr.bf16.gmra.mrb[0].mxu0 %v5439
        %v5562 = vpop.f32.mrb[0].mxu0
        %v5563 = vadd.f32 0.0, %v5562
        %v5564 = vpop.f32.mrb[0].mxu0
        %v5565 = vpop.f32.mrb[0].mxu0
        %v5566 = vadd.f32 0.0, %v5565
        %v5567 = vpop.f32.mrb[0].mxu0
        %5568 = vdwg.mxu0
        %v5569 = vpack.c.bf16 %v5510, %v5507
        %v5570 = vpack.c.bf16 %v5518, %v5515
        %v5571 = vpack.c.bf16 %v5526, %v5523
        %v5572 = vpack.c.bf16 %v5534, %v5531
        %v5573 = vpack.c.bf16 %v5542, %v5539
        %v5574 = vpack.c.bf16 %v5550, %v5547
        %v5575 = vpack.c.bf16 %v5558, %v5555
        %v5576 = vpack.c.bf16 %v5566, %v5563
        %s5577 = scalar_lea.vmem [#allocation7], 160
        %v5578 = vld [vmem:[%s5577] sm:$0xff]
        %v5579 = vld [vmem:[%s5577 + $0x8] sm:$0xff]
        %v5580 = vld [vmem:[%s5577 + $0x10] sm:$0xff]
        %v5581 = vld [vmem:[%s5577 + $0x18] sm:$0xff]
        %v5586 = vunpack.c.l.b16 %v5578
        %v5587 = vunpack.c.h.b16 %v5578
        %v5588 = vunpack.c.l.b16 %v5579
        %v5589 = vunpack.c.h.b16 %v5579
        %v5590 = vunpack.c.l.b16 %v5580
        %v5591 = vunpack.c.h.b16 %v5580
        %v5592 = vunpack.c.l.b16 %v5581
        %v5593 = vunpack.c.h.b16 %v5581
        %v5594 = vpack.c.b16 %v5588, %v5586
        %v5595 = vpack.c.b16 %v5589, %v5587
        %v5596 = vpack.c.b16 %v5592, %v5590
        %v5597 = vpack.c.b16 %v5593, %v5591
        %v5603 = vsel %vm1923, %v5569, 0
        %v5606 = vsel %vm1923, %v5570, 0
        %v5609 = vsel %vm1923, %v5571, 0
        %v5612 = vsel %vm1923, %v5572, 0
        %v5615 = vsel %vm1923, %v5573, 0
        %v5618 = vsel %vm1923, %v5574, 0
        %v5621 = vsel %vm1923, %v5575, 0
        %v5624 = vsel %vm1923, %v5576, 0
        %5626 = vmatprep.subr.bf16.mxu0 %v5595
        %5627 = vmatpush1.bf16.msra.mxu0 %v5594
        %5628 = vmatprep.subr.bf16.mxu0 %v5597
        %5629 = vmatpush1.bf16.msra.mxu0 %v5596
        %5630 = vmatprep.subr.bf16.mxu0 0
        %5631 = vmatpush1.bf16.msra.mxu0 0
        %5632 = vmatprep.subr.bf16.mxu0 0
        %5633 = vmatpush1.bf16.msra.mxu0 0
        %5634 = vmatprep.subr.bf16.mxu0 0
        %5635 = vmatpush1.bf16.msra.mxu0 0
        %5636 = vmatprep.subr.bf16.mxu0 0
        %5637 = vmatpush1.bf16.msra.mxu0 0
        %5638 = vmatprep.subr.bf16.mxu0 0
        %5639 = vmatpush1.bf16.msra.mxu0 0
        %5640 = vmatprep.subr.bf16.mxu0 0
        %5641 = vmatpush1.bf16.msra.mxu0 0
        %5642 = vmatprep.subr.bf16.mxu0 0
        %5643 = vmatpush1.bf16.msra.mxu0 0
        %5644 = vmatprep.subr.bf16.mxu0 0
        %5645 = vmatpush1.bf16.msra.mxu0 0
        %5646 = vmatprep.subr.bf16.mxu0 0
        %5647 = vmatpush1.bf16.msra.mxu0 0
        %5648 = vmatprep.subr.bf16.mxu0 0
        %5649 = vmatpush1.bf16.msra.mxu0 0
        %5650 = vmatprep.subr.bf16.mxu0 0
        %5651 = vmatpush1.bf16.msra.mxu0 0
        %5652 = vmatprep.subr.bf16.mxu0 0
        %5653 = vmatpush1.bf16.msra.mxu0 0
        %5654 = vmatprep.subr.bf16.mxu0 0
        %5655 = vmatpush1.bf16.msra.mxu0 0
        %5656 = vmatprep.subr.bf16.mxu0 0
        %5657 = vmatpush1.bf16.msra.mxu0 0
        %5658 = vmatprep.mubr.bf16.mxu0 0
        %5659 = vmatmul.mubr.bf16.gmra.mrb[0].mxu0 %v5603
        %v5660 = vpop.f32.mrb[0].mxu0
        %v5661 = vadd.f32 0.0, %v5660
        %v5662 = vpop.f32.mrb[0].mxu0
        %v5663 = vadd.f32 0.0, %v5662
        %v5664 = vpop.f32.mrb[0].mxu0
        %v5665 = vadd.f32 0.0, %v5664
        %v5666 = vpop.f32.mrb[0].mxu0
        %v5667 = vadd.f32 0.0, %v5666
        %5668 = vmatprep.mubr.bf16.mxu0 0
        %5669 = vmatmul.mubr.bf16.gmra.mrb[0].mxu0 %v5606
        %v5670 = vpop.f32.mrb[0].mxu0
        %v5671 = vadd.f32 0.0, %v5670
        %v5672 = vpop.f32.mrb[0].mxu0
        %v5673 = vadd.f32 0.0, %v5672
        %v5674 = vpop.f32.mrb[0].mxu0
        %v5675 = vadd.f32 0.0, %v5674
        %v5676 = vpop.f32.mrb[0].mxu0
        %v5677 = vadd.f32 0.0, %v5676
        %5678 = vmatprep.mubr.bf16.mxu0 0
        %5679 = vmatmul.mubr.bf16.gmra.mrb[0].mxu0 %v5609
        %v5680 = vpop.f32.mrb[0].mxu0
        %v5681 = vadd.f32 0.0, %v5680
        %v5682 = vpop.f32.mrb[0].mxu0
        %v5683 = vadd.f32 0.0, %v5682
        %v5684 = vpop.f32.mrb[0].mxu0
        %v5685 = vadd.f32 0.0, %v5684
        %v5686 = vpop.f32.mrb[0].mxu0
        %v5687 = vadd.f32 0.0, %v5686
        %5688 = vmatprep.mubr.bf16.mxu0 0
        %5689 = vmatmul.mubr.bf16.gmra.mrb[0].mxu0 %v5612
        %v5690 = vpop.f32.mrb[0].mxu0
        %v5691 = vadd.f32 0.0, %v5690
        %v5692 = vpop.f32.mrb[0].mxu0
        %v5693 = vadd.f32 0.0, %v5692
        %v5694 = vpop.f32.mrb[0].mxu0
        %v5695 = vadd.f32 0.0, %v5694
        %v5696 = vpop.f32.mrb[0].mxu0
        %v5697 = vadd.f32 0.0, %v5696
        %5698 = vmatprep.mubr.bf16.mxu0 0
        %5699 = vmatmul.mubr.bf16.gmra.mrb[0].mxu0 %v5615
        %v5700 = vpop.f32.mrb[0].mxu0
        %v5701 = vadd.f32 0.0, %v5700
        %v5702 = vpop.f32.mrb[0].mxu0
        %v5703 = vadd.f32 0.0, %v5702
        %v5704 = vpop.f32.mrb[0].mxu0
        %v5705 = vadd.f32 0.0, %v5704
        %v5706 = vpop.f32.mrb[0].mxu0
        %v5707 = vadd.f32 0.0, %v5706
        %5708 = vmatprep.mubr.bf16.mxu0 0
        %5709 = vmatmul.mubr.bf16.gmra.mrb[0].mxu0 %v5618
        %v5710 = vpop.f32.mrb[0].mxu0
        %v5711 = vadd.f32 0.0, %v5710
        %v5712 = vpop.f32.mrb[0].mxu0
        %v5713 = vadd.f32 0.0, %v5712
        %v5714 = vpop.f32.mrb[0].mxu0
        %v5715 = vadd.f32 0.0, %v5714
        %v5716 = vpop.f32.mrb[0].mxu0
        %v5717 = vadd.f32 0.0, %v5716
        %5718 = vmatprep.mubr.bf16.mxu0 0
        %5719 = vmatmul.mubr.bf16.gmra.mrb[0].mxu0 %v5621
        %v5720 = vpop.f32.mrb[0].mxu0
        %v5721 = vadd.f32 0.0, %v5720
        %v5722 = vpop.f32.mrb[0].mxu0
        %v5723 = vadd.f32 0.0, %v5722
        %v5724 = vpop.f32.mrb[0].mxu0
        %v5725 = vadd.f32 0.0, %v5724
        %v5726 = vpop.f32.mrb[0].mxu0
        %v5727 = vadd.f32 0.0, %v5726
        %5728 = vmatprep.mubr.bf16.mxu0 0
        %5729 = vmatmul.mubr.bf16.gmra.mrb[0].mxu0 %v5624
        %v5730 = vpop.f32.mrb[0].mxu0
        %v5731 = vadd.f32 0.0, %v5730
        %v5732 = vpop.f32.mrb[0].mxu0
        %v5733 = vadd.f32 0.0, %v5732
        %v5734 = vpop.f32.mrb[0].mxu0
        %v5735 = vadd.f32 0.0, %v5734
        %v5736 = vpop.f32.mrb[0].mxu0
        %v5737 = vadd.f32 0.0, %v5736
        %5738 = vdwg.mxu0
        %v5739 = vadd.f32 %v5063, %v5661
        %v5740 = vadd.f32 %v5064, %v5663
        %v5741 = vadd.f32 %v5065, %v5665
        %v5742 = vadd.f32 %v5066, %v5667
        %v5743 = vadd.f32 %v5067, %v5671
        %v5744 = vadd.f32 %v5068, %v5673
        %v5745 = vadd.f32 %v5069, %v5675
        %v5746 = vadd.f32 %v5070, %v5677
        %v5747 = vadd.f32 %v5071, %v5681
        %v5748 = vadd.f32 %v5072, %v5683
        %v5749 = vadd.f32 %v5073, %v5685
        %v5750 = vadd.f32 %v5074, %v5687
        %v5751 = vadd.f32 %v5075, %v5691
        %v5752 = vadd.f32 %v5076, %v5693
        %v5753 = vadd.f32 %v5077, %v5695
        %v5754 = vadd.f32 %v5078, %v5697
        %v5755 = vadd.f32 %v5079, %v5701
        %v5756 = vadd.f32 %v5080, %v5703
        %v5757 = vadd.f32 %v5081, %v5705
        %v5758 = vadd.f32 %v5082, %v5707
        %v5759 = vadd.f32 %v5083, %v5711
        %v5760 = vadd.f32 %v5084, %v5713
        %v5761 = vadd.f32 %v5085, %v5715
        %v5762 = vadd.f32 %v5086, %v5717
        %v5763 = vadd.f32 %v5087, %v5721
        %v5764 = vadd.f32 %v5088, %v5723
        %v5765 = vadd.f32 %v5089, %v5725
        %v5766 = vadd.f32 %v5090, %v5727
        %v5767 = vadd.f32 %v5091, %v5731
        %v5768 = vadd.f32 %v5092, %v5733
        %v5769 = vadd.f32 %v5093, %v5735
        %v5770 = vadd.f32 %v5094, %v5737
        %5771 = vrot.lane.b32.xlu0 %v1832, 64
        %v5772 = vpop.permute.xlu0 %5771
        %5773 = vrot.lane.b32.xlu0 %v1834, 64
        %v5774 = vpop.permute.xlu0 %5773
        %5775 = vrot.lane.b32.xlu0 %v1836, 64
        %v5776 = vpop.permute.xlu0 %5775
        %5777 = vrot.lane.b32.xlu0 %v1838, 64
        %v5778 = vpop.permute.xlu0 %5777
        %5779 = vrot.lane.b32.xlu0 %v1840, 64
        %v5780 = vpop.permute.xlu0 %5779
        %5781 = vrot.lane.b32.xlu0 %v1842, 64
        %v5782 = vpop.permute.xlu0 %5781
        %5783 = vrot.lane.b32.xlu0 %v1844, 64
        %v5784 = vpop.permute.xlu0 %5783
        %5785 = vrot.lane.b32.xlu0 %v1846, 64
        %v5786 = vpop.permute.xlu0 %5785
        %5787 = vrot.lane.b32.xlu0 %v1848, 64
        %v5788 = vpop.permute.xlu0 %5787
        %5789 = vrot.lane.b32.xlu0 %v1850, 64
        %v5790 = vpop.permute.xlu0 %5789
        %5791 = vrot.lane.b32.xlu0 %v1852, 64
        %v5792 = vpop.permute.xlu0 %5791
        %5793 = vrot.lane.b32.xlu0 %v1854, 64
        %v5794 = vpop.permute.xlu0 %5793
        %5795 = vrot.lane.b32.xlu0 %v1856, 64
        %v5796 = vpop.permute.xlu0 %5795
        %5797 = vrot.lane.b32.xlu0 %v1858, 64
        %v5798 = vpop.permute.xlu0 %5797
        %5799 = vrot.lane.b32.xlu0 %v1860, 64
        %v5800 = vpop.permute.xlu0 %5799
        %5801 = vrot.lane.b32.xlu0 %v1862, 64
        %v5802 = vpop.permute.xlu0 %5801
        %v5804 = vsel %vm1923, %v5772, 0
        %v5807 = vsel %vm1923, %v5774, 0
        %v5810 = vsel %vm1923, %v5776, 0
        %v5813 = vsel %vm1923, %v5778, 0
        %v5816 = vsel %vm1923, %v5780, 0
        %v5819 = vsel %vm1923, %v5782, 0
        %v5822 = vsel %vm1923, %v5784, 0
        %v5825 = vsel %vm1923, %v5786, 0
        %v5828 = vsel %vm1923, %v5788, 0
        %v5831 = vsel %vm1923, %v5790, 0
        %v5834 = vsel %vm1923, %v5792, 0
        %v5837 = vsel %vm1923, %v5794, 0
        %v5840 = vsel %vm1923, %v5796, 0
        %v5843 = vsel %vm1923, %v5798, 0
        %v5846 = vsel %vm1923, %v5800, 0
        %v5849 = vsel %vm1923, %v5802, 0
        %5851 = vmatprep.subr.bf16.mxu0 0
        %5852 = vmatpush1.bf16.xpose.msra.mxu0 %v5828
        %5853 = vmatprep.subr.bf16.mxu0 0
        %5854 = vmatpush1.bf16.xpose.msra.mxu0 %v5831
        %5855 = vmatprep.subr.bf16.mxu0 0
        %5856 = vmatpush1.bf16.xpose.msra.mxu0 %v5834
        %5857 = vmatprep.subr.bf16.mxu0 0
        %5858 = vmatpush1.bf16.xpose.msra.mxu0 %v5837
        %5859 = vmatprep.subr.bf16.mxu0 0
        %5860 = vmatpush1.bf16.xpose.msra.mxu0 %v5840
        %5861 = vmatprep.subr.bf16.mxu0 0
        %5862 = vmatpush1.bf16.xpose.msra.mxu0 %v5843
        %5863 = vmatprep.subr.bf16.mxu0 0
        %5864 = vmatpush1.bf16.xpose.msra.mxu0 %v5846
        %5865 = vmatprep.subr.bf16.mxu0 0
        %5866 = vmatpush1.bf16.xpose.msra.mxu0 %v5849
        %5867 = vmatprep.subr.bf16.mxu0 0
        %5868 = vmatpush1.bf16.xpose.msra.mxu0 0
        %5869 = vmatprep.subr.bf16.mxu0 0
        %5870 = vmatpush1.bf16.xpose.msra.mxu0 0
        %5871 = vmatprep.subr.bf16.mxu0 0
        %5872 = vmatpush1.bf16.xpose.msra.mxu0 0
        %5873 = vmatprep.subr.bf16.mxu0 0
        %5874 = vmatpush1.bf16.xpose.msra.mxu0 0
        %5875 = vmatprep.subr.bf16.mxu0 0
        %5876 = vmatpush1.bf16.xpose.msra.mxu0 0
        %5877 = vmatprep.subr.bf16.mxu0 0
        %5878 = vmatpush1.bf16.xpose.msra.mxu0 0
        %5879 = vmatprep.subr.bf16.mxu0 0
        %5880 = vmatpush1.bf16.xpose.msra.mxu0 0
        %5881 = vmatprep.subr.bf16.mxu0 0
        %5882 = vmatpush1.bf16.xpose.msra.mxu0 0
        %5883 = vmatprep.mubr.bf16.mxu0 0
        %5884 = vmatmul.mubr.bf16.gmra.mrb[0].mxu0 %v5804
        %v5885 = vpop.f32.mrb[0].mxu0
        %v5886 = vadd.f32 0.0, %v5885
        %v5887 = vpop.f32.mrb[0].mxu0
        %v5888 = vpop.f32.mrb[0].mxu0
        %v5889 = vadd.f32 0.0, %v5888
        %v5890 = vpop.f32.mrb[0].mxu0
        %5891 = vmatprep.mubr.bf16.mxu0 0
        %5892 = vmatmul.mubr.bf16.gmra.mrb[0].mxu0 %v5807
        %v5893 = vpop.f32.mrb[0].mxu0
        %v5894 = vadd.f32 0.0, %v5893
        %v5895 = vpop.f32.mrb[0].mxu0
        %v5896 = vpop.f32.mrb[0].mxu0
        %v5897 = vadd.f32 0.0, %v5896
        %v5898 = vpop.f32.mrb[0].mxu0
        %5899 = vmatprep.mubr.bf16.mxu0 0
        %5900 = vmatmul.mubr.bf16.gmra.mrb[0].mxu0 %v5810
        %v5901 = vpop.f32.mrb[0].mxu0
        %v5902 = vadd.f32 0.0, %v5901
        %v5903 = vpop.f32.mrb[0].mxu0
        %v5904 = vpop.f32.mrb[0].mxu0
        %v5905 = vadd.f32 0.0, %v5904
        %v5906 = vpop.f32.mrb[0].mxu0
        %5907 = vmatprep.mubr.bf16.mxu0 0
        %5908 = vmatmul.mubr.bf16.gmra.mrb[0].mxu0 %v5813
        %v5909 = vpop.f32.mrb[0].mxu0
        %v5910 = vadd.f32 0.0, %v5909
        %v5911 = vpop.f32.mrb[0].mxu0
        %v5912 = vpop.f32.mrb[0].mxu0
        %v5913 = vadd.f32 0.0, %v5912
        %v5914 = vpop.f32.mrb[0].mxu0
        %5915 = vmatprep.mubr.bf16.mxu0 0
        %5916 = vmatmul.mubr.bf16.gmra.mrb[0].mxu0 %v5816
        %v5917 = vpop.f32.mrb[0].mxu0
        %v5918 = vadd.f32 0.0, %v5917
        %v5919 = vpop.f32.mrb[0].mxu0
        %v5920 = vpop.f32.mrb[0].mxu0
        %v5921 = vadd.f32 0.0, %v5920
        %v5922 = vpop.f32.mrb[0].mxu0
        %5923 = vmatprep.mubr.bf16.mxu0 0
        %5924 = vmatmul.mubr.bf16.gmra.mrb[0].mxu0 %v5819
        %v5925 = vpop.f32.mrb[0].mxu0
        %v5926 = vadd.f32 0.0, %v5925
        %v5927 = vpop.f32.mrb[0].mxu0
        %v5928 = vpop.f32.mrb[0].mxu0
        %v5929 = vadd.f32 0.0, %v5928
        %v5930 = vpop.f32.mrb[0].mxu0
        %5931 = vmatprep.mubr.bf16.mxu0 0
        %5932 = vmatmul.mubr.bf16.gmra.mrb[0].mxu0 %v5822
        %v5933 = vpop.f32.mrb[0].mxu0
        %v5934 = vadd.f32 0.0, %v5933
        %v5935 = vpop.f32.mrb[0].mxu0
        %v5936 = vpop.f32.mrb[0].mxu0
        %v5937 = vadd.f32 0.0, %v5936
        %v5938 = vpop.f32.mrb[0].mxu0
        %5939 = vmatprep.mubr.bf16.mxu0 0
        %5940 = vmatmul.mubr.bf16.gmra.mrb[0].mxu0 %v5825
        %v5941 = vpop.f32.mrb[0].mxu0
        %v5942 = vadd.f32 0.0, %v5941
        %v5943 = vpop.f32.mrb[0].mxu0
        %v5944 = vpop.f32.mrb[0].mxu0
        %v5945 = vadd.f32 0.0, %v5944
        %v5946 = vpop.f32.mrb[0].mxu0
        %5947 = vdwg.mxu0
        %5948 = vmax.xlane.f32.xlu0 %v5886
        %v5949 = vpop.xlane.xlu0 %5948
        %5950 = vmax.xlane.f32.xlu0 %v5889
        %v5951 = vpop.xlane.xlu0 %5950
        %5952 = vmax.xlane.f32.xlu0 %v5894
        %v5953 = vpop.xlane.xlu0 %5952
        %5954 = vmax.xlane.f32.xlu0 %v5897
        %v5955 = vpop.xlane.xlu0 %5954
        %5956 = vmax.xlane.f32.xlu0 %v5902
        %v5957 = vpop.xlane.xlu0 %5956
        %5958 = vmax.xlane.f32.xlu0 %v5905
        %v5959 = vpop.xlane.xlu0 %5958
        %5960 = vmax.xlane.f32.xlu0 %v5910
        %v5961 = vpop.xlane.xlu0 %5960
        %5962 = vmax.xlane.f32.xlu0 %v5913
        %v5963 = vpop.xlane.xlu0 %5962
        %5964 = vmax.xlane.f32.xlu0 %v5918
        %v5965 = vpop.xlane.xlu0 %5964
        %5966 = vmax.xlane.f32.xlu0 %v5921
        %v5967 = vpop.xlane.xlu0 %5966
        %5968 = vmax.xlane.f32.xlu0 %v5926
        %v5969 = vpop.xlane.xlu0 %5968
        %5970 = vmax.xlane.f32.xlu0 %v5929
        %v5971 = vpop.xlane.xlu0 %5970
        %5972 = vmax.xlane.f32.xlu0 %v5934
        %v5973 = vpop.xlane.xlu0 %5972
        %5974 = vmax.xlane.f32.xlu0 %v5937
        %v5975 = vpop.xlane.xlu0 %5974
        %5976 = vmax.xlane.f32.xlu0 %v5942
        %v5977 = vpop.xlane.xlu0 %5976
        %5978 = vmax.xlane.f32.xlu0 %v5945
        %v5979 = vpop.xlane.xlu0 %5978
        %v5980 = vsub.f32 %v5886, %v5949
        %v5981 = vsub.f32 %v5889, %v5951
        %v5982 = vsub.f32 %v5894, %v5953
        %v5983 = vsub.f32 %v5897, %v5955
        %v5984 = vsub.f32 %v5902, %v5957
        %v5985 = vsub.f32 %v5905, %v5959
        %v5986 = vsub.f32 %v5910, %v5961
        %v5987 = vsub.f32 %v5913, %v5963
        %v5988 = vsub.f32 %v5918, %v5965
        %v5989 = vsub.f32 %v5921, %v5967
        %v5990 = vsub.f32 %v5926, %v5969
        %v5991 = vsub.f32 %v5929, %v5971
        %v5992 = vsub.f32 %v5934, %v5973
        %v5993 = vsub.f32 %v5937, %v5975
        %v5994 = vsub.f32 %v5942, %v5977
        %v5995 = vsub.f32 %v5945, %v5979
        %v5996 = vmul.f32 %v5980, 1.442695
        %v5997 = vpow.pop %v5996
        %v5998 = vmul.f32 %v5981, 1.442695
        %v5999 = vpow.pop %v5998
        %v6000 = vmul.f32 %v5982, 1.442695
        %v6001 = vpow.pop %v6000
        %v6002 = vmul.f32 %v5983, 1.442695
        %v6003 = vpow.pop %v6002
        %v6004 = vmul.f32 %v5984, 1.442695
        %v6005 = vpow.pop %v6004
        %v6006 = vmul.f32 %v5985, 1.442695
        %v6007 = vpow.pop %v6006
        %v6008 = vmul.f32 %v5986, 1.442695
        %v6009 = vpow.pop %v6008
        %v6010 = vmul.f32 %v5987, 1.442695
        %v6011 = vpow.pop %v6010
        %v6012 = vmul.f32 %v5988, 1.442695
        %v6013 = vpow.pop %v6012
        %v6014 = vmul.f32 %v5989, 1.442695
        %v6015 = vpow.pop %v6014
        %v6016 = vmul.f32 %v5990, 1.442695
        %v6017 = vpow.pop %v6016
        %v6018 = vmul.f32 %v5991, 1.442695
        %v6019 = vpow.pop %v6018
        %v6020 = vmul.f32 %v5992, 1.442695
        %v6021 = vpow.pop %v6020
        %v6022 = vmul.f32 %v5993, 1.442695
        %v6023 = vpow.pop %v6022
        %v6024 = vmul.f32 %v5994, 1.442695
        %v6025 = vpow.pop %v6024
        %v6026 = vmul.f32 %v5995, 1.442695
        %v6027 = vpow.pop %v6026
        %6028 = vadd.xlane.f32.xlu0 %v5997
        %v6029 = vpop.xlane.xlu0 %6028
        %6030 = vadd.xlane.f32.xlu0 %v5999
        %v6031 = vpop.xlane.xlu0 %6030
        %6032 = vadd.xlane.f32.xlu0 %v6001
        %v6033 = vpop.xlane.xlu0 %6032
        %6034 = vadd.xlane.f32.xlu0 %v6003
        %v6035 = vpop.xlane.xlu0 %6034
        %6036 = vadd.xlane.f32.xlu0 %v6005
        %v6037 = vpop.xlane.xlu0 %6036
        %6038 = vadd.xlane.f32.xlu0 %v6007
        %v6039 = vpop.xlane.xlu0 %6038
        %6040 = vadd.xlane.f32.xlu0 %v6009
        %v6041 = vpop.xlane.xlu0 %6040
        %6042 = vadd.xlane.f32.xlu0 %v6011
        %v6043 = vpop.xlane.xlu0 %6042
        %6044 = vadd.xlane.f32.xlu0 %v6013
        %v6045 = vpop.xlane.xlu0 %6044
        %6046 = vadd.xlane.f32.xlu0 %v6015
        %v6047 = vpop.xlane.xlu0 %6046
        %6048 = vadd.xlane.f32.xlu0 %v6017
        %v6049 = vpop.xlane.xlu0 %6048
        %6050 = vadd.xlane.f32.xlu0 %v6019
        %v6051 = vpop.xlane.xlu0 %6050
        %6052 = vadd.xlane.f32.xlu0 %v6021
        %v6053 = vpop.xlane.xlu0 %6052
        %6054 = vadd.xlane.f32.xlu0 %v6023
        %v6055 = vpop.xlane.xlu0 %6054
        %6056 = vadd.xlane.f32.xlu0 %v6025
        %v6057 = vpop.xlane.xlu0 %6056
        %6058 = vadd.xlane.f32.xlu0 %v6027
        %v6059 = vpop.xlane.xlu0 %6058
        %v6060 = vrcp.pop %v6029
        %v6061 = vrcp.pop %v6031
        %v6062 = vrcp.pop %v6033
        %v6063 = vrcp.pop %v6035
        %v6064 = vrcp.pop %v6037
        %v6065 = vrcp.pop %v6039
        %v6066 = vrcp.pop %v6041
        %v6067 = vrcp.pop %v6043
        %v6068 = vrcp.pop %v6045
        %v6069 = vrcp.pop %v6047
        %v6070 = vrcp.pop %v6049
        %v6071 = vrcp.pop %v6051
        %v6072 = vrcp.pop %v6053
        %v6073 = vrcp.pop %v6055
        %v6074 = vrcp.pop %v6057
        %v6075 = vrcp.pop %v6059
        %v6076 = vmul.f32 %v5997, %v6060
        %v6077 = vmul.f32 %v5999, %v6061
        %v6078 = vmul.f32 %v6001, %v6062
        %v6079 = vmul.f32 %v6003, %v6063
        %v6080 = vmul.f32 %v6005, %v6064
        %v6081 = vmul.f32 %v6007, %v6065
        %v6082 = vmul.f32 %v6009, %v6066
        %v6083 = vmul.f32 %v6011, %v6067
        %v6084 = vmul.f32 %v6013, %v6068
        %v6085 = vmul.f32 %v6015, %v6069
        %v6086 = vmul.f32 %v6017, %v6070
        %v6087 = vmul.f32 %v6019, %v6071
        %v6088 = vmul.f32 %v6021, %v6072
        %v6089 = vmul.f32 %v6023, %v6073
        %v6090 = vmul.f32 %v6025, %v6074
        %v6091 = vmul.f32 %v6027, %v6075
        %v6092 = vpack.c.bf16 %v6077, %v6076
        %v6093 = vpack.c.bf16 %v6079, %v6078
        %v6094 = vpack.c.bf16 %v6081, %v6080
        %v6095 = vpack.c.bf16 %v6083, %v6082
        %v6096 = vpack.c.bf16 %v6085, %v6084
        %v6097 = vpack.c.bf16 %v6087, %v6086
        %v6098 = vpack.c.bf16 %v6089, %v6088
        %v6099 = vpack.c.bf16 %v6091, %v6090
        %6100 = vrot.lane.b32.xlu0 %v1864, 64
        %v6101 = vpop.permute.xlu0 %6100
        %6102 = vrot.lane.b32.xlu0 %v1866, 64
        %v6103 = vpop.permute.xlu0 %6102
        %6104 = vrot.lane.b32.xlu0 %v1868, 64
        %v6105 = vpop.permute.xlu0 %6104
        %6106 = vrot.lane.b32.xlu0 %v1870, 64
        %v6107 = vpop.permute.xlu0 %6106
        %6108 = vrot.lane.b32.xlu0 %v1872, 64
        %v6109 = vpop.permute.xlu0 %6108
        %6110 = vrot.lane.b32.xlu0 %v1874, 64
        %v6111 = vpop.permute.xlu0 %6110
        %6112 = vrot.lane.b32.xlu0 %v1876, 64
        %v6113 = vpop.permute.xlu0 %6112
        %6114 = vrot.lane.b32.xlu0 %v1878, 64
        %v6115 = vpop.permute.xlu0 %6114
        %6124 = vmatprep.subr.bf16.mxu0 0
        %6125 = vmatpush1.bf16.msra.mxu0 %v6101
        %6126 = vmatprep.subr.bf16.mxu0 0
        %6127 = vmatpush1.bf16.msra.mxu0 %v6103
        %6128 = vmatprep.subr.bf16.mxu0 0
        %6129 = vmatpush1.bf16.msra.mxu0 %v6105
        %6130 = vmatprep.subr.bf16.mxu0 0
        %6131 = vmatpush1.bf16.msra.mxu0 %v6107
        %6132 = vmatprep.subr.bf16.mxu0 0
        %6133 = vmatpush1.bf16.msra.mxu0 %v6109
        %6134 = vmatprep.subr.bf16.mxu0 0
        %6135 = vmatpush1.bf16.msra.mxu0 %v6111
        %6136 = vmatprep.subr.bf16.mxu0 0
        %6137 = vmatpush1.bf16.msra.mxu0 %v6113
        %6138 = vmatprep.subr.bf16.mxu0 0
        %6139 = vmatpush1.bf16.msra.mxu0 %v6115
        %6140 = vmatprep.subr.bf16.mxu0 0
        %6141 = vmatpush1.bf16.msra.mxu0 0
        %6142 = vmatprep.subr.bf16.mxu0 0
        %6143 = vmatpush1.bf16.msra.mxu0 0
        %6144 = vmatprep.subr.bf16.mxu0 0
        %6145 = vmatpush1.bf16.msra.mxu0 0
        %6146 = vmatprep.subr.bf16.mxu0 0
        %6147 = vmatpush1.bf16.msra.mxu0 0
        %6148 = vmatprep.subr.bf16.mxu0 0
        %6149 = vmatpush1.bf16.msra.mxu0 0
        %6150 = vmatprep.subr.bf16.mxu0 0
        %6151 = vmatpush1.bf16.msra.mxu0 0
        %6152 = vmatprep.subr.bf16.mxu0 0
        %6153 = vmatpush1.bf16.msra.mxu0 0
        %6154 = vmatprep.subr.bf16.mxu0 0
        %6155 = vmatpush1.bf16.msra.mxu0 0
        %6156 = vmatprep.mubr.bf16.mxu0 0
        %6157 = vmatmul.mubr.bf16.gmra.mrb[0].mxu0 %v6092
        %v6158 = vpop.f32.mrb[0].mxu0
        %v6159 = vadd.f32 0.0, %v6158
        %v6160 = vpop.f32.mrb[0].mxu0
        %v6161 = vpop.f32.mrb[0].mxu0
        %v6162 = vadd.f32 0.0, %v6161
        %v6163 = vpop.f32.mrb[0].mxu0
        %6164 = vmatprep.mubr.bf16.mxu0 0
        %6165 = vmatmul.mubr.bf16.gmra.mrb[0].mxu0 %v6093
        %v6166 = vpop.f32.mrb[0].mxu0
        %v6167 = vadd.f32 0.0, %v6166
        %v6168 = vpop.f32.mrb[0].mxu0
        %v6169 = vpop.f32.mrb[0].mxu0
        %v6170 = vadd.f32 0.0, %v6169
        %v6171 = vpop.f32.mrb[0].mxu0
        %6172 = vmatprep.mubr.bf16.mxu0 0
        %6173 = vmatmul.mubr.bf16.gmra.mrb[0].mxu0 %v6094
        %v6174 = vpop.f32.mrb[0].mxu0
        %v6175 = vadd.f32 0.0, %v6174
        %v6176 = vpop.f32.mrb[0].mxu0
        %v6177 = vpop.f32.mrb[0].mxu0
        %v6178 = vadd.f32 0.0, %v6177
        %v6179 = vpop.f32.mrb[0].mxu0
        %6180 = vmatprep.mubr.bf16.mxu0 0
        %6181 = vmatmul.mubr.bf16.gmra.mrb[0].mxu0 %v6095
        %v6182 = vpop.f32.mrb[0].mxu0
        %v6183 = vadd.f32 0.0, %v6182
        %v6184 = vpop.f32.mrb[0].mxu0
        %v6185 = vpop.f32.mrb[0].mxu0
        %v6186 = vadd.f32 0.0, %v6185
        %v6187 = vpop.f32.mrb[0].mxu0
        %6188 = vmatprep.mubr.bf16.mxu0 0
        %6189 = vmatmul.mubr.bf16.gmra.mrb[0].mxu0 %v6096
        %v6190 = vpop.f32.mrb[0].mxu0
        %v6191 = vadd.f32 0.0, %v6190
        %v6192 = vpop.f32.mrb[0].mxu0
        %v6193 = vpop.f32.mrb[0].mxu0
        %v6194 = vadd.f32 0.0, %v6193
        %v6195 = vpop.f32.mrb[0].mxu0
        %6196 = vmatprep.mubr.bf16.mxu0 0
        %6197 = vmatmul.mubr.bf16.gmra.mrb[0].mxu0 %v6097
        %v6198 = vpop.f32.mrb[0].mxu0
        %v6199 = vadd.f32 0.0, %v6198
        %v6200 = vpop.f32.mrb[0].mxu0
        %v6201 = vpop.f32.mrb[0].mxu0
        %v6202 = vadd.f32 0.0, %v6201
        %v6203 = vpop.f32.mrb[0].mxu0
        %6204 = vmatprep.mubr.bf16.mxu0 0
        %6205 = vmatmul.mubr.bf16.gmra.mrb[0].mxu0 %v6098
        %v6206 = vpop.f32.mrb[0].mxu0
        %v6207 = vadd.f32 0.0, %v6206
        %v6208 = vpop.f32.mrb[0].mxu0
        %v6209 = vpop.f32.mrb[0].mxu0
        %v6210 = vadd.f32 0.0, %v6209
        %v6211 = vpop.f32.mrb[0].mxu0
        %6212 = vmatprep.mubr.bf16.mxu0 0
        %6213 = vmatmul.mubr.bf16.gmra.mrb[0].mxu0 %v6099
        %v6214 = vpop.f32.mrb[0].mxu0
        %v6215 = vadd.f32 0.0, %v6214
        %v6216 = vpop.f32.mrb[0].mxu0
        %v6217 = vpop.f32.mrb[0].mxu0
        %v6218 = vadd.f32 0.0, %v6217
        %v6219 = vpop.f32.mrb[0].mxu0
        %6220 = vdwg.mxu0
        %v6221 = vpack.c.bf16 %v6162, %v6159
        %v6222 = vpack.c.bf16 %v6170, %v6167
        %v6223 = vpack.c.bf16 %v6178, %v6175
        %v6224 = vpack.c.bf16 %v6186, %v6183
        %v6225 = vpack.c.bf16 %v6194, %v6191
        %v6226 = vpack.c.bf16 %v6202, %v6199
        %v6227 = vpack.c.bf16 %v6210, %v6207
        %v6228 = vpack.c.bf16 %v6218, %v6215
        %s6229 = scalar_lea.vmem [#allocation7], 192
        %v6230 = vld [vmem:[%s6229] sm:$0xff]
        %v6231 = vld [vmem:[%s6229 + $0x8] sm:$0xff]
        %v6232 = vld [vmem:[%s6229 + $0x10] sm:$0xff]
        %v6233 = vld [vmem:[%s6229 + $0x18] sm:$0xff]
        %v6238 = vunpack.c.l.b16 %v6230
        %v6239 = vunpack.c.h.b16 %v6230
        %v6240 = vunpack.c.l.b16 %v6231
        %v6241 = vunpack.c.h.b16 %v6231
        %v6242 = vunpack.c.l.b16 %v6232
        %v6243 = vunpack.c.h.b16 %v6232
        %v6244 = vunpack.c.l.b16 %v6233
        %v6245 = vunpack.c.h.b16 %v6233
        %v6246 = vpack.c.b16 %v6240, %v6238
        %v6247 = vpack.c.b16 %v6241, %v6239
        %v6248 = vpack.c.b16 %v6244, %v6242
        %v6249 = vpack.c.b16 %v6245, %v6243
        %v6255 = vsel %vm1923, %v6221, 0
        %v6258 = vsel %vm1923, %v6222, 0
        %v6261 = vsel %vm1923, %v6223, 0
        %v6264 = vsel %vm1923, %v6224, 0
        %v6267 = vsel %vm1923, %v6225, 0
        %v6270 = vsel %vm1923, %v6226, 0
        %v6273 = vsel %vm1923, %v6227, 0
        %v6276 = vsel %vm1923, %v6228, 0
        %6278 = vmatprep.subr.bf16.mxu0 %v6247
        %6279 = vmatpush1.bf16.msra.mxu0 %v6246
        %6280 = vmatprep.subr.bf16.mxu0 %v6249
        %6281 = vmatpush1.bf16.msra.mxu0 %v6248
        %6282 = vmatprep.subr.bf16.mxu0 0
        %6283 = vmatpush1.bf16.msra.mxu0 0
        %6284 = vmatprep.subr.bf16.mxu0 0
        %6285 = vmatpush1.bf16.msra.mxu0 0
        %6286 = vmatprep.subr.bf16.mxu0 0
        %6287 = vmatpush1.bf16.msra.mxu0 0
        %6288 = vmatprep.subr.bf16.mxu0 0
        %6289 = vmatpush1.bf16.msra.mxu0 0
        %6290 = vmatprep.subr.bf16.mxu0 0
        %6291 = vmatpush1.bf16.msra.mxu0 0
        %6292 = vmatprep.subr.bf16.mxu0 0
        %6293 = vmatpush1.bf16.msra.mxu0 0
        %6294 = vmatprep.subr.bf16.mxu0 0
        %6295 = vmatpush1.bf16.msra.mxu0 0
        %6296 = vmatprep.subr.bf16.mxu0 0
        %6297 = vmatpush1.bf16.msra.mxu0 0
        %6298 = vmatprep.subr.bf16.mxu0 0
        %6299 = vmatpush1.bf16.msra.mxu0 0
        %6300 = vmatprep.subr.bf16.mxu0 0
        %6301 = vmatpush1.bf16.msra.mxu0 0
        %6302 = vmatprep.subr.bf16.mxu0 0
        %6303 = vmatpush1.bf16.msra.mxu0 0
        %6304 = vmatprep.subr.bf16.mxu0 0
        %6305 = vmatpush1.bf16.msra.mxu0 0
        %6306 = vmatprep.subr.bf16.mxu0 0
        %6307 = vmatpush1.bf16.msra.mxu0 0
        %6308 = vmatprep.subr.bf16.mxu0 0
        %6309 = vmatpush1.bf16.msra.mxu0 0
        %6310 = vmatprep.mubr.bf16.mxu0 0
        %6311 = vmatmul.mubr.bf16.gmra.mrb[0].mxu0 %v6255
        %v6312 = vpop.f32.mrb[0].mxu0
        %v6313 = vadd.f32 0.0, %v6312
        %v6314 = vpop.f32.mrb[0].mxu0
        %v6315 = vadd.f32 0.0, %v6314
        %v6316 = vpop.f32.mrb[0].mxu0
        %v6317 = vadd.f32 0.0, %v6316
        %v6318 = vpop.f32.mrb[0].mxu0
        %v6319 = vadd.f32 0.0, %v6318
        %6320 = vmatprep.mubr.bf16.mxu0 0
        %6321 = vmatmul.mubr.bf16.gmra.mrb[0].mxu0 %v6258
        %v6322 = vpop.f32.mrb[0].mxu0
        %v6323 = vadd.f32 0.0, %v6322
        %v6324 = vpop.f32.mrb[0].mxu0
        %v6325 = vadd.f32 0.0, %v6324
        %v6326 = vpop.f32.mrb[0].mxu0
        %v6327 = vadd.f32 0.0, %v6326
        %v6328 = vpop.f32.mrb[0].mxu0
        %v6329 = vadd.f32 0.0, %v6328
        %6330 = vmatprep.mubr.bf16.mxu0 0
        %6331 = vmatmul.mubr.bf16.gmra.mrb[0].mxu0 %v6261
        %v6332 = vpop.f32.mrb[0].mxu0
        %v6333 = vadd.f32 0.0, %v6332
        %v6334 = vpop.f32.mrb[0].mxu0
        %v6335 = vadd.f32 0.0, %v6334
        %v6336 = vpop.f32.mrb[0].mxu0
        %v6337 = vadd.f32 0.0, %v6336
        %v6338 = vpop.f32.mrb[0].mxu0
        %v6339 = vadd.f32 0.0, %v6338
        %6340 = vmatprep.mubr.bf16.mxu0 0
        %6341 = vmatmul.mubr.bf16.gmra.mrb[0].mxu0 %v6264
        %v6342 = vpop.f32.mrb[0].mxu0
        %v6343 = vadd.f32 0.0, %v6342
        %v6344 = vpop.f32.mrb[0].mxu0
        %v6345 = vadd.f32 0.0, %v6344
        %v6346 = vpop.f32.mrb[0].mxu0
        %v6347 = vadd.f32 0.0, %v6346
        %v6348 = vpop.f32.mrb[0].mxu0
        %v6349 = vadd.f32 0.0, %v6348
        %6350 = vmatprep.mubr.bf16.mxu0 0
        %6351 = vmatmul.mubr.bf16.gmra.mrb[0].mxu0 %v6267
        %v6352 = vpop.f32.mrb[0].mxu0
        %v6353 = vadd.f32 0.0, %v6352
        %v6354 = vpop.f32.mrb[0].mxu0
        %v6355 = vadd.f32 0.0, %v6354
        %v6356 = vpop.f32.mrb[0].mxu0
        %v6357 = vadd.f32 0.0, %v6356
        %v6358 = vpop.f32.mrb[0].mxu0
        %v6359 = vadd.f32 0.0, %v6358
        %6360 = vmatprep.mubr.bf16.mxu0 0
        %6361 = vmatmul.mubr.bf16.gmra.mrb[0].mxu0 %v6270
        %v6362 = vpop.f32.mrb[0].mxu0
        %v6363 = vadd.f32 0.0, %v6362
        %v6364 = vpop.f32.mrb[0].mxu0
        %v6365 = vadd.f32 0.0, %v6364
        %v6366 = vpop.f32.mrb[0].mxu0
        %v6367 = vadd.f32 0.0, %v6366
        %v6368 = vpop.f32.mrb[0].mxu0
        %v6369 = vadd.f32 0.0, %v6368
        %6370 = vmatprep.mubr.bf16.mxu0 0
        %6371 = vmatmul.mubr.bf16.gmra.mrb[0].mxu0 %v6273
        %v6372 = vpop.f32.mrb[0].mxu0
        %v6373 = vadd.f32 0.0, %v6372
        %v6374 = vpop.f32.mrb[0].mxu0
        %v6375 = vadd.f32 0.0, %v6374
        %v6376 = vpop.f32.mrb[0].mxu0
        %v6377 = vadd.f32 0.0, %v6376
        %v6378 = vpop.f32.mrb[0].mxu0
        %v6379 = vadd.f32 0.0, %v6378
        %6380 = vmatprep.mubr.bf16.mxu0 0
        %6381 = vmatmul.mubr.bf16.gmra.mrb[0].mxu0 %v6276
        %v6382 = vpop.f32.mrb[0].mxu0
        %v6383 = vadd.f32 0.0, %v6382
        %v6384 = vpop.f32.mrb[0].mxu0
        %v6385 = vadd.f32 0.0, %v6384
        %v6386 = vpop.f32.mrb[0].mxu0
        %v6387 = vadd.f32 0.0, %v6386
        %v6388 = vpop.f32.mrb[0].mxu0
        %v6389 = vadd.f32 0.0, %v6388
        %6390 = vdwg.mxu0
        %v6391 = vadd.f32 %v5739, %v6313
        %v6392 = vadd.f32 %v5740, %v6315
        %v6393 = vadd.f32 %v5741, %v6317
        %v6394 = vadd.f32 %v5742, %v6319
        %v6395 = vadd.f32 %v5743, %v6323
        %v6396 = vadd.f32 %v5744, %v6325
        %v6397 = vadd.f32 %v5745, %v6327
        %v6398 = vadd.f32 %v5746, %v6329
        %v6399 = vadd.f32 %v5747, %v6333
        %v6400 = vadd.f32 %v5748, %v6335
        %v6401 = vadd.f32 %v5749, %v6337
        %v6402 = vadd.f32 %v5750, %v6339
        %v6403 = vadd.f32 %v5751, %v6343
        %v6404 = vadd.f32 %v5752, %v6345
        %v6405 = vadd.f32 %v5753, %v6347
        %v6406 = vadd.f32 %v5754, %v6349
        %v6407 = vadd.f32 %v5755, %v6353
        %v6408 = vadd.f32 %v5756, %v6355
        %v6409 = vadd.f32 %v5757, %v6357
        %v6410 = vadd.f32 %v5758, %v6359
        %v6411 = vadd.f32 %v5759, %v6363
        %v6412 = vadd.f32 %v5760, %v6365
        %v6413 = vadd.f32 %v5761, %v6367
        %v6414 = vadd.f32 %v5762, %v6369
        %v6415 = vadd.f32 %v5763, %v6373
        %v6416 = vadd.f32 %v5764, %v6375
        %v6417 = vadd.f32 %v5765, %v6377
        %v6418 = vadd.f32 %v5766, %v6379
        %v6419 = vadd.f32 %v5767, %v6383
        %v6420 = vadd.f32 %v5768, %v6385
        %v6421 = vadd.f32 %v5769, %v6387
        %v6422 = vadd.f32 %v5770, %v6389
        %6423 = vrot.lane.b32.xlu0 %v1832, 32
        %v6424 = vpop.permute.xlu0 %6423
        %6425 = vrot.lane.b32.xlu0 %v1834, 32
        %v6426 = vpop.permute.xlu0 %6425
        %6427 = vrot.lane.b32.xlu0 %v1836, 32
        %v6428 = vpop.permute.xlu0 %6427
        %6429 = vrot.lane.b32.xlu0 %v1838, 32
        %v6430 = vpop.permute.xlu0 %6429
        %6431 = vrot.lane.b32.xlu0 %v1840, 32
        %v6432 = vpop.permute.xlu0 %6431
        %6433 = vrot.lane.b32.xlu0 %v1842, 32
        %v6434 = vpop.permute.xlu0 %6433
        %6435 = vrot.lane.b32.xlu0 %v1844, 32
        %v6436 = vpop.permute.xlu0 %6435
        %6437 = vrot.lane.b32.xlu0 %v1846, 32
        %v6438 = vpop.permute.xlu0 %6437
        %6439 = vrot.lane.b32.xlu0 %v1848, 32
        %v6440 = vpop.permute.xlu0 %6439
        %6441 = vrot.lane.b32.xlu0 %v1850, 32
        %v6442 = vpop.permute.xlu0 %6441
        %6443 = vrot.lane.b32.xlu0 %v1852, 32
        %v6444 = vpop.permute.xlu0 %6443
        %6445 = vrot.lane.b32.xlu0 %v1854, 32
        %v6446 = vpop.permute.xlu0 %6445
        %6447 = vrot.lane.b32.xlu0 %v1856, 32
        %v6448 = vpop.permute.xlu0 %6447
        %6449 = vrot.lane.b32.xlu0 %v1858, 32
        %v6450 = vpop.permute.xlu0 %6449
        %6451 = vrot.lane.b32.xlu0 %v1860, 32
        %v6452 = vpop.permute.xlu0 %6451
        %6453 = vrot.lane.b32.xlu0 %v1862, 32
        %v6454 = vpop.permute.xlu0 %6453
        %v6456 = vsel %vm1923, %v6424, 0
        %v6459 = vsel %vm1923, %v6426, 0
        %v6462 = vsel %vm1923, %v6428, 0
        %v6465 = vsel %vm1923, %v6430, 0
        %v6468 = vsel %vm1923, %v6432, 0
        %v6471 = vsel %vm1923, %v6434, 0
        %v6474 = vsel %vm1923, %v6436, 0
        %v6477 = vsel %vm1923, %v6438, 0
        %v6480 = vsel %vm1923, %v6440, 0
        %v6483 = vsel %vm1923, %v6442, 0
        %v6486 = vsel %vm1923, %v6444, 0
        %v6489 = vsel %vm1923, %v6446, 0
        %v6492 = vsel %vm1923, %v6448, 0
        %v6495 = vsel %vm1923, %v6450, 0
        %v6498 = vsel %vm1923, %v6452, 0
        %v6501 = vsel %vm1923, %v6454, 0
        %6503 = vmatprep.subr.bf16.mxu0 0
        %6504 = vmatpush1.bf16.xpose.msra.mxu0 %v6480
        %6505 = vmatprep.subr.bf16.mxu0 0
        %6506 = vmatpush1.bf16.xpose.msra.mxu0 %v6483
        %6507 = vmatprep.subr.bf16.mxu0 0
        %6508 = vmatpush1.bf16.xpose.msra.mxu0 %v6486
        %6509 = vmatprep.subr.bf16.mxu0 0
        %6510 = vmatpush1.bf16.xpose.msra.mxu0 %v6489
        %6511 = vmatprep.subr.bf16.mxu0 0
        %6512 = vmatpush1.bf16.xpose.msra.mxu0 %v6492
        %6513 = vmatprep.subr.bf16.mxu0 0
        %6514 = vmatpush1.bf16.xpose.msra.mxu0 %v6495
        %6515 = vmatprep.subr.bf16.mxu0 0
        %6516 = vmatpush1.bf16.xpose.msra.mxu0 %v6498
        %6517 = vmatprep.subr.bf16.mxu0 0
        %6518 = vmatpush1.bf16.xpose.msra.mxu0 %v6501
        %6519 = vmatprep.subr.bf16.mxu0 0
        %6520 = vmatpush1.bf16.xpose.msra.mxu0 0
        %6521 = vmatprep.subr.bf16.mxu0 0
        %6522 = vmatpush1.bf16.xpose.msra.mxu0 0
        %6523 = vmatprep.subr.bf16.mxu0 0
        %6524 = vmatpush1.bf16.xpose.msra.mxu0 0
        %6525 = vmatprep.subr.bf16.mxu0 0
        %6526 = vmatpush1.bf16.xpose.msra.mxu0 0
        %6527 = vmatprep.subr.bf16.mxu0 0
        %6528 = vmatpush1.bf16.xpose.msra.mxu0 0
        %6529 = vmatprep.subr.bf16.mxu0 0
        %6530 = vmatpush1.bf16.xpose.msra.mxu0 0
        %6531 = vmatprep.subr.bf16.mxu0 0
        %6532 = vmatpush1.bf16.xpose.msra.mxu0 0
        %6533 = vmatprep.subr.bf16.mxu0 0
        %6534 = vmatpush1.bf16.xpose.msra.mxu0 0
        %6535 = vmatprep.mubr.bf16.mxu0 0
        %6536 = vmatmul.mubr.bf16.gmra.mrb[0].mxu0 %v6456
        %v6537 = vpop.f32.mrb[0].mxu0
        %v6538 = vadd.f32 0.0, %v6537
        %v6539 = vpop.f32.mrb[0].mxu0
        %v6540 = vpop.f32.mrb[0].mxu0
        %v6541 = vadd.f32 0.0, %v6540
        %v6542 = vpop.f32.mrb[0].mxu0
        %6543 = vmatprep.mubr.bf16.mxu0 0
        %6544 = vmatmul.mubr.bf16.gmra.mrb[0].mxu0 %v6459
        %v6545 = vpop.f32.mrb[0].mxu0
        %v6546 = vadd.f32 0.0, %v6545
        %v6547 = vpop.f32.mrb[0].mxu0
        %v6548 = vpop.f32.mrb[0].mxu0
        %v6549 = vadd.f32 0.0, %v6548
        %v6550 = vpop.f32.mrb[0].mxu0
        %6551 = vmatprep.mubr.bf16.mxu0 0
        %6552 = vmatmul.mubr.bf16.gmra.mrb[0].mxu0 %v6462
        %v6553 = vpop.f32.mrb[0].mxu0
        %v6554 = vadd.f32 0.0, %v6553
        %v6555 = vpop.f32.mrb[0].mxu0
        %v6556 = vpop.f32.mrb[0].mxu0
        %v6557 = vadd.f32 0.0, %v6556
        %v6558 = vpop.f32.mrb[0].mxu0
        %6559 = vmatprep.mubr.bf16.mxu0 0
        %6560 = vmatmul.mubr.bf16.gmra.mrb[0].mxu0 %v6465
        %v6561 = vpop.f32.mrb[0].mxu0
        %v6562 = vadd.f32 0.0, %v6561
        %v6563 = vpop.f32.mrb[0].mxu0
        %v6564 = vpop.f32.mrb[0].mxu0
        %v6565 = vadd.f32 0.0, %v6564
        %v6566 = vpop.f32.mrb[0].mxu0
        %6567 = vmatprep.mubr.bf16.mxu0 0
        %6568 = vmatmul.mubr.bf16.gmra.mrb[0].mxu0 %v6468
        %v6569 = vpop.f32.mrb[0].mxu0
        %v6570 = vadd.f32 0.0, %v6569
        %v6571 = vpop.f32.mrb[0].mxu0
        %v6572 = vpop.f32.mrb[0].mxu0
        %v6573 = vadd.f32 0.0, %v6572
        %v6574 = vpop.f32.mrb[0].mxu0
        %6575 = vmatprep.mubr.bf16.mxu0 0
        %6576 = vmatmul.mubr.bf16.gmra.mrb[0].mxu0 %v6471
        %v6577 = vpop.f32.mrb[0].mxu0
        %v6578 = vadd.f32 0.0, %v6577
        %v6579 = vpop.f32.mrb[0].mxu0
        %v6580 = vpop.f32.mrb[0].mxu0
        %v6581 = vadd.f32 0.0, %v6580
        %v6582 = vpop.f32.mrb[0].mxu0
        %6583 = vmatprep.mubr.bf16.mxu0 0
        %6584 = vmatmul.mubr.bf16.gmra.mrb[0].mxu0 %v6474
        %v6585 = vpop.f32.mrb[0].mxu0
        %v6586 = vadd.f32 0.0, %v6585
        %v6587 = vpop.f32.mrb[0].mxu0
        %v6588 = vpop.f32.mrb[0].mxu0
        %v6589 = vadd.f32 0.0, %v6588
        %v6590 = vpop.f32.mrb[0].mxu0
        %6591 = vmatprep.mubr.bf16.mxu0 0
        %6592 = vmatmul.mubr.bf16.gmra.mrb[0].mxu0 %v6477
        %v6593 = vpop.f32.mrb[0].mxu0
        %v6594 = vadd.f32 0.0, %v6593
        %v6595 = vpop.f32.mrb[0].mxu0
        %v6596 = vpop.f32.mrb[0].mxu0
        %v6597 = vadd.f32 0.0, %v6596
        %v6598 = vpop.f32.mrb[0].mxu0
        %6599 = vdwg.mxu0
        %6600 = vmax.xlane.f32.xlu0 %v6538
        %v6601 = vpop.xlane.xlu0 %6600
        %6602 = vmax.xlane.f32.xlu0 %v6541
        %v6603 = vpop.xlane.xlu0 %6602
        %6604 = vmax.xlane.f32.xlu0 %v6546
        %v6605 = vpop.xlane.xlu0 %6604
        %6606 = vmax.xlane.f32.xlu0 %v6549
        %v6607 = vpop.xlane.xlu0 %6606
        %6608 = vmax.xlane.f32.xlu0 %v6554
        %v6609 = vpop.xlane.xlu0 %6608
        %6610 = vmax.xlane.f32.xlu0 %v6557
        %v6611 = vpop.xlane.xlu0 %6610
        %6612 = vmax.xlane.f32.xlu0 %v6562
        %v6613 = vpop.xlane.xlu0 %6612
        %6614 = vmax.xlane.f32.xlu0 %v6565
        %v6615 = vpop.xlane.xlu0 %6614
        %6616 = vmax.xlane.f32.xlu0 %v6570
        %v6617 = vpop.xlane.xlu0 %6616
        %6618 = vmax.xlane.f32.xlu0 %v6573
        %v6619 = vpop.xlane.xlu0 %6618
        %6620 = vmax.xlane.f32.xlu0 %v6578
        %v6621 = vpop.xlane.xlu0 %6620
        %6622 = vmax.xlane.f32.xlu0 %v6581
        %v6623 = vpop.xlane.xlu0 %6622
        %6624 = vmax.xlane.f32.xlu0 %v6586
        %v6625 = vpop.xlane.xlu0 %6624
        %6626 = vmax.xlane.f32.xlu0 %v6589
        %v6627 = vpop.xlane.xlu0 %6626
        %6628 = vmax.xlane.f32.xlu0 %v6594
        %v6629 = vpop.xlane.xlu0 %6628
        %6630 = vmax.xlane.f32.xlu0 %v6597
        %v6631 = vpop.xlane.xlu0 %6630
        %v6632 = vsub.f32 %v6538, %v6601
        %v6633 = vsub.f32 %v6541, %v6603
        %v6634 = vsub.f32 %v6546, %v6605
        %v6635 = vsub.f32 %v6549, %v6607
        %v6636 = vsub.f32 %v6554, %v6609
        %v6637 = vsub.f32 %v6557, %v6611
        %v6638 = vsub.f32 %v6562, %v6613
        %v6639 = vsub.f32 %v6565, %v6615
        %v6640 = vsub.f32 %v6570, %v6617
        %v6641 = vsub.f32 %v6573, %v6619
        %v6642 = vsub.f32 %v6578, %v6621
        %v6643 = vsub.f32 %v6581, %v6623
        %v6644 = vsub.f32 %v6586, %v6625
        %v6645 = vsub.f32 %v6589, %v6627
        %v6646 = vsub.f32 %v6594, %v6629
        %v6647 = vsub.f32 %v6597, %v6631
        %v6648 = vmul.f32 %v6632, 1.442695
        %v6649 = vpow.pop %v6648
        %v6650 = vmul.f32 %v6633, 1.442695
        %v6651 = vpow.pop %v6650
        %v6652 = vmul.f32 %v6634, 1.442695
        %v6653 = vpow.pop %v6652
        %v6654 = vmul.f32 %v6635, 1.442695
        %v6655 = vpow.pop %v6654
        %v6656 = vmul.f32 %v6636, 1.442695
        %v6657 = vpow.pop %v6656
        %v6658 = vmul.f32 %v6637, 1.442695
        %v6659 = vpow.pop %v6658
        %v6660 = vmul.f32 %v6638, 1.442695
        %v6661 = vpow.pop %v6660
        %v6662 = vmul.f32 %v6639, 1.442695
        %v6663 = vpow.pop %v6662
        %v6664 = vmul.f32 %v6640, 1.442695
        %v6665 = vpow.pop %v6664
        %v6666 = vmul.f32 %v6641, 1.442695
        %v6667 = vpow.pop %v6666
        %v6668 = vmul.f32 %v6642, 1.442695
        %v6669 = vpow.pop %v6668
        %v6670 = vmul.f32 %v6643, 1.442695
        %v6671 = vpow.pop %v6670
        %v6672 = vmul.f32 %v6644, 1.442695
        %v6673 = vpow.pop %v6672
        %v6674 = vmul.f32 %v6645, 1.442695
        %v6675 = vpow.pop %v6674
        %v6676 = vmul.f32 %v6646, 1.442695
        %v6677 = vpow.pop %v6676
        %v6678 = vmul.f32 %v6647, 1.442695
        %v6679 = vpow.pop %v6678
        %6680 = vadd.xlane.f32.xlu0 %v6649
        %v6681 = vpop.xlane.xlu0 %6680
        %6682 = vadd.xlane.f32.xlu0 %v6651
        %v6683 = vpop.xlane.xlu0 %6682
        %6684 = vadd.xlane.f32.xlu0 %v6653
        %v6685 = vpop.xlane.xlu0 %6684
        %6686 = vadd.xlane.f32.xlu0 %v6655
        %v6687 = vpop.xlane.xlu0 %6686
        %6688 = vadd.xlane.f32.xlu0 %v6657
        %v6689 = vpop.xlane.xlu0 %6688
        %6690 = vadd.xlane.f32.xlu0 %v6659
        %v6691 = vpop.xlane.xlu0 %6690
        %6692 = vadd.xlane.f32.xlu0 %v6661
        %v6693 = vpop.xlane.xlu0 %6692
        %6694 = vadd.xlane.f32.xlu0 %v6663
        %v6695 = vpop.xlane.xlu0 %6694
        %6696 = vadd.xlane.f32.xlu0 %v6665
        %v6697 = vpop.xlane.xlu0 %6696
        %6698 = vadd.xlane.f32.xlu0 %v6667
        %v6699 = vpop.xlane.xlu0 %6698
        %6700 = vadd.xlane.f32.xlu0 %v6669
        %v6701 = vpop.xlane.xlu0 %6700
        %6702 = vadd.xlane.f32.xlu0 %v6671
        %v6703 = vpop.xlane.xlu0 %6702
        %6704 = vadd.xlane.f32.xlu0 %v6673
        %v6705 = vpop.xlane.xlu0 %6704
        %6706 = vadd.xlane.f32.xlu0 %v6675
        %v6707 = vpop.xlane.xlu0 %6706
        %6708 = vadd.xlane.f32.xlu0 %v6677
        %v6709 = vpop.xlane.xlu0 %6708
        %6710 = vadd.xlane.f32.xlu0 %v6679
        %v6711 = vpop.xlane.xlu0 %6710
        %v6712 = vrcp.pop %v6681
        %v6713 = vrcp.pop %v6683
        %v6714 = vrcp.pop %v6685
        %v6715 = vrcp.pop %v6687
        %v6716 = vrcp.pop %v6689
        %v6717 = vrcp.pop %v6691
        %v6718 = vrcp.pop %v6693
        %v6719 = vrcp.pop %v6695
        %v6720 = vrcp.pop %v6697
        %v6721 = vrcp.pop %v6699
        %v6722 = vrcp.pop %v6701
        %v6723 = vrcp.pop %v6703
        %v6724 = vrcp.pop %v6705
        %v6725 = vrcp.pop %v6707
        %v6726 = vrcp.pop %v6709
        %v6727 = vrcp.pop %v6711
        %v6728 = vmul.f32 %v6649, %v6712
        %v6729 = vmul.f32 %v6651, %v6713
        %v6730 = vmul.f32 %v6653, %v6714
        %v6731 = vmul.f32 %v6655, %v6715
        %v6732 = vmul.f32 %v6657, %v6716
        %v6733 = vmul.f32 %v6659, %v6717
        %v6734 = vmul.f32 %v6661, %v6718
        %v6735 = vmul.f32 %v6663, %v6719
        %v6736 = vmul.f32 %v6665, %v6720
        %v6737 = vmul.f32 %v6667, %v6721
        %v6738 = vmul.f32 %v6669, %v6722
        %v6739 = vmul.f32 %v6671, %v6723
        %v6740 = vmul.f32 %v6673, %v6724
        %v6741 = vmul.f32 %v6675, %v6725
        %v6742 = vmul.f32 %v6677, %v6726
        %v6743 = vmul.f32 %v6679, %v6727
        %v6744 = vpack.c.bf16 %v6729, %v6728
        %v6745 = vpack.c.bf16 %v6731, %v6730
        %v6746 = vpack.c.bf16 %v6733, %v6732
        %v6747 = vpack.c.bf16 %v6735, %v6734
        %v6748 = vpack.c.bf16 %v6737, %v6736
        %v6749 = vpack.c.bf16 %v6739, %v6738
        %v6750 = vpack.c.bf16 %v6741, %v6740
        %v6751 = vpack.c.bf16 %v6743, %v6742
        %6752 = vrot.lane.b32.xlu0 %v1864, 32
        %v6753 = vpop.permute.xlu0 %6752
        %6754 = vrot.lane.b32.xlu0 %v1866, 32
        %v6755 = vpop.permute.xlu0 %6754
        %6756 = vrot.lane.b32.xlu0 %v1868, 32
        %v6757 = vpop.permute.xlu0 %6756
        %6758 = vrot.lane.b32.xlu0 %v1870, 32
        %v6759 = vpop.permute.xlu0 %6758
        %6760 = vrot.lane.b32.xlu0 %v1872, 32
        %v6761 = vpop.permute.xlu0 %6760
        %6762 = vrot.lane.b32.xlu0 %v1874, 32
        %v6763 = vpop.permute.xlu0 %6762
        %6764 = vrot.lane.b32.xlu0 %v1876, 32
        %v6765 = vpop.permute.xlu0 %6764
        %6766 = vrot.lane.b32.xlu0 %v1878, 32
        %v6767 = vpop.permute.xlu0 %6766
        %6776 = vmatprep.subr.bf16.mxu0 0
        %6777 = vmatpush1.bf16.msra.mxu0 %v6753
        %6778 = vmatprep.subr.bf16.mxu0 0
        %6779 = vmatpush1.bf16.msra.mxu0 %v6755
        %6780 = vmatprep.subr.bf16.mxu0 0
        %6781 = vmatpush1.bf16.msra.mxu0 %v6757
        %6782 = vmatprep.subr.bf16.mxu0 0
        %6783 = vmatpush1.bf16.msra.mxu0 %v6759
        %6784 = vmatprep.subr.bf16.mxu0 0
        %6785 = vmatpush1.bf16.msra.mxu0 %v6761
        %6786 = vmatprep.subr.bf16.mxu0 0
        %6787 = vmatpush1.bf16.msra.mxu0 %v6763
        %6788 = vmatprep.subr.bf16.mxu0 0
        %6789 = vmatpush1.bf16.msra.mxu0 %v6765
        %6790 = vmatprep.subr.bf16.mxu0 0
        %6791 = vmatpush1.bf16.msra.mxu0 %v6767
        %6792 = vmatprep.subr.bf16.mxu0 0
        %6793 = vmatpush1.bf16.msra.mxu0 0
        %6794 = vmatprep.subr.bf16.mxu0 0
        %6795 = vmatpush1.bf16.msra.mxu0 0
        %6796 = vmatprep.subr.bf16.mxu0 0
        %6797 = vmatpush1.bf16.msra.mxu0 0
        %6798 = vmatprep.subr.bf16.mxu0 0
        %6799 = vmatpush1.bf16.msra.mxu0 0
        %6800 = vmatprep.subr.bf16.mxu0 0
        %6801 = vmatpush1.bf16.msra.mxu0 0
        %6802 = vmatprep.subr.bf16.mxu0 0
        %6803 = vmatpush1.bf16.msra.mxu0 0
        %6804 = vmatprep.subr.bf16.mxu0 0
        %6805 = vmatpush1.bf16.msra.mxu0 0
        %6806 = vmatprep.subr.bf16.mxu0 0
        %6807 = vmatpush1.bf16.msra.mxu0 0
        %6808 = vmatprep.mubr.bf16.mxu0 0
        %6809 = vmatmul.mubr.bf16.gmra.mrb[0].mxu0 %v6744
        %v6810 = vpop.f32.mrb[0].mxu0
        %v6811 = vadd.f32 0.0, %v6810
        %v6812 = vpop.f32.mrb[0].mxu0
        %v6813 = vpop.f32.mrb[0].mxu0
        %v6814 = vadd.f32 0.0, %v6813
        %v6815 = vpop.f32.mrb[0].mxu0
        %6816 = vmatprep.mubr.bf16.mxu0 0
        %6817 = vmatmul.mubr.bf16.gmra.mrb[0].mxu0 %v6745
        %v6818 = vpop.f32.mrb[0].mxu0
        %v6819 = vadd.f32 0.0, %v6818
        %v6820 = vpop.f32.mrb[0].mxu0
        %v6821 = vpop.f32.mrb[0].mxu0
        %v6822 = vadd.f32 0.0, %v6821
        %v6823 = vpop.f32.mrb[0].mxu0
        %6824 = vmatprep.mubr.bf16.mxu0 0
        %6825 = vmatmul.mubr.bf16.gmra.mrb[0].mxu0 %v6746
        %v6826 = vpop.f32.mrb[0].mxu0
        %v6827 = vadd.f32 0.0, %v6826
        %v6828 = vpop.f32.mrb[0].mxu0
        %v6829 = vpop.f32.mrb[0].mxu0
        %v6830 = vadd.f32 0.0, %v6829
        %v6831 = vpop.f32.mrb[0].mxu0
        %6832 = vmatprep.mubr.bf16.mxu0 0
        %6833 = vmatmul.mubr.bf16.gmra.mrb[0].mxu0 %v6747
        %v6834 = vpop.f32.mrb[0].mxu0
        %v6835 = vadd.f32 0.0, %v6834
        %v6836 = vpop.f32.mrb[0].mxu0
        %v6837 = vpop.f32.mrb[0].mxu0
        %v6838 = vadd.f32 0.0, %v6837
        %v6839 = vpop.f32.mrb[0].mxu0
        %6840 = vmatprep.mubr.bf16.mxu0 0
        %6841 = vmatmul.mubr.bf16.gmra.mrb[0].mxu0 %v6748
        %v6842 = vpop.f32.mrb[0].mxu0
        %v6843 = vadd.f32 0.0, %v6842
        %v6844 = vpop.f32.mrb[0].mxu0
        %v6845 = vpop.f32.mrb[0].mxu0
        %v6846 = vadd.f32 0.0, %v6845
        %v6847 = vpop.f32.mrb[0].mxu0
        %6848 = vmatprep.mubr.bf16.mxu0 0
        %6849 = vmatmul.mubr.bf16.gmra.mrb[0].mxu0 %v6749
        %v6850 = vpop.f32.mrb[0].mxu0
        %v6851 = vadd.f32 0.0, %v6850
        %v6852 = vpop.f32.mrb[0].mxu0
        %v6853 = vpop.f32.mrb[0].mxu0
        %v6854 = vadd.f32 0.0, %v6853
        %v6855 = vpop.f32.mrb[0].mxu0
        %6856 = vmatprep.mubr.bf16.mxu0 0
        %6857 = vmatmul.mubr.bf16.gmra.mrb[0].mxu0 %v6750
        %v6858 = vpop.f32.mrb[0].mxu0
        %v6859 = vadd.f32 0.0, %v6858
        %v6860 = vpop.f32.mrb[0].mxu0
        %v6861 = vpop.f32.mrb[0].mxu0
        %v6862 = vadd.f32 0.0, %v6861
        %v6863 = vpop.f32.mrb[0].mxu0
        %6864 = vmatprep.mubr.bf16.mxu0 0
        %6865 = vmatmul.mubr.bf16.gmra.mrb[0].mxu0 %v6751
        %v6866 = vpop.f32.mrb[0].mxu0
        %v6867 = vadd.f32 0.0, %v6866
        %v6868 = vpop.f32.mrb[0].mxu0
        %v6869 = vpop.f32.mrb[0].mxu0
        %v6870 = vadd.f32 0.0, %v6869
        %v6871 = vpop.f32.mrb[0].mxu0
        %6872 = vdwg.mxu0
        %v6873 = vpack.c.bf16 %v6814, %v6811
        %v6874 = vpack.c.bf16 %v6822, %v6819
        %v6875 = vpack.c.bf16 %v6830, %v6827
        %v6876 = vpack.c.bf16 %v6838, %v6835
        %v6877 = vpack.c.bf16 %v6846, %v6843
        %v6878 = vpack.c.bf16 %v6854, %v6851
        %v6879 = vpack.c.bf16 %v6862, %v6859
        %v6880 = vpack.c.bf16 %v6870, %v6867
        %s6881 = scalar_lea.vmem [#allocation7], 224
        %v6882 = vld [vmem:[%s6881] sm:$0xff]
        %v6883 = vld [vmem:[%s6881 + $0x8] sm:$0xff]
        %v6884 = vld [vmem:[%s6881 + $0x10] sm:$0xff]
        %v6885 = vld [vmem:[%s6881 + $0x18] sm:$0xff]
        %v6890 = vunpack.c.l.b16 %v6882
        %v6891 = vunpack.c.h.b16 %v6882
        %v6892 = vunpack.c.l.b16 %v6883
        %v6893 = vunpack.c.h.b16 %v6883
        %v6894 = vunpack.c.l.b16 %v6884
        %v6895 = vunpack.c.h.b16 %v6884
        %v6896 = vunpack.c.l.b16 %v6885
        %v6897 = vunpack.c.h.b16 %v6885
        %v6898 = vpack.c.b16 %v6892, %v6890
        %v6899 = vpack.c.b16 %v6893, %v6891
        %v6900 = vpack.c.b16 %v6896, %v6894
        %v6901 = vpack.c.b16 %v6897, %v6895
        %v6907 = vsel %vm1923, %v6873, 0
        %v6910 = vsel %vm1923, %v6874, 0
        %v6913 = vsel %vm1923, %v6875, 0
        %v6916 = vsel %vm1923, %v6876, 0
        %v6919 = vsel %vm1923, %v6877, 0
        %v6922 = vsel %vm1923, %v6878, 0
        %v6925 = vsel %vm1923, %v6879, 0
        %v6928 = vsel %vm1923, %v6880, 0
        %6930 = vmatprep.subr.bf16.mxu0 %v6899
        %6931 = vmatpush1.bf16.msra.mxu0 %v6898
        %6932 = vmatprep.subr.bf16.mxu0 %v6901
        %6933 = vmatpush1.bf16.msra.mxu0 %v6900
        %6934 = vmatprep.subr.bf16.mxu0 0
        %6935 = vmatpush1.bf16.msra.mxu0 0
        %6936 = vmatprep.subr.bf16.mxu0 0
        %6937 = vmatpush1.bf16.msra.mxu0 0
        %6938 = vmatprep.subr.bf16.mxu0 0
        %6939 = vmatpush1.bf16.msra.mxu0 0
        %6940 = vmatprep.subr.bf16.mxu0 0
        %6941 = vmatpush1.bf16.msra.mxu0 0
        %6942 = vmatprep.subr.bf16.mxu0 0
        %6943 = vmatpush1.bf16.msra.mxu0 0
        %6944 = vmatprep.subr.bf16.mxu0 0
        %6945 = vmatpush1.bf16.msra.mxu0 0
        %6946 = vmatprep.subr.bf16.mxu0 0
        %6947 = vmatpush1.bf16.msra.mxu0 0
        %6948 = vmatprep.subr.bf16.mxu0 0
        %6949 = vmatpush1.bf16.msra.mxu0 0
        %6950 = vmatprep.subr.bf16.mxu0 0
        %6951 = vmatpush1.bf16.msra.mxu0 0
        %6952 = vmatprep.subr.bf16.mxu0 0
        %6953 = vmatpush1.bf16.msra.mxu0 0
        %6954 = vmatprep.subr.bf16.mxu0 0
        %6955 = vmatpush1.bf16.msra.mxu0 0
        %6956 = vmatprep.subr.bf16.mxu0 0
        %6957 = vmatpush1.bf16.msra.mxu0 0
        %6958 = vmatprep.subr.bf16.mxu0 0
        %6959 = vmatpush1.bf16.msra.mxu0 0
        %6960 = vmatprep.subr.bf16.mxu0 0
        %6961 = vmatpush1.bf16.msra.mxu0 0
        %6962 = vmatprep.mubr.bf16.mxu0 0
        %6963 = vmatmul.mubr.bf16.gmra.mrb[0].mxu0 %v6907
        %v6964 = vpop.f32.mrb[0].mxu0
        %v6965 = vadd.f32 0.0, %v6964
        %v6966 = vpop.f32.mrb[0].mxu0
        %v6967 = vadd.f32 0.0, %v6966
        %v6968 = vpop.f32.mrb[0].mxu0
        %v6969 = vadd.f32 0.0, %v6968
        %v6970 = vpop.f32.mrb[0].mxu0
        %v6971 = vadd.f32 0.0, %v6970
        %6972 = vmatprep.mubr.bf16.mxu0 0
        %6973 = vmatmul.mubr.bf16.gmra.mrb[0].mxu0 %v6910
        %v6974 = vpop.f32.mrb[0].mxu0
        %v6975 = vadd.f32 0.0, %v6974
        %v6976 = vpop.f32.mrb[0].mxu0
        %v6977 = vadd.f32 0.0, %v6976
        %v6978 = vpop.f32.mrb[0].mxu0
        %v6979 = vadd.f32 0.0, %v6978
        %v6980 = vpop.f32.mrb[0].mxu0
        %v6981 = vadd.f32 0.0, %v6980
        %6982 = vmatprep.mubr.bf16.mxu0 0
        %6983 = vmatmul.mubr.bf16.gmra.mrb[0].mxu0 %v6913
        %v6984 = vpop.f32.mrb[0].mxu0
        %v6985 = vadd.f32 0.0, %v6984
        %v6986 = vpop.f32.mrb[0].mxu0
        %v6987 = vadd.f32 0.0, %v6986
        %v6988 = vpop.f32.mrb[0].mxu0
        %v6989 = vadd.f32 0.0, %v6988
        %v6990 = vpop.f32.mrb[0].mxu0
        %v6991 = vadd.f32 0.0, %v6990
        %6992 = vmatprep.mubr.bf16.mxu0 0
        %6993 = vmatmul.mubr.bf16.gmra.mrb[0].mxu0 %v6916
        %v6994 = vpop.f32.mrb[0].mxu0
        %v6995 = vadd.f32 0.0, %v6994
        %v6996 = vpop.f32.mrb[0].mxu0
        %v6997 = vadd.f32 0.0, %v6996
        %v6998 = vpop.f32.mrb[0].mxu0
        %v6999 = vadd.f32 0.0, %v6998
        %v7000 = vpop.f32.mrb[0].mxu0
        %v7001 = vadd.f32 0.0, %v7000
        %7002 = vmatprep.mubr.bf16.mxu0 0
        %7003 = vmatmul.mubr.bf16.gmra.mrb[0].mxu0 %v6919
        %v7004 = vpop.f32.mrb[0].mxu0
        %v7005 = vadd.f32 0.0, %v7004
        %v7006 = vpop.f32.mrb[0].mxu0
        %v7007 = vadd.f32 0.0, %v7006
        %v7008 = vpop.f32.mrb[0].mxu0
        %v7009 = vadd.f32 0.0, %v7008
        %v7010 = vpop.f32.mrb[0].mxu0
        %v7011 = vadd.f32 0.0, %v7010
        %7012 = vmatprep.mubr.bf16.mxu0 0
        %7013 = vmatmul.mubr.bf16.gmra.mrb[0].mxu0 %v6922
        %v7014 = vpop.f32.mrb[0].mxu0
        %v7015 = vadd.f32 0.0, %v7014
        %v7016 = vpop.f32.mrb[0].mxu0
        %v7017 = vadd.f32 0.0, %v7016
        %v7018 = vpop.f32.mrb[0].mxu0
        %v7019 = vadd.f32 0.0, %v7018
        %v7020 = vpop.f32.mrb[0].mxu0
        %v7021 = vadd.f32 0.0, %v7020
        %7022 = vmatprep.mubr.bf16.mxu0 0
        %7023 = vmatmul.mubr.bf16.gmra.mrb[0].mxu0 %v6925
        %v7024 = vpop.f32.mrb[0].mxu0
        %v7025 = vadd.f32 0.0, %v7024
        %v7026 = vpop.f32.mrb[0].mxu0
        %v7027 = vadd.f32 0.0, %v7026
        %v7028 = vpop.f32.mrb[0].mxu0
        %v7029 = vadd.f32 0.0, %v7028
        %v7030 = vpop.f32.mrb[0].mxu0
        %v7031 = vadd.f32 0.0, %v7030
        %7032 = vmatprep.mubr.bf16.mxu0 0
        %7033 = vmatmul.mubr.bf16.gmra.mrb[0].mxu0 %v6928
        %v7034 = vpop.f32.mrb[0].mxu0
        %v7035 = vadd.f32 0.0, %v7034
        %v7036 = vpop.f32.mrb[0].mxu0
        %v7037 = vadd.f32 0.0, %v7036
        %v7038 = vpop.f32.mrb[0].mxu0
        %v7039 = vadd.f32 0.0, %v7038
        %v7040 = vpop.f32.mrb[0].mxu0
        %v7041 = vadd.f32 0.0, %v7040
        %7042 = vdwg.mxu0
        %v7043 = vadd.f32 %v6391, %v6965
        %v7044 = vadd.f32 %v6392, %v6967
        %v7045 = vadd.f32 %v6393, %v6969
        %v7046 = vadd.f32 %v6394, %v6971
        %v7047 = vadd.f32 %v6395, %v6975
        %v7048 = vadd.f32 %v6396, %v6977
        %v7049 = vadd.f32 %v6397, %v6979
        %v7050 = vadd.f32 %v6398, %v6981
        %v7051 = vadd.f32 %v6399, %v6985
        %v7052 = vadd.f32 %v6400, %v6987
        %v7053 = vadd.f32 %v6401, %v6989
        %v7054 = vadd.f32 %v6402, %v6991
        %v7055 = vadd.f32 %v6403, %v6995
        %v7056 = vadd.f32 %v6404, %v6997
        %v7057 = vadd.f32 %v6405, %v6999
        %v7058 = vadd.f32 %v6406, %v7001
        %v7059 = vadd.f32 %v6407, %v7005
        %v7060 = vadd.f32 %v6408, %v7007
        %v7061 = vadd.f32 %v6409, %v7009
        %v7062 = vadd.f32 %v6410, %v7011
        %v7063 = vadd.f32 %v6411, %v7015
        %v7064 = vadd.f32 %v6412, %v7017
        %v7065 = vadd.f32 %v6413, %v7019
        %v7066 = vadd.f32 %v6414, %v7021
        %v7067 = vadd.f32 %v6415, %v7025
        %v7068 = vadd.f32 %v6416, %v7027
        %v7069 = vadd.f32 %v6417, %v7029
        %v7070 = vadd.f32 %v6418, %v7031
        %v7071 = vadd.f32 %v6419, %v7035
        %v7072 = vadd.f32 %v6420, %v7037
        %v7073 = vadd.f32 %v6421, %v7039
        %v7074 = vadd.f32 %v6422, %v7041
        %v7075 = vld [vmem:[%s6] sm:$0x3]
        %v7076 = vld [vmem:[%s7] sm:$0x3]
        %v7077 = vadd.f32 %v7043, %v7044
        %7078 = vadd.xlane.f32.xlu0 %v7077
        %v7079 = vpop.xlane.xlu0 %7078
        %v7080 = vadd.f32 %v7045, %v7046
        %7081 = vadd.xlane.f32.xlu0 %v7080
        %v7082 = vpop.xlane.xlu0 %7081
        %v7083 = vadd.f32 %v7047, %v7048
        %7084 = vadd.xlane.f32.xlu0 %v7083
        %v7085 = vpop.xlane.xlu0 %7084
        %v7086 = vadd.f32 %v7049, %v7050
        %7087 = vadd.xlane.f32.xlu0 %v7086
        %v7088 = vpop.xlane.xlu0 %7087
        %v7089 = vadd.f32 %v7051, %v7052
        %7090 = vadd.xlane.f32.xlu0 %v7089
        %v7091 = vpop.xlane.xlu0 %7090
        %v7092 = vadd.f32 %v7053, %v7054
        %7093 = vadd.xlane.f32.xlu0 %v7092
        %v7094 = vpop.xlane.xlu0 %7093
        %v7095 = vadd.f32 %v7055, %v7056
        %7096 = vadd.xlane.f32.xlu0 %v7095
        %v7097 = vpop.xlane.xlu0 %7096
        %v7098 = vadd.f32 %v7057, %v7058
        %7099 = vadd.xlane.f32.xlu0 %v7098
        %v7100 = vpop.xlane.xlu0 %7099
        %v7101 = vadd.f32 %v7059, %v7060
        %7102 = vadd.xlane.f32.xlu0 %v7101
        %v7103 = vpop.xlane.xlu0 %7102
        %v7104 = vadd.f32 %v7061, %v7062
        %7105 = vadd.xlane.f32.xlu0 %v7104
        %v7106 = vpop.xlane.xlu0 %7105
        %v7107 = vadd.f32 %v7063, %v7064
        %7108 = vadd.xlane.f32.xlu0 %v7107
        %v7109 = vpop.xlane.xlu0 %7108
        %v7110 = vadd.f32 %v7065, %v7066
        %7111 = vadd.xlane.f32.xlu0 %v7110
        %v7112 = vpop.xlane.xlu0 %7111
        %v7113 = vadd.f32 %v7067, %v7068
        %7114 = vadd.xlane.f32.xlu0 %v7113
        %v7115 = vpop.xlane.xlu0 %7114
        %v7116 = vadd.f32 %v7069, %v7070
        %7117 = vadd.xlane.f32.xlu0 %v7116
        %v7118 = vpop.xlane.xlu0 %7117
        %v7119 = vadd.f32 %v7071, %v7072
        %7120 = vadd.xlane.f32.xlu0 %v7119
        %v7121 = vpop.xlane.xlu0 %7120
        %v7122 = vadd.f32 %v7073, %v7074
        %7123 = vadd.xlane.f32.xlu0 %v7122
        %v7124 = vpop.xlane.xlu0 %7123
        %v7125 = vmul.f32 %v7079, %v573
        %v7126 = vmul.f32 %v7082, %v573
        %v7127 = vmul.f32 %v7085, %v573
        %v7128 = vmul.f32 %v7088, %v573
        %v7129 = vmul.f32 %v7091, %v573
        %v7130 = vmul.f32 %v7094, %v573
        %v7131 = vmul.f32 %v7097, %v573
        %v7132 = vmul.f32 %v7100, %v573
        %v7133 = vmul.f32 %v7103, %v573
        %v7134 = vmul.f32 %v7106, %v573
        %v7135 = vmul.f32 %v7109, %v573
        %v7136 = vmul.f32 %v7112, %v573
        %v7137 = vmul.f32 %v7115, %v573
        %v7138 = vmul.f32 %v7118, %v573
        %v7139 = vmul.f32 %v7121, %v573
        %v7140 = vmul.f32 %v7124, %v573
        %v7141 = vsub.f32 %v7043, %v7125
        %v7142 = vsub.f32 %v7044, %v7125
        %v7143 = vsub.f32 %v7045, %v7126
        %v7144 = vsub.f32 %v7046, %v7126
        %v7145 = vsub.f32 %v7047, %v7127
        %v7146 = vsub.f32 %v7048, %v7127
        %v7147 = vsub.f32 %v7049, %v7128
        %v7148 = vsub.f32 %v7050, %v7128
        %v7149 = vsub.f32 %v7051, %v7129
        %v7150 = vsub.f32 %v7052, %v7129
        %v7151 = vsub.f32 %v7053, %v7130
        %v7152 = vsub.f32 %v7054, %v7130
        %v7153 = vsub.f32 %v7055, %v7131
        %v7154 = vsub.f32 %v7056, %v7131
        %v7155 = vsub.f32 %v7057, %v7132
        %v7156 = vsub.f32 %v7058, %v7132
        %v7157 = vsub.f32 %v7059, %v7133
        %v7158 = vsub.f32 %v7060, %v7133
        %v7159 = vsub.f32 %v7061, %v7134
        %v7160 = vsub.f32 %v7062, %v7134
        %v7161 = vsub.f32 %v7063, %v7135
        %v7162 = vsub.f32 %v7064, %v7135
        %v7163 = vsub.f32 %v7065, %v7136
        %v7164 = vsub.f32 %v7066, %v7136
        %v7165 = vsub.f32 %v7067, %v7137
        %v7166 = vsub.f32 %v7068, %v7137
        %v7167 = vsub.f32 %v7069, %v7138
        %v7168 = vsub.f32 %v7070, %v7138
        %v7169 = vsub.f32 %v7071, %v7139
        %v7170 = vsub.f32 %v7072, %v7139
        %v7171 = vsub.f32 %v7073, %v7140
        %v7172 = vsub.f32 %v7074, %v7140
        %v7173 = vmul.f32 %v7141, %v7141
        %v7174 = vmul.f32 %v7142, %v7142
        %v7175 = vmul.f32 %v7143, %v7143
        %v7176 = vmul.f32 %v7144, %v7144
        %v7177 = vmul.f32 %v7145, %v7145
        %v7178 = vmul.f32 %v7146, %v7146
        %v7179 = vmul.f32 %v7147, %v7147
        %v7180 = vmul.f32 %v7148, %v7148
        %v7181 = vmul.f32 %v7149, %v7149
        %v7182 = vmul.f32 %v7150, %v7150
        %v7183 = vmul.f32 %v7151, %v7151
        %v7184 = vmul.f32 %v7152, %v7152
        %v7185 = vmul.f32 %v7153, %v7153
        %v7186 = vmul.f32 %v7154, %v7154
        %v7187 = vmul.f32 %v7155, %v7155
        %v7188 = vmul.f32 %v7156, %v7156
        %v7189 = vmul.f32 %v7157, %v7157
        %v7190 = vmul.f32 %v7158, %v7158
        %v7191 = vmul.f32 %v7159, %v7159
        %v7192 = vmul.f32 %v7160, %v7160
        %v7193 = vmul.f32 %v7161, %v7161
        %v7194 = vmul.f32 %v7162, %v7162
        %v7195 = vmul.f32 %v7163, %v7163
        %v7196 = vmul.f32 %v7164, %v7164
        %v7197 = vmul.f32 %v7165, %v7165
        %v7198 = vmul.f32 %v7166, %v7166
        %v7199 = vmul.f32 %v7167, %v7167
        %v7200 = vmul.f32 %v7168, %v7168
        %v7201 = vmul.f32 %v7169, %v7169
        %v7202 = vmul.f32 %v7170, %v7170
        %v7203 = vmul.f32 %v7171, %v7171
        %v7204 = vmul.f32 %v7172, %v7172
        %v7205 = vadd.f32 %v7173, %v7174
        %7206 = vadd.xlane.f32.xlu0 %v7205
        %v7207 = vpop.xlane.xlu0 %7206
        %v7208 = vadd.f32 %v7175, %v7176
        %7209 = vadd.xlane.f32.xlu0 %v7208
        %v7210 = vpop.xlane.xlu0 %7209
        %v7211 = vadd.f32 %v7177, %v7178
        %7212 = vadd.xlane.f32.xlu0 %v7211
        %v7213 = vpop.xlane.xlu0 %7212
        %v7214 = vadd.f32 %v7179, %v7180
        %7215 = vadd.xlane.f32.xlu0 %v7214
        %v7216 = vpop.xlane.xlu0 %7215
        %v7217 = vadd.f32 %v7181, %v7182
        %7218 = vadd.xlane.f32.xlu0 %v7217
        %v7219 = vpop.xlane.xlu0 %7218
        %v7220 = vadd.f32 %v7183, %v7184
        %7221 = vadd.xlane.f32.xlu0 %v7220
        %v7222 = vpop.xlane.xlu0 %7221
        %v7223 = vadd.f32 %v7185, %v7186
        %7224 = vadd.xlane.f32.xlu0 %v7223
        %v7225 = vpop.xlane.xlu0 %7224
        %v7226 = vadd.f32 %v7187, %v7188
        %7227 = vadd.xlane.f32.xlu0 %v7226
        %v7228 = vpop.xlane.xlu0 %7227
        %v7229 = vadd.f32 %v7189, %v7190
        %7230 = vadd.xlane.f32.xlu0 %v7229
        %v7231 = vpop.xlane.xlu0 %7230
        %v7232 = vadd.f32 %v7191, %v7192
        %7233 = vadd.xlane.f32.xlu0 %v7232
        %v7234 = vpop.xlane.xlu0 %7233
        %v7235 = vadd.f32 %v7193, %v7194
        %7236 = vadd.xlane.f32.xlu0 %v7235
        %v7237 = vpop.xlane.xlu0 %7236
        %v7238 = vadd.f32 %v7195, %v7196
        %7239 = vadd.xlane.f32.xlu0 %v7238
        %v7240 = vpop.xlane.xlu0 %7239
        %v7241 = vadd.f32 %v7197, %v7198
        %7242 = vadd.xlane.f32.xlu0 %v7241
        %v7243 = vpop.xlane.xlu0 %7242
        %v7244 = vadd.f32 %v7199, %v7200
        %7245 = vadd.xlane.f32.xlu0 %v7244
        %v7246 = vpop.xlane.xlu0 %7245
        %v7247 = vadd.f32 %v7201, %v7202
        %7248 = vadd.xlane.f32.xlu0 %v7247
        %v7249 = vpop.xlane.xlu0 %7248
        %v7250 = vadd.f32 %v7203, %v7204
        %7251 = vadd.xlane.f32.xlu0 %v7250
        %v7252 = vpop.xlane.xlu0 %7251
        %v7253 = vmul.f32 %v7207, %v573
        %v7254 = vmul.f32 %v7210, %v573
        %v7255 = vmul.f32 %v7213, %v573
        %v7256 = vmul.f32 %v7216, %v573
        %v7257 = vmul.f32 %v7219, %v573
        %v7258 = vmul.f32 %v7222, %v573
        %v7259 = vmul.f32 %v7225, %v573
        %v7260 = vmul.f32 %v7228, %v573
        %v7261 = vmul.f32 %v7231, %v573
        %v7262 = vmul.f32 %v7234, %v573
        %v7263 = vmul.f32 %v7237, %v573
        %v7264 = vmul.f32 %v7240, %v573
        %v7265 = vmul.f32 %v7243, %v573
        %v7266 = vmul.f32 %v7246, %v573
        %v7267 = vmul.f32 %v7249, %v573
        %v7268 = vmul.f32 %v7252, %v573
        %v7269 = vadd.f32 %v7253, 1e-05
        %v7270 = vadd.f32 %v7254, 1e-05
        %v7271 = vadd.f32 %v7255, 1e-05
        %v7272 = vadd.f32 %v7256, 1e-05
        %v7273 = vadd.f32 %v7257, 1e-05
        %v7274 = vadd.f32 %v7258, 1e-05
        %v7275 = vadd.f32 %v7259, 1e-05
        %v7276 = vadd.f32 %v7260, 1e-05
        %v7277 = vadd.f32 %v7261, 1e-05
        %v7278 = vadd.f32 %v7262, 1e-05
        %v7279 = vadd.f32 %v7263, 1e-05
        %v7280 = vadd.f32 %v7264, 1e-05
        %v7281 = vadd.f32 %v7265, 1e-05
        %v7282 = vadd.f32 %v7266, 1e-05
        %v7283 = vadd.f32 %v7267, 1e-05
        %v7284 = vadd.f32 %v7268, 1e-05
        %v7285 = vrsqrt.pop %v7269
        %v7286 = vrsqrt.pop %v7270
        %v7287 = vrsqrt.pop %v7271
        %v7288 = vrsqrt.pop %v7272
        %v7289 = vrsqrt.pop %v7273
        %v7290 = vrsqrt.pop %v7274
        %v7291 = vrsqrt.pop %v7275
        %v7292 = vrsqrt.pop %v7276
        %v7293 = vrsqrt.pop %v7277
        %v7294 = vrsqrt.pop %v7278
        %v7295 = vrsqrt.pop %v7279
        %v7296 = vrsqrt.pop %v7280
        %v7297 = vrsqrt.pop %v7281
        %v7298 = vrsqrt.pop %v7282
        %v7299 = vrsqrt.pop %v7283
        %v7300 = vrsqrt.pop %v7284
        %v7301 = vmul.f32 %v7141, %v7285
        %v7302 = vmul.f32 %v7142, %v7285
        %v7303 = vmul.f32 %v7143, %v7286
        %v7304 = vmul.f32 %v7144, %v7286
        %v7305 = vmul.f32 %v7145, %v7287
        %v7306 = vmul.f32 %v7146, %v7287
        %v7307 = vmul.f32 %v7147, %v7288
        %v7308 = vmul.f32 %v7148, %v7288
        %v7309 = vmul.f32 %v7149, %v7289
        %v7310 = vmul.f32 %v7150, %v7289
        %v7311 = vmul.f32 %v7151, %v7290
        %v7312 = vmul.f32 %v7152, %v7290
        %v7313 = vmul.f32 %v7153, %v7291
        %v7314 = vmul.f32 %v7154, %v7291
        %v7315 = vmul.f32 %v7155, %v7292
        %v7316 = vmul.f32 %v7156, %v7292
        %v7317 = vmul.f32 %v7157, %v7293
        %v7318 = vmul.f32 %v7158, %v7293
        %v7319 = vmul.f32 %v7159, %v7294
        %v7320 = vmul.f32 %v7160, %v7294
        %v7321 = vmul.f32 %v7161, %v7295
        %v7322 = vmul.f32 %v7162, %v7295
        %v7323 = vmul.f32 %v7163, %v7296
        %v7324 = vmul.f32 %v7164, %v7296
        %v7325 = vmul.f32 %v7165, %v7297
        %v7326 = vmul.f32 %v7166, %v7297
        %v7327 = vmul.f32 %v7167, %v7298
        %v7328 = vmul.f32 %v7168, %v7298
        %v7329 = vmul.f32 %v7169, %v7299
        %v7330 = vmul.f32 %v7170, %v7299
        %v7331 = vmul.f32 %v7171, %v7300
        %v7332 = vmul.f32 %v7172, %v7300
        %v7334 = vlaneseq
        %v7335 = vshrl.u32 %v7334, 7
        %v7336 = vsub.s32 0, %v7335
        %v7337 = vrot.slane %v7075, %v7336
        %v7338 = vlaneseq
        %v7339 = vshrl.u32 %v7338, 7
        %v7340 = vsub.s32 1, %v7339
        %v7341 = vrot.slane %v7075, %v7340
        %v7344 = vmul.f32 %v7301, %v7337
        %v7345 = vmul.f32 %v7302, %v7341
        %v7346 = vmul.f32 %v7303, %v7337
        %v7347 = vmul.f32 %v7304, %v7341
        %v7348 = vmul.f32 %v7305, %v7337
        %v7349 = vmul.f32 %v7306, %v7341
        %v7350 = vmul.f32 %v7307, %v7337
        %v7351 = vmul.f32 %v7308, %v7341
        %v7352 = vmul.f32 %v7309, %v7337
        %v7353 = vmul.f32 %v7310, %v7341
        %v7354 = vmul.f32 %v7311, %v7337
        %v7355 = vmul.f32 %v7312, %v7341
        %v7356 = vmul.f32 %v7313, %v7337
        %v7357 = vmul.f32 %v7314, %v7341
        %v7358 = vmul.f32 %v7315, %v7337
        %v7359 = vmul.f32 %v7316, %v7341
        %v7360 = vmul.f32 %v7317, %v7337
        %v7361 = vmul.f32 %v7318, %v7341
        %v7362 = vmul.f32 %v7319, %v7337
        %v7363 = vmul.f32 %v7320, %v7341
        %v7364 = vmul.f32 %v7321, %v7337
        %v7365 = vmul.f32 %v7322, %v7341
        %v7366 = vmul.f32 %v7323, %v7337
        %v7367 = vmul.f32 %v7324, %v7341
        %v7368 = vmul.f32 %v7325, %v7337
        %v7369 = vmul.f32 %v7326, %v7341
        %v7370 = vmul.f32 %v7327, %v7337
        %v7371 = vmul.f32 %v7328, %v7341
        %v7372 = vmul.f32 %v7329, %v7337
        %v7373 = vmul.f32 %v7330, %v7341
        %v7374 = vmul.f32 %v7331, %v7337
        %v7375 = vmul.f32 %v7332, %v7341
        %v7377 = vlaneseq
        %v7378 = vshrl.u32 %v7377, 7
        %v7379 = vsub.s32 0, %v7378
        %v7380 = vrot.slane %v7076, %v7379
        %v7381 = vlaneseq
        %v7382 = vshrl.u32 %v7381, 7
        %v7383 = vsub.s32 1, %v7382
        %v7384 = vrot.slane %v7076, %v7383
        %v7387 = vadd.f32 %v7344, %v7380
        %v7388 = vadd.f32 %v7345, %v7384
        %v7389 = vadd.f32 %v7346, %v7380
        %v7390 = vadd.f32 %v7347, %v7384
        %v7391 = vadd.f32 %v7348, %v7380
        %v7392 = vadd.f32 %v7349, %v7384
        %v7393 = vadd.f32 %v7350, %v7380
        %v7394 = vadd.f32 %v7351, %v7384
        %v7395 = vadd.f32 %v7352, %v7380
        %v7396 = vadd.f32 %v7353, %v7384
        %v7397 = vadd.f32 %v7354, %v7380
        %v7398 = vadd.f32 %v7355, %v7384
        %v7399 = vadd.f32 %v7356, %v7380
        %v7400 = vadd.f32 %v7357, %v7384
        %v7401 = vadd.f32 %v7358, %v7380
        %v7402 = vadd.f32 %v7359, %v7384
        %v7403 = vadd.f32 %v7360, %v7380
        %v7404 = vadd.f32 %v7361, %v7384
        %v7405 = vadd.f32 %v7362, %v7380
        %v7406 = vadd.f32 %v7363, %v7384
        %v7407 = vadd.f32 %v7364, %v7380
        %v7408 = vadd.f32 %v7365, %v7384
        %v7409 = vadd.f32 %v7366, %v7380
        %v7410 = vadd.f32 %v7367, %v7384
        %v7411 = vadd.f32 %v7368, %v7380
        %v7412 = vadd.f32 %v7369, %v7384
        %v7413 = vadd.f32 %v7370, %v7380
        %v7414 = vadd.f32 %v7371, %v7384
        %v7415 = vadd.f32 %v7372, %v7380
        %v7416 = vadd.f32 %v7373, %v7384
        %v7417 = vadd.f32 %v7374, %v7380
        %v7418 = vadd.f32 %v7375, %v7384
        %v7419 = vpack.c.bf16 %v7389, %v7387
        %v7420 = vpack.c.bf16 %v7390, %v7388
        %v7421 = vpack.c.bf16 %v7393, %v7391
        %v7422 = vpack.c.bf16 %v7394, %v7392
        %v7423 = vpack.c.bf16 %v7397, %v7395
        %v7424 = vpack.c.bf16 %v7398, %v7396
        %v7425 = vpack.c.bf16 %v7401, %v7399
        %v7426 = vpack.c.bf16 %v7402, %v7400
        %v7427 = vpack.c.bf16 %v7405, %v7403
        %v7428 = vpack.c.bf16 %v7406, %v7404
        %v7429 = vpack.c.bf16 %v7409, %v7407
        %v7430 = vpack.c.bf16 %v7410, %v7408
        %v7431 = vpack.c.bf16 %v7413, %v7411
        %v7432 = vpack.c.bf16 %v7414, %v7412
        %v7433 = vpack.c.bf16 %v7417, %v7415
        %v7434 = vpack.c.bf16 %v7418, %v7416
        %v7435 = vld [vmem:[#allocation8] sm:$0xff]
        %v7436 = vld [vmem:[#allocation8 + $0x8] sm:$0xff]
        %v7437 = vld [vmem:[#allocation8 + $0x10] sm:$0xff]
        %v7438 = vld [vmem:[#allocation8 + $0x18] sm:$0xff]
        %v7439 = vld [vmem:[#allocation8 + $0x20] sm:$0xff]
        %v7440 = vld [vmem:[#allocation8 + $0x28] sm:$0xff]
        %v7441 = vld [vmem:[#allocation8 + $0x30] sm:$0xff]
        %v7442 = vld [vmem:[#allocation8 + $0x38] sm:$0xff]
        %v7443 = vld [vmem:[#allocation8 + $0x40] sm:$0xff]
        %v7444 = vld [vmem:[#allocation8 + $0x48] sm:$0xff]
        %v7445 = vld [vmem:[#allocation8 + $0x50] sm:$0xff]
        %v7446 = vld [vmem:[#allocation8 + $0x58] sm:$0xff]
        %v7447 = vld [vmem:[#allocation8 + $0x60] sm:$0xff]
        %v7448 = vld [vmem:[#allocation8 + $0x68] sm:$0xff]
        %v7449 = vld [vmem:[#allocation8 + $0x70] sm:$0xff]
        %v7450 = vld [vmem:[#allocation8 + $0x78] sm:$0xff]
        %v7451 = vld [vmem:[#allocation8 + $0x80] sm:$0xff]
        %v7452 = vld [vmem:[#allocation8 + $0x88] sm:$0xff]
        %v7453 = vld [vmem:[#allocation8 + $0x90] sm:$0xff]
        %v7454 = vld [vmem:[#allocation8 + $0x98] sm:$0xff]
        %v7455 = vld [vmem:[#allocation8 + $0xa0] sm:$0xff]
        %v7456 = vld [vmem:[#allocation8 + $0xa8] sm:$0xff]
        %v7457 = vld [vmem:[#allocation8 + $0xb0] sm:$0xff]
        %v7458 = vld [vmem:[#allocation8 + $0xb8] sm:$0xff]
        %v7459 = vld [vmem:[#allocation8 + $0xc0] sm:$0xff]
        %v7460 = vld [vmem:[#allocation8 + $0xc8] sm:$0xff]
        %v7461 = vld [vmem:[#allocation8 + $0xd0] sm:$0xff]
        %v7462 = vld [vmem:[#allocation8 + $0xd8] sm:$0xff]
        %v7463 = vld [vmem:[#allocation8 + $0xe0] sm:$0xff]
        %v7464 = vld [vmem:[#allocation8 + $0xe8] sm:$0xff]
        %v7465 = vld [vmem:[#allocation8 + $0xf0] sm:$0xff]
        %v7466 = vld [vmem:[#allocation8 + $0xf8] sm:$0xff]
        %v7467 = vld [vmem:[#allocation8 + $0x100] sm:$0xff]
        %v7468 = vld [vmem:[#allocation8 + $0x108] sm:$0xff]
        %v7469 = vld [vmem:[#allocation8 + $0x110] sm:$0xff]
        %v7470 = vld [vmem:[#allocation8 + $0x118] sm:$0xff]
        %v7471 = vld [vmem:[#allocation8 + $0x120] sm:$0xff]
        %v7472 = vld [vmem:[#allocation8 + $0x128] sm:$0xff]
        %v7473 = vld [vmem:[#allocation8 + $0x130] sm:$0xff]
        %v7474 = vld [vmem:[#allocation8 + $0x138] sm:$0xff]
        %v7475 = vld [vmem:[#allocation8 + $0x140] sm:$0xff]
        %v7476 = vld [vmem:[#allocation8 + $0x148] sm:$0xff]
        %v7477 = vld [vmem:[#allocation8 + $0x150] sm:$0xff]
        %v7478 = vld [vmem:[#allocation8 + $0x158] sm:$0xff]
        %v7479 = vld [vmem:[#allocation8 + $0x160] sm:$0xff]
        %v7480 = vld [vmem:[#allocation8 + $0x168] sm:$0xff]
        %v7481 = vld [vmem:[#allocation8 + $0x170] sm:$0xff]
        %v7482 = vld [vmem:[#allocation8 + $0x178] sm:$0xff]
        %v7483 = vld [vmem:[#allocation8 + $0x180] sm:$0xff]
        %v7484 = vld [vmem:[#allocation8 + $0x188] sm:$0xff]
        %v7485 = vld [vmem:[#allocation8 + $0x190] sm:$0xff]
        %v7486 = vld [vmem:[#allocation8 + $0x198] sm:$0xff]
        %v7487 = vld [vmem:[#allocation8 + $0x1a0] sm:$0xff]
        %v7488 = vld [vmem:[#allocation8 + $0x1a8] sm:$0xff]
        %v7489 = vld [vmem:[#allocation8 + $0x1b0] sm:$0xff]
        %v7490 = vld [vmem:[#allocation8 + $0x1b8] sm:$0xff]
        %v7491 = vld [vmem:[#allocation8 + $0x1c0] sm:$0xff]
        %v7492 = vld [vmem:[#allocation8 + $0x1c8] sm:$0xff]
        %v7493 = vld [vmem:[#allocation8 + $0x1d0] sm:$0xff]
        %v7494 = vld [vmem:[#allocation8 + $0x1d8] sm:$0xff]
        %v7495 = vld [vmem:[#allocation8 + $0x1e0] sm:$0xff]
        %v7496 = vld [vmem:[#allocation8 + $0x1e8] sm:$0xff]
        %v7497 = vld [vmem:[#allocation8 + $0x1f0] sm:$0xff]
        %v7498 = vld [vmem:[#allocation8 + $0x1f8] sm:$0xff]
        %v7499 = vld [vmem:[#allocation8 + $0x200] sm:$0xff]
        %v7500 = vld [vmem:[#allocation8 + $0x208] sm:$0xff]
        %v7501 = vld [vmem:[#allocation8 + $0x210] sm:$0xff]
        %v7502 = vld [vmem:[#allocation8 + $0x218] sm:$0xff]
        %v7503 = vld [vmem:[#allocation8 + $0x220] sm:$0xff]
        %v7504 = vld [vmem:[#allocation8 + $0x228] sm:$0xff]
        %v7505 = vld [vmem:[#allocation8 + $0x230] sm:$0xff]
        %v7506 = vld [vmem:[#allocation8 + $0x238] sm:$0xff]
        %v7507 = vld [vmem:[#allocation8 + $0x240] sm:$0xff]
        %v7508 = vld [vmem:[#allocation8 + $0x248] sm:$0xff]
        %v7509 = vld [vmem:[#allocation8 + $0x250] sm:$0xff]
        %v7510 = vld [vmem:[#allocation8 + $0x258] sm:$0xff]
        %v7511 = vld [vmem:[#allocation8 + $0x260] sm:$0xff]
        %v7512 = vld [vmem:[#allocation8 + $0x268] sm:$0xff]
        %v7513 = vld [vmem:[#allocation8 + $0x270] sm:$0xff]
        %v7514 = vld [vmem:[#allocation8 + $0x278] sm:$0xff]
        %v7515 = vld [vmem:[#allocation8 + $0x280] sm:$0xff]
        %v7516 = vld [vmem:[#allocation8 + $0x288] sm:$0xff]
        %v7517 = vld [vmem:[#allocation8 + $0x290] sm:$0xff]
        %v7518 = vld [vmem:[#allocation8 + $0x298] sm:$0xff]
        %v7519 = vld [vmem:[#allocation8 + $0x2a0] sm:$0xff]
        %v7520 = vld [vmem:[#allocation8 + $0x2a8] sm:$0xff]
        %v7521 = vld [vmem:[#allocation8 + $0x2b0] sm:$0xff]
        %v7522 = vld [vmem:[#allocation8 + $0x2b8] sm:$0xff]
        %v7523 = vld [vmem:[#allocation8 + $0x2c0] sm:$0xff]
        %v7524 = vld [vmem:[#allocation8 + $0x2c8] sm:$0xff]
        %v7525 = vld [vmem:[#allocation8 + $0x2d0] sm:$0xff]
        %v7526 = vld [vmem:[#allocation8 + $0x2d8] sm:$0xff]
        %v7527 = vld [vmem:[#allocation8 + $0x2e0] sm:$0xff]
        %v7528 = vld [vmem:[#allocation8 + $0x2e8] sm:$0xff]
        %v7529 = vld [vmem:[#allocation8 + $0x2f0] sm:$0xff]
        %v7530 = vld [vmem:[#allocation8 + $0x2f8] sm:$0xff]
        %v7531 = vld [vmem:[#allocation8 + $0x300] sm:$0xff]
        %v7532 = vld [vmem:[#allocation8 + $0x308] sm:$0xff]
        %v7533 = vld [vmem:[#allocation8 + $0x310] sm:$0xff]
        %v7534 = vld [vmem:[#allocation8 + $0x318] sm:$0xff]
        %v7535 = vld [vmem:[#allocation8 + $0x320] sm:$0xff]
        %v7536 = vld [vmem:[#allocation8 + $0x328] sm:$0xff]
        %v7537 = vld [vmem:[#allocation8 + $0x330] sm:$0xff]
        %v7538 = vld [vmem:[#allocation8 + $0x338] sm:$0xff]
        %v7539 = vld [vmem:[#allocation8 + $0x340] sm:$0xff]
        %v7540 = vld [vmem:[#allocation8 + $0x348] sm:$0xff]
        %v7541 = vld [vmem:[#allocation8 + $0x350] sm:$0xff]
        %v7542 = vld [vmem:[#allocation8 + $0x358] sm:$0xff]
        %v7543 = vld [vmem:[#allocation8 + $0x360] sm:$0xff]
        %v7544 = vld [vmem:[#allocation8 + $0x368] sm:$0xff]
        %v7545 = vld [vmem:[#allocation8 + $0x370] sm:$0xff]
        %v7546 = vld [vmem:[#allocation8 + $0x378] sm:$0xff]
        %v7547 = vld [vmem:[#allocation8 + $0x380] sm:$0xff]
        %v7548 = vld [vmem:[#allocation8 + $0x388] sm:$0xff]
        %v7549 = vld [vmem:[#allocation8 + $0x390] sm:$0xff]
        %v7550 = vld [vmem:[#allocation8 + $0x398] sm:$0xff]
        %v7551 = vld [vmem:[#allocation8 + $0x3a0] sm:$0xff]
        %v7552 = vld [vmem:[#allocation8 + $0x3a8] sm:$0xff]
        %v7553 = vld [vmem:[#allocation8 + $0x3b0] sm:$0xff]
        %v7554 = vld [vmem:[#allocation8 + $0x3b8] sm:$0xff]
        %v7555 = vld [vmem:[#allocation8 + $0x3c0] sm:$0xff]
        %v7556 = vld [vmem:[#allocation8 + $0x3c8] sm:$0xff]
        %v7557 = vld [vmem:[#allocation8 + $0x3d0] sm:$0xff]
        %v7558 = vld [vmem:[#allocation8 + $0x3d8] sm:$0xff]
        %v7559 = vld [vmem:[#allocation8 + $0x3e0] sm:$0xff]
        %v7560 = vld [vmem:[#allocation8 + $0x3e8] sm:$0xff]
        %v7561 = vld [vmem:[#allocation8 + $0x3f0] sm:$0xff]
        %v7562 = vld [vmem:[#allocation8 + $0x3f8] sm:$0xff]
        %v7563 = vld [vmem:[%s9] sm:$0xff]
        %v7565 = vlaneseq
        %v7566 = vshrl.u32 %v7565, 7
        %v7567 = vsub.s32 0, %v7566
        %v7568 = vrot.slane %v7563, %v7567
        %v7569 = vlaneseq
        %v7570 = vshrl.u32 %v7569, 7
        %v7571 = vsub.s32 1, %v7570
        %v7572 = vrot.slane %v7563, %v7571
        %v7573 = vlaneseq
        %v7574 = vshrl.u32 %v7573, 7
        %v7575 = vsub.s32 2, %v7574
        %v7576 = vrot.slane %v7563, %v7575
        %v7577 = vlaneseq
        %v7578 = vshrl.u32 %v7577, 7
        %v7579 = vsub.s32 3, %v7578
        %v7580 = vrot.slane %v7563, %v7579
        %v7581 = vlaneseq
        %v7582 = vshrl.u32 %v7581, 7
        %v7583 = vsub.s32 4, %v7582
        %v7584 = vrot.slane %v7563, %v7583
        %v7585 = vlaneseq
        %v7586 = vshrl.u32 %v7585, 7
        %v7587 = vsub.s32 5, %v7586
        %v7588 = vrot.slane %v7563, %v7587
        %v7589 = vlaneseq
        %v7590 = vshrl.u32 %v7589, 7
        %v7591 = vsub.s32 6, %v7590
        %v7592 = vrot.slane %v7563, %v7591
        %v7593 = vlaneseq
        %v7594 = vshrl.u32 %v7593, 7
        %v7595 = vsub.s32 7, %v7594
        %v7596 = vrot.slane %v7563, %v7595
        %v7733 = vunpack.c.l.b16 %v7435
        %v7734 = vunpack.c.h.b16 %v7435
        %v7735 = vunpack.c.l.b16 %v7436
        %v7736 = vunpack.c.h.b16 %v7436
        %v7737 = vunpack.c.l.b16 %v7437
        %v7738 = vunpack.c.h.b16 %v7437
        %v7739 = vunpack.c.l.b16 %v7438
        %v7740 = vunpack.c.h.b16 %v7438
        %v7741 = vunpack.c.l.b16 %v7439
        %v7742 = vunpack.c.h.b16 %v7439
        %v7743 = vunpack.c.l.b16 %v7440
        %v7744 = vunpack.c.h.b16 %v7440
        %v7745 = vunpack.c.l.b16 %v7441
        %v7746 = vunpack.c.h.b16 %v7441
        %v7747 = vunpack.c.l.b16 %v7442
        %v7748 = vunpack.c.h.b16 %v7442
        %v7749 = vunpack.c.l.b16 %v7443
        %v7750 = vunpack.c.h.b16 %v7443
        %v7751 = vunpack.c.l.b16 %v7444
        %v7752 = vunpack.c.h.b16 %v7444
        %v7753 = vunpack.c.l.b16 %v7445
        %v7754 = vunpack.c.h.b16 %v7445
        %v7755 = vunpack.c.l.b16 %v7446
        %v7756 = vunpack.c.h.b16 %v7446
        %v7757 = vunpack.c.l.b16 %v7447
        %v7758 = vunpack.c.h.b16 %v7447
        %v7759 = vunpack.c.l.b16 %v7448
        %v7760 = vunpack.c.h.b16 %v7448
        %v7761 = vunpack.c.l.b16 %v7449
        %v7762 = vunpack.c.h.b16 %v7449
        %v7763 = vunpack.c.l.b16 %v7450
        %v7764 = vunpack.c.h.b16 %v7450
        %v7765 = vunpack.c.l.b16 %v7451
        %v7766 = vunpack.c.h.b16 %v7451
        %v7767 = vunpack.c.l.b16 %v7452
        %v7768 = vunpack.c.h.b16 %v7452
        %v7769 = vunpack.c.l.b16 %v7453
        %v7770 = vunpack.c.h.b16 %v7453
        %v7771 = vunpack.c.l.b16 %v7454
        %v7772 = vunpack.c.h.b16 %v7454
        %v7773 = vunpack.c.l.b16 %v7455
        %v7774 = vunpack.c.h.b16 %v7455
        %v7775 = vunpack.c.l.b16 %v7456
        %v7776 = vunpack.c.h.b16 %v7456
        %v7777 = vunpack.c.l.b16 %v7457
        %v7778 = vunpack.c.h.b16 %v7457
        %v7779 = vunpack.c.l.b16 %v7458
        %v7780 = vunpack.c.h.b16 %v7458
        %v7781 = vunpack.c.l.b16 %v7459
        %v7782 = vunpack.c.h.b16 %v7459
        %v7783 = vunpack.c.l.b16 %v7460
        %v7784 = vunpack.c.h.b16 %v7460
        %v7785 = vunpack.c.l.b16 %v7461
        %v7786 = vunpack.c.h.b16 %v7461
        %v7787 = vunpack.c.l.b16 %v7462
        %v7788 = vunpack.c.h.b16 %v7462
        %v7789 = vunpack.c.l.b16 %v7463
        %v7790 = vunpack.c.h.b16 %v7463
        %v7791 = vunpack.c.l.b16 %v7464
        %v7792 = vunpack.c.h.b16 %v7464
        %v7793 = vunpack.c.l.b16 %v7465
        %v7794 = vunpack.c.h.b16 %v7465
        %v7795 = vunpack.c.l.b16 %v7466
        %v7796 = vunpack.c.h.b16 %v7466
        %v7797 = vunpack.c.l.b16 %v7467
        %v7798 = vunpack.c.h.b16 %v7467
        %v7799 = vunpack.c.l.b16 %v7468
        %v7800 = vunpack.c.h.b16 %v7468
        %v7801 = vunpack.c.l.b16 %v7469
        %v7802 = vunpack.c.h.b16 %v7469
        %v7803 = vunpack.c.l.b16 %v7470
        %v7804 = vunpack.c.h.b16 %v7470
        %v7805 = vunpack.c.l.b16 %v7471
        %v7806 = vunpack.c.h.b16 %v7471
        %v7807 = vunpack.c.l.b16 %v7472
        %v7808 = vunpack.c.h.b16 %v7472
        %v7809 = vunpack.c.l.b16 %v7473
        %v7810 = vunpack.c.h.b16 %v7473
        %v7811 = vunpack.c.l.b16 %v7474
        %v7812 = vunpack.c.h.b16 %v7474
        %v7813 = vunpack.c.l.b16 %v7475
        %v7814 = vunpack.c.h.b16 %v7475
        %v7815 = vunpack.c.l.b16 %v7476
        %v7816 = vunpack.c.h.b16 %v7476
        %v7817 = vunpack.c.l.b16 %v7477
        %v7818 = vunpack.c.h.b16 %v7477
        %v7819 = vunpack.c.l.b16 %v7478
        %v7820 = vunpack.c.h.b16 %v7478
        %v7821 = vunpack.c.l.b16 %v7479
        %v7822 = vunpack.c.h.b16 %v7479
        %v7823 = vunpack.c.l.b16 %v7480
        %v7824 = vunpack.c.h.b16 %v7480
        %v7825 = vunpack.c.l.b16 %v7481
        %v7826 = vunpack.c.h.b16 %v7481
        %v7827 = vunpack.c.l.b16 %v7482
        %v7828 = vunpack.c.h.b16 %v7482
        %v7829 = vunpack.c.l.b16 %v7483
        %v7830 = vunpack.c.h.b16 %v7483
        %v7831 = vunpack.c.l.b16 %v7484
        %v7832 = vunpack.c.h.b16 %v7484
        %v7833 = vunpack.c.l.b16 %v7485
        %v7834 = vunpack.c.h.b16 %v7485
        %v7835 = vunpack.c.l.b16 %v7486
        %v7836 = vunpack.c.h.b16 %v7486
        %v7837 = vunpack.c.l.b16 %v7487
        %v7838 = vunpack.c.h.b16 %v7487
        %v7839 = vunpack.c.l.b16 %v7488
        %v7840 = vunpack.c.h.b16 %v7488
        %v7841 = vunpack.c.l.b16 %v7489
        %v7842 = vunpack.c.h.b16 %v7489
        %v7843 = vunpack.c.l.b16 %v7490
        %v7844 = vunpack.c.h.b16 %v7490
        %v7845 = vunpack.c.l.b16 %v7491
        %v7846 = vunpack.c.h.b16 %v7491
        %v7847 = vunpack.c.l.b16 %v7492
        %v7848 = vunpack.c.h.b16 %v7492
        %v7849 = vunpack.c.l.b16 %v7493
        %v7850 = vunpack.c.h.b16 %v7493
        %v7851 = vunpack.c.l.b16 %v7494
        %v7852 = vunpack.c.h.b16 %v7494
        %v7853 = vunpack.c.l.b16 %v7495
        %v7854 = vunpack.c.h.b16 %v7495
        %v7855 = vunpack.c.l.b16 %v7496
        %v7856 = vunpack.c.h.b16 %v7496
        %v7857 = vunpack.c.l.b16 %v7497
        %v7858 = vunpack.c.h.b16 %v7497
        %v7859 = vunpack.c.l.b16 %v7498
        %v7860 = vunpack.c.h.b16 %v7498
        %v7861 = vunpack.c.l.b16 %v7499
        %v7862 = vunpack.c.h.b16 %v7499
        %v7863 = vunpack.c.l.b16 %v7500
        %v7864 = vunpack.c.h.b16 %v7500
        %v7865 = vunpack.c.l.b16 %v7501
        %v7866 = vunpack.c.h.b16 %v7501
        %v7867 = vunpack.c.l.b16 %v7502
        %v7868 = vunpack.c.h.b16 %v7502
        %v7869 = vunpack.c.l.b16 %v7503
        %v7870 = vunpack.c.h.b16 %v7503
        %v7871 = vunpack.c.l.b16 %v7504
        %v7872 = vunpack.c.h.b16 %v7504
        %v7873 = vunpack.c.l.b16 %v7505
        %v7874 = vunpack.c.h.b16 %v7505
        %v7875 = vunpack.c.l.b16 %v7506
        %v7876 = vunpack.c.h.b16 %v7506
        %v7877 = vunpack.c.l.b16 %v7507
        %v7878 = vunpack.c.h.b16 %v7507
        %v7879 = vunpack.c.l.b16 %v7508
        %v7880 = vunpack.c.h.b16 %v7508
        %v7881 = vunpack.c.l.b16 %v7509
        %v7882 = vunpack.c.h.b16 %v7509
        %v7883 = vunpack.c.l.b16 %v7510
        %v7884 = vunpack.c.h.b16 %v7510
        %v7885 = vunpack.c.l.b16 %v7511
        %v7886 = vunpack.c.h.b16 %v7511
        %v7887 = vunpack.c.l.b16 %v7512
        %v7888 = vunpack.c.h.b16 %v7512
        %v7889 = vunpack.c.l.b16 %v7513
        %v7890 = vunpack.c.h.b16 %v7513
        %v7891 = vunpack.c.l.b16 %v7514
        %v7892 = vunpack.c.h.b16 %v7514
        %v7893 = vunpack.c.l.b16 %v7515
        %v7894 = vunpack.c.h.b16 %v7515
        %v7895 = vunpack.c.l.b16 %v7516
        %v7896 = vunpack.c.h.b16 %v7516
        %v7897 = vunpack.c.l.b16 %v7517
        %v7898 = vunpack.c.h.b16 %v7517
        %v7899 = vunpack.c.l.b16 %v7518
        %v7900 = vunpack.c.h.b16 %v7518
        %v7901 = vunpack.c.l.b16 %v7519
        %v7902 = vunpack.c.h.b16 %v7519
        %v7903 = vunpack.c.l.b16 %v7520
        %v7904 = vunpack.c.h.b16 %v7520
        %v7905 = vunpack.c.l.b16 %v7521
        %v7906 = vunpack.c.h.b16 %v7521
        %v7907 = vunpack.c.l.b16 %v7522
        %v7908 = vunpack.c.h.b16 %v7522
        %v7909 = vunpack.c.l.b16 %v7523
        %v7910 = vunpack.c.h.b16 %v7523
        %v7911 = vunpack.c.l.b16 %v7524
        %v7912 = vunpack.c.h.b16 %v7524
        %v7913 = vunpack.c.l.b16 %v7525
        %v7914 = vunpack.c.h.b16 %v7525
        %v7915 = vunpack.c.l.b16 %v7526
        %v7916 = vunpack.c.h.b16 %v7526
        %v7917 = vunpack.c.l.b16 %v7527
        %v7918 = vunpack.c.h.b16 %v7527
        %v7919 = vunpack.c.l.b16 %v7528
        %v7920 = vunpack.c.h.b16 %v7528
        %v7921 = vunpack.c.l.b16 %v7529
        %v7922 = vunpack.c.h.b16 %v7529
        %v7923 = vunpack.c.l.b16 %v7530
        %v7924 = vunpack.c.h.b16 %v7530
        %v7925 = vunpack.c.l.b16 %v7531
        %v7926 = vunpack.c.h.b16 %v7531
        %v7927 = vunpack.c.l.b16 %v7532
        %v7928 = vunpack.c.h.b16 %v7532
        %v7929 = vunpack.c.l.b16 %v7533
        %v7930 = vunpack.c.h.b16 %v7533
        %v7931 = vunpack.c.l.b16 %v7534
        %v7932 = vunpack.c.h.b16 %v7534
        %v7933 = vunpack.c.l.b16 %v7535
        %v7934 = vunpack.c.h.b16 %v7535
        %v7935 = vunpack.c.l.b16 %v7536
        %v7936 = vunpack.c.h.b16 %v7536
        %v7937 = vunpack.c.l.b16 %v7537
        %v7938 = vunpack.c.h.b16 %v7537
        %v7939 = vunpack.c.l.b16 %v7538
        %v7940 = vunpack.c.h.b16 %v7538
        %v7941 = vunpack.c.l.b16 %v7539
        %v7942 = vunpack.c.h.b16 %v7539
        %v7943 = vunpack.c.l.b16 %v7540
        %v7944 = vunpack.c.h.b16 %v7540
        %v7945 = vunpack.c.l.b16 %v7541
        %v7946 = vunpack.c.h.b16 %v7541
        %v7947 = vunpack.c.l.b16 %v7542
        %v7948 = vunpack.c.h.b16 %v7542
        %v7949 = vunpack.c.l.b16 %v7543
        %v7950 = vunpack.c.h.b16 %v7543
        %v7951 = vunpack.c.l.b16 %v7544
        %v7952 = vunpack.c.h.b16 %v7544
        %v7953 = vunpack.c.l.b16 %v7545
        %v7954 = vunpack.c.h.b16 %v7545
        %v7955 = vunpack.c.l.b16 %v7546
        %v7956 = vunpack.c.h.b16 %v7546
        %v7957 = vunpack.c.l.b16 %v7547
        %v7958 = vunpack.c.h.b16 %v7547
        %v7959 = vunpack.c.l.b16 %v7548
        %v7960 = vunpack.c.h.b16 %v7548
        %v7961 = vunpack.c.l.b16 %v7549
        %v7962 = vunpack.c.h.b16 %v7549
        %v7963 = vunpack.c.l.b16 %v7550
        %v7964 = vunpack.c.h.b16 %v7550
        %v7965 = vunpack.c.l.b16 %v7551
        %v7966 = vunpack.c.h.b16 %v7551
        %v7967 = vunpack.c.l.b16 %v7552
        %v7968 = vunpack.c.h.b16 %v7552
        %v7969 = vunpack.c.l.b16 %v7553
        %v7970 = vunpack.c.h.b16 %v7553
        %v7971 = vunpack.c.l.b16 %v7554
        %v7972 = vunpack.c.h.b16 %v7554
        %v7973 = vunpack.c.l.b16 %v7555
        %v7974 = vunpack.c.h.b16 %v7555
        %v7975 = vunpack.c.l.b16 %v7556
        %v7976 = vunpack.c.h.b16 %v7556
        %v7977 = vunpack.c.l.b16 %v7557
        %v7978 = vunpack.c.h.b16 %v7557
        %v7979 = vunpack.c.l.b16 %v7558
        %v7980 = vunpack.c.h.b16 %v7558
        %v7981 = vunpack.c.l.b16 %v7559
        %v7982 = vunpack.c.h.b16 %v7559
        %v7983 = vunpack.c.l.b16 %v7560
        %v7984 = vunpack.c.h.b16 %v7560
        %v7985 = vunpack.c.l.b16 %v7561
        %v7986 = vunpack.c.h.b16 %v7561
        %v7987 = vunpack.c.l.b16 %v7562
        %v7988 = vunpack.c.h.b16 %v7562
        %v7989 = vpack.c.b16 %v7741, %v7733
        %v7990 = vpack.c.b16 %v7742, %v7734
        %v7991 = vpack.c.b16 %v7743, %v7735
        %v7992 = vpack.c.b16 %v7744, %v7736
        %v7993 = vpack.c.b16 %v7745, %v7737
        %v7994 = vpack.c.b16 %v7746, %v7738
        %v7995 = vpack.c.b16 %v7747, %v7739
        %v7996 = vpack.c.b16 %v7748, %v7740
        %v7997 = vpack.c.b16 %v7757, %v7749
        %v7998 = vpack.c.b16 %v7758, %v7750
        %v7999 = vpack.c.b16 %v7759, %v7751
        %v8000 = vpack.c.b16 %v7760, %v7752
        %v8001 = vpack.c.b16 %v7761, %v7753
        %v8002 = vpack.c.b16 %v7762, %v7754
        %v8003 = vpack.c.b16 %v7763, %v7755
        %v8004 = vpack.c.b16 %v7764, %v7756
        %v8005 = vpack.c.b16 %v7773, %v7765
        %v8006 = vpack.c.b16 %v7774, %v7766
        %v8007 = vpack.c.b16 %v7775, %v7767
        %v8008 = vpack.c.b16 %v7776, %v7768
        %v8009 = vpack.c.b16 %v7777, %v7769
        %v8010 = vpack.c.b16 %v7778, %v7770
        %v8011 = vpack.c.b16 %v7779, %v7771
        %v8012 = vpack.c.b16 %v7780, %v7772
        %v8013 = vpack.c.b16 %v7789, %v7781
        %v8014 = vpack.c.b16 %v7790, %v7782
        %v8015 = vpack.c.b16 %v7791, %v7783
        %v8016 = vpack.c.b16 %v7792, %v7784
        %v8017 = vpack.c.b16 %v7793, %v7785
        %v8018 = vpack.c.b16 %v7794, %v7786
        %v8019 = vpack.c.b16 %v7795, %v7787
        %v8020 = vpack.c.b16 %v7796, %v7788
        %v8021 = vpack.c.b16 %v7805, %v7797
        %v8022 = vpack.c.b16 %v7806, %v7798
        %v8023 = vpack.c.b16 %v7807, %v7799
        %v8024 = vpack.c.b16 %v7808, %v7800
        %v8025 = vpack.c.b16 %v7809, %v7801
        %v8026 = vpack.c.b16 %v7810, %v7802
        %v8027 = vpack.c.b16 %v7811, %v7803
        %v8028 = vpack.c.b16 %v7812, %v7804
        %v8029 = vpack.c.b16 %v7821, %v7813
        %v8030 = vpack.c.b16 %v7822, %v7814
        %v8031 = vpack.c.b16 %v7823, %v7815
        %v8032 = vpack.c.b16 %v7824, %v7816
        %v8033 = vpack.c.b16 %v7825, %v7817
        %v8034 = vpack.c.b16 %v7826, %v7818
        %v8035 = vpack.c.b16 %v7827, %v7819
        %v8036 = vpack.c.b16 %v7828, %v7820
        %v8037 = vpack.c.b16 %v7837, %v7829
        %v8038 = vpack.c.b16 %v7838, %v7830
        %v8039 = vpack.c.b16 %v7839, %v7831
        %v8040 = vpack.c.b16 %v7840, %v7832
        %v8041 = vpack.c.b16 %v7841, %v7833
        %v8042 = vpack.c.b16 %v7842, %v7834
        %v8043 = vpack.c.b16 %v7843, %v7835
        %v8044 = vpack.c.b16 %v7844, %v7836
        %v8045 = vpack.c.b16 %v7853, %v7845
        %v8046 = vpack.c.b16 %v7854, %v7846
        %v8047 = vpack.c.b16 %v7855, %v7847
        %v8048 = vpack.c.b16 %v7856, %v7848
        %v8049 = vpack.c.b16 %v7857, %v7849
        %v8050 = vpack.c.b16 %v7858, %v7850
        %v8051 = vpack.c.b16 %v7859, %v7851
        %v8052 = vpack.c.b16 %v7860, %v7852
        %v8053 = vpack.c.b16 %v7869, %v7861
        %v8054 = vpack.c.b16 %v7870, %v7862
        %v8055 = vpack.c.b16 %v7871, %v7863
        %v8056 = vpack.c.b16 %v7872, %v7864
        %v8057 = vpack.c.b16 %v7873, %v7865
        %v8058 = vpack.c.b16 %v7874, %v7866
        %v8059 = vpack.c.b16 %v7875, %v7867
        %v8060 = vpack.c.b16 %v7876, %v7868
        %v8061 = vpack.c.b16 %v7885, %v7877
        %v8062 = vpack.c.b16 %v7886, %v7878
        %v8063 = vpack.c.b16 %v7887, %v7879
        %v8064 = vpack.c.b16 %v7888, %v7880
        %v8065 = vpack.c.b16 %v7889, %v7881
        %v8066 = vpack.c.b16 %v7890, %v7882
        %v8067 = vpack.c.b16 %v7891, %v7883
        %v8068 = vpack.c.b16 %v7892, %v7884
        %v8069 = vpack.c.b16 %v7901, %v7893
        %v8070 = vpack.c.b16 %v7902, %v7894
        %v8071 = vpack.c.b16 %v7903, %v7895
        %v8072 = vpack.c.b16 %v7904, %v7896
        %v8073 = vpack.c.b16 %v7905, %v7897
        %v8074 = vpack.c.b16 %v7906, %v7898
        %v8075 = vpack.c.b16 %v7907, %v7899
        %v8076 = vpack.c.b16 %v7908, %v7900
        %v8077 = vpack.c.b16 %v7917, %v7909
        %v8078 = vpack.c.b16 %v7918, %v7910
        %v8079 = vpack.c.b16 %v7919, %v7911
        %v8080 = vpack.c.b16 %v7920, %v7912
        %v8081 = vpack.c.b16 %v7921, %v7913
        %v8082 = vpack.c.b16 %v7922, %v7914
        %v8083 = vpack.c.b16 %v7923, %v7915
        %v8084 = vpack.c.b16 %v7924, %v7916
        %v8085 = vpack.c.b16 %v7933, %v7925
        %v8086 = vpack.c.b16 %v7934, %v7926
        %v8087 = vpack.c.b16 %v7935, %v7927
        %v8088 = vpack.c.b16 %v7936, %v7928
        %v8089 = vpack.c.b16 %v7937, %v7929
        %v8090 = vpack.c.b16 %v7938, %v7930
        %v8091 = vpack.c.b16 %v7939, %v7931
        %v8092 = vpack.c.b16 %v7940, %v7932
        %v8093 = vpack.c.b16 %v7949, %v7941
        %v8094 = vpack.c.b16 %v7950, %v7942
        %v8095 = vpack.c.b16 %v7951, %v7943
        %v8096 = vpack.c.b16 %v7952, %v7944
        %v8097 = vpack.c.b16 %v7953, %v7945
        %v8098 = vpack.c.b16 %v7954, %v7946
        %v8099 = vpack.c.b16 %v7955, %v7947
        %v8100 = vpack.c.b16 %v7956, %v7948
        %v8101 = vpack.c.b16 %v7965, %v7957
        %v8102 = vpack.c.b16 %v7966, %v7958
        %v8103 = vpack.c.b16 %v7967, %v7959
        %v8104 = vpack.c.b16 %v7968, %v7960
        %v8105 = vpack.c.b16 %v7969, %v7961
        %v8106 = vpack.c.b16 %v7970, %v7962
        %v8107 = vpack.c.b16 %v7971, %v7963
        %v8108 = vpack.c.b16 %v7972, %v7964
        %v8109 = vpack.c.b16 %v7981, %v7973
        %v8110 = vpack.c.b16 %v7982, %v7974
        %v8111 = vpack.c.b16 %v7983, %v7975
        %v8112 = vpack.c.b16 %v7984, %v7976
        %v8113 = vpack.c.b16 %v7985, %v7977
        %v8114 = vpack.c.b16 %v7986, %v7978
        %v8115 = vpack.c.b16 %v7987, %v7979
        %v8116 = vpack.c.b16 %v7988, %v7980
        %8245 = vmatprep.subr.bf16.mxu0 %v7990
        %8246 = vmatpush1.bf16.msra.mxu0 %v7989
        %8247 = vmatprep.subr.bf16.mxu0 %v7998
        %8248 = vmatpush1.bf16.msra.mxu0 %v7997
        %8249 = vmatprep.subr.bf16.mxu0 %v8006
        %8250 = vmatpush1.bf16.msra.mxu0 %v8005
        %8251 = vmatprep.subr.bf16.mxu0 %v8014
        %8252 = vmatpush1.bf16.msra.mxu0 %v8013
        %8253 = vmatprep.subr.bf16.mxu0 %v8022
        %8254 = vmatpush1.bf16.msra.mxu0 %v8021
        %8255 = vmatprep.subr.bf16.mxu0 %v8030
        %8256 = vmatpush1.bf16.msra.mxu0 %v8029
        %8257 = vmatprep.subr.bf16.mxu0 %v8038
        %8258 = vmatpush1.bf16.msra.mxu0 %v8037
        %8259 = vmatprep.subr.bf16.mxu0 %v8046
        %8260 = vmatpush1.bf16.msra.mxu0 %v8045
        %8261 = vmatprep.subr.bf16.mxu0 %v8054
        %8262 = vmatpush1.bf16.msra.mxu0 %v8053
        %8263 = vmatprep.subr.bf16.mxu0 %v8062
        %8264 = vmatpush1.bf16.msra.mxu0 %v8061
        %8265 = vmatprep.subr.bf16.mxu0 %v8070
        %8266 = vmatpush1.bf16.msra.mxu0 %v8069
        %8267 = vmatprep.subr.bf16.mxu0 %v8078
        %8268 = vmatpush1.bf16.msra.mxu0 %v8077
        %8269 = vmatprep.subr.bf16.mxu0 %v8086
        %8270 = vmatpush1.bf16.msra.mxu0 %v8085
        %8271 = vmatprep.subr.bf16.mxu0 %v8094
        %8272 = vmatpush1.bf16.msra.mxu0 %v8093
        %8273 = vmatprep.subr.bf16.mxu0 %v8102
        %8274 = vmatpush1.bf16.msra.mxu0 %v8101
        %8275 = vmatprep.subr.bf16.mxu0 %v8110
        %8276 = vmatpush1.bf16.msra.mxu0 %v8109
        %8277 = vmatprep.mubr.bf16.mxu0 %v7420
        %8278 = vmatmul.mubr.bf16.gmra.mrb[0].mxu0 %v7419
        %v8279 = vpop.f32.mrb[0].mxu0
        %v8280 = vadd.f32 %v7568, %v8279
        %v8281 = vpop.f32.mrb[0].mxu0
        %v8282 = vadd.f32 %v7572, %v8281
        %v8283 = vpop.f32.mrb[0].mxu0
        %v8284 = vadd.f32 %v7568, %v8283
        %v8285 = vpop.f32.mrb[0].mxu0
        %v8286 = vadd.f32 %v7572, %v8285
        %8287 = vmatprep.mubr.bf16.mxu0 %v7422
        %8288 = vmatmul.mubr.bf16.gmra.mrb[0].mxu0 %v7421
        %v8289 = vpop.f32.mrb[0].mxu0
        %v8290 = vadd.f32 %v7568, %v8289
        %v8291 = vpop.f32.mrb[0].mxu0
        %v8292 = vadd.f32 %v7572, %v8291
        %v8293 = vpop.f32.mrb[0].mxu0
        %v8294 = vadd.f32 %v7568, %v8293
        %v8295 = vpop.f32.mrb[0].mxu0
        %v8296 = vadd.f32 %v7572, %v8295
        %8297 = vmatprep.mubr.bf16.mxu0 %v7424
        %8298 = vmatmul.mubr.bf16.gmra.mrb[0].mxu0 %v7423
        %v8299 = vpop.f32.mrb[0].mxu0
        %v8300 = vadd.f32 %v7568, %v8299
        %v8301 = vpop.f32.mrb[0].mxu0
        %v8302 = vadd.f32 %v7572, %v8301
        %v8303 = vpop.f32.mrb[0].mxu0
        %v8304 = vadd.f32 %v7568, %v8303
        %v8305 = vpop.f32.mrb[0].mxu0
        %v8306 = vadd.f32 %v7572, %v8305
        %8307 = vmatprep.mubr.bf16.mxu0 %v7426
        %8308 = vmatmul.mubr.bf16.gmra.mrb[0].mxu0 %v7425
        %v8309 = vpop.f32.mrb[0].mxu0
        %v8310 = vadd.f32 %v7568, %v8309
        %v8311 = vpop.f32.mrb[0].mxu0
        %v8312 = vadd.f32 %v7572, %v8311
        %v8313 = vpop.f32.mrb[0].mxu0
        %v8314 = vadd.f32 %v7568, %v8313
        %v8315 = vpop.f32.mrb[0].mxu0
        %v8316 = vadd.f32 %v7572, %v8315
        %8317 = vmatprep.mubr.bf16.mxu0 %v7428
        %8318 = vmatmul.mubr.bf16.gmra.mrb[0].mxu0 %v7427
        %v8319 = vpop.f32.mrb[0].mxu0
        %v8320 = vadd.f32 %v7568, %v8319
        %v8321 = vpop.f32.mrb[0].mxu0
        %v8322 = vadd.f32 %v7572, %v8321
        %v8323 = vpop.f32.mrb[0].mxu0
        %v8324 = vadd.f32 %v7568, %v8323
        %v8325 = vpop.f32.mrb[0].mxu0
        %v8326 = vadd.f32 %v7572, %v8325
        %8327 = vmatprep.mubr.bf16.mxu0 %v7430
        %8328 = vmatmul.mubr.bf16.gmra.mrb[0].mxu0 %v7429
        %v8329 = vpop.f32.mrb[0].mxu0
        %v8330 = vadd.f32 %v7568, %v8329
        %v8331 = vpop.f32.mrb[0].mxu0
        %v8332 = vadd.f32 %v7572, %v8331
        %v8333 = vpop.f32.mrb[0].mxu0
        %v8334 = vadd.f32 %v7568, %v8333
        %v8335 = vpop.f32.mrb[0].mxu0
        %v8336 = vadd.f32 %v7572, %v8335
        %8337 = vmatprep.mubr.bf16.mxu0 %v7432
        %8338 = vmatmul.mubr.bf16.gmra.mrb[0].mxu0 %v7431
        %v8339 = vpop.f32.mrb[0].mxu0
        %v8340 = vadd.f32 %v7568, %v8339
        %v8341 = vpop.f32.mrb[0].mxu0
        %v8342 = vadd.f32 %v7572, %v8341
        %v8343 = vpop.f32.mrb[0].mxu0
        %v8344 = vadd.f32 %v7568, %v8343
        %v8345 = vpop.f32.mrb[0].mxu0
        %v8346 = vadd.f32 %v7572, %v8345
        %8347 = vmatprep.mubr.bf16.mxu0 %v7434
        %8348 = vmatmul.mubr.bf16.gmra.mrb[0].mxu0 %v7433
        %v8349 = vpop.f32.mrb[0].mxu0
        %v8350 = vadd.f32 %v7568, %v8349
        %v8351 = vpop.f32.mrb[0].mxu0
        %v8352 = vadd.f32 %v7572, %v8351
        %v8353 = vpop.f32.mrb[0].mxu0
        %v8354 = vadd.f32 %v7568, %v8353
        %v8355 = vpop.f32.mrb[0].mxu0
        %v8356 = vadd.f32 %v7572, %v8355
        %8357 = vdwg.mxu0
        %8358 = vmatprep.subr.bf16.mxu0 %v7992
        %8359 = vmatpush1.bf16.msra.mxu0 %v7991
        %8360 = vmatprep.subr.bf16.mxu0 %v8000
        %8361 = vmatpush1.bf16.msra.mxu0 %v7999
        %8362 = vmatprep.subr.bf16.mxu0 %v8008
        %8363 = vmatpush1.bf16.msra.mxu0 %v8007
        %8364 = vmatprep.subr.bf16.mxu0 %v8016
        %8365 = vmatpush1.bf16.msra.mxu0 %v8015
        %8366 = vmatprep.subr.bf16.mxu0 %v8024
        %8367 = vmatpush1.bf16.msra.mxu0 %v8023
        %8368 = vmatprep.subr.bf16.mxu0 %v8032
        %8369 = vmatpush1.bf16.msra.mxu0 %v8031
        %8370 = vmatprep.subr.bf16.mxu0 %v8040
        %8371 = vmatpush1.bf16.msra.mxu0 %v8039
        %8372 = vmatprep.subr.bf16.mxu0 %v8048
        %8373 = vmatpush1.bf16.msra.mxu0 %v8047
        %8374 = vmatprep.subr.bf16.mxu0 %v8056
        %8375 = vmatpush1.bf16.msra.mxu0 %v8055
        %8376 = vmatprep.subr.bf16.mxu0 %v8064
        %8377 = vmatpush1.bf16.msra.mxu0 %v8063
        %8378 = vmatprep.subr.bf16.mxu0 %v8072
        %8379 = vmatpush1.bf16.msra.mxu0 %v8071
        %8380 = vmatprep.subr.bf16.mxu0 %v8080
        %8381 = vmatpush1.bf16.msra.mxu0 %v8079
        %8382 = vmatprep.subr.bf16.mxu0 %v8088
        %8383 = vmatpush1.bf16.msra.mxu0 %v8087
        %8384 = vmatprep.subr.bf16.mxu0 %v8096
        %8385 = vmatpush1.bf16.msra.mxu0 %v8095
        %8386 = vmatprep.subr.bf16.mxu0 %v8104
        %8387 = vmatpush1.bf16.msra.mxu0 %v8103
        %8388 = vmatprep.subr.bf16.mxu0 %v8112
        %8389 = vmatpush1.bf16.msra.mxu0 %v8111
        %8390 = vmatprep.mubr.bf16.mxu0 %v7420
        %8391 = vmatmul.mubr.bf16.gmra.mrb[0].mxu0 %v7419
        %v8392 = vpop.f32.mrb[0].mxu0
        %v8393 = vadd.f32 %v7576, %v8392
        %v8394 = vpop.f32.mrb[0].mxu0
        %v8395 = vadd.f32 %v7580, %v8394
        %v8396 = vpop.f32.mrb[0].mxu0
        %v8397 = vadd.f32 %v7576, %v8396
        %v8398 = vpop.f32.mrb[0].mxu0
        %v8399 = vadd.f32 %v7580, %v8398
        %8400 = vmatprep.mubr.bf16.mxu0 %v7422
        %8401 = vmatmul.mubr.bf16.gmra.mrb[0].mxu0 %v7421
        %v8402 = vpop.f32.mrb[0].mxu0
        %v8403 = vadd.f32 %v7576, %v8402
        %v8404 = vpop.f32.mrb[0].mxu0
        %v8405 = vadd.f32 %v7580, %v8404
        %v8406 = vpop.f32.mrb[0].mxu0
        %v8407 = vadd.f32 %v7576, %v8406
        %v8408 = vpop.f32.mrb[0].mxu0
        %v8409 = vadd.f32 %v7580, %v8408
        %8410 = vmatprep.mubr.bf16.mxu0 %v7424
        %8411 = vmatmul.mubr.bf16.gmra.mrb[0].mxu0 %v7423
        %v8412 = vpop.f32.mrb[0].mxu0
        %v8413 = vadd.f32 %v7576, %v8412
        %v8414 = vpop.f32.mrb[0].mxu0
        %v8415 = vadd.f32 %v7580, %v8414
        %v8416 = vpop.f32.mrb[0].mxu0
        %v8417 = vadd.f32 %v7576, %v8416
        %v8418 = vpop.f32.mrb[0].mxu0
        %v8419 = vadd.f32 %v7580, %v8418
        %8420 = vmatprep.mubr.bf16.mxu0 %v7426
        %8421 = vmatmul.mubr.bf16.gmra.mrb[0].mxu0 %v7425
        %v8422 = vpop.f32.mrb[0].mxu0
        %v8423 = vadd.f32 %v7576, %v8422
        %v8424 = vpop.f32.mrb[0].mxu0
        %v8425 = vadd.f32 %v7580, %v8424
        %v8426 = vpop.f32.mrb[0].mxu0
        %v8427 = vadd.f32 %v7576, %v8426
        %v8428 = vpop.f32.mrb[0].mxu0
        %v8429 = vadd.f32 %v7580, %v8428
        %8430 = vmatprep.mubr.bf16.mxu0 %v7428
        %8431 = vmatmul.mubr.bf16.gmra.mrb[0].mxu0 %v7427
        %v8432 = vpop.f32.mrb[0].mxu0
        %v8433 = vadd.f32 %v7576, %v8432
        %v8434 = vpop.f32.mrb[0].mxu0
        %v8435 = vadd.f32 %v7580, %v8434
        %v8436 = vpop.f32.mrb[0].mxu0
        %v8437 = vadd.f32 %v7576, %v8436
        %v8438 = vpop.f32.mrb[0].mxu0
        %v8439 = vadd.f32 %v7580, %v8438
        %8440 = vmatprep.mubr.bf16.mxu0 %v7430
        %8441 = vmatmul.mubr.bf16.gmra.mrb[0].mxu0 %v7429
        %v8442 = vpop.f32.mrb[0].mxu0
        %v8443 = vadd.f32 %v7576, %v8442
        %v8444 = vpop.f32.mrb[0].mxu0
        %v8445 = vadd.f32 %v7580, %v8444
        %v8446 = vpop.f32.mrb[0].mxu0
        %v8447 = vadd.f32 %v7576, %v8446
        %v8448 = vpop.f32.mrb[0].mxu0
        %v8449 = vadd.f32 %v7580, %v8448
        %8450 = vmatprep.mubr.bf16.mxu0 %v7432
        %8451 = vmatmul.mubr.bf16.gmra.mrb[0].mxu0 %v7431
        %v8452 = vpop.f32.mrb[0].mxu0
        %v8453 = vadd.f32 %v7576, %v8452
        %v8454 = vpop.f32.mrb[0].mxu0
        %v8455 = vadd.f32 %v7580, %v8454
        %v8456 = vpop.f32.mrb[0].mxu0
        %v8457 = vadd.f32 %v7576, %v8456
        %v8458 = vpop.f32.mrb[0].mxu0
        %v8459 = vadd.f32 %v7580, %v8458
        %8460 = vmatprep.mubr.bf16.mxu0 %v7434
        %8461 = vmatmul.mubr.bf16.gmra.mrb[0].mxu0 %v7433
        %v8462 = vpop.f32.mrb[0].mxu0
        %v8463 = vadd.f32 %v7576, %v8462
        %v8464 = vpop.f32.mrb[0].mxu0
        %v8465 = vadd.f32 %v7580, %v8464
        %v8466 = vpop.f32.mrb[0].mxu0
        %v8467 = vadd.f32 %v7576, %v8466
        %v8468 = vpop.f32.mrb[0].mxu0
        %v8469 = vadd.f32 %v7580, %v8468
        %8470 = vdwg.mxu0
        %8471 = vmatprep.subr.bf16.mxu0 %v7994
        %8472 = vmatpush1.bf16.msra.mxu0 %v7993
        %8473 = vmatprep.subr.bf16.mxu0 %v8002
        %8474 = vmatpush1.bf16.msra.mxu0 %v8001
        %8475 = vmatprep.subr.bf16.mxu0 %v8010
        %8476 = vmatpush1.bf16.msra.mxu0 %v8009
        %8477 = vmatprep.subr.bf16.mxu0 %v8018
        %8478 = vmatpush1.bf16.msra.mxu0 %v8017
        %8479 = vmatprep.subr.bf16.mxu0 %v8026
        %8480 = vmatpush1.bf16.msra.mxu0 %v8025
        %8481 = vmatprep.subr.bf16.mxu0 %v8034
        %8482 = vmatpush1.bf16.msra.mxu0 %v8033
        %8483 = vmatprep.subr.bf16.mxu0 %v8042
        %8484 = vmatpush1.bf16.msra.mxu0 %v8041
        %8485 = vmatprep.subr.bf16.mxu0 %v8050
        %8486 = vmatpush1.bf16.msra.mxu0 %v8049
        %8487 = vmatprep.subr.bf16.mxu0 %v8058
        %8488 = vmatpush1.bf16.msra.mxu0 %v8057
        %8489 = vmatprep.subr.bf16.mxu0 %v8066
        %8490 = vmatpush1.bf16.msra.mxu0 %v8065
        %8491 = vmatprep.subr.bf16.mxu0 %v8074
        %8492 = vmatpush1.bf16.msra.mxu0 %v8073
        %8493 = vmatprep.subr.bf16.mxu0 %v8082
        %8494 = vmatpush1.bf16.msra.mxu0 %v8081
        %8495 = vmatprep.subr.bf16.mxu0 %v8090
        %8496 = vmatpush1.bf16.msra.mxu0 %v8089
        %8497 = vmatprep.subr.bf16.mxu0 %v8098
        %8498 = vmatpush1.bf16.msra.mxu0 %v8097
        %8499 = vmatprep.subr.bf16.mxu0 %v8106
        %8500 = vmatpush1.bf16.msra.mxu0 %v8105
        %8501 = vmatprep.subr.bf16.mxu0 %v8114
        %8502 = vmatpush1.bf16.msra.mxu0 %v8113
        %8503 = vmatprep.mubr.bf16.mxu0 %v7420
        %8504 = vmatmul.mubr.bf16.gmra.mrb[0].mxu0 %v7419
        %v8505 = vpop.f32.mrb[0].mxu0
        %v8506 = vadd.f32 %v7584, %v8505
        %v8507 = vpop.f32.mrb[0].mxu0
        %v8508 = vadd.f32 %v7588, %v8507
        %v8509 = vpop.f32.mrb[0].mxu0
        %v8510 = vadd.f32 %v7584, %v8509
        %v8511 = vpop.f32.mrb[0].mxu0
        %v8512 = vadd.f32 %v7588, %v8511
        %8513 = vmatprep.mubr.bf16.mxu0 %v7422
        %8514 = vmatmul.mubr.bf16.gmra.mrb[0].mxu0 %v7421
        %v8515 = vpop.f32.mrb[0].mxu0
        %v8516 = vadd.f32 %v7584, %v8515
        %v8517 = vpop.f32.mrb[0].mxu0
        %v8518 = vadd.f32 %v7588, %v8517
        %v8519 = vpop.f32.mrb[0].mxu0
        %v8520 = vadd.f32 %v7584, %v8519
        %v8521 = vpop.f32.mrb[0].mxu0
        %v8522 = vadd.f32 %v7588, %v8521
        %8523 = vmatprep.mubr.bf16.mxu0 %v7424
        %8524 = vmatmul.mubr.bf16.gmra.mrb[0].mxu0 %v7423
        %v8525 = vpop.f32.mrb[0].mxu0
        %v8526 = vadd.f32 %v7584, %v8525
        %v8527 = vpop.f32.mrb[0].mxu0
        %v8528 = vadd.f32 %v7588, %v8527
        %v8529 = vpop.f32.mrb[0].mxu0
        %v8530 = vadd.f32 %v7584, %v8529
        %v8531 = vpop.f32.mrb[0].mxu0
        %v8532 = vadd.f32 %v7588, %v8531
        %8533 = vmatprep.mubr.bf16.mxu0 %v7426
        %8534 = vmatmul.mubr.bf16.gmra.mrb[0].mxu0 %v7425
        %v8535 = vpop.f32.mrb[0].mxu0
        %v8536 = vadd.f32 %v7584, %v8535
        %v8537 = vpop.f32.mrb[0].mxu0
        %v8538 = vadd.f32 %v7588, %v8537
        %v8539 = vpop.f32.mrb[0].mxu0
        %v8540 = vadd.f32 %v7584, %v8539
        %v8541 = vpop.f32.mrb[0].mxu0
        %v8542 = vadd.f32 %v7588, %v8541
        %8543 = vmatprep.mubr.bf16.mxu0 %v7428
        %8544 = vmatmul.mubr.bf16.gmra.mrb[0].mxu0 %v7427
        %v8545 = vpop.f32.mrb[0].mxu0
        %v8546 = vadd.f32 %v7584, %v8545
        %v8547 = vpop.f32.mrb[0].mxu0
        %v8548 = vadd.f32 %v7588, %v8547
        %v8549 = vpop.f32.mrb[0].mxu0
        %v8550 = vadd.f32 %v7584, %v8549
        %v8551 = vpop.f32.mrb[0].mxu0
        %v8552 = vadd.f32 %v7588, %v8551
        %8553 = vmatprep.mubr.bf16.mxu0 %v7430
        %8554 = vmatmul.mubr.bf16.gmra.mrb[0].mxu0 %v7429
        %v8555 = vpop.f32.mrb[0].mxu0
        %v8556 = vadd.f32 %v7584, %v8555
        %v8557 = vpop.f32.mrb[0].mxu0
        %v8558 = vadd.f32 %v7588, %v8557
        %v8559 = vpop.f32.mrb[0].mxu0
        %v8560 = vadd.f32 %v7584, %v8559
        %v8561 = vpop.f32.mrb[0].mxu0
        %v8562 = vadd.f32 %v7588, %v8561
        %8563 = vmatprep.mubr.bf16.mxu0 %v7432
        %8564 = vmatmul.mubr.bf16.gmra.mrb[0].mxu0 %v7431
        %v8565 = vpop.f32.mrb[0].mxu0
        %v8566 = vadd.f32 %v7584, %v8565
        %v8567 = vpop.f32.mrb[0].mxu0
        %v8568 = vadd.f32 %v7588, %v8567
        %v8569 = vpop.f32.mrb[0].mxu0
        %v8570 = vadd.f32 %v7584, %v8569
        %v8571 = vpop.f32.mrb[0].mxu0
        %v8572 = vadd.f32 %v7588, %v8571
        %8573 = vmatprep.mubr.bf16.mxu0 %v7434
        %8574 = vmatmul.mubr.bf16.gmra.mrb[0].mxu0 %v7433
        %v8575 = vpop.f32.mrb[0].mxu0
        %v8576 = vadd.f32 %v7584, %v8575
        %v8577 = vpop.f32.mrb[0].mxu0
        %v8578 = vadd.f32 %v7588, %v8577
        %v8579 = vpop.f32.mrb[0].mxu0
        %v8580 = vadd.f32 %v7584, %v8579
        %v8581 = vpop.f32.mrb[0].mxu0
        %v8582 = vadd.f32 %v7588, %v8581
        %8583 = vdwg.mxu0
        %8584 = vmatprep.subr.bf16.mxu0 %v7996
        %8585 = vmatpush1.bf16.msra.mxu0 %v7995
        %8586 = vmatprep.subr.bf16.mxu0 %v8004
        %8587 = vmatpush1.bf16.msra.mxu0 %v8003
        %8588 = vmatprep.subr.bf16.mxu0 %v8012
        %8589 = vmatpush1.bf16.msra.mxu0 %v8011
        %8590 = vmatprep.subr.bf16.mxu0 %v8020
        %8591 = vmatpush1.bf16.msra.mxu0 %v8019
        %8592 = vmatprep.subr.bf16.mxu0 %v8028
        %8593 = vmatpush1.bf16.msra.mxu0 %v8027
        %8594 = vmatprep.subr.bf16.mxu0 %v8036
        %8595 = vmatpush1.bf16.msra.mxu0 %v8035
        %8596 = vmatprep.subr.bf16.mxu0 %v8044
        %8597 = vmatpush1.bf16.msra.mxu0 %v8043
        %8598 = vmatprep.subr.bf16.mxu0 %v8052
        %8599 = vmatpush1.bf16.msra.mxu0 %v8051
        %8600 = vmatprep.subr.bf16.mxu0 %v8060
        %8601 = vmatpush1.bf16.msra.mxu0 %v8059
        %8602 = vmatprep.subr.bf16.mxu0 %v8068
        %8603 = vmatpush1.bf16.msra.mxu0 %v8067
        %8604 = vmatprep.subr.bf16.mxu0 %v8076
        %8605 = vmatpush1.bf16.msra.mxu0 %v8075
        %8606 = vmatprep.subr.bf16.mxu0 %v8084
        %8607 = vmatpush1.bf16.msra.mxu0 %v8083
        %8608 = vmatprep.subr.bf16.mxu0 %v8092
        %8609 = vmatpush1.bf16.msra.mxu0 %v8091
        %8610 = vmatprep.subr.bf16.mxu0 %v8100
        %8611 = vmatpush1.bf16.msra.mxu0 %v8099
        %8612 = vmatprep.subr.bf16.mxu0 %v8108
        %8613 = vmatpush1.bf16.msra.mxu0 %v8107
        %8614 = vmatprep.subr.bf16.mxu0 %v8116
        %8615 = vmatpush1.bf16.msra.mxu0 %v8115
        %8616 = vmatprep.mubr.bf16.mxu0 %v7420
        %8617 = vmatmul.mubr.bf16.gmra.mrb[0].mxu0 %v7419
        %v8618 = vpop.f32.mrb[0].mxu0
        %v8619 = vadd.f32 %v7592, %v8618
        %v8620 = vpop.f32.mrb[0].mxu0
        %v8621 = vadd.f32 %v7596, %v8620
        %v8622 = vpop.f32.mrb[0].mxu0
        %v8623 = vadd.f32 %v7592, %v8622
        %v8624 = vpop.f32.mrb[0].mxu0
        %v8625 = vadd.f32 %v7596, %v8624
        %8626 = vmatprep.mubr.bf16.mxu0 %v7422
        %8627 = vmatmul.mubr.bf16.gmra.mrb[0].mxu0 %v7421
        %v8628 = vpop.f32.mrb[0].mxu0
        %v8629 = vadd.f32 %v7592, %v8628
        %v8630 = vpop.f32.mrb[0].mxu0
        %v8631 = vadd.f32 %v7596, %v8630
        %v8632 = vpop.f32.mrb[0].mxu0
        %v8633 = vadd.f32 %v7592, %v8632
        %v8634 = vpop.f32.mrb[0].mxu0
        %v8635 = vadd.f32 %v7596, %v8634
        %8636 = vmatprep.mubr.bf16.mxu0 %v7424
        %8637 = vmatmul.mubr.bf16.gmra.mrb[0].mxu0 %v7423
        %v8638 = vpop.f32.mrb[0].mxu0
        %v8639 = vadd.f32 %v7592, %v8638
        %v8640 = vpop.f32.mrb[0].mxu0
        %v8641 = vadd.f32 %v7596, %v8640
        %v8642 = vpop.f32.mrb[0].mxu0
        %v8643 = vadd.f32 %v7592, %v8642
        %v8644 = vpop.f32.mrb[0].mxu0
        %v8645 = vadd.f32 %v7596, %v8644
        %8646 = vmatprep.mubr.bf16.mxu0 %v7426
        %8647 = vmatmul.mubr.bf16.gmra.mrb[0].mxu0 %v7425
        %v8648 = vpop.f32.mrb[0].mxu0
        %v8649 = vadd.f32 %v7592, %v8648
        %v8650 = vpop.f32.mrb[0].mxu0
        %v8651 = vadd.f32 %v7596, %v8650
        %v8652 = vpop.f32.mrb[0].mxu0
        %v8653 = vadd.f32 %v7592, %v8652
        %v8654 = vpop.f32.mrb[0].mxu0
        %v8655 = vadd.f32 %v7596, %v8654
        %8656 = vmatprep.mubr.bf16.mxu0 %v7428
        %8657 = vmatmul.mubr.bf16.gmra.mrb[0].mxu0 %v7427
        %v8658 = vpop.f32.mrb[0].mxu0
        %v8659 = vadd.f32 %v7592, %v8658
        %v8660 = vpop.f32.mrb[0].mxu0
        %v8661 = vadd.f32 %v7596, %v8660
        %v8662 = vpop.f32.mrb[0].mxu0
        %v8663 = vadd.f32 %v7592, %v8662
        %v8664 = vpop.f32.mrb[0].mxu0
        %v8665 = vadd.f32 %v7596, %v8664
        %8666 = vmatprep.mubr.bf16.mxu0 %v7430
        %8667 = vmatmul.mubr.bf16.gmra.mrb[0].mxu0 %v7429
        %v8668 = vpop.f32.mrb[0].mxu0
        %v8669 = vadd.f32 %v7592, %v8668
        %v8670 = vpop.f32.mrb[0].mxu0
        %v8671 = vadd.f32 %v7596, %v8670
        %v8672 = vpop.f32.mrb[0].mxu0
        %v8673 = vadd.f32 %v7592, %v8672
        %v8674 = vpop.f32.mrb[0].mxu0
        %v8675 = vadd.f32 %v7596, %v8674
        %8676 = vmatprep.mubr.bf16.mxu0 %v7432
        %8677 = vmatmul.mubr.bf16.gmra.mrb[0].mxu0 %v7431
        %v8678 = vpop.f32.mrb[0].mxu0
        %v8679 = vadd.f32 %v7592, %v8678
        %v8680 = vpop.f32.mrb[0].mxu0
        %v8681 = vadd.f32 %v7596, %v8680
        %v8682 = vpop.f32.mrb[0].mxu0
        %v8683 = vadd.f32 %v7592, %v8682
        %v8684 = vpop.f32.mrb[0].mxu0
        %v8685 = vadd.f32 %v7596, %v8684
        %8686 = vmatprep.mubr.bf16.mxu0 %v7434
        %8687 = vmatmul.mubr.bf16.gmra.mrb[0].mxu0 %v7433
        %v8688 = vpop.f32.mrb[0].mxu0
        %v8689 = vadd.f32 %v7592, %v8688
        %v8690 = vpop.f32.mrb[0].mxu0
        %v8691 = vadd.f32 %v7596, %v8690
        %v8692 = vpop.f32.mrb[0].mxu0
        %v8693 = vadd.f32 %v7592, %v8692
        %v8694 = vpop.f32.mrb[0].mxu0
        %v8695 = vadd.f32 %v7596, %v8694
        %8696 = vdwg.mxu0
        %v8697 = vmul.f32 %v8280, 0.5
        %v8698 = vmul.f32 %v8282, 0.5
        %v8699 = vmul.f32 %v8393, 0.5
        %v8700 = vmul.f32 %v8395, 0.5
        %v8701 = vmul.f32 %v8506, 0.5
        %v8702 = vmul.f32 %v8508, 0.5
        %v8703 = vmul.f32 %v8619, 0.5
        %v8704 = vmul.f32 %v8621, 0.5
        %v8705 = vmul.f32 %v8284, 0.5
        %v8706 = vmul.f32 %v8286, 0.5
        %v8707 = vmul.f32 %v8397, 0.5
        %v8708 = vmul.f32 %v8399, 0.5
        %v8709 = vmul.f32 %v8510, 0.5
        %v8710 = vmul.f32 %v8512, 0.5
        %v8711 = vmul.f32 %v8623, 0.5
        %v8712 = vmul.f32 %v8625, 0.5
        %v8713 = vmul.f32 %v8290, 0.5
        %v8714 = vmul.f32 %v8292, 0.5
        %v8715 = vmul.f32 %v8403, 0.5
        %v8716 = vmul.f32 %v8405, 0.5
        %v8717 = vmul.f32 %v8516, 0.5
        %v8718 = vmul.f32 %v8518, 0.5
        %v8719 = vmul.f32 %v8629, 0.5
        %v8720 = vmul.f32 %v8631, 0.5
        %v8721 = vmul.f32 %v8294, 0.5
        %v8722 = vmul.f32 %v8296, 0.5
        %v8723 = vmul.f32 %v8407, 0.5
        %v8724 = vmul.f32 %v8409, 0.5
        %v8725 = vmul.f32 %v8520, 0.5
        %v8726 = vmul.f32 %v8522, 0.5
        %v8727 = vmul.f32 %v8633, 0.5
        %v8728 = vmul.f32 %v8635, 0.5
        %v8729 = vmul.f32 %v8300, 0.5
        %v8730 = vmul.f32 %v8302, 0.5
        %v8731 = vmul.f32 %v8413, 0.5
        %v8732 = vmul.f32 %v8415, 0.5
        %v8733 = vmul.f32 %v8526, 0.5
        %v8734 = vmul.f32 %v8528, 0.5
        %v8735 = vmul.f32 %v8639, 0.5
        %v8736 = vmul.f32 %v8641, 0.5
        %v8737 = vmul.f32 %v8304, 0.5
        %v8738 = vmul.f32 %v8306, 0.5
        %v8739 = vmul.f32 %v8417, 0.5
        %v8740 = vmul.f32 %v8419, 0.5
        %v8741 = vmul.f32 %v8530, 0.5
        %v8742 = vmul.f32 %v8532, 0.5
        %v8743 = vmul.f32 %v8643, 0.5
        %v8744 = vmul.f32 %v8645, 0.5
        %v8745 = vmul.f32 %v8310, 0.5
        %v8746 = vmul.f32 %v8312, 0.5
        %v8747 = vmul.f32 %v8423, 0.5
        %v8748 = vmul.f32 %v8425, 0.5
        %v8749 = vmul.f32 %v8536, 0.5
        %v8750 = vmul.f32 %v8538, 0.5
        %v8751 = vmul.f32 %v8649, 0.5
        %v8752 = vmul.f32 %v8651, 0.5
        %v8753 = vmul.f32 %v8314, 0.5
        %v8754 = vmul.f32 %v8316, 0.5
        %v8755 = vmul.f32 %v8427, 0.5
        %v8756 = vmul.f32 %v8429, 0.5
        %v8757 = vmul.f32 %v8540, 0.5
        %v8758 = vmul.f32 %v8542, 0.5
        %v8759 = vmul.f32 %v8653, 0.5
        %v8760 = vmul.f32 %v8655, 0.5
        %v8761 = vmul.f32 %v8320, 0.5
        %v8762 = vmul.f32 %v8322, 0.5
        %v8763 = vmul.f32 %v8433, 0.5
        %v8764 = vmul.f32 %v8435, 0.5
        %v8765 = vmul.f32 %v8546, 0.5
        %v8766 = vmul.f32 %v8548, 0.5
        %v8767 = vmul.f32 %v8659, 0.5
        %v8768 = vmul.f32 %v8661, 0.5
        %v8769 = vmul.f32 %v8324, 0.5
        %v8770 = vmul.f32 %v8326, 0.5
        %v8771 = vmul.f32 %v8437, 0.5
        %v8772 = vmul.f32 %v8439, 0.5
        %v8773 = vmul.f32 %v8550, 0.5
        %v8774 = vmul.f32 %v8552, 0.5
        %v8775 = vmul.f32 %v8663, 0.5
        %v8776 = vmul.f32 %v8665, 0.5
        %v8777 = vmul.f32 %v8330, 0.5
        %v8778 = vmul.f32 %v8332, 0.5
        %v8779 = vmul.f32 %v8443, 0.5
        %v8780 = vmul.f32 %v8445, 0.5
        %v8781 = vmul.f32 %v8556, 0.5
        %v8782 = vmul.f32 %v8558, 0.5
        %v8783 = vmul.f32 %v8669, 0.5
        %v8784 = vmul.f32 %v8671, 0.5
        %v8785 = vmul.f32 %v8334, 0.5
        %v8786 = vmul.f32 %v8336, 0.5
        %v8787 = vmul.f32 %v8447, 0.5
        %v8788 = vmul.f32 %v8449, 0.5
        %v8789 = vmul.f32 %v8560, 0.5
        %v8790 = vmul.f32 %v8562, 0.5
        %v8791 = vmul.f32 %v8673, 0.5
        %v8792 = vmul.f32 %v8675, 0.5
        %v8793 = vmul.f32 %v8340, 0.5
        %v8794 = vmul.f32 %v8342, 0.5
        %v8795 = vmul.f32 %v8453, 0.5
        %v8796 = vmul.f32 %v8455, 0.5
        %v8797 = vmul.f32 %v8566, 0.5
        %v8798 = vmul.f32 %v8568, 0.5
        %v8799 = vmul.f32 %v8679, 0.5
        %v8800 = vmul.f32 %v8681, 0.5
        %v8801 = vmul.f32 %v8344, 0.5
        %v8802 = vmul.f32 %v8346, 0.5
        %v8803 = vmul.f32 %v8457, 0.5
        %v8804 = vmul.f32 %v8459, 0.5
        %v8805 = vmul.f32 %v8570, 0.5
        %v8806 = vmul.f32 %v8572, 0.5
        %v8807 = vmul.f32 %v8683, 0.5
        %v8808 = vmul.f32 %v8685, 0.5
        %v8809 = vmul.f32 %v8350, 0.5
        %v8810 = vmul.f32 %v8352, 0.5
        %v8811 = vmul.f32 %v8463, 0.5
        %v8812 = vmul.f32 %v8465, 0.5
        %v8813 = vmul.f32 %v8576, 0.5
        %v8814 = vmul.f32 %v8578, 0.5
        %v8815 = vmul.f32 %v8689, 0.5
        %v8816 = vmul.f32 %v8691, 0.5
        %v8817 = vmul.f32 %v8354, 0.5
        %v8818 = vmul.f32 %v8356, 0.5
        %v8819 = vmul.f32 %v8467, 0.5
        %v8820 = vmul.f32 %v8469, 0.5
        %v8821 = vmul.f32 %v8580, 0.5
        %v8822 = vmul.f32 %v8582, 0.5
        %v8823 = vmul.f32 %v8693, 0.5
        %v8824 = vmul.f32 %v8695, 0.5
        %v8825 = vmul.f32 %v8280, 0.044715
        %v8826 = vmul.f32 %v8282, 0.044715
        %v8827 = vmul.f32 %v8393, 0.044715
        %v8828 = vmul.f32 %v8395, 0.044715
        %v8829 = vmul.f32 %v8506, 0.044715
        %v8830 = vmul.f32 %v8508, 0.044715
        %v8831 = vmul.f32 %v8619, 0.044715
        %v8832 = vmul.f32 %v8621, 0.044715
        %v8833 = vmul.f32 %v8284, 0.044715
        %v8834 = vmul.f32 %v8286, 0.044715
        %v8835 = vmul.f32 %v8397, 0.044715
        %v8836 = vmul.f32 %v8399, 0.044715
        %v8837 = vmul.f32 %v8510, 0.044715
        %v8838 = vmul.f32 %v8512, 0.044715
        %v8839 = vmul.f32 %v8623, 0.044715
        %v8840 = vmul.f32 %v8625, 0.044715
        %v8841 = vmul.f32 %v8290, 0.044715
        %v8842 = vmul.f32 %v8292, 0.044715
        %v8843 = vmul.f32 %v8403, 0.044715
        %v8844 = vmul.f32 %v8405, 0.044715
        %v8845 = vmul.f32 %v8516, 0.044715
        %v8846 = vmul.f32 %v8518, 0.044715
        %v8847 = vmul.f32 %v8629, 0.044715
        %v8848 = vmul.f32 %v8631, 0.044715
        %v8849 = vmul.f32 %v8294, 0.044715
        %v8850 = vmul.f32 %v8296, 0.044715
        %v8851 = vmul.f32 %v8407, 0.044715
        %v8852 = vmul.f32 %v8409, 0.044715
        %v8853 = vmul.f32 %v8520, 0.044715
        %v8854 = vmul.f32 %v8522, 0.044715
        %v8855 = vmul.f32 %v8633, 0.044715
        %v8856 = vmul.f32 %v8635, 0.044715
        %v8857 = vmul.f32 %v8300, 0.044715
        %v8858 = vmul.f32 %v8302, 0.044715
        %v8859 = vmul.f32 %v8413, 0.044715
        %v8860 = vmul.f32 %v8415, 0.044715
        %v8861 = vmul.f32 %v8526, 0.044715
        %v8862 = vmul.f32 %v8528, 0.044715
        %v8863 = vmul.f32 %v8639, 0.044715
        %v8864 = vmul.f32 %v8641, 0.044715
        %v8865 = vmul.f32 %v8304, 0.044715
        %v8866 = vmul.f32 %v8306, 0.044715
        %v8867 = vmul.f32 %v8417, 0.044715
        %v8868 = vmul.f32 %v8419, 0.044715
        %v8869 = vmul.f32 %v8530, 0.044715
        %v8870 = vmul.f32 %v8532, 0.044715
        %v8871 = vmul.f32 %v8643, 0.044715
        %v8872 = vmul.f32 %v8645, 0.044715
        %v8873 = vmul.f32 %v8310, 0.044715
        %v8874 = vmul.f32 %v8312, 0.044715
        %v8875 = vmul.f32 %v8423, 0.044715
        %v8876 = vmul.f32 %v8425, 0.044715
        %v8877 = vmul.f32 %v8536, 0.044715
        %v8878 = vmul.f32 %v8538, 0.044715
        %v8879 = vmul.f32 %v8649, 0.044715
        %v8880 = vmul.f32 %v8651, 0.044715
        %v8881 = vmul.f32 %v8314, 0.044715
        %v8882 = vmul.f32 %v8316, 0.044715
        %v8883 = vmul.f32 %v8427, 0.044715
        %v8884 = vmul.f32 %v8429, 0.044715
        %v8885 = vmul.f32 %v8540, 0.044715
        %v8886 = vmul.f32 %v8542, 0.044715
        %v8887 = vmul.f32 %v8653, 0.044715
        %v8888 = vmul.f32 %v8655, 0.044715
        %v8889 = vmul.f32 %v8320, 0.044715
        %v8890 = vmul.f32 %v8322, 0.044715
        %v8891 = vmul.f32 %v8433, 0.044715
        %v8892 = vmul.f32 %v8435, 0.044715
        %v8893 = vmul.f32 %v8546, 0.044715
        %v8894 = vmul.f32 %v8548, 0.044715
        %v8895 = vmul.f32 %v8659, 0.044715
        %v8896 = vmul.f32 %v8661, 0.044715
        %v8897 = vmul.f32 %v8324, 0.044715
        %v8898 = vmul.f32 %v8326, 0.044715
        %v8899 = vmul.f32 %v8437, 0.044715
        %v8900 = vmul.f32 %v8439, 0.044715
        %v8901 = vmul.f32 %v8550, 0.044715
        %v8902 = vmul.f32 %v8552, 0.044715
        %v8903 = vmul.f32 %v8663, 0.044715
        %v8904 = vmul.f32 %v8665, 0.044715
        %v8905 = vmul.f32 %v8330, 0.044715
        %v8906 = vmul.f32 %v8332, 0.044715
        %v8907 = vmul.f32 %v8443, 0.044715
        %v8908 = vmul.f32 %v8445, 0.044715
        %v8909 = vmul.f32 %v8556, 0.044715
        %v8910 = vmul.f32 %v8558, 0.044715
        %v8911 = vmul.f32 %v8669, 0.044715
        %v8912 = vmul.f32 %v8671, 0.044715
        %v8913 = vmul.f32 %v8334, 0.044715
        %v8914 = vmul.f32 %v8336, 0.044715
        %v8915 = vmul.f32 %v8447, 0.044715
        %v8916 = vmul.f32 %v8449, 0.044715
        %v8917 = vmul.f32 %v8560, 0.044715
        %v8918 = vmul.f32 %v8562, 0.044715
        %v8919 = vmul.f32 %v8673, 0.044715
        %v8920 = vmul.f32 %v8675, 0.044715
        %v8921 = vmul.f32 %v8340, 0.044715
        %v8922 = vmul.f32 %v8342, 0.044715
        %v8923 = vmul.f32 %v8453, 0.044715
        %v8924 = vmul.f32 %v8455, 0.044715
        %v8925 = vmul.f32 %v8566, 0.044715
        %v8926 = vmul.f32 %v8568, 0.044715
        %v8927 = vmul.f32 %v8679, 0.044715
        %v8928 = vmul.f32 %v8681, 0.044715
        %v8929 = vmul.f32 %v8344, 0.044715
        %v8930 = vmul.f32 %v8346, 0.044715
        %v8931 = vmul.f32 %v8457, 0.044715
        %v8932 = vmul.f32 %v8459, 0.044715
        %v8933 = vmul.f32 %v8570, 0.044715
        %v8934 = vmul.f32 %v8572, 0.044715
        %v8935 = vmul.f32 %v8683, 0.044715
        %v8936 = vmul.f32 %v8685, 0.044715
        %v8937 = vmul.f32 %v8350, 0.044715
        %v8938 = vmul.f32 %v8352, 0.044715
        %v8939 = vmul.f32 %v8463, 0.044715
        %v8940 = vmul.f32 %v8465, 0.044715
        %v8941 = vmul.f32 %v8576, 0.044715
        %v8942 = vmul.f32 %v8578, 0.044715
        %v8943 = vmul.f32 %v8689, 0.044715
        %v8944 = vmul.f32 %v8691, 0.044715
        %v8945 = vmul.f32 %v8354, 0.044715
        %v8946 = vmul.f32 %v8356, 0.044715
        %v8947 = vmul.f32 %v8467, 0.044715
        %v8948 = vmul.f32 %v8469, 0.044715
        %v8949 = vmul.f32 %v8580, 0.044715
        %v8950 = vmul.f32 %v8582, 0.044715
        %v8951 = vmul.f32 %v8693, 0.044715
        %v8952 = vmul.f32 %v8695, 0.044715
        %v8953 = vmul.f32 %v8825, %v8280
        %v8954 = vmul.f32 %v8826, %v8282
        %v8955 = vmul.f32 %v8827, %v8393
        %v8956 = vmul.f32 %v8828, %v8395
        %v8957 = vmul.f32 %v8829, %v8506
        %v8958 = vmul.f32 %v8830, %v8508
        %v8959 = vmul.f32 %v8831, %v8619
        %v8960 = vmul.f32 %v8832, %v8621
        %v8961 = vmul.f32 %v8833, %v8284
        %v8962 = vmul.f32 %v8834, %v8286
        %v8963 = vmul.f32 %v8835, %v8397
        %v8964 = vmul.f32 %v8836, %v8399
        %v8965 = vmul.f32 %v8837, %v8510
        %v8966 = vmul.f32 %v8838, %v8512
        %v8967 = vmul.f32 %v8839, %v8623
        %v8968 = vmul.f32 %v8840, %v8625
        %v8969 = vmul.f32 %v8841, %v8290
        %v8970 = vmul.f32 %v8842, %v8292
        %v8971 = vmul.f32 %v8843, %v8403
        %v8972 = vmul.f32 %v8844, %v8405
        %v8973 = vmul.f32 %v8845, %v8516
        %v8974 = vmul.f32 %v8846, %v8518
        %v8975 = vmul.f32 %v8847, %v8629
        %v8976 = vmul.f32 %v8848, %v8631
        %v8977 = vmul.f32 %v8849, %v8294
        %v8978 = vmul.f32 %v8850, %v8296
        %v8979 = vmul.f32 %v8851, %v8407
        %v8980 = vmul.f32 %v8852, %v8409
        %v8981 = vmul.f32 %v8853, %v8520
        %v8982 = vmul.f32 %v8854, %v8522
        %v8983 = vmul.f32 %v8855, %v8633
        %v8984 = vmul.f32 %v8856, %v8635
        %v8985 = vmul.f32 %v8857, %v8300
        %v8986 = vmul.f32 %v8858, %v8302
        %v8987 = vmul.f32 %v8859, %v8413
        %v8988 = vmul.f32 %v8860, %v8415
        %v8989 = vmul.f32 %v8861, %v8526
        %v8990 = vmul.f32 %v8862, %v8528
        %v8991 = vmul.f32 %v8863, %v8639
        %v8992 = vmul.f32 %v8864, %v8641
        %v8993 = vmul.f32 %v8865, %v8304
        %v8994 = vmul.f32 %v8866, %v8306
        %v8995 = vmul.f32 %v8867, %v8417
        %v8996 = vmul.f32 %v8868, %v8419
        %v8997 = vmul.f32 %v8869, %v8530
        %v8998 = vmul.f32 %v8870, %v8532
        %v8999 = vmul.f32 %v8871, %v8643
        %v9000 = vmul.f32 %v8872, %v8645
        %v9001 = vmul.f32 %v8873, %v8310
        %v9002 = vmul.f32 %v8874, %v8312
        %v9003 = vmul.f32 %v8875, %v8423
        %v9004 = vmul.f32 %v8876, %v8425
        %v9005 = vmul.f32 %v8877, %v8536
        %v9006 = vmul.f32 %v8878, %v8538
        %v9007 = vmul.f32 %v8879, %v8649
        %v9008 = vmul.f32 %v8880, %v8651
        %v9009 = vmul.f32 %v8881, %v8314
        %v9010 = vmul.f32 %v8882, %v8316
        %v9011 = vmul.f32 %v8883, %v8427
        %v9012 = vmul.f32 %v8884, %v8429
        %v9013 = vmul.f32 %v8885, %v8540
        %v9014 = vmul.f32 %v8886, %v8542
        %v9015 = vmul.f32 %v8887, %v8653
        %v9016 = vmul.f32 %v8888, %v8655
        %v9017 = vmul.f32 %v8889, %v8320
        %v9018 = vmul.f32 %v8890, %v8322
        %v9019 = vmul.f32 %v8891, %v8433
        %v9020 = vmul.f32 %v8892, %v8435
        %v9021 = vmul.f32 %v8893, %v8546
        %v9022 = vmul.f32 %v8894, %v8548
        %v9023 = vmul.f32 %v8895, %v8659
        %v9024 = vmul.f32 %v8896, %v8661
        %v9025 = vmul.f32 %v8897, %v8324
        %v9026 = vmul.f32 %v8898, %v8326
        %v9027 = vmul.f32 %v8899, %v8437
        %v9028 = vmul.f32 %v8900, %v8439
        %v9029 = vmul.f32 %v8901, %v8550
        %v9030 = vmul.f32 %v8902, %v8552
        %v9031 = vmul.f32 %v8903, %v8663
        %v9032 = vmul.f32 %v8904, %v8665
        %v9033 = vmul.f32 %v8905, %v8330
        %v9034 = vmul.f32 %v8906, %v8332
        %v9035 = vmul.f32 %v8907, %v8443
        %v9036 = vmul.f32 %v8908, %v8445
        %v9037 = vmul.f32 %v8909, %v8556
        %v9038 = vmul.f32 %v8910, %v8558
        %v9039 = vmul.f32 %v8911, %v8669
        %v9040 = vmul.f32 %v8912, %v8671
        %v9041 = vmul.f32 %v8913, %v8334
        %v9042 = vmul.f32 %v8914, %v8336
        %v9043 = vmul.f32 %v8915, %v8447
        %v9044 = vmul.f32 %v8916, %v8449
        %v9045 = vmul.f32 %v8917, %v8560
        %v9046 = vmul.f32 %v8918, %v8562
        %v9047 = vmul.f32 %v8919, %v8673
        %v9048 = vmul.f32 %v8920, %v8675
        %v9049 = vmul.f32 %v8921, %v8340
        %v9050 = vmul.f32 %v8922, %v8342
        %v9051 = vmul.f32 %v8923, %v8453
        %v9052 = vmul.f32 %v8924, %v8455
        %v9053 = vmul.f32 %v8925, %v8566
        %v9054 = vmul.f32 %v8926, %v8568
        %v9055 = vmul.f32 %v8927, %v8679
        %v9056 = vmul.f32 %v8928, %v8681
        %v9057 = vmul.f32 %v8929, %v8344
        %v9058 = vmul.f32 %v8930, %v8346
        %v9059 = vmul.f32 %v8931, %v8457
        %v9060 = vmul.f32 %v8932, %v8459
        %v9061 = vmul.f32 %v8933, %v8570
        %v9062 = vmul.f32 %v8934, %v8572
        %v9063 = vmul.f32 %v8935, %v8683
        %v9064 = vmul.f32 %v8936, %v8685
        %v9065 = vmul.f32 %v8937, %v8350
        %v9066 = vmul.f32 %v8938, %v8352
        %v9067 = vmul.f32 %v8939, %v8463
        %v9068 = vmul.f32 %v8940, %v8465
        %v9069 = vmul.f32 %v8941, %v8576
        %v9070 = vmul.f32 %v8942, %v8578
        %v9071 = vmul.f32 %v8943, %v8689
        %v9072 = vmul.f32 %v8944, %v8691
        %v9073 = vmul.f32 %v8945, %v8354
        %v9074 = vmul.f32 %v8946, %v8356
        %v9075 = vmul.f32 %v8947, %v8467
        %v9076 = vmul.f32 %v8948, %v8469
        %v9077 = vmul.f32 %v8949, %v8580
        %v9078 = vmul.f32 %v8950, %v8582
        %v9079 = vmul.f32 %v8951, %v8693
        %v9080 = vmul.f32 %v8952, %v8695
        %v9081 = vmul.f32 %v8953, %v8280
        %v9082 = vmul.f32 %v8954, %v8282
        %v9083 = vmul.f32 %v8955, %v8393
        %v9084 = vmul.f32 %v8956, %v8395
        %v9085 = vmul.f32 %v8957, %v8506
        %v9086 = vmul.f32 %v8958, %v8508
        %v9087 = vmul.f32 %v8959, %v8619
        %v9088 = vmul.f32 %v8960, %v8621
        %v9089 = vmul.f32 %v8961, %v8284
        %v9090 = vmul.f32 %v8962, %v8286
        %v9091 = vmul.f32 %v8963, %v8397
        %v9092 = vmul.f32 %v8964, %v8399
        %v9093 = vmul.f32 %v8965, %v8510
        %v9094 = vmul.f32 %v8966, %v8512
        %v9095 = vmul.f32 %v8967, %v8623
        %v9096 = vmul.f32 %v8968, %v8625
        %v9097 = vmul.f32 %v8969, %v8290
        %v9098 = vmul.f32 %v8970, %v8292
        %v9099 = vmul.f32 %v8971, %v8403
        %v9100 = vmul.f32 %v8972, %v8405
        %v9101 = vmul.f32 %v8973, %v8516
        %v9102 = vmul.f32 %v8974, %v8518
        %v9103 = vmul.f32 %v8975, %v8629
        %v9104 = vmul.f32 %v8976, %v8631
        %v9105 = vmul.f32 %v8977, %v8294
        %v9106 = vmul.f32 %v8978, %v8296
        %v9107 = vmul.f32 %v8979, %v8407
        %v9108 = vmul.f32 %v8980, %v8409
        %v9109 = vmul.f32 %v8981, %v8520
        %v9110 = vmul.f32 %v8982, %v8522
        %v9111 = vmul.f32 %v8983, %v8633
        %v9112 = vmul.f32 %v8984, %v8635
        %v9113 = vmul.f32 %v8985, %v8300
        %v9114 = vmul.f32 %v8986, %v8302
        %v9115 = vmul.f32 %v8987, %v8413
        %v9116 = vmul.f32 %v8988, %v8415
        %v9117 = vmul.f32 %v8989, %v8526
        %v9118 = vmul.f32 %v8990, %v8528
        %v9119 = vmul.f32 %v8991, %v8639
        %v9120 = vmul.f32 %v8992, %v8641
        %v9121 = vmul.f32 %v8993, %v8304
        %v9122 = vmul.f32 %v8994, %v8306
        %v9123 = vmul.f32 %v8995, %v8417
        %v9124 = vmul.f32 %v8996, %v8419
        %v9125 = vmul.f32 %v8997, %v8530
        %v9126 = vmul.f32 %v8998, %v8532
        %v9127 = vmul.f32 %v8999, %v8643
        %v9128 = vmul.f32 %v9000, %v8645
        %v9129 = vmul.f32 %v9001, %v8310
        %v9130 = vmul.f32 %v9002, %v8312
        %v9131 = vmul.f32 %v9003, %v8423
        %v9132 = vmul.f32 %v9004, %v8425
        %v9133 = vmul.f32 %v9005, %v8536
        %v9134 = vmul.f32 %v9006, %v8538
        %v9135 = vmul.f32 %v9007, %v8649
        %v9136 = vmul.f32 %v9008, %v8651
        %v9137 = vmul.f32 %v9009, %v8314
        %v9138 = vmul.f32 %v9010, %v8316
        %v9139 = vmul.f32 %v9011, %v8427
        %v9140 = vmul.f32 %v9012, %v8429
        %v9141 = vmul.f32 %v9013, %v8540
        %v9142 = vmul.f32 %v9014, %v8542
        %v9143 = vmul.f32 %v9015, %v8653
        %v9144 = vmul.f32 %v9016, %v8655
        %v9145 = vmul.f32 %v9017, %v8320
        %v9146 = vmul.f32 %v9018, %v8322
        %v9147 = vmul.f32 %v9019, %v8433
        %v9148 = vmul.f32 %v9020, %v8435
        %v9149 = vmul.f32 %v9021, %v8546
        %v9150 = vmul.f32 %v9022, %v8548
        %v9151 = vmul.f32 %v9023, %v8659
        %v9152 = vmul.f32 %v9024, %v8661
        %v9153 = vmul.f32 %v9025, %v8324
        %v9154 = vmul.f32 %v9026, %v8326
        %v9155 = vmul.f32 %v9027, %v8437
        %v9156 = vmul.f32 %v9028, %v8439
        %v9157 = vmul.f32 %v9029, %v8550
        %v9158 = vmul.f32 %v9030, %v8552
        %v9159 = vmul.f32 %v9031, %v8663
        %v9160 = vmul.f32 %v9032, %v8665
        %v9161 = vmul.f32 %v9033, %v8330
        %v9162 = vmul.f32 %v9034, %v8332
        %v9163 = vmul.f32 %v9035, %v8443
        %v9164 = vmul.f32 %v9036, %v8445
        %v9165 = vmul.f32 %v9037, %v8556
        %v9166 = vmul.f32 %v9038, %v8558
        %v9167 = vmul.f32 %v9039, %v8669
        %v9168 = vmul.f32 %v9040, %v8671
        %v9169 = vmul.f32 %v9041, %v8334
        %v9170 = vmul.f32 %v9042, %v8336
        %v9171 = vmul.f32 %v9043, %v8447
        %v9172 = vmul.f32 %v9044, %v8449
        %v9173 = vmul.f32 %v9045, %v8560
        %v9174 = vmul.f32 %v9046, %v8562
        %v9175 = vmul.f32 %v9047, %v8673
        %v9176 = vmul.f32 %v9048, %v8675
        %v9177 = vmul.f32 %v9049, %v8340
        %v9178 = vmul.f32 %v9050, %v8342
        %v9179 = vmul.f32 %v9051, %v8453
        %v9180 = vmul.f32 %v9052, %v8455
        %v9181 = vmul.f32 %v9053, %v8566
        %v9182 = vmul.f32 %v9054, %v8568
        %v9183 = vmul.f32 %v9055, %v8679
        %v9184 = vmul.f32 %v9056, %v8681
        %v9185 = vmul.f32 %v9057, %v8344
        %v9186 = vmul.f32 %v9058, %v8346
        %v9187 = vmul.f32 %v9059, %v8457
        %v9188 = vmul.f32 %v9060, %v8459
        %v9189 = vmul.f32 %v9061, %v8570
        %v9190 = vmul.f32 %v9062, %v8572
        %v9191 = vmul.f32 %v9063, %v8683
        %v9192 = vmul.f32 %v9064, %v8685
        %v9193 = vmul.f32 %v9065, %v8350
        %v9194 = vmul.f32 %v9066, %v8352
        %v9195 = vmul.f32 %v9067, %v8463
        %v9196 = vmul.f32 %v9068, %v8465
        %v9197 = vmul.f32 %v9069, %v8576
        %v9198 = vmul.f32 %v9070, %v8578
        %v9199 = vmul.f32 %v9071, %v8689
        %v9200 = vmul.f32 %v9072, %v8691
        %v9201 = vmul.f32 %v9073, %v8354
        %v9202 = vmul.f32 %v9074, %v8356
        %v9203 = vmul.f32 %v9075, %v8467
        %v9204 = vmul.f32 %v9076, %v8469
        %v9205 = vmul.f32 %v9077, %v8580
        %v9206 = vmul.f32 %v9078, %v8582
        %v9207 = vmul.f32 %v9079, %v8693
        %v9208 = vmul.f32 %v9080, %v8695
        %v9209 = vadd.f32 %v8280, %v9081
        %v9210 = vadd.f32 %v8282, %v9082
        %v9211 = vadd.f32 %v8393, %v9083
        %v9212 = vadd.f32 %v8395, %v9084
        %v9213 = vadd.f32 %v8506, %v9085
        %v9214 = vadd.f32 %v8508, %v9086
        %v9215 = vadd.f32 %v8619, %v9087
        %v9216 = vadd.f32 %v8621, %v9088
        %v9217 = vadd.f32 %v8284, %v9089
        %v9218 = vadd.f32 %v8286, %v9090
        %v9219 = vadd.f32 %v8397, %v9091
        %v9220 = vadd.f32 %v8399, %v9092
        %v9221 = vadd.f32 %v8510, %v9093
        %v9222 = vadd.f32 %v8512, %v9094
        %v9223 = vadd.f32 %v8623, %v9095
        %v9224 = vadd.f32 %v8625, %v9096
        %v9225 = vadd.f32 %v8290, %v9097
        %v9226 = vadd.f32 %v8292, %v9098
        %v9227 = vadd.f32 %v8403, %v9099
        %v9228 = vadd.f32 %v8405, %v9100
        %v9229 = vadd.f32 %v8516, %v9101
        %v9230 = vadd.f32 %v8518, %v9102
        %v9231 = vadd.f32 %v8629, %v9103
        %v9232 = vadd.f32 %v8631, %v9104
        %v9233 = vadd.f32 %v8294, %v9105
        %v9234 = vadd.f32 %v8296, %v9106
        %v9235 = vadd.f32 %v8407, %v9107
        %v9236 = vadd.f32 %v8409, %v9108
        %v9237 = vadd.f32 %v8520, %v9109
        %v9238 = vadd.f32 %v8522, %v9110
        %v9239 = vadd.f32 %v8633, %v9111
        %v9240 = vadd.f32 %v8635, %v9112
        %v9241 = vadd.f32 %v8300, %v9113
        %v9242 = vadd.f32 %v8302, %v9114
        %v9243 = vadd.f32 %v8413, %v9115
        %v9244 = vadd.f32 %v8415, %v9116
        %v9245 = vadd.f32 %v8526, %v9117
        %v9246 = vadd.f32 %v8528, %v9118
        %v9247 = vadd.f32 %v8639, %v9119
        %v9248 = vadd.f32 %v8641, %v9120
        %v9249 = vadd.f32 %v8304, %v9121
        %v9250 = vadd.f32 %v8306, %v9122
        %v9251 = vadd.f32 %v8417, %v9123
        %v9252 = vadd.f32 %v8419, %v9124
        %v9253 = vadd.f32 %v8530, %v9125
        %v9254 = vadd.f32 %v8532, %v9126
        %v9255 = vadd.f32 %v8643, %v9127
        %v9256 = vadd.f32 %v8645, %v9128
        %v9257 = vadd.f32 %v8310, %v9129
        %v9258 = vadd.f32 %v8312, %v9130
        %v9259 = vadd.f32 %v8423, %v9131
        %v9260 = vadd.f32 %v8425, %v9132
        %v9261 = vadd.f32 %v8536, %v9133
        %v9262 = vadd.f32 %v8538, %v9134
        %v9263 = vadd.f32 %v8649, %v9135
        %v9264 = vadd.f32 %v8651, %v9136
        %v9265 = vadd.f32 %v8314, %v9137
        %v9266 = vadd.f32 %v8316, %v9138
        %v9267 = vadd.f32 %v8427, %v9139
        %v9268 = vadd.f32 %v8429, %v9140
        %v9269 = vadd.f32 %v8540, %v9141
        %v9270 = vadd.f32 %v8542, %v9142
        %v9271 = vadd.f32 %v8653, %v9143
        %v9272 = vadd.f32 %v8655, %v9144
        %v9273 = vadd.f32 %v8320, %v9145
        %v9274 = vadd.f32 %v8322, %v9146
        %v9275 = vadd.f32 %v8433, %v9147
        %v9276 = vadd.f32 %v8435, %v9148
        %v9277 = vadd.f32 %v8546, %v9149
        %v9278 = vadd.f32 %v8548, %v9150
        %v9279 = vadd.f32 %v8659, %v9151
        %v9280 = vadd.f32 %v8661, %v9152
        %v9281 = vadd.f32 %v8324, %v9153
        %v9282 = vadd.f32 %v8326, %v9154
        %v9283 = vadd.f32 %v8437, %v9155
        %v9284 = vadd.f32 %v8439, %v9156
        %v9285 = vadd.f32 %v8550, %v9157
        %v9286 = vadd.f32 %v8552, %v9158
        %v9287 = vadd.f32 %v8663, %v9159
        %v9288 = vadd.f32 %v8665, %v9160
        %v9289 = vadd.f32 %v8330, %v9161
        %v9290 = vadd.f32 %v8332, %v9162
        %v9291 = vadd.f32 %v8443, %v9163
        %v9292 = vadd.f32 %v8445, %v9164
        %v9293 = vadd.f32 %v8556, %v9165
        %v9294 = vadd.f32 %v8558, %v9166
        %v9295 = vadd.f32 %v8669, %v9167
        %v9296 = vadd.f32 %v8671, %v9168
        %v9297 = vadd.f32 %v8334, %v9169
        %v9298 = vadd.f32 %v8336, %v9170
        %v9299 = vadd.f32 %v8447, %v9171
        %v9300 = vadd.f32 %v8449, %v9172
        %v9301 = vadd.f32 %v8560, %v9173
        %v9302 = vadd.f32 %v8562, %v9174
        %v9303 = vadd.f32 %v8673, %v9175
        %v9304 = vadd.f32 %v8675, %v9176
        %v9305 = vadd.f32 %v8340, %v9177
        %v9306 = vadd.f32 %v8342, %v9178
        %v9307 = vadd.f32 %v8453, %v9179
        %v9308 = vadd.f32 %v8455, %v9180
        %v9309 = vadd.f32 %v8566, %v9181
        %v9310 = vadd.f32 %v8568, %v9182
        %v9311 = vadd.f32 %v8679, %v9183
        %v9312 = vadd.f32 %v8681, %v9184
        %v9313 = vadd.f32 %v8344, %v9185
        %v9314 = vadd.f32 %v8346, %v9186
        %v9315 = vadd.f32 %v8457, %v9187
        %v9316 = vadd.f32 %v8459, %v9188
        %v9317 = vadd.f32 %v8570, %v9189
        %v9318 = vadd.f32 %v8572, %v9190
        %v9319 = vadd.f32 %v8683, %v9191
        %v9320 = vadd.f32 %v8685, %v9192
        %v9321 = vadd.f32 %v8350, %v9193
        %v9322 = vadd.f32 %v8352, %v9194
        %v9323 = vadd.f32 %v8463, %v9195
        %v9324 = vadd.f32 %v8465, %v9196
        %v9325 = vadd.f32 %v8576, %v9197
        %v9326 = vadd.f32 %v8578, %v9198
        %v9327 = vadd.f32 %v8689, %v9199
        %v9328 = vadd.f32 %v8691, %v9200
        %v9329 = vadd.f32 %v8354, %v9201
        %v9330 = vadd.f32 %v8356, %v9202
        %v9331 = vadd.f32 %v8467, %v9203
        %v9332 = vadd.f32 %v8469, %v9204
        %v9333 = vadd.f32 %v8580, %v9205
        %v9334 = vadd.f32 %v8582, %v9206
        %v9335 = vadd.f32 %v8693, %v9207
        %v9336 = vadd.f32 %v8695, %v9208
        %v9337 = vmul.f32 %v9209, 0.7978846
        %v9338 = vmul.f32 %v9210, 0.7978846
        %v9339 = vmul.f32 %v9211, 0.7978846
        %v9340 = vmul.f32 %v9212, 0.7978846
        %v9341 = vmul.f32 %v9213, 0.7978846
        %v9342 = vmul.f32 %v9214, 0.7978846
        %v9343 = vmul.f32 %v9215, 0.7978846
        %v9344 = vmul.f32 %v9216, 0.7978846
        %v9345 = vmul.f32 %v9217, 0.7978846
        %v9346 = vmul.f32 %v9218, 0.7978846
        %v9347 = vmul.f32 %v9219, 0.7978846
        %v9348 = vmul.f32 %v9220, 0.7978846
        %v9349 = vmul.f32 %v9221, 0.7978846
        %v9350 = vmul.f32 %v9222, 0.7978846
        %v9351 = vmul.f32 %v9223, 0.7978846
        %v9352 = vmul.f32 %v9224, 0.7978846
        %v9353 = vmul.f32 %v9225, 0.7978846
        %v9354 = vmul.f32 %v9226, 0.7978846
        %v9355 = vmul.f32 %v9227, 0.7978846
        %v9356 = vmul.f32 %v9228, 0.7978846
        %v9357 = vmul.f32 %v9229, 0.7978846
        %v9358 = vmul.f32 %v9230, 0.7978846
        %v9359 = vmul.f32 %v9231, 0.7978846
        %v9360 = vmul.f32 %v9232, 0.7978846
        %v9361 = vmul.f32 %v9233, 0.7978846
        %v9362 = vmul.f32 %v9234, 0.7978846
        %v9363 = vmul.f32 %v9235, 0.7978846
        %v9364 = vmul.f32 %v9236, 0.7978846
        %v9365 = vmul.f32 %v9237, 0.7978846
        %v9366 = vmul.f32 %v9238, 0.7978846
        %v9367 = vmul.f32 %v9239, 0.7978846
        %v9368 = vmul.f32 %v9240, 0.7978846
        %v9369 = vmul.f32 %v9241, 0.7978846
        %v9370 = vmul.f32 %v9242, 0.7978846
        %v9371 = vmul.f32 %v9243, 0.7978846
        %v9372 = vmul.f32 %v9244, 0.7978846
        %v9373 = vmul.f32 %v9245, 0.7978846
        %v9374 = vmul.f32 %v9246, 0.7978846
        %v9375 = vmul.f32 %v9247, 0.7978846
        %v9376 = vmul.f32 %v9248, 0.7978846
        %v9377 = vmul.f32 %v9249, 0.7978846
        %v9378 = vmul.f32 %v9250, 0.7978846
        %v9379 = vmul.f32 %v9251, 0.7978846
        %v9380 = vmul.f32 %v9252, 0.7978846
        %v9381 = vmul.f32 %v9253, 0.7978846
        %v9382 = vmul.f32 %v9254, 0.7978846
        %v9383 = vmul.f32 %v9255, 0.7978846
        %v9384 = vmul.f32 %v9256, 0.7978846
        %v9385 = vmul.f32 %v9257, 0.7978846
        %v9386 = vmul.f32 %v9258, 0.7978846
        %v9387 = vmul.f32 %v9259, 0.7978846
        %v9388 = vmul.f32 %v9260, 0.7978846
        %v9389 = vmul.f32 %v9261, 0.7978846
        %v9390 = vmul.f32 %v9262, 0.7978846
        %v9391 = vmul.f32 %v9263, 0.7978846
        %v9392 = vmul.f32 %v9264, 0.7978846
        %v9393 = vmul.f32 %v9265, 0.7978846
        %v9394 = vmul.f32 %v9266, 0.7978846
        %v9395 = vmul.f32 %v9267, 0.7978846
        %v9396 = vmul.f32 %v9268, 0.7978846
        %v9397 = vmul.f32 %v9269, 0.7978846
        %v9398 = vmul.f32 %v9270, 0.7978846
        %v9399 = vmul.f32 %v9271, 0.7978846
        %v9400 = vmul.f32 %v9272, 0.7978846
        %v9401 = vmul.f32 %v9273, 0.7978846
        %v9402 = vmul.f32 %v9274, 0.7978846
        %v9403 = vmul.f32 %v9275, 0.7978846
        %v9404 = vmul.f32 %v9276, 0.7978846
        %v9405 = vmul.f32 %v9277, 0.7978846
        %v9406 = vmul.f32 %v9278, 0.7978846
        %v9407 = vmul.f32 %v9279, 0.7978846
        %v9408 = vmul.f32 %v9280, 0.7978846
        %v9409 = vmul.f32 %v9281, 0.7978846
        %v9410 = vmul.f32 %v9282, 0.7978846
        %v9411 = vmul.f32 %v9283, 0.7978846
        %v9412 = vmul.f32 %v9284, 0.7978846
        %v9413 = vmul.f32 %v9285, 0.7978846
        %v9414 = vmul.f32 %v9286, 0.7978846
        %v9415 = vmul.f32 %v9287, 0.7978846
        %v9416 = vmul.f32 %v9288, 0.7978846
        %v9417 = vmul.f32 %v9289, 0.7978846
        %v9418 = vmul.f32 %v9290, 0.7978846
        %v9419 = vmul.f32 %v9291, 0.7978846
        %v9420 = vmul.f32 %v9292, 0.7978846
        %v9421 = vmul.f32 %v9293, 0.7978846
        %v9422 = vmul.f32 %v9294, 0.7978846
        %v9423 = vmul.f32 %v9295, 0.7978846
        %v9424 = vmul.f32 %v9296, 0.7978846
        %v9425 = vmul.f32 %v9297, 0.7978846
        %v9426 = vmul.f32 %v9298, 0.7978846
        %v9427 = vmul.f32 %v9299, 0.7978846
        %v9428 = vmul.f32 %v9300, 0.7978846
        %v9429 = vmul.f32 %v9301, 0.7978846
        %v9430 = vmul.f32 %v9302, 0.7978846
        %v9431 = vmul.f32 %v9303, 0.7978846
        %v9432 = vmul.f32 %v9304, 0.7978846
        %v9433 = vmul.f32 %v9305, 0.7978846
        %v9434 = vmul.f32 %v9306, 0.7978846
        %v9435 = vmul.f32 %v9307, 0.7978846
        %v9436 = vmul.f32 %v9308, 0.7978846
        %v9437 = vmul.f32 %v9309, 0.7978846
        %v9438 = vmul.f32 %v9310, 0.7978846
        %v9439 = vmul.f32 %v9311, 0.7978846
        %v9440 = vmul.f32 %v9312, 0.7978846
        %v9441 = vmul.f32 %v9313, 0.7978846
        %v9442 = vmul.f32 %v9314, 0.7978846
        %v9443 = vmul.f32 %v9315, 0.7978846
        %v9444 = vmul.f32 %v9316, 0.7978846
        %v9445 = vmul.f32 %v9317, 0.7978846
        %v9446 = vmul.f32 %v9318, 0.7978846
        %v9447 = vmul.f32 %v9319, 0.7978846
        %v9448 = vmul.f32 %v9320, 0.7978846
        %v9449 = vmul.f32 %v9321, 0.7978846
        %v9450 = vmul.f32 %v9322, 0.7978846
        %v9451 = vmul.f32 %v9323, 0.7978846
        %v9452 = vmul.f32 %v9324, 0.7978846
        %v9453 = vmul.f32 %v9325, 0.7978846
        %v9454 = vmul.f32 %v9326, 0.7978846
        %v9455 = vmul.f32 %v9327, 0.7978846
        %v9456 = vmul.f32 %v9328, 0.7978846
        %v9457 = vmul.f32 %v9329, 0.7978846
        %v9458 = vmul.f32 %v9330, 0.7978846
        %v9459 = vmul.f32 %v9331, 0.7978846
        %v9460 = vmul.f32 %v9332, 0.7978846
        %v9461 = vmul.f32 %v9333, 0.7978846
        %v9462 = vmul.f32 %v9334, 0.7978846
        %v9463 = vmul.f32 %v9335, 0.7978846
        %v9464 = vmul.f32 %v9336, 0.7978846
        %v9465 = vtanh.pop %v9337
        %v9466 = vtanh.pop %v9338
        %v9467 = vtanh.pop %v9339
        %v9468 = vtanh.pop %v9340
        %v9469 = vtanh.pop %v9341
        %v9470 = vtanh.pop %v9342
        %v9471 = vtanh.pop %v9343
        %v9472 = vtanh.pop %v9344
        %v9473 = vtanh.pop %v9345
        %v9474 = vtanh.pop %v9346
        %v9475 = vtanh.pop %v9347
        %v9476 = vtanh.pop %v9348
        %v9477 = vtanh.pop %v9349
        %v9478 = vtanh.pop %v9350
        %v9479 = vtanh.pop %v9351
        %v9480 = vtanh.pop %v9352
        %v9481 = vtanh.pop %v9353
        %v9482 = vtanh.pop %v9354
        %v9483 = vtanh.pop %v9355
        %v9484 = vtanh.pop %v9356
        %v9485 = vtanh.pop %v9357
        %v9486 = vtanh.pop %v9358
        %v9487 = vtanh.pop %v9359
        %v9488 = vtanh.pop %v9360
        %v9489 = vtanh.pop %v9361
        %v9490 = vtanh.pop %v9362
        %v9491 = vtanh.pop %v9363
        %v9492 = vtanh.pop %v9364
        %v9493 = vtanh.pop %v9365
        %v9494 = vtanh.pop %v9366
        %v9495 = vtanh.pop %v9367
        %v9496 = vtanh.pop %v9368
        %v9497 = vtanh.pop %v9369
        %v9498 = vtanh.pop %v9370
        %v9499 = vtanh.pop %v9371
        %v9500 = vtanh.pop %v9372
        %v9501 = vtanh.pop %v9373
        %v9502 = vtanh.pop %v9374
        %v9503 = vtanh.pop %v9375
        %v9504 = vtanh.pop %v9376
        %v9505 = vtanh.pop %v9377
        %v9506 = vtanh.pop %v9378
        %v9507 = vtanh.pop %v9379
        %v9508 = vtanh.pop %v9380
        %v9509 = vtanh.pop %v9381
        %v9510 = vtanh.pop %v9382
        %v9511 = vtanh.pop %v9383
        %v9512 = vtanh.pop %v9384
        %v9513 = vtanh.pop %v9385
        %v9514 = vtanh.pop %v9386
        %v9515 = vtanh.pop %v9387
        %v9516 = vtanh.pop %v9388
        %v9517 = vtanh.pop %v9389
        %v9518 = vtanh.pop %v9390
        %v9519 = vtanh.pop %v9391
        %v9520 = vtanh.pop %v9392
        %v9521 = vtanh.pop %v9393
        %v9522 = vtanh.pop %v9394
        %v9523 = vtanh.pop %v9395
        %v9524 = vtanh.pop %v9396
        %v9525 = vtanh.pop %v9397
        %v9526 = vtanh.pop %v9398
        %v9527 = vtanh.pop %v9399
        %v9528 = vtanh.pop %v9400
        %v9529 = vtanh.pop %v9401
        %v9530 = vtanh.pop %v9402
        %v9531 = vtanh.pop %v9403
        %v9532 = vtanh.pop %v9404
        %v9533 = vtanh.pop %v9405
        %v9534 = vtanh.pop %v9406
        %v9535 = vtanh.pop %v9407
        %v9536 = vtanh.pop %v9408
        %v9537 = vtanh.pop %v9409
        %v9538 = vtanh.pop %v9410
        %v9539 = vtanh.pop %v9411
        %v9540 = vtanh.pop %v9412
        %v9541 = vtanh.pop %v9413
        %v9542 = vtanh.pop %v9414
        %v9543 = vtanh.pop %v9415
        %v9544 = vtanh.pop %v9416
        %v9545 = vtanh.pop %v9417
        %v9546 = vtanh.pop %v9418
        %v9547 = vtanh.pop %v9419
        %v9548 = vtanh.pop %v9420
        %v9549 = vtanh.pop %v9421
        %v9550 = vtanh.pop %v9422
        %v9551 = vtanh.pop %v9423
        %v9552 = vtanh.pop %v9424
        %v9553 = vtanh.pop %v9425
        %v9554 = vtanh.pop %v9426
        %v9555 = vtanh.pop %v9427
        %v9556 = vtanh.pop %v9428
        %v9557 = vtanh.pop %v9429
        %v9558 = vtanh.pop %v9430
        %v9559 = vtanh.pop %v9431
        %v9560 = vtanh.pop %v9432
        %v9561 = vtanh.pop %v9433
        %v9562 = vtanh.pop %v9434
        %v9563 = vtanh.pop %v9435
        %v9564 = vtanh.pop %v9436
        %v9565 = vtanh.pop %v9437
        %v9566 = vtanh.pop %v9438
        %v9567 = vtanh.pop %v9439
        %v9568 = vtanh.pop %v9440
        %v9569 = vtanh.pop %v9441
        %v9570 = vtanh.pop %v9442
        %v9571 = vtanh.pop %v9443
        %v9572 = vtanh.pop %v9444
        %v9573 = vtanh.pop %v9445
        %v9574 = vtanh.pop %v9446
        %v9575 = vtanh.pop %v9447
        %v9576 = vtanh.pop %v9448
        %v9577 = vtanh.pop %v9449
        %v9578 = vtanh.pop %v9450
        %v9579 = vtanh.pop %v9451
        %v9580 = vtanh.pop %v9452
        %v9581 = vtanh.pop %v9453
        %v9582 = vtanh.pop %v9454
        %v9583 = vtanh.pop %v9455
        %v9584 = vtanh.pop %v9456
        %v9585 = vtanh.pop %v9457
        %v9586 = vtanh.pop %v9458
        %v9587 = vtanh.pop %v9459
        %v9588 = vtanh.pop %v9460
        %v9589 = vtanh.pop %v9461
        %v9590 = vtanh.pop %v9462
        %v9591 = vtanh.pop %v9463
        %v9592 = vtanh.pop %v9464
        %v9593 = vadd.f32 %v9465, 1.0
        %v9594 = vadd.f32 %v9466, 1.0
        %v9595 = vadd.f32 %v9467, 1.0
        %v9596 = vadd.f32 %v9468, 1.0
        %v9597 = vadd.f32 %v9469, 1.0
        %v9598 = vadd.f32 %v9470, 1.0
        %v9599 = vadd.f32 %v9471, 1.0
        %v9600 = vadd.f32 %v9472, 1.0
        %v9601 = vadd.f32 %v9473, 1.0
        %v9602 = vadd.f32 %v9474, 1.0
        %v9603 = vadd.f32 %v9475, 1.0
        %v9604 = vadd.f32 %v9476, 1.0
        %v9605 = vadd.f32 %v9477, 1.0
        %v9606 = vadd.f32 %v9478, 1.0
        %v9607 = vadd.f32 %v9479, 1.0
        %v9608 = vadd.f32 %v9480, 1.0
        %v9609 = vadd.f32 %v9481, 1.0
        %v9610 = vadd.f32 %v9482, 1.0
        %v9611 = vadd.f32 %v9483, 1.0
        %v9612 = vadd.f32 %v9484, 1.0
        %v9613 = vadd.f32 %v9485, 1.0
        %v9614 = vadd.f32 %v9486, 1.0
        %v9615 = vadd.f32 %v9487, 1.0
        %v9616 = vadd.f32 %v9488, 1.0
        %v9617 = vadd.f32 %v9489, 1.0
        %v9618 = vadd.f32 %v9490, 1.0
        %v9619 = vadd.f32 %v9491, 1.0
        %v9620 = vadd.f32 %v9492, 1.0
        %v9621 = vadd.f32 %v9493, 1.0
        %v9622 = vadd.f32 %v9494, 1.0
        %v9623 = vadd.f32 %v9495, 1.0
        %v9624 = vadd.f32 %v9496, 1.0
        %v9625 = vadd.f32 %v9497, 1.0
        %v9626 = vadd.f32 %v9498, 1.0
        %v9627 = vadd.f32 %v9499, 1.0
        %v9628 = vadd.f32 %v9500, 1.0
        %v9629 = vadd.f32 %v9501, 1.0
        %v9630 = vadd.f32 %v9502, 1.0
        %v9631 = vadd.f32 %v9503, 1.0
        %v9632 = vadd.f32 %v9504, 1.0
        %v9633 = vadd.f32 %v9505, 1.0
        %v9634 = vadd.f32 %v9506, 1.0
        %v9635 = vadd.f32 %v9507, 1.0
        %v9636 = vadd.f32 %v9508, 1.0
        %v9637 = vadd.f32 %v9509, 1.0
        %v9638 = vadd.f32 %v9510, 1.0
        %v9639 = vadd.f32 %v9511, 1.0
        %v9640 = vadd.f32 %v9512, 1.0
        %v9641 = vadd.f32 %v9513, 1.0
        %v9642 = vadd.f32 %v9514, 1.0
        %v9643 = vadd.f32 %v9515, 1.0
        %v9644 = vadd.f32 %v9516, 1.0
        %v9645 = vadd.f32 %v9517, 1.0
        %v9646 = vadd.f32 %v9518, 1.0
        %v9647 = vadd.f32 %v9519, 1.0
        %v9648 = vadd.f32 %v9520, 1.0
        %v9649 = vadd.f32 %v9521, 1.0
        %v9650 = vadd.f32 %v9522, 1.0
        %v9651 = vadd.f32 %v9523, 1.0
        %v9652 = vadd.f32 %v9524, 1.0
        %v9653 = vadd.f32 %v9525, 1.0
        %v9654 = vadd.f32 %v9526, 1.0
        %v9655 = vadd.f32 %v9527, 1.0
        %v9656 = vadd.f32 %v9528, 1.0
        %v9657 = vadd.f32 %v9529, 1.0
        %v9658 = vadd.f32 %v9530, 1.0
        %v9659 = vadd.f32 %v9531, 1.0
        %v9660 = vadd.f32 %v9532, 1.0
        %v9661 = vadd.f32 %v9533, 1.0
        %v9662 = vadd.f32 %v9534, 1.0
        %v9663 = vadd.f32 %v9535, 1.0
        %v9664 = vadd.f32 %v9536, 1.0
        %v9665 = vadd.f32 %v9537, 1.0
        %v9666 = vadd.f32 %v9538, 1.0
        %v9667 = vadd.f32 %v9539, 1.0
        %v9668 = vadd.f32 %v9540, 1.0
        %v9669 = vadd.f32 %v9541, 1.0
        %v9670 = vadd.f32 %v9542, 1.0
        %v9671 = vadd.f32 %v9543, 1.0
        %v9672 = vadd.f32 %v9544, 1.0
        %v9673 = vadd.f32 %v9545, 1.0
        %v9674 = vadd.f32 %v9546, 1.0
        %v9675 = vadd.f32 %v9547, 1.0
        %v9676 = vadd.f32 %v9548, 1.0
        %v9677 = vadd.f32 %v9549, 1.0
        %v9678 = vadd.f32 %v9550, 1.0
        %v9679 = vadd.f32 %v9551, 1.0
        %v9680 = vadd.f32 %v9552, 1.0
        %v9681 = vadd.f32 %v9553, 1.0
        %v9682 = vadd.f32 %v9554, 1.0
        %v9683 = vadd.f32 %v9555, 1.0
        %v9684 = vadd.f32 %v9556, 1.0
        %v9685 = vadd.f32 %v9557, 1.0
        %v9686 = vadd.f32 %v9558, 1.0
        %v9687 = vadd.f32 %v9559, 1.0
        %v9688 = vadd.f32 %v9560, 1.0
        %v9689 = vadd.f32 %v9561, 1.0
        %v9690 = vadd.f32 %v9562, 1.0
        %v9691 = vadd.f32 %v9563, 1.0
        %v9692 = vadd.f32 %v9564, 1.0
        %v9693 = vadd.f32 %v9565, 1.0
        %v9694 = vadd.f32 %v9566, 1.0
        %v9695 = vadd.f32 %v9567, 1.0
        %v9696 = vadd.f32 %v9568, 1.0
        %v9697 = vadd.f32 %v9569, 1.0
        %v9698 = vadd.f32 %v9570, 1.0
        %v9699 = vadd.f32 %v9571, 1.0
        %v9700 = vadd.f32 %v9572, 1.0
        %v9701 = vadd.f32 %v9573, 1.0
        %v9702 = vadd.f32 %v9574, 1.0
        %v9703 = vadd.f32 %v9575, 1.0
        %v9704 = vadd.f32 %v9576, 1.0
        %v9705 = vadd.f32 %v9577, 1.0
        %v9706 = vadd.f32 %v9578, 1.0
        %v9707 = vadd.f32 %v9579, 1.0
        %v9708 = vadd.f32 %v9580, 1.0
        %v9709 = vadd.f32 %v9581, 1.0
        %v9710 = vadd.f32 %v9582, 1.0
        %v9711 = vadd.f32 %v9583, 1.0
        %v9712 = vadd.f32 %v9584, 1.0
        %v9713 = vadd.f32 %v9585, 1.0
        %v9714 = vadd.f32 %v9586, 1.0
        %v9715 = vadd.f32 %v9587, 1.0
        %v9716 = vadd.f32 %v9588, 1.0
        %v9717 = vadd.f32 %v9589, 1.0
        %v9718 = vadd.f32 %v9590, 1.0
        %v9719 = vadd.f32 %v9591, 1.0
        %v9720 = vadd.f32 %v9592, 1.0
        %v9721 = vmul.f32 %v8697, %v9593
        %v9722 = vmul.f32 %v8698, %v9594
        %v9723 = vmul.f32 %v8699, %v9595
        %v9724 = vmul.f32 %v8700, %v9596
        %v9725 = vmul.f32 %v8701, %v9597
        %v9726 = vmul.f32 %v8702, %v9598
        %v9727 = vmul.f32 %v8703, %v9599
        %v9728 = vmul.f32 %v8704, %v9600
        %v9729 = vmul.f32 %v8705, %v9601
        %v9730 = vmul.f32 %v8706, %v9602
        %v9731 = vmul.f32 %v8707, %v9603
        %v9732 = vmul.f32 %v8708, %v9604
        %v9733 = vmul.f32 %v8709, %v9605
        %v9734 = vmul.f32 %v8710, %v9606
        %v9735 = vmul.f32 %v8711, %v9607
        %v9736 = vmul.f32 %v8712, %v9608
        %v9737 = vmul.f32 %v8713, %v9609
        %v9738 = vmul.f32 %v8714, %v9610
        %v9739 = vmul.f32 %v8715, %v9611
        %v9740 = vmul.f32 %v8716, %v9612
        %v9741 = vmul.f32 %v8717, %v9613
        %v9742 = vmul.f32 %v8718, %v9614
        %v9743 = vmul.f32 %v8719, %v9615
        %v9744 = vmul.f32 %v8720, %v9616
        %v9745 = vmul.f32 %v8721, %v9617
        %v9746 = vmul.f32 %v8722, %v9618
        %v9747 = vmul.f32 %v8723, %v9619
        %v9748 = vmul.f32 %v8724, %v9620
        %v9749 = vmul.f32 %v8725, %v9621
        %v9750 = vmul.f32 %v8726, %v9622
        %v9751 = vmul.f32 %v8727, %v9623
        %v9752 = vmul.f32 %v8728, %v9624
        %v9753 = vmul.f32 %v8729, %v9625
        %v9754 = vmul.f32 %v8730, %v9626
        %v9755 = vmul.f32 %v8731, %v9627
        %v9756 = vmul.f32 %v8732, %v9628
        %v9757 = vmul.f32 %v8733, %v9629
        %v9758 = vmul.f32 %v8734, %v9630
        %v9759 = vmul.f32 %v8735, %v9631
        %v9760 = vmul.f32 %v8736, %v9632
        %v9761 = vmul.f32 %v8737, %v9633
        %v9762 = vmul.f32 %v8738, %v9634
        %v9763 = vmul.f32 %v8739, %v9635
        %v9764 = vmul.f32 %v8740, %v9636
        %v9765 = vmul.f32 %v8741, %v9637
        %v9766 = vmul.f32 %v8742, %v9638
        %v9767 = vmul.f32 %v8743, %v9639
        %v9768 = vmul.f32 %v8744, %v9640
        %v9769 = vmul.f32 %v8745, %v9641
        %v9770 = vmul.f32 %v8746, %v9642
        %v9771 = vmul.f32 %v8747, %v9643
        %v9772 = vmul.f32 %v8748, %v9644
        %v9773 = vmul.f32 %v8749, %v9645
        %v9774 = vmul.f32 %v8750, %v9646
        %v9775 = vmul.f32 %v8751, %v9647
        %v9776 = vmul.f32 %v8752, %v9648
        %v9777 = vmul.f32 %v8753, %v9649
        %v9778 = vmul.f32 %v8754, %v9650
        %v9779 = vmul.f32 %v8755, %v9651
        %v9780 = vmul.f32 %v8756, %v9652
        %v9781 = vmul.f32 %v8757, %v9653
        %v9782 = vmul.f32 %v8758, %v9654
        %v9783 = vmul.f32 %v8759, %v9655
        %v9784 = vmul.f32 %v8760, %v9656
        %v9785 = vmul.f32 %v8761, %v9657
        %v9786 = vmul.f32 %v8762, %v9658
        %v9787 = vmul.f32 %v8763, %v9659
        %v9788 = vmul.f32 %v8764, %v9660
        %v9789 = vmul.f32 %v8765, %v9661
        %v9790 = vmul.f32 %v8766, %v9662
        %v9791 = vmul.f32 %v8767, %v9663
        %v9792 = vmul.f32 %v8768, %v9664
        %v9793 = vmul.f32 %v8769, %v9665
        %v9794 = vmul.f32 %v8770, %v9666
        %v9795 = vmul.f32 %v8771, %v9667
        %v9796 = vmul.f32 %v8772, %v9668
        %v9797 = vmul.f32 %v8773, %v9669
        %v9798 = vmul.f32 %v8774, %v9670
        %v9799 = vmul.f32 %v8775, %v9671
        %v9800 = vmul.f32 %v8776, %v9672
        %v9801 = vmul.f32 %v8777, %v9673
        %v9802 = vmul.f32 %v8778, %v9674
        %v9803 = vmul.f32 %v8779, %v9675
        %v9804 = vmul.f32 %v8780, %v9676
        %v9805 = vmul.f32 %v8781, %v9677
        %v9806 = vmul.f32 %v8782, %v9678
        %v9807 = vmul.f32 %v8783, %v9679
        %v9808 = vmul.f32 %v8784, %v9680
        %v9809 = vmul.f32 %v8785, %v9681
        %v9810 = vmul.f32 %v8786, %v9682
        %v9811 = vmul.f32 %v8787, %v9683
        %v9812 = vmul.f32 %v8788, %v9684
        %v9813 = vmul.f32 %v8789, %v9685
        %v9814 = vmul.f32 %v8790, %v9686
        %v9815 = vmul.f32 %v8791, %v9687
        %v9816 = vmul.f32 %v8792, %v9688
        %v9817 = vmul.f32 %v8793, %v9689
        %v9818 = vmul.f32 %v8794, %v9690
        %v9819 = vmul.f32 %v8795, %v9691
        %v9820 = vmul.f32 %v8796, %v9692
        %v9821 = vmul.f32 %v8797, %v9693
        %v9822 = vmul.f32 %v8798, %v9694
        %v9823 = vmul.f32 %v8799, %v9695
        %v9824 = vmul.f32 %v8800, %v9696
        %v9825 = vmul.f32 %v8801, %v9697
        %v9826 = vmul.f32 %v8802, %v9698
        %v9827 = vmul.f32 %v8803, %v9699
        %v9828 = vmul.f32 %v8804, %v9700
        %v9829 = vmul.f32 %v8805, %v9701
        %v9830 = vmul.f32 %v8806, %v9702
        %v9831 = vmul.f32 %v8807, %v9703
        %v9832 = vmul.f32 %v8808, %v9704
        %v9833 = vmul.f32 %v8809, %v9705
        %v9834 = vmul.f32 %v8810, %v9706
        %v9835 = vmul.f32 %v8811, %v9707
        %v9836 = vmul.f32 %v8812, %v9708
        %v9837 = vmul.f32 %v8813, %v9709
        %v9838 = vmul.f32 %v8814, %v9710
        %v9839 = vmul.f32 %v8815, %v9711
        %v9840 = vmul.f32 %v8816, %v9712
        %v9841 = vmul.f32 %v8817, %v9713
        %v9842 = vmul.f32 %v8818, %v9714
        %v9843 = vmul.f32 %v8819, %v9715
        %v9844 = vmul.f32 %v8820, %v9716
        %v9845 = vmul.f32 %v8821, %v9717
        %v9846 = vmul.f32 %v8822, %v9718
        %v9847 = vmul.f32 %v8823, %v9719
        %v9848 = vmul.f32 %v8824, %v9720
        %v9849 = vpack.c.bf16 %v9729, %v9721
        %v9850 = vpack.c.bf16 %v9730, %v9722
        %v9851 = vpack.c.bf16 %v9731, %v9723
        %v9852 = vpack.c.bf16 %v9732, %v9724
        %v9853 = vpack.c.bf16 %v9733, %v9725
        %v9854 = vpack.c.bf16 %v9734, %v9726
        %v9855 = vpack.c.bf16 %v9735, %v9727
        %v9856 = vpack.c.bf16 %v9736, %v9728
        %v9857 = vpack.c.bf16 %v9745, %v9737
        %v9858 = vpack.c.bf16 %v9746, %v9738
        %v9859 = vpack.c.bf16 %v9747, %v9739
        %v9860 = vpack.c.bf16 %v9748, %v9740
        %v9861 = vpack.c.bf16 %v9749, %v9741
        %v9862 = vpack.c.bf16 %v9750, %v9742
        %v9863 = vpack.c.bf16 %v9751, %v9743
        %v9864 = vpack.c.bf16 %v9752, %v9744
        %v9865 = vpack.c.bf16 %v9761, %v9753
        %v9866 = vpack.c.bf16 %v9762, %v9754
        %v9867 = vpack.c.bf16 %v9763, %v9755
        %v9868 = vpack.c.bf16 %v9764, %v9756
        %v9869 = vpack.c.bf16 %v9765, %v9757
        %v9870 = vpack.c.bf16 %v9766, %v9758
        %v9871 = vpack.c.bf16 %v9767, %v9759
        %v9872 = vpack.c.bf16 %v9768, %v9760
        %v9873 = vpack.c.bf16 %v9777, %v9769
        %v9874 = vpack.c.bf16 %v9778, %v9770
        %v9875 = vpack.c.bf16 %v9779, %v9771
        %v9876 = vpack.c.bf16 %v9780, %v9772
        %v9877 = vpack.c.bf16 %v9781, %v9773
        %v9878 = vpack.c.bf16 %v9782, %v9774
        %v9879 = vpack.c.bf16 %v9783, %v9775
        %v9880 = vpack.c.bf16 %v9784, %v9776
        %v9881 = vpack.c.bf16 %v9793, %v9785
        %v9882 = vpack.c.bf16 %v9794, %v9786
        %v9883 = vpack.c.bf16 %v9795, %v9787
        %v9884 = vpack.c.bf16 %v9796, %v9788
        %v9885 = vpack.c.bf16 %v9797, %v9789
        %v9886 = vpack.c.bf16 %v9798, %v9790
        %v9887 = vpack.c.bf16 %v9799, %v9791
        %v9888 = vpack.c.bf16 %v9800, %v9792
        %v9889 = vpack.c.bf16 %v9809, %v9801
        %v9890 = vpack.c.bf16 %v9810, %v9802
        %v9891 = vpack.c.bf16 %v9811, %v9803
        %v9892 = vpack.c.bf16 %v9812, %v9804
        %v9893 = vpack.c.bf16 %v9813, %v9805
        %v9894 = vpack.c.bf16 %v9814, %v9806
        %v9895 = vpack.c.bf16 %v9815, %v9807
        %v9896 = vpack.c.bf16 %v9816, %v9808
        %v9897 = vpack.c.bf16 %v9825, %v9817
        %v9898 = vpack.c.bf16 %v9826, %v9818
        %v9899 = vpack.c.bf16 %v9827, %v9819
        %v9900 = vpack.c.bf16 %v9828, %v9820
        %v9901 = vpack.c.bf16 %v9829, %v9821
        %v9902 = vpack.c.bf16 %v9830, %v9822
        %v9903 = vpack.c.bf16 %v9831, %v9823
        %v9904 = vpack.c.bf16 %v9832, %v9824
        %v9905 = vpack.c.bf16 %v9841, %v9833
        %v9906 = vpack.c.bf16 %v9842, %v9834
        %v9907 = vpack.c.bf16 %v9843, %v9835
        %v9908 = vpack.c.bf16 %v9844, %v9836
        %v9909 = vpack.c.bf16 %v9845, %v9837
        %v9910 = vpack.c.bf16 %v9846, %v9838
        %v9911 = vpack.c.bf16 %v9847, %v9839
        %v9912 = vpack.c.bf16 %v9848, %v9840
        %v9913 = vld [vmem:[#allocation10] sm:$0xff]
        %v9914 = vld [vmem:[#allocation10 + $0x8] sm:$0xff]
        %v9915 = vld [vmem:[#allocation10 + $0x10] sm:$0xff]
        %v9916 = vld [vmem:[#allocation10 + $0x18] sm:$0xff]
        %v9917 = vld [vmem:[#allocation10 + $0x20] sm:$0xff]
        %v9918 = vld [vmem:[#allocation10 + $0x28] sm:$0xff]
        %v9919 = vld [vmem:[#allocation10 + $0x30] sm:$0xff]
        %v9920 = vld [vmem:[#allocation10 + $0x38] sm:$0xff]
        %v9921 = vld [vmem:[#allocation10 + $0x40] sm:$0xff]
        %v9922 = vld [vmem:[#allocation10 + $0x48] sm:$0xff]
        %v9923 = vld [vmem:[#allocation10 + $0x50] sm:$0xff]
        %v9924 = vld [vmem:[#allocation10 + $0x58] sm:$0xff]
        %v9925 = vld [vmem:[#allocation10 + $0x60] sm:$0xff]
        %v9926 = vld [vmem:[#allocation10 + $0x68] sm:$0xff]
        %v9927 = vld [vmem:[#allocation10 + $0x70] sm:$0xff]
        %v9928 = vld [vmem:[#allocation10 + $0x78] sm:$0xff]
        %v9929 = vld [vmem:[#allocation10 + $0x80] sm:$0xff]
        %v9930 = vld [vmem:[#allocation10 + $0x88] sm:$0xff]
        %v9931 = vld [vmem:[#allocation10 + $0x90] sm:$0xff]
        %v9932 = vld [vmem:[#allocation10 + $0x98] sm:$0xff]
        %v9933 = vld [vmem:[#allocation10 + $0xa0] sm:$0xff]
        %v9934 = vld [vmem:[#allocation10 + $0xa8] sm:$0xff]
        %v9935 = vld [vmem:[#allocation10 + $0xb0] sm:$0xff]
        %v9936 = vld [vmem:[#allocation10 + $0xb8] sm:$0xff]
        %v9937 = vld [vmem:[#allocation10 + $0xc0] sm:$0xff]
        %v9938 = vld [vmem:[#allocation10 + $0xc8] sm:$0xff]
        %v9939 = vld [vmem:[#allocation10 + $0xd0] sm:$0xff]
        %v9940 = vld [vmem:[#allocation10 + $0xd8] sm:$0xff]
        %v9941 = vld [vmem:[#allocation10 + $0xe0] sm:$0xff]
        %v9942 = vld [vmem:[#allocation10 + $0xe8] sm:$0xff]
        %v9943 = vld [vmem:[#allocation10 + $0xf0] sm:$0xff]
        %v9944 = vld [vmem:[#allocation10 + $0xf8] sm:$0xff]
        %v9945 = vld [vmem:[#allocation10 + $0x100] sm:$0xff]
        %v9946 = vld [vmem:[#allocation10 + $0x108] sm:$0xff]
        %v9947 = vld [vmem:[#allocation10 + $0x110] sm:$0xff]
        %v9948 = vld [vmem:[#allocation10 + $0x118] sm:$0xff]
        %v9949 = vld [vmem:[#allocation10 + $0x120] sm:$0xff]
        %v9950 = vld [vmem:[#allocation10 + $0x128] sm:$0xff]
        %v9951 = vld [vmem:[#allocation10 + $0x130] sm:$0xff]
        %v9952 = vld [vmem:[#allocation10 + $0x138] sm:$0xff]
        %v9953 = vld [vmem:[#allocation10 + $0x140] sm:$0xff]
        %v9954 = vld [vmem:[#allocation10 + $0x148] sm:$0xff]
        %v9955 = vld [vmem:[#allocation10 + $0x150] sm:$0xff]
        %v9956 = vld [vmem:[#allocation10 + $0x158] sm:$0xff]
        %v9957 = vld [vmem:[#allocation10 + $0x160] sm:$0xff]
        %v9958 = vld [vmem:[#allocation10 + $0x168] sm:$0xff]
        %v9959 = vld [vmem:[#allocation10 + $0x170] sm:$0xff]
        %v9960 = vld [vmem:[#allocation10 + $0x178] sm:$0xff]
        %v9961 = vld [vmem:[#allocation10 + $0x180] sm:$0xff]
        %v9962 = vld [vmem:[#allocation10 + $0x188] sm:$0xff]
        %v9963 = vld [vmem:[#allocation10 + $0x190] sm:$0xff]
        %v9964 = vld [vmem:[#allocation10 + $0x198] sm:$0xff]
        %v9965 = vld [vmem:[#allocation10 + $0x1a0] sm:$0xff]
        %v9966 = vld [vmem:[#allocation10 + $0x1a8] sm:$0xff]
        %v9967 = vld [vmem:[#allocation10 + $0x1b0] sm:$0xff]
        %v9968 = vld [vmem:[#allocation10 + $0x1b8] sm:$0xff]
        %v9969 = vld [vmem:[#allocation10 + $0x1c0] sm:$0xff]
        %v9970 = vld [vmem:[#allocation10 + $0x1c8] sm:$0xff]
        %v9971 = vld [vmem:[#allocation10 + $0x1d0] sm:$0xff]
        %v9972 = vld [vmem:[#allocation10 + $0x1d8] sm:$0xff]
        %v9973 = vld [vmem:[#allocation10 + $0x1e0] sm:$0xff]
        %v9974 = vld [vmem:[#allocation10 + $0x1e8] sm:$0xff]
        %v9975 = vld [vmem:[#allocation10 + $0x1f0] sm:$0xff]
        %v9976 = vld [vmem:[#allocation10 + $0x1f8] sm:$0xff]
        %v9977 = vld [vmem:[#allocation10 + $0x200] sm:$0xff]
        %v9978 = vld [vmem:[#allocation10 + $0x208] sm:$0xff]
        %v9979 = vld [vmem:[#allocation10 + $0x210] sm:$0xff]
        %v9980 = vld [vmem:[#allocation10 + $0x218] sm:$0xff]
        %v9981 = vld [vmem:[#allocation10 + $0x220] sm:$0xff]
        %v9982 = vld [vmem:[#allocation10 + $0x228] sm:$0xff]
        %v9983 = vld [vmem:[#allocation10 + $0x230] sm:$0xff]
        %v9984 = vld [vmem:[#allocation10 + $0x238] sm:$0xff]
        %v9985 = vld [vmem:[#allocation10 + $0x240] sm:$0xff]
        %v9986 = vld [vmem:[#allocation10 + $0x248] sm:$0xff]
        %v9987 = vld [vmem:[#allocation10 + $0x250] sm:$0xff]
        %v9988 = vld [vmem:[#allocation10 + $0x258] sm:$0xff]
        %v9989 = vld [vmem:[#allocation10 + $0x260] sm:$0xff]
        %v9990 = vld [vmem:[#allocation10 + $0x268] sm:$0xff]
        %v9991 = vld [vmem:[#allocation10 + $0x270] sm:$0xff]
        %v9992 = vld [vmem:[#allocation10 + $0x278] sm:$0xff]
        %v9993 = vld [vmem:[#allocation10 + $0x280] sm:$0xff]
        %v9994 = vld [vmem:[#allocation10 + $0x288] sm:$0xff]
        %v9995 = vld [vmem:[#allocation10 + $0x290] sm:$0xff]
        %v9996 = vld [vmem:[#allocation10 + $0x298] sm:$0xff]
        %v9997 = vld [vmem:[#allocation10 + $0x2a0] sm:$0xff]
        %v9998 = vld [vmem:[#allocation10 + $0x2a8] sm:$0xff]
        %v9999 = vld [vmem:[#allocation10 + $0x2b0] sm:$0xff]
        %v10000 = vld [vmem:[#allocation10 + $0x2b8] sm:$0xff]
        %v10001 = vld [vmem:[#allocation10 + $0x2c0] sm:$0xff]
        %v10002 = vld [vmem:[#allocation10 + $0x2c8] sm:$0xff]
        %v10003 = vld [vmem:[#allocation10 + $0x2d0] sm:$0xff]
        %v10004 = vld [vmem:[#allocation10 + $0x2d8] sm:$0xff]
        %v10005 = vld [vmem:[#allocation10 + $0x2e0] sm:$0xff]
        %v10006 = vld [vmem:[#allocation10 + $0x2e8] sm:$0xff]
        %v10007 = vld [vmem:[#allocation10 + $0x2f0] sm:$0xff]
        %v10008 = vld [vmem:[#allocation10 + $0x2f8] sm:$0xff]
        %v10009 = vld [vmem:[#allocation10 + $0x300] sm:$0xff]
        %v10010 = vld [vmem:[#allocation10 + $0x308] sm:$0xff]
        %v10011 = vld [vmem:[#allocation10 + $0x310] sm:$0xff]
        %v10012 = vld [vmem:[#allocation10 + $0x318] sm:$0xff]
        %v10013 = vld [vmem:[#allocation10 + $0x320] sm:$0xff]
        %v10014 = vld [vmem:[#allocation10 + $0x328] sm:$0xff]
        %v10015 = vld [vmem:[#allocation10 + $0x330] sm:$0xff]
        %v10016 = vld [vmem:[#allocation10 + $0x338] sm:$0xff]
        %v10017 = vld [vmem:[#allocation10 + $0x340] sm:$0xff]
        %v10018 = vld [vmem:[#allocation10 + $0x348] sm:$0xff]
        %v10019 = vld [vmem:[#allocation10 + $0x350] sm:$0xff]
        %v10020 = vld [vmem:[#allocation10 + $0x358] sm:$0xff]
        %v10021 = vld [vmem:[#allocation10 + $0x360] sm:$0xff]
        %v10022 = vld [vmem:[#allocation10 + $0x368] sm:$0xff]
        %v10023 = vld [vmem:[#allocation10 + $0x370] sm:$0xff]
        %v10024 = vld [vmem:[#allocation10 + $0x378] sm:$0xff]
        %v10025 = vld [vmem:[#allocation10 + $0x380] sm:$0xff]
        %v10026 = vld [vmem:[#allocation10 + $0x388] sm:$0xff]
        %v10027 = vld [vmem:[#allocation10 + $0x390] sm:$0xff]
        %v10028 = vld [vmem:[#allocation10 + $0x398] sm:$0xff]
        %v10029 = vld [vmem:[#allocation10 + $0x3a0] sm:$0xff]
        %v10030 = vld [vmem:[#allocation10 + $0x3a8] sm:$0xff]
        %v10031 = vld [vmem:[#allocation10 + $0x3b0] sm:$0xff]
        %v10032 = vld [vmem:[#allocation10 + $0x3b8] sm:$0xff]
        %v10033 = vld [vmem:[#allocation10 + $0x3c0] sm:$0xff]
        %v10034 = vld [vmem:[#allocation10 + $0x3c8] sm:$0xff]
        %v10035 = vld [vmem:[#allocation10 + $0x3d0] sm:$0xff]
        %v10036 = vld [vmem:[#allocation10 + $0x3d8] sm:$0xff]
        %v10037 = vld [vmem:[#allocation10 + $0x3e0] sm:$0xff]
        %v10038 = vld [vmem:[#allocation10 + $0x3e8] sm:$0xff]
        %v10039 = vld [vmem:[#allocation10 + $0x3f0] sm:$0xff]
        %v10040 = vld [vmem:[#allocation10 + $0x3f8] sm:$0xff]
        %v10041 = vld [vmem:[%s11] sm:$0x3]
        %v10043 = vlaneseq
        %v10044 = vshrl.u32 %v10043, 7
        %v10045 = vsub.s32 0, %v10044
        %v10046 = vrot.slane %v10041, %v10045
        %v10047 = vlaneseq
        %v10048 = vshrl.u32 %v10047, 7
        %v10049 = vsub.s32 1, %v10048
        %v10050 = vrot.slane %v10041, %v10049
        %v10181 = vunpack.c.l.b16 %v9913
        %v10182 = vunpack.c.h.b16 %v9913
        %v10183 = vunpack.c.l.b16 %v9914
        %v10184 = vunpack.c.h.b16 %v9914
        %v10185 = vunpack.c.l.b16 %v9915
        %v10186 = vunpack.c.h.b16 %v9915
        %v10187 = vunpack.c.l.b16 %v9916
        %v10188 = vunpack.c.h.b16 %v9916
        %v10189 = vunpack.c.l.b16 %v9917
        %v10190 = vunpack.c.h.b16 %v9917
        %v10191 = vunpack.c.l.b16 %v9918
        %v10192 = vunpack.c.h.b16 %v9918
        %v10193 = vunpack.c.l.b16 %v9919
        %v10194 = vunpack.c.h.b16 %v9919
        %v10195 = vunpack.c.l.b16 %v9920
        %v10196 = vunpack.c.h.b16 %v9920
        %v10197 = vunpack.c.l.b16 %v9921
        %v10198 = vunpack.c.h.b16 %v9921
        %v10199 = vunpack.c.l.b16 %v9922
        %v10200 = vunpack.c.h.b16 %v9922
        %v10201 = vunpack.c.l.b16 %v9923
        %v10202 = vunpack.c.h.b16 %v9923
        %v10203 = vunpack.c.l.b16 %v9924
        %v10204 = vunpack.c.h.b16 %v9924
        %v10205 = vunpack.c.l.b16 %v9925
        %v10206 = vunpack.c.h.b16 %v9925
        %v10207 = vunpack.c.l.b16 %v9926
        %v10208 = vunpack.c.h.b16 %v9926
        %v10209 = vunpack.c.l.b16 %v9927
        %v10210 = vunpack.c.h.b16 %v9927
        %v10211 = vunpack.c.l.b16 %v9928
        %v10212 = vunpack.c.h.b16 %v9928
        %v10213 = vunpack.c.l.b16 %v9929
        %v10214 = vunpack.c.h.b16 %v9929
        %v10215 = vunpack.c.l.b16 %v9930
        %v10216 = vunpack.c.h.b16 %v9930
        %v10217 = vunpack.c.l.b16 %v9931
        %v10218 = vunpack.c.h.b16 %v9931
        %v10219 = vunpack.c.l.b16 %v9932
        %v10220 = vunpack.c.h.b16 %v9932
        %v10221 = vunpack.c.l.b16 %v9933
        %v10222 = vunpack.c.h.b16 %v9933
        %v10223 = vunpack.c.l.b16 %v9934
        %v10224 = vunpack.c.h.b16 %v9934
        %v10225 = vunpack.c.l.b16 %v9935
        %v10226 = vunpack.c.h.b16 %v9935
        %v10227 = vunpack.c.l.b16 %v9936
        %v10228 = vunpack.c.h.b16 %v9936
        %v10229 = vunpack.c.l.b16 %v9937
        %v10230 = vunpack.c.h.b16 %v9937
        %v10231 = vunpack.c.l.b16 %v9938
        %v10232 = vunpack.c.h.b16 %v9938
        %v10233 = vunpack.c.l.b16 %v9939
        %v10234 = vunpack.c.h.b16 %v9939
        %v10235 = vunpack.c.l.b16 %v9940
        %v10236 = vunpack.c.h.b16 %v9940
        %v10237 = vunpack.c.l.b16 %v9941
        %v10238 = vunpack.c.h.b16 %v9941
        %v10239 = vunpack.c.l.b16 %v9942
        %v10240 = vunpack.c.h.b16 %v9942
        %v10241 = vunpack.c.l.b16 %v9943
        %v10242 = vunpack.c.h.b16 %v9943
        %v10243 = vunpack.c.l.b16 %v9944
        %v10244 = vunpack.c.h.b16 %v9944
        %v10245 = vunpack.c.l.b16 %v9945
        %v10246 = vunpack.c.h.b16 %v9945
        %v10247 = vunpack.c.l.b16 %v9946
        %v10248 = vunpack.c.h.b16 %v9946
        %v10249 = vunpack.c.l.b16 %v9947
        %v10250 = vunpack.c.h.b16 %v9947
        %v10251 = vunpack.c.l.b16 %v9948
        %v10252 = vunpack.c.h.b16 %v9948
        %v10253 = vunpack.c.l.b16 %v9949
        %v10254 = vunpack.c.h.b16 %v9949
        %v10255 = vunpack.c.l.b16 %v9950
        %v10256 = vunpack.c.h.b16 %v9950
        %v10257 = vunpack.c.l.b16 %v9951
        %v10258 = vunpack.c.h.b16 %v9951
        %v10259 = vunpack.c.l.b16 %v9952
        %v10260 = vunpack.c.h.b16 %v9952
        %v10261 = vunpack.c.l.b16 %v9953
        %v10262 = vunpack.c.h.b16 %v9953
        %v10263 = vunpack.c.l.b16 %v9954
        %v10264 = vunpack.c.h.b16 %v9954
        %v10265 = vunpack.c.l.b16 %v9955
        %v10266 = vunpack.c.h.b16 %v9955
        %v10267 = vunpack.c.l.b16 %v9956
        %v10268 = vunpack.c.h.b16 %v9956
        %v10269 = vunpack.c.l.b16 %v9957
        %v10270 = vunpack.c.h.b16 %v9957
        %v10271 = vunpack.c.l.b16 %v9958
        %v10272 = vunpack.c.h.b16 %v9958
        %v10273 = vunpack.c.l.b16 %v9959
        %v10274 = vunpack.c.h.b16 %v9959
        %v10275 = vunpack.c.l.b16 %v9960
        %v10276 = vunpack.c.h.b16 %v9960
        %v10277 = vunpack.c.l.b16 %v9961
        %v10278 = vunpack.c.h.b16 %v9961
        %v10279 = vunpack.c.l.b16 %v9962
        %v10280 = vunpack.c.h.b16 %v9962
        %v10281 = vunpack.c.l.b16 %v9963
        %v10282 = vunpack.c.h.b16 %v9963
        %v10283 = vunpack.c.l.b16 %v9964
        %v10284 = vunpack.c.h.b16 %v9964
        %v10285 = vunpack.c.l.b16 %v9965
        %v10286 = vunpack.c.h.b16 %v9965
        %v10287 = vunpack.c.l.b16 %v9966
        %v10288 = vunpack.c.h.b16 %v9966
        %v10289 = vunpack.c.l.b16 %v9967
        %v10290 = vunpack.c.h.b16 %v9967
        %v10291 = vunpack.c.l.b16 %v9968
        %v10292 = vunpack.c.h.b16 %v9968
        %v10293 = vunpack.c.l.b16 %v9969
        %v10294 = vunpack.c.h.b16 %v9969
        %v10295 = vunpack.c.l.b16 %v9970
        %v10296 = vunpack.c.h.b16 %v9970
        %v10297 = vunpack.c.l.b16 %v9971
        %v10298 = vunpack.c.h.b16 %v9971
        %v10299 = vunpack.c.l.b16 %v9972
        %v10300 = vunpack.c.h.b16 %v9972
        %v10301 = vunpack.c.l.b16 %v9973
        %v10302 = vunpack.c.h.b16 %v9973
        %v10303 = vunpack.c.l.b16 %v9974
        %v10304 = vunpack.c.h.b16 %v9974
        %v10305 = vunpack.c.l.b16 %v9975
        %v10306 = vunpack.c.h.b16 %v9975
        %v10307 = vunpack.c.l.b16 %v9976
        %v10308 = vunpack.c.h.b16 %v9976
        %v10309 = vunpack.c.l.b16 %v9977
        %v10310 = vunpack.c.h.b16 %v9977
        %v10311 = vunpack.c.l.b16 %v9978
        %v10312 = vunpack.c.h.b16 %v9978
        %v10313 = vunpack.c.l.b16 %v9979
        %v10314 = vunpack.c.h.b16 %v9979
        %v10315 = vunpack.c.l.b16 %v9980
        %v10316 = vunpack.c.h.b16 %v9980
        %v10317 = vunpack.c.l.b16 %v9981
        %v10318 = vunpack.c.h.b16 %v9981
        %v10319 = vunpack.c.l.b16 %v9982
        %v10320 = vunpack.c.h.b16 %v9982
        %v10321 = vunpack.c.l.b16 %v9983
        %v10322 = vunpack.c.h.b16 %v9983
        %v10323 = vunpack.c.l.b16 %v9984
        %v10324 = vunpack.c.h.b16 %v9984
        %v10325 = vunpack.c.l.b16 %v9985
        %v10326 = vunpack.c.h.b16 %v9985
        %v10327 = vunpack.c.l.b16 %v9986
        %v10328 = vunpack.c.h.b16 %v9986
        %v10329 = vunpack.c.l.b16 %v9987
        %v10330 = vunpack.c.h.b16 %v9987
        %v10331 = vunpack.c.l.b16 %v9988
        %v10332 = vunpack.c.h.b16 %v9988
        %v10333 = vunpack.c.l.b16 %v9989
        %v10334 = vunpack.c.h.b16 %v9989
        %v10335 = vunpack.c.l.b16 %v9990
        %v10336 = vunpack.c.h.b16 %v9990
        %v10337 = vunpack.c.l.b16 %v9991
        %v10338 = vunpack.c.h.b16 %v9991
        %v10339 = vunpack.c.l.b16 %v9992
        %v10340 = vunpack.c.h.b16 %v9992
        %v10341 = vunpack.c.l.b16 %v9993
        %v10342 = vunpack.c.h.b16 %v9993
        %v10343 = vunpack.c.l.b16 %v9994
        %v10344 = vunpack.c.h.b16 %v9994
        %v10345 = vunpack.c.l.b16 %v9995
        %v10346 = vunpack.c.h.b16 %v9995
        %v10347 = vunpack.c.l.b16 %v9996
        %v10348 = vunpack.c.h.b16 %v9996
        %v10349 = vunpack.c.l.b16 %v9997
        %v10350 = vunpack.c.h.b16 %v9997
        %v10351 = vunpack.c.l.b16 %v9998
        %v10352 = vunpack.c.h.b16 %v9998
        %v10353 = vunpack.c.l.b16 %v9999
        %v10354 = vunpack.c.h.b16 %v9999
        %v10355 = vunpack.c.l.b16 %v10000
        %v10356 = vunpack.c.h.b16 %v10000
        %v10357 = vunpack.c.l.b16 %v10001
        %v10358 = vunpack.c.h.b16 %v10001
        %v10359 = vunpack.c.l.b16 %v10002
        %v10360 = vunpack.c.h.b16 %v10002
        %v10361 = vunpack.c.l.b16 %v10003
        %v10362 = vunpack.c.h.b16 %v10003
        %v10363 = vunpack.c.l.b16 %v10004
        %v10364 = vunpack.c.h.b16 %v10004
        %v10365 = vunpack.c.l.b16 %v10005
        %v10366 = vunpack.c.h.b16 %v10005
        %v10367 = vunpack.c.l.b16 %v10006
        %v10368 = vunpack.c.h.b16 %v10006
        %v10369 = vunpack.c.l.b16 %v10007
        %v10370 = vunpack.c.h.b16 %v10007
        %v10371 = vunpack.c.l.b16 %v10008
        %v10372 = vunpack.c.h.b16 %v10008
        %v10373 = vunpack.c.l.b16 %v10009
        %v10374 = vunpack.c.h.b16 %v10009
        %v10375 = vunpack.c.l.b16 %v10010
        %v10376 = vunpack.c.h.b16 %v10010
        %v10377 = vunpack.c.l.b16 %v10011
        %v10378 = vunpack.c.h.b16 %v10011
        %v10379 = vunpack.c.l.b16 %v10012
        %v10380 = vunpack.c.h.b16 %v10012
        %v10381 = vunpack.c.l.b16 %v10013
        %v10382 = vunpack.c.h.b16 %v10013
        %v10383 = vunpack.c.l.b16 %v10014
        %v10384 = vunpack.c.h.b16 %v10014
        %v10385 = vunpack.c.l.b16 %v10015
        %v10386 = vunpack.c.h.b16 %v10015
        %v10387 = vunpack.c.l.b16 %v10016
        %v10388 = vunpack.c.h.b16 %v10016
        %v10389 = vunpack.c.l.b16 %v10017
        %v10390 = vunpack.c.h.b16 %v10017
        %v10391 = vunpack.c.l.b16 %v10018
        %v10392 = vunpack.c.h.b16 %v10018
        %v10393 = vunpack.c.l.b16 %v10019
        %v10394 = vunpack.c.h.b16 %v10019
        %v10395 = vunpack.c.l.b16 %v10020
        %v10396 = vunpack.c.h.b16 %v10020
        %v10397 = vunpack.c.l.b16 %v10021
        %v10398 = vunpack.c.h.b16 %v10021
        %v10399 = vunpack.c.l.b16 %v10022
        %v10400 = vunpack.c.h.b16 %v10022
        %v10401 = vunpack.c.l.b16 %v10023
        %v10402 = vunpack.c.h.b16 %v10023
        %v10403 = vunpack.c.l.b16 %v10024
        %v10404 = vunpack.c.h.b16 %v10024
        %v10405 = vunpack.c.l.b16 %v10025
        %v10406 = vunpack.c.h.b16 %v10025
        %v10407 = vunpack.c.l.b16 %v10026
        %v10408 = vunpack.c.h.b16 %v10026
        %v10409 = vunpack.c.l.b16 %v10027
        %v10410 = vunpack.c.h.b16 %v10027
        %v10411 = vunpack.c.l.b16 %v10028
        %v10412 = vunpack.c.h.b16 %v10028
        %v10413 = vunpack.c.l.b16 %v10029
        %v10414 = vunpack.c.h.b16 %v10029
        %v10415 = vunpack.c.l.b16 %v10030
        %v10416 = vunpack.c.h.b16 %v10030
        %v10417 = vunpack.c.l.b16 %v10031
        %v10418 = vunpack.c.h.b16 %v10031
        %v10419 = vunpack.c.l.b16 %v10032
        %v10420 = vunpack.c.h.b16 %v10032
        %v10421 = vunpack.c.l.b16 %v10033
        %v10422 = vunpack.c.h.b16 %v10033
        %v10423 = vunpack.c.l.b16 %v10034
        %v10424 = vunpack.c.h.b16 %v10034
        %v10425 = vunpack.c.l.b16 %v10035
        %v10426 = vunpack.c.h.b16 %v10035
        %v10427 = vunpack.c.l.b16 %v10036
        %v10428 = vunpack.c.h.b16 %v10036
        %v10429 = vunpack.c.l.b16 %v10037
        %v10430 = vunpack.c.h.b16 %v10037
        %v10431 = vunpack.c.l.b16 %v10038
        %v10432 = vunpack.c.h.b16 %v10038
        %v10433 = vunpack.c.l.b16 %v10039
        %v10434 = vunpack.c.h.b16 %v10039
        %v10435 = vunpack.c.l.b16 %v10040
        %v10436 = vunpack.c.h.b16 %v10040
        %v10437 = vpack.c.b16 %v10183, %v10181
        %v10438 = vpack.c.b16 %v10184, %v10182
        %v10439 = vpack.c.b16 %v10187, %v10185
        %v10440 = vpack.c.b16 %v10188, %v10186
        %v10441 = vpack.c.b16 %v10191, %v10189
        %v10442 = vpack.c.b16 %v10192, %v10190
        %v10443 = vpack.c.b16 %v10195, %v10193
        %v10444 = vpack.c.b16 %v10196, %v10194
        %v10445 = vpack.c.b16 %v10199, %v10197
        %v10446 = vpack.c.b16 %v10200, %v10198
        %v10447 = vpack.c.b16 %v10203, %v10201
        %v10448 = vpack.c.b16 %v10204, %v10202
        %v10449 = vpack.c.b16 %v10207, %v10205
        %v10450 = vpack.c.b16 %v10208, %v10206
        %v10451 = vpack.c.b16 %v10211, %v10209
        %v10452 = vpack.c.b16 %v10212, %v10210
        %v10453 = vpack.c.b16 %v10215, %v10213
        %v10454 = vpack.c.b16 %v10216, %v10214
        %v10455 = vpack.c.b16 %v10219, %v10217
        %v10456 = vpack.c.b16 %v10220, %v10218
        %v10457 = vpack.c.b16 %v10223, %v10221
        %v10458 = vpack.c.b16 %v10224, %v10222
        %v10459 = vpack.c.b16 %v10227, %v10225
        %v10460 = vpack.c.b16 %v10228, %v10226
        %v10461 = vpack.c.b16 %v10231, %v10229
        %v10462 = vpack.c.b16 %v10232, %v10230
        %v10463 = vpack.c.b16 %v10235, %v10233
        %v10464 = vpack.c.b16 %v10236, %v10234
        %v10465 = vpack.c.b16 %v10239, %v10237
        %v10466 = vpack.c.b16 %v10240, %v10238
        %v10467 = vpack.c.b16 %v10243, %v10241
        %v10468 = vpack.c.b16 %v10244, %v10242
        %v10469 = vpack.c.b16 %v10247, %v10245
        %v10470 = vpack.c.b16 %v10248, %v10246
        %v10471 = vpack.c.b16 %v10251, %v10249
        %v10472 = vpack.c.b16 %v10252, %v10250
        %v10473 = vpack.c.b16 %v10255, %v10253
        %v10474 = vpack.c.b16 %v10256, %v10254
        %v10475 = vpack.c.b16 %v10259, %v10257
        %v10476 = vpack.c.b16 %v10260, %v10258
        %v10477 = vpack.c.b16 %v10263, %v10261
        %v10478 = vpack.c.b16 %v10264, %v10262
        %v10479 = vpack.c.b16 %v10267, %v10265
        %v10480 = vpack.c.b16 %v10268, %v10266
        %v10481 = vpack.c.b16 %v10271, %v10269
        %v10482 = vpack.c.b16 %v10272, %v10270
        %v10483 = vpack.c.b16 %v10275, %v10273
        %v10484 = vpack.c.b16 %v10276, %v10274
        %v10485 = vpack.c.b16 %v10279, %v10277
        %v10486 = vpack.c.b16 %v10280, %v10278
        %v10487 = vpack.c.b16 %v10283, %v10281
        %v10488 = vpack.c.b16 %v10284, %v10282
        %v10489 = vpack.c.b16 %v10287, %v10285
        %v10490 = vpack.c.b16 %v10288, %v10286
        %v10491 = vpack.c.b16 %v10291, %v10289
        %v10492 = vpack.c.b16 %v10292, %v10290
        %v10493 = vpack.c.b16 %v10295, %v10293
        %v10494 = vpack.c.b16 %v10296, %v10294
        %v10495 = vpack.c.b16 %v10299, %v10297
        %v10496 = vpack.c.b16 %v10300, %v10298
        %v10497 = vpack.c.b16 %v10303, %v10301
        %v10498 = vpack.c.b16 %v10304, %v10302
        %v10499 = vpack.c.b16 %v10307, %v10305
        %v10500 = vpack.c.b16 %v10308, %v10306
        %v10501 = vpack.c.b16 %v10311, %v10309
        %v10502 = vpack.c.b16 %v10312, %v10310
        %v10503 = vpack.c.b16 %v10315, %v10313
        %v10504 = vpack.c.b16 %v10316, %v10314
        %v10505 = vpack.c.b16 %v10319, %v10317
        %v10506 = vpack.c.b16 %v10320, %v10318
        %v10507 = vpack.c.b16 %v10323, %v10321
        %v10508 = vpack.c.b16 %v10324, %v10322
        %v10509 = vpack.c.b16 %v10327, %v10325
        %v10510 = vpack.c.b16 %v10328, %v10326
        %v10511 = vpack.c.b16 %v10331, %v10329
        %v10512 = vpack.c.b16 %v10332, %v10330
        %v10513 = vpack.c.b16 %v10335, %v10333
        %v10514 = vpack.c.b16 %v10336, %v10334
        %v10515 = vpack.c.b16 %v10339, %v10337
        %v10516 = vpack.c.b16 %v10340, %v10338
        %v10517 = vpack.c.b16 %v10343, %v10341
        %v10518 = vpack.c.b16 %v10344, %v10342
        %v10519 = vpack.c.b16 %v10347, %v10345
        %v10520 = vpack.c.b16 %v10348, %v10346
        %v10521 = vpack.c.b16 %v10351, %v10349
        %v10522 = vpack.c.b16 %v10352, %v10350
        %v10523 = vpack.c.b16 %v10355, %v10353
        %v10524 = vpack.c.b16 %v10356, %v10354
        %v10525 = vpack.c.b16 %v10359, %v10357
        %v10526 = vpack.c.b16 %v10360, %v10358
        %v10527 = vpack.c.b16 %v10363, %v10361
        %v10528 = vpack.c.b16 %v10364, %v10362
        %v10529 = vpack.c.b16 %v10367, %v10365
        %v10530 = vpack.c.b16 %v10368, %v10366
        %v10531 = vpack.c.b16 %v10371, %v10369
        %v10532 = vpack.c.b16 %v10372, %v10370
        %v10533 = vpack.c.b16 %v10375, %v10373
        %v10534 = vpack.c.b16 %v10376, %v10374
        %v10535 = vpack.c.b16 %v10379, %v10377
        %v10536 = vpack.c.b16 %v10380, %v10378
        %v10537 = vpack.c.b16 %v10383, %v10381
        %v10538 = vpack.c.b16 %v10384, %v10382
        %v10539 = vpack.c.b16 %v10387, %v10385
        %v10540 = vpack.c.b16 %v10388, %v10386
        %v10541 = vpack.c.b16 %v10391, %v10389
        %v10542 = vpack.c.b16 %v10392, %v10390
        %v10543 = vpack.c.b16 %v10395, %v10393
        %v10544 = vpack.c.b16 %v10396, %v10394
        %v10545 = vpack.c.b16 %v10399, %v10397
        %v10546 = vpack.c.b16 %v10400, %v10398
        %v10547 = vpack.c.b16 %v10403, %v10401
        %v10548 = vpack.c.b16 %v10404, %v10402
        %v10549 = vpack.c.b16 %v10407, %v10405
        %v10550 = vpack.c.b16 %v10408, %v10406
        %v10551 = vpack.c.b16 %v10411, %v10409
        %v10552 = vpack.c.b16 %v10412, %v10410
        %v10553 = vpack.c.b16 %v10415, %v10413
        %v10554 = vpack.c.b16 %v10416, %v10414
        %v10555 = vpack.c.b16 %v10419, %v10417
        %v10556 = vpack.c.b16 %v10420, %v10418
        %v10557 = vpack.c.b16 %v10423, %v10421
        %v10558 = vpack.c.b16 %v10424, %v10422
        %v10559 = vpack.c.b16 %v10427, %v10425
        %v10560 = vpack.c.b16 %v10428, %v10426
        %v10561 = vpack.c.b16 %v10431, %v10429
        %v10562 = vpack.c.b16 %v10432, %v10430
        %v10563 = vpack.c.b16 %v10435, %v10433
        %v10564 = vpack.c.b16 %v10436, %v10434
        %10693 = vmatprep.subr.bf16.mxu0 %v10438
        %10694 = vmatpush1.bf16.msra.mxu0 %v10437
        %10695 = vmatprep.subr.bf16.mxu0 %v10440
        %10696 = vmatpush1.bf16.msra.mxu0 %v10439
        %10697 = vmatprep.subr.bf16.mxu0 %v10442
        %10698 = vmatpush1.bf16.msra.mxu0 %v10441
        %10699 = vmatprep.subr.bf16.mxu0 %v10444
        %10700 = vmatpush1.bf16.msra.mxu0 %v10443
        %10701 = vmatprep.subr.bf16.mxu0 %v10446
        %10702 = vmatpush1.bf16.msra.mxu0 %v10445
        %10703 = vmatprep.subr.bf16.mxu0 %v10448
        %10704 = vmatpush1.bf16.msra.mxu0 %v10447
        %10705 = vmatprep.subr.bf16.mxu0 %v10450
        %10706 = vmatpush1.bf16.msra.mxu0 %v10449
        %10707 = vmatprep.subr.bf16.mxu0 %v10452
        %10708 = vmatpush1.bf16.msra.mxu0 %v10451
        %10709 = vmatprep.subr.bf16.mxu0 %v10454
        %10710 = vmatpush1.bf16.msra.mxu0 %v10453
        %10711 = vmatprep.subr.bf16.mxu0 %v10456
        %10712 = vmatpush1.bf16.msra.mxu0 %v10455
        %10713 = vmatprep.subr.bf16.mxu0 %v10458
        %10714 = vmatpush1.bf16.msra.mxu0 %v10457
        %10715 = vmatprep.subr.bf16.mxu0 %v10460
        %10716 = vmatpush1.bf16.msra.mxu0 %v10459
        %10717 = vmatprep.subr.bf16.mxu0 %v10462
        %10718 = vmatpush1.bf16.msra.mxu0 %v10461
        %10719 = vmatprep.subr.bf16.mxu0 %v10464
        %10720 = vmatpush1.bf16.msra.mxu0 %v10463
        %10721 = vmatprep.subr.bf16.mxu0 %v10466
        %10722 = vmatpush1.bf16.msra.mxu0 %v10465
        %10723 = vmatprep.subr.bf16.mxu0 %v10468
        %10724 = vmatpush1.bf16.msra.mxu0 %v10467
        %10725 = vmatprep.mubr.bf16.mxu0 %v9850
        %10726 = vmatmul.mubr.bf16.gmra.mrb[0].mxu0 %v9849
        %v10727 = vpop.f32.mrb[0].mxu0
        %v10728 = vadd.f32 %v10046, %v10727
        %v10729 = vpop.f32.mrb[0].mxu0
        %v10730 = vadd.f32 %v10050, %v10729
        %v10731 = vpop.f32.mrb[0].mxu0
        %v10732 = vadd.f32 %v10046, %v10731
        %v10733 = vpop.f32.mrb[0].mxu0
        %v10734 = vadd.f32 %v10050, %v10733
        %10735 = vmatprep.mubr.bf16.mxu0 %v9858
        %10736 = vmatmul.mubr.bf16.gmra.mrb[0].mxu0 %v9857
        %v10737 = vpop.f32.mrb[0].mxu0
        %v10738 = vadd.f32 %v10046, %v10737
        %v10739 = vpop.f32.mrb[0].mxu0
        %v10740 = vadd.f32 %v10050, %v10739
        %v10741 = vpop.f32.mrb[0].mxu0
        %v10742 = vadd.f32 %v10046, %v10741
        %v10743 = vpop.f32.mrb[0].mxu0
        %v10744 = vadd.f32 %v10050, %v10743
        %10745 = vmatprep.mubr.bf16.mxu0 %v9866
        %10746 = vmatmul.mubr.bf16.gmra.mrb[0].mxu0 %v9865
        %v10747 = vpop.f32.mrb[0].mxu0
        %v10748 = vadd.f32 %v10046, %v10747
        %v10749 = vpop.f32.mrb[0].mxu0
        %v10750 = vadd.f32 %v10050, %v10749
        %v10751 = vpop.f32.mrb[0].mxu0
        %v10752 = vadd.f32 %v10046, %v10751
        %v10753 = vpop.f32.mrb[0].mxu0
        %v10754 = vadd.f32 %v10050, %v10753
        %10755 = vmatprep.mubr.bf16.mxu0 %v9874
        %10756 = vmatmul.mubr.bf16.gmra.mrb[0].mxu0 %v9873
        %v10757 = vpop.f32.mrb[0].mxu0
        %v10758 = vadd.f32 %v10046, %v10757
        %v10759 = vpop.f32.mrb[0].mxu0
        %v10760 = vadd.f32 %v10050, %v10759
        %v10761 = vpop.f32.mrb[0].mxu0
        %v10762 = vadd.f32 %v10046, %v10761
        %v10763 = vpop.f32.mrb[0].mxu0
        %v10764 = vadd.f32 %v10050, %v10763
        %10765 = vmatprep.mubr.bf16.mxu0 %v9882
        %10766 = vmatmul.mubr.bf16.gmra.mrb[0].mxu0 %v9881
        %v10767 = vpop.f32.mrb[0].mxu0
        %v10768 = vadd.f32 %v10046, %v10767
        %v10769 = vpop.f32.mrb[0].mxu0
        %v10770 = vadd.f32 %v10050, %v10769
        %v10771 = vpop.f32.mrb[0].mxu0
        %v10772 = vadd.f32 %v10046, %v10771
        %v10773 = vpop.f32.mrb[0].mxu0
        %v10774 = vadd.f32 %v10050, %v10773
        %10775 = vmatprep.mubr.bf16.mxu0 %v9890
        %10776 = vmatmul.mubr.bf16.gmra.mrb[0].mxu0 %v9889
        %v10777 = vpop.f32.mrb[0].mxu0
        %v10778 = vadd.f32 %v10046, %v10777
        %v10779 = vpop.f32.mrb[0].mxu0
        %v10780 = vadd.f32 %v10050, %v10779
        %v10781 = vpop.f32.mrb[0].mxu0
        %v10782 = vadd.f32 %v10046, %v10781
        %v10783 = vpop.f32.mrb[0].mxu0
        %v10784 = vadd.f32 %v10050, %v10783
        %10785 = vmatprep.mubr.bf16.mxu0 %v9898
        %10786 = vmatmul.mubr.bf16.gmra.mrb[0].mxu0 %v9897
        %v10787 = vpop.f32.mrb[0].mxu0
        %v10788 = vadd.f32 %v10046, %v10787
        %v10789 = vpop.f32.mrb[0].mxu0
        %v10790 = vadd.f32 %v10050, %v10789
        %v10791 = vpop.f32.mrb[0].mxu0
        %v10792 = vadd.f32 %v10046, %v10791
        %v10793 = vpop.f32.mrb[0].mxu0
        %v10794 = vadd.f32 %v10050, %v10793
        %10795 = vmatprep.mubr.bf16.mxu0 %v9906
        %10796 = vmatmul.mubr.bf16.gmra.mrb[0].mxu0 %v9905
        %v10797 = vpop.f32.mrb[0].mxu0
        %v10798 = vadd.f32 %v10046, %v10797
        %v10799 = vpop.f32.mrb[0].mxu0
        %v10800 = vadd.f32 %v10050, %v10799
        %v10801 = vpop.f32.mrb[0].mxu0
        %v10802 = vadd.f32 %v10046, %v10801
        %v10803 = vpop.f32.mrb[0].mxu0
        %v10804 = vadd.f32 %v10050, %v10803
        %10805 = vdwg.mxu0
        %10806 = vmatprep.subr.bf16.mxu0 %v10470
        %10807 = vmatpush1.bf16.msra.mxu0 %v10469
        %10808 = vmatprep.subr.bf16.mxu0 %v10472
        %10809 = vmatpush1.bf16.msra.mxu0 %v10471
        %10810 = vmatprep.subr.bf16.mxu0 %v10474
        %10811 = vmatpush1.bf16.msra.mxu0 %v10473
        %10812 = vmatprep.subr.bf16.mxu0 %v10476
        %10813 = vmatpush1.bf16.msra.mxu0 %v10475
        %10814 = vmatprep.subr.bf16.mxu0 %v10478
        %10815 = vmatpush1.bf16.msra.mxu0 %v10477
        %10816 = vmatprep.subr.bf16.mxu0 %v10480
        %10817 = vmatpush1.bf16.msra.mxu0 %v10479
        %10818 = vmatprep.subr.bf16.mxu0 %v10482
        %10819 = vmatpush1.bf16.msra.mxu0 %v10481
        %10820 = vmatprep.subr.bf16.mxu0 %v10484
        %10821 = vmatpush1.bf16.msra.mxu0 %v10483
        %10822 = vmatprep.subr.bf16.mxu0 %v10486
        %10823 = vmatpush1.bf16.msra.mxu0 %v10485
        %10824 = vmatprep.subr.bf16.mxu0 %v10488
        %10825 = vmatpush1.bf16.msra.mxu0 %v10487
        %10826 = vmatprep.subr.bf16.mxu0 %v10490
        %10827 = vmatpush1.bf16.msra.mxu0 %v10489
        %10828 = vmatprep.subr.bf16.mxu0 %v10492
        %10829 = vmatpush1.bf16.msra.mxu0 %v10491
        %10830 = vmatprep.subr.bf16.mxu0 %v10494
        %10831 = vmatpush1.bf16.msra.mxu0 %v10493
        %10832 = vmatprep.subr.bf16.mxu0 %v10496
        %10833 = vmatpush1.bf16.msra.mxu0 %v10495
        %10834 = vmatprep.subr.bf16.mxu0 %v10498
        %10835 = vmatpush1.bf16.msra.mxu0 %v10497
        %10836 = vmatprep.subr.bf16.mxu0 %v10500
        %10837 = vmatpush1.bf16.msra.mxu0 %v10499
        %10838 = vmatprep.mubr.bf16.mxu0 %v9852
        %10839 = vmatmul.mubr.bf16.gmra.mrb[0].mxu0 %v9851
        %v10840 = vpop.f32.mrb[0].mxu0
        %v10841 = vadd.f32 %v10728, %v10840
        %v10842 = vpop.f32.mrb[0].mxu0
        %v10843 = vadd.f32 %v10730, %v10842
        %v10844 = vpop.f32.mrb[0].mxu0
        %v10845 = vadd.f32 %v10732, %v10844
        %v10846 = vpop.f32.mrb[0].mxu0
        %v10847 = vadd.f32 %v10734, %v10846
        %10848 = vmatprep.mubr.bf16.mxu0 %v9860
        %10849 = vmatmul.mubr.bf16.gmra.mrb[0].mxu0 %v9859
        %v10850 = vpop.f32.mrb[0].mxu0
        %v10851 = vadd.f32 %v10738, %v10850
        %v10852 = vpop.f32.mrb[0].mxu0
        %v10853 = vadd.f32 %v10740, %v10852
        %v10854 = vpop.f32.mrb[0].mxu0
        %v10855 = vadd.f32 %v10742, %v10854
        %v10856 = vpop.f32.mrb[0].mxu0
        %v10857 = vadd.f32 %v10744, %v10856
        %10858 = vmatprep.mubr.bf16.mxu0 %v9868
        %10859 = vmatmul.mubr.bf16.gmra.mrb[0].mxu0 %v9867
        %v10860 = vpop.f32.mrb[0].mxu0
        %v10861 = vadd.f32 %v10748, %v10860
        %v10862 = vpop.f32.mrb[0].mxu0
        %v10863 = vadd.f32 %v10750, %v10862
        %v10864 = vpop.f32.mrb[0].mxu0
        %v10865 = vadd.f32 %v10752, %v10864
        %v10866 = vpop.f32.mrb[0].mxu0
        %v10867 = vadd.f32 %v10754, %v10866
        %10868 = vmatprep.mubr.bf16.mxu0 %v9876
        %10869 = vmatmul.mubr.bf16.gmra.mrb[0].mxu0 %v9875
        %v10870 = vpop.f32.mrb[0].mxu0
        %v10871 = vadd.f32 %v10758, %v10870
        %v10872 = vpop.f32.mrb[0].mxu0
        %v10873 = vadd.f32 %v10760, %v10872
        %v10874 = vpop.f32.mrb[0].mxu0
        %v10875 = vadd.f32 %v10762, %v10874
        %v10876 = vpop.f32.mrb[0].mxu0
        %v10877 = vadd.f32 %v10764, %v10876
        %10878 = vmatprep.mubr.bf16.mxu0 %v9884
        %10879 = vmatmul.mubr.bf16.gmra.mrb[0].mxu0 %v9883
        %v10880 = vpop.f32.mrb[0].mxu0
        %v10881 = vadd.f32 %v10768, %v10880
        %v10882 = vpop.f32.mrb[0].mxu0
        %v10883 = vadd.f32 %v10770, %v10882
        %v10884 = vpop.f32.mrb[0].mxu0
        %v10885 = vadd.f32 %v10772, %v10884
        %v10886 = vpop.f32.mrb[0].mxu0
        %v10887 = vadd.f32 %v10774, %v10886
        %10888 = vmatprep.mubr.bf16.mxu0 %v9892
        %10889 = vmatmul.mubr.bf16.gmra.mrb[0].mxu0 %v9891
        %v10890 = vpop.f32.mrb[0].mxu0
        %v10891 = vadd.f32 %v10778, %v10890
        %v10892 = vpop.f32.mrb[0].mxu0
        %v10893 = vadd.f32 %v10780, %v10892
        %v10894 = vpop.f32.mrb[0].mxu0
        %v10895 = vadd.f32 %v10782, %v10894
        %v10896 = vpop.f32.mrb[0].mxu0
        %v10897 = vadd.f32 %v10784, %v10896
        %10898 = vmatprep.mubr.bf16.mxu0 %v9900
        %10899 = vmatmul.mubr.bf16.gmra.mrb[0].mxu0 %v9899
        %v10900 = vpop.f32.mrb[0].mxu0
        %v10901 = vadd.f32 %v10788, %v10900
        %v10902 = vpop.f32.mrb[0].mxu0
        %v10903 = vadd.f32 %v10790, %v10902
        %v10904 = vpop.f32.mrb[0].mxu0
        %v10905 = vadd.f32 %v10792, %v10904
        %v10906 = vpop.f32.mrb[0].mxu0
        %v10907 = vadd.f32 %v10794, %v10906
        %10908 = vmatprep.mubr.bf16.mxu0 %v9908
        %10909 = vmatmul.mubr.bf16.gmra.mrb[0].mxu0 %v9907
        %v10910 = vpop.f32.mrb[0].mxu0
        %v10911 = vadd.f32 %v10798, %v10910
        %v10912 = vpop.f32.mrb[0].mxu0
        %v10913 = vadd.f32 %v10800, %v10912
        %v10914 = vpop.f32.mrb[0].mxu0
        %v10915 = vadd.f32 %v10802, %v10914
        %v10916 = vpop.f32.mrb[0].mxu0
        %v10917 = vadd.f32 %v10804, %v10916
        %10918 = vdwg.mxu0
        %10919 = vmatprep.subr.bf16.mxu0 %v10502
        %10920 = vmatpush1.bf16.msra.mxu0 %v10501
        %10921 = vmatprep.subr.bf16.mxu0 %v10504
        %10922 = vmatpush1.bf16.msra.mxu0 %v10503
        %10923 = vmatprep.subr.bf16.mxu0 %v10506
        %10924 = vmatpush1.bf16.msra.mxu0 %v10505
        %10925 = vmatprep.subr.bf16.mxu0 %v10508
        %10926 = vmatpush1.bf16.msra.mxu0 %v10507
        %10927 = vmatprep.subr.bf16.mxu0 %v10510
        %10928 = vmatpush1.bf16.msra.mxu0 %v10509
        %10929 = vmatprep.subr.bf16.mxu0 %v10512
        %10930 = vmatpush1.bf16.msra.mxu0 %v10511
        %10931 = vmatprep.subr.bf16.mxu0 %v10514
        %10932 = vmatpush1.bf16.msra.mxu0 %v10513
        %10933 = vmatprep.subr.bf16.mxu0 %v10516
        %10934 = vmatpush1.bf16.msra.mxu0 %v10515
        %10935 = vmatprep.subr.bf16.mxu0 %v10518
        %10936 = vmatpush1.bf16.msra.mxu0 %v10517
        %10937 = vmatprep.subr.bf16.mxu0 %v10520
        %10938 = vmatpush1.bf16.msra.mxu0 %v10519
        %10939 = vmatprep.subr.bf16.mxu0 %v10522
        %10940 = vmatpush1.bf16.msra.mxu0 %v10521
        %10941 = vmatprep.subr.bf16.mxu0 %v10524
        %10942 = vmatpush1.bf16.msra.mxu0 %v10523
        %10943 = vmatprep.subr.bf16.mxu0 %v10526
        %10944 = vmatpush1.bf16.msra.mxu0 %v10525
        %10945 = vmatprep.subr.bf16.mxu0 %v10528
        %10946 = vmatpush1.bf16.msra.mxu0 %v10527
        %10947 = vmatprep.subr.bf16.mxu0 %v10530
        %10948 = vmatpush1.bf16.msra.mxu0 %v10529
        %10949 = vmatprep.subr.bf16.mxu0 %v10532
        %10950 = vmatpush1.bf16.msra.mxu0 %v10531
        %10951 = vmatprep.mubr.bf16.mxu0 %v9854
        %10952 = vmatmul.mubr.bf16.gmra.mrb[0].mxu0 %v9853
        %v10953 = vpop.f32.mrb[0].mxu0
        %v10954 = vadd.f32 %v10841, %v10953
        %v10955 = vpop.f32.mrb[0].mxu0
        %v10956 = vadd.f32 %v10843, %v10955
        %v10957 = vpop.f32.mrb[0].mxu0
        %v10958 = vadd.f32 %v10845, %v10957
        %v10959 = vpop.f32.mrb[0].mxu0
        %v10960 = vadd.f32 %v10847, %v10959
        %10961 = vmatprep.mubr.bf16.mxu0 %v9862
        %10962 = vmatmul.mubr.bf16.gmra.mrb[0].mxu0 %v9861
        %v10963 = vpop.f32.mrb[0].mxu0
        %v10964 = vadd.f32 %v10851, %v10963
        %v10965 = vpop.f32.mrb[0].mxu0
        %v10966 = vadd.f32 %v10853, %v10965
        %v10967 = vpop.f32.mrb[0].mxu0
        %v10968 = vadd.f32 %v10855, %v10967
        %v10969 = vpop.f32.mrb[0].mxu0
        %v10970 = vadd.f32 %v10857, %v10969
        %10971 = vmatprep.mubr.bf16.mxu0 %v9870
        %10972 = vmatmul.mubr.bf16.gmra.mrb[0].mxu0 %v9869
        %v10973 = vpop.f32.mrb[0].mxu0
        %v10974 = vadd.f32 %v10861, %v10973
        %v10975 = vpop.f32.mrb[0].mxu0
        %v10976 = vadd.f32 %v10863, %v10975
        %v10977 = vpop.f32.mrb[0].mxu0
        %v10978 = vadd.f32 %v10865, %v10977
        %v10979 = vpop.f32.mrb[0].mxu0
        %v10980 = vadd.f32 %v10867, %v10979
        %10981 = vmatprep.mubr.bf16.mxu0 %v9878
        %10982 = vmatmul.mubr.bf16.gmra.mrb[0].mxu0 %v9877
        %v10983 = vpop.f32.mrb[0].mxu0
        %v10984 = vadd.f32 %v10871, %v10983
        %v10985 = vpop.f32.mrb[0].mxu0
        %v10986 = vadd.f32 %v10873, %v10985
        %v10987 = vpop.f32.mrb[0].mxu0
        %v10988 = vadd.f32 %v10875, %v10987
        %v10989 = vpop.f32.mrb[0].mxu0
        %v10990 = vadd.f32 %v10877, %v10989
        %10991 = vmatprep.mubr.bf16.mxu0 %v9886
        %10992 = vmatmul.mubr.bf16.gmra.mrb[0].mxu0 %v9885
        %v10993 = vpop.f32.mrb[0].mxu0
        %v10994 = vadd.f32 %v10881, %v10993
        %v10995 = vpop.f32.mrb[0].mxu0
        %v10996 = vadd.f32 %v10883, %v10995
        %v10997 = vpop.f32.mrb[0].mxu0
        %v10998 = vadd.f32 %v10885, %v10997
        %v10999 = vpop.f32.mrb[0].mxu0
        %v11000 = vadd.f32 %v10887, %v10999
        %11001 = vmatprep.mubr.bf16.mxu0 %v9894
        %11002 = vmatmul.mubr.bf16.gmra.mrb[0].mxu0 %v9893
        %v11003 = vpop.f32.mrb[0].mxu0
        %v11004 = vadd.f32 %v10891, %v11003
        %v11005 = vpop.f32.mrb[0].mxu0
        %v11006 = vadd.f32 %v10893, %v11005
        %v11007 = vpop.f32.mrb[0].mxu0
        %v11008 = vadd.f32 %v10895, %v11007
        %v11009 = vpop.f32.mrb[0].mxu0
        %v11010 = vadd.f32 %v10897, %v11009
        %11011 = vmatprep.mubr.bf16.mxu0 %v9902
        %11012 = vmatmul.mubr.bf16.gmra.mrb[0].mxu0 %v9901
        %v11013 = vpop.f32.mrb[0].mxu0
        %v11014 = vadd.f32 %v10901, %v11013
        %v11015 = vpop.f32.mrb[0].mxu0
        %v11016 = vadd.f32 %v10903, %v11015
        %v11017 = vpop.f32.mrb[0].mxu0
        %v11018 = vadd.f32 %v10905, %v11017
        %v11019 = vpop.f32.mrb[0].mxu0
        %v11020 = vadd.f32 %v10907, %v11019
        %11021 = vmatprep.mubr.bf16.mxu0 %v9910
        %11022 = vmatmul.mubr.bf16.gmra.mrb[0].mxu0 %v9909
        %v11023 = vpop.f32.mrb[0].mxu0
        %v11024 = vadd.f32 %v10911, %v11023
        %v11025 = vpop.f32.mrb[0].mxu0
        %v11026 = vadd.f32 %v10913, %v11025
        %v11027 = vpop.f32.mrb[0].mxu0
        %v11028 = vadd.f32 %v10915, %v11027
        %v11029 = vpop.f32.mrb[0].mxu0
        %v11030 = vadd.f32 %v10917, %v11029
        %11031 = vdwg.mxu0
        %11032 = vmatprep.subr.bf16.mxu0 %v10534
        %11033 = vmatpush1.bf16.msra.mxu0 %v10533
        %11034 = vmatprep.subr.bf16.mxu0 %v10536
        %11035 = vmatpush1.bf16.msra.mxu0 %v10535
        %11036 = vmatprep.subr.bf16.mxu0 %v10538
        %11037 = vmatpush1.bf16.msra.mxu0 %v10537
        %11038 = vmatprep.subr.bf16.mxu0 %v10540
        %11039 = vmatpush1.bf16.msra.mxu0 %v10539
        %11040 = vmatprep.subr.bf16.mxu0 %v10542
        %11041 = vmatpush1.bf16.msra.mxu0 %v10541
        %11042 = vmatprep.subr.bf16.mxu0 %v10544
        %11043 = vmatpush1.bf16.msra.mxu0 %v10543
        %11044 = vmatprep.subr.bf16.mxu0 %v10546
        %11045 = vmatpush1.bf16.msra.mxu0 %v10545
        %11046 = vmatprep.subr.bf16.mxu0 %v10548
        %11047 = vmatpush1.bf16.msra.mxu0 %v10547
        %11048 = vmatprep.subr.bf16.mxu0 %v10550
        %11049 = vmatpush1.bf16.msra.mxu0 %v10549
        %11050 = vmatprep.subr.bf16.mxu0 %v10552
        %11051 = vmatpush1.bf16.msra.mxu0 %v10551
        %11052 = vmatprep.subr.bf16.mxu0 %v10554
        %11053 = vmatpush1.bf16.msra.mxu0 %v10553
        %11054 = vmatprep.subr.bf16.mxu0 %v10556
        %11055 = vmatpush1.bf16.msra.mxu0 %v10555
        %11056 = vmatprep.subr.bf16.mxu0 %v10558
        %11057 = vmatpush1.bf16.msra.mxu0 %v10557
        %11058 = vmatprep.subr.bf16.mxu0 %v10560
        %11059 = vmatpush1.bf16.msra.mxu0 %v10559
        %11060 = vmatprep.subr.bf16.mxu0 %v10562
        %11061 = vmatpush1.bf16.msra.mxu0 %v10561
        %11062 = vmatprep.subr.bf16.mxu0 %v10564
        %11063 = vmatpush1.bf16.msra.mxu0 %v10563
        %11064 = vmatprep.mubr.bf16.mxu0 %v9856
        %11065 = vmatmul.mubr.bf16.gmra.mrb[0].mxu0 %v9855
        %v11066 = vpop.f32.mrb[0].mxu0
        %v11067 = vadd.f32 %v10954, %v11066
        %v11068 = vpop.f32.mrb[0].mxu0
        %v11069 = vadd.f32 %v10956, %v11068
        %v11070 = vpop.f32.mrb[0].mxu0
        %v11071 = vadd.f32 %v10958, %v11070
        %v11072 = vpop.f32.mrb[0].mxu0
        %v11073 = vadd.f32 %v10960, %v11072
        %11074 = vmatprep.mubr.bf16.mxu0 %v9864
        %11075 = vmatmul.mubr.bf16.gmra.mrb[0].mxu0 %v9863
        %v11076 = vpop.f32.mrb[0].mxu0
        %v11077 = vadd.f32 %v10964, %v11076
        %v11078 = vpop.f32.mrb[0].mxu0
        %v11079 = vadd.f32 %v10966, %v11078
        %v11080 = vpop.f32.mrb[0].mxu0
        %v11081 = vadd.f32 %v10968, %v11080
        %v11082 = vpop.f32.mrb[0].mxu0
        %v11083 = vadd.f32 %v10970, %v11082
        %11084 = vmatprep.mubr.bf16.mxu0 %v9872
        %11085 = vmatmul.mubr.bf16.gmra.mrb[0].mxu0 %v9871
        %v11086 = vpop.f32.mrb[0].mxu0
        %v11087 = vadd.f32 %v10974, %v11086
        %v11088 = vpop.f32.mrb[0].mxu0
        %v11089 = vadd.f32 %v10976, %v11088
        %v11090 = vpop.f32.mrb[0].mxu0
        %v11091 = vadd.f32 %v10978, %v11090
        %v11092 = vpop.f32.mrb[0].mxu0
        %v11093 = vadd.f32 %v10980, %v11092
        %11094 = vmatprep.mubr.bf16.mxu0 %v9880
        %11095 = vmatmul.mubr.bf16.gmra.mrb[0].mxu0 %v9879
        %v11096 = vpop.f32.mrb[0].mxu0
        %v11097 = vadd.f32 %v10984, %v11096
        %v11098 = vpop.f32.mrb[0].mxu0
        %v11099 = vadd.f32 %v10986, %v11098
        %v11100 = vpop.f32.mrb[0].mxu0
        %v11101 = vadd.f32 %v10988, %v11100
        %v11102 = vpop.f32.mrb[0].mxu0
        %v11103 = vadd.f32 %v10990, %v11102
        %11104 = vmatprep.mubr.bf16.mxu0 %v9888
        %11105 = vmatmul.mubr.bf16.gmra.mrb[0].mxu0 %v9887
        %v11106 = vpop.f32.mrb[0].mxu0
        %v11107 = vadd.f32 %v10994, %v11106
        %v11108 = vpop.f32.mrb[0].mxu0
        %v11109 = vadd.f32 %v10996, %v11108
        %v11110 = vpop.f32.mrb[0].mxu0
        %v11111 = vadd.f32 %v10998, %v11110
        %v11112 = vpop.f32.mrb[0].mxu0
        %v11113 = vadd.f32 %v11000, %v11112
        %11114 = vmatprep.mubr.bf16.mxu0 %v9896
        %11115 = vmatmul.mubr.bf16.gmra.mrb[0].mxu0 %v9895
        %v11116 = vpop.f32.mrb[0].mxu0
        %v11117 = vadd.f32 %v11004, %v11116
        %v11118 = vpop.f32.mrb[0].mxu0
        %v11119 = vadd.f32 %v11006, %v11118
        %v11120 = vpop.f32.mrb[0].mxu0
        %v11121 = vadd.f32 %v11008, %v11120
        %v11122 = vpop.f32.mrb[0].mxu0
        %v11123 = vadd.f32 %v11010, %v11122
        %11124 = vmatprep.mubr.bf16.mxu0 %v9904
        %11125 = vmatmul.mubr.bf16.gmra.mrb[0].mxu0 %v9903
        %v11126 = vpop.f32.mrb[0].mxu0
        %v11127 = vadd.f32 %v11014, %v11126
        %v11128 = vpop.f32.mrb[0].mxu0
        %v11129 = vadd.f32 %v11016, %v11128
        %v11130 = vpop.f32.mrb[0].mxu0
        %v11131 = vadd.f32 %v11018, %v11130
        %v11132 = vpop.f32.mrb[0].mxu0
        %v11133 = vadd.f32 %v11020, %v11132
        %11134 = vmatprep.mubr.bf16.mxu0 %v9912
        %11135 = vmatmul.mubr.bf16.gmra.mrb[0].mxu0 %v9911
        %v11136 = vpop.f32.mrb[0].mxu0
        %v11137 = vadd.f32 %v11024, %v11136
        %v11138 = vpop.f32.mrb[0].mxu0
        %v11139 = vadd.f32 %v11026, %v11138
        %v11140 = vpop.f32.mrb[0].mxu0
        %v11141 = vadd.f32 %v11028, %v11140
        %v11142 = vpop.f32.mrb[0].mxu0
        %v11143 = vadd.f32 %v11030, %v11142
        %11144 = vdwg.mxu0
        %v11145 = vadd.f32 %v7043, %v11067
        %v11146 = vadd.f32 %v7044, %v11069
        %v11147 = vadd.f32 %v7045, %v11071
        %v11148 = vadd.f32 %v7046, %v11073
        %v11149 = vadd.f32 %v7047, %v11077
        %v11150 = vadd.f32 %v7048, %v11079
        %v11151 = vadd.f32 %v7049, %v11081
        %v11152 = vadd.f32 %v7050, %v11083
        %v11153 = vadd.f32 %v7051, %v11087
        %v11154 = vadd.f32 %v7052, %v11089
        %v11155 = vadd.f32 %v7053, %v11091
        %v11156 = vadd.f32 %v7054, %v11093
        %v11157 = vadd.f32 %v7055, %v11097
        %v11158 = vadd.f32 %v7056, %v11099
        %v11159 = vadd.f32 %v7057, %v11101
        %v11160 = vadd.f32 %v7058, %v11103
        %v11161 = vadd.f32 %v7059, %v11107
        %v11162 = vadd.f32 %v7060, %v11109
        %v11163 = vadd.f32 %v7061, %v11111
        %v11164 = vadd.f32 %v7062, %v11113
        %v11165 = vadd.f32 %v7063, %v11117
        %v11166 = vadd.f32 %v7064, %v11119
        %v11167 = vadd.f32 %v7065, %v11121
        %v11168 = vadd.f32 %v7066, %v11123
        %v11169 = vadd.f32 %v7067, %v11127
        %v11170 = vadd.f32 %v7068, %v11129
        %v11171 = vadd.f32 %v7069, %v11131
        %v11172 = vadd.f32 %v7070, %v11133
        %v11173 = vadd.f32 %v7071, %v11137
        %v11174 = vadd.f32 %v7072, %v11139
        %v11175 = vadd.f32 %v7073, %v11141
        %v11176 = vadd.f32 %v7074, %v11143
        %11177 = vst [vmem:[%s489] sm:$0xff] %v11145
        %11178 = vst [vmem:[%s489 + $0x8] sm:$0xff] %v11146
        %11179 = vst [vmem:[%s489 + $0x10] sm:$0xff] %v11147
        %11180 = vst [vmem:[%s489 + $0x18] sm:$0xff] %v11148
        %11181 = vst [vmem:[%s489 + $0x20] sm:$0xff] %v11149
        %11182 = vst [vmem:[%s489 + $0x28] sm:$0xff] %v11150
        %11183 = vst [vmem:[%s489 + $0x30] sm:$0xff] %v11151
        %11184 = vst [vmem:[%s489 + $0x38] sm:$0xff] %v11152
        %11185 = vst [vmem:[%s489 + $0x40] sm:$0xff] %v11153
        %11186 = vst [vmem:[%s489 + $0x48] sm:$0xff] %v11154
        %11187 = vst [vmem:[%s489 + $0x50] sm:$0xff] %v11155
        %11188 = vst [vmem:[%s489 + $0x58] sm:$0xff] %v11156
        %11189 = vst [vmem:[%s489 + $0x60] sm:$0xff] %v11157
        %11190 = vst [vmem:[%s489 + $0x68] sm:$0xff] %v11158
        %11191 = vst [vmem:[%s489 + $0x70] sm:$0xff] %v11159
        %11192 = vst [vmem:[%s489 + $0x78] sm:$0xff] %v11160
        %11193 = vst [vmem:[%s489 + $0x80] sm:$0xff] %v11161
        %11194 = vst [vmem:[%s489 + $0x88] sm:$0xff] %v11162
        %11195 = vst [vmem:[%s489 + $0x90] sm:$0xff] %v11163
        %11196 = vst [vmem:[%s489 + $0x98] sm:$0xff] %v11164
        %11197 = vst [vmem:[%s489 + $0xa0] sm:$0xff] %v11165
        %11198 = vst [vmem:[%s489 + $0xa8] sm:$0xff] %v11166
        %11199 = vst [vmem:[%s489 + $0xb0] sm:$0xff] %v11167
        %11200 = vst [vmem:[%s489 + $0xb8] sm:$0xff] %v11168
        %11201 = vst [vmem:[%s489 + $0xc0] sm:$0xff] %v11169
        %11202 = vst [vmem:[%s489 + $0xc8] sm:$0xff] %v11170
        %11203 = vst [vmem:[%s489 + $0xd0] sm:$0xff] %v11171
        %11204 = vst [vmem:[%s489 + $0xd8] sm:$0xff] %v11172
        %11205 = vst [vmem:[%s489 + $0xe0] sm:$0xff] %v11173
        %11206 = vst [vmem:[%s489 + $0xe8] sm:$0xff] %v11174
        %11207 = vst [vmem:[%s489 + $0xf0] sm:$0xff] %v11175
        %11208 = vst [vmem:[%s489 + $0xf8] sm:$0xff] %v11176
        %s11209 = sand.u32 %s296, 1
        %s11210 = scalar_lea.sflag [#allocation4], %s11209
        %s11211 = sand.u32 %s296, 1
        %s11212 = smul.addr %s11211, 256
        %s11213 = scalar_lea.vmem [#allocation11], %s11212
        // Predicated region
        $region89: #{tpu_custom_call.1} parent=67 // pred_check
          %p11214 = pneg %p306
        $region90: #{tpu_custom_call.1} parent=67 // pred_check_branch
          %11216 = sbr.rel (%p11214) target = $region92
        $region91: #{tpu_custom_call.1} parent=67 // pred_region
          %s11218 = ssub.s32 4096, 4096
          %11219 = vsyncadd %s11210, %s11218
          %s11220 = smul.addr %s31, 32
          %s11221 = smul.addr %s11220, 128
          %s11222 = scalar_lea.hbm %s12, %s11221
          %s11223 = sshll.u32 %s11213, 4
          %s11224 = int_to_ptr.vmem [resolvable:$true] %s11223
          %11229 = dma.vmem_to_hbm [thread:$0]  %s11224, 4096, %s11222, %s11210, 256, 256, 16
        $region92: #{tpu_custom_call.1} parent=67 // pred_fallthru
          _
      $region68: #{tpu_custom_call.1} parent=5 // pred_fallthru
        _
      %p11230 = scmp.le.s32.totalorder 2, %s26
      // Predicated region
      $region93: #{tpu_custom_call.1} parent=5 // pred_check
        %p11231 = pneg %p11230
      $region94: #{tpu_custom_call.1} parent=5 // pred_check_branch
        %11233 = sbr.rel (%p11231) target = $region96
      $region95: #{tpu_custom_call.1} parent=5 // pred_region
        %s11234 = ssub.s32 %s26, 2
        // Predicated region
        $region97: #{tpu_custom_call.1} parent=95 // pred_check
          %p11235 = pneg %p312
        $region98: #{tpu_custom_call.1} parent=95 // pred_check_branch
          %11237 = sbr.rel (%p11235) target = $region100
        $region99: #{tpu_custom_call.1} parent=95 // pred_region
          %s11238 = sand.u32 %s297, 1
          %s11239 = scalar_lea.sflag [#allocation4], %s11238
          %s11240 = sand.u32 %s297, 1
          %s11241 = smul.addr %s11240, 256
          %s11242 = scalar_lea.vmem [#allocation11], %s11241
          %11243 = dma.done %s11239, 4096
        $region100: #{tpu_custom_call.1} parent=95 // pred_fallthru
          _
      $region96: #{tpu_custom_call.1} parent=5 // pred_fallthru
        _
    $region6: #{tpu_custom_call.1} parent=1 // loop_footer
      %s30 = sadd.s32 1, %s26
    $region7: #{tpu_custom_call.1} parent=1 // loop_footer_branch
      %25 = sbr.rel target = $region3
    $region8: #{tpu_custom_call.1} parent=1 // loop_exit
      _
    %11244 = vsyncpa [#allocation3], 1
    %s11245 = scalar_lea.sflag [#allocation3], 1
    %11246 = vsyncpa %s11245, 1
    %11247 = vsyncpa [#allocation6], 1
    %11248 = vsyncpa [#allocation9], 1
    %11249 = vsyncpa [#allocation4], 1
    %s11250 = scalar_lea.sflag [#allocation4], 1
    %11251 = vsyncpa %s11250, 1

</llo_original>
